<compile_context>
chip_gen: v6e
topology: v6e:2x2x1
jax: 0.10.0
libtpu: 0.0.40
codegen_flags: <defaults>
</compile_context>

<pallas_src>
import functools

import numpy as np
import jax
import jax.numpy as jnp
from jax.experimental import pallas as pl
from jax.experimental.pallas import tpu as pltpu

BN_EPS = 1e-5
LANE = 128          # TPU vreg lane width; channel dims are padded to multiples of this
NEG_LARGE = -1e30   # maxpool spatial padding value (finite, bf16-representable)


def _round_up(x, m):
    return (x + m - 1) // m * m


def _cpad(c):
    return _round_up(c, LANE)


# --------------------------------------------------------------------------- #
# Kernel 1: tiled MXU matmul with fused (bias+BN) shift + optional ReLU.
# --------------------------------------------------------------------------- #
def _matmul_kernel(x_ref, w_ref, shift_ref, o_ref, acc_ref, *, relu):
    @pl.when(pl.program_id(2) == 0)
    def _init():
        acc_ref[...] = jnp.zeros_like(acc_ref)

    acc_ref[...] += jnp.dot(x_ref[...], w_ref[...],
                            preferred_element_type=jnp.float32)

    @pl.when(pl.program_id(2) == pl.num_programs(2) - 1)
    def _finalize():
        out = acc_ref[...] + shift_ref[...]
        if relu:
            out = jnp.maximum(out, 0.0)
        o_ref[...] = out.astype(o_ref.dtype)


def fused_matmul(x, w, shift, *, relu):
    """relu?((x @ w) + shift); bf16 MXU inputs, f32 accumulation.

    x: [M, K] bf16, w: [K, N] bf16 (BN scale pre-folded), shift: [1, N] f32.
    Returns [M, N] bf16 (N is already lane-padded by the caller).
    """
    M, K = x.shape
    N = w.shape[1]

    # Tiles that fit every generation's scoped-VMEM default (incl. double buffering).
    Mp = _round_up(M, 16)
    if Mp <= 256:
        tm = Mp
    else:
        tm, Mp = 256, _round_up(Mp, 256)
    Np = _round_up(N, LANE)
    if Np <= 512:
        tn = Np
    else:
        tn, Np = 512, _round_up(Np, 512)
    Kp = _round_up(K, LANE)
    if Kp <= 512:
        tk = Kp
    else:
        tk = next(c for c in (512, 384, 256, 128) if Kp % c == 0)

    # If the parallel grid collapses to one step, split M so v7x's 2 TensorCores
    # both get work (costs one extra tiny grid step on single-core generations).
    if Mp // tm == 1 and Np // tn == 1 and Mp % 32 == 0:
        tm = Mp // 2

    xp = jnp.pad(x, ((0, Mp - M), (0, Kp - K)))
    wp = jnp.pad(w, ((0, Kp - K), (0, Np - N)))
    sp = jnp.pad(shift, ((0, 0), (0, Np - N)))

    out = pl.pallas_call(
        functools.partial(_matmul_kernel, relu=relu),
        out_shape=jax.ShapeDtypeStruct((Mp, Np), jnp.bfloat16),
        grid=(Mp // tm, Np // tn, Kp // tk),
        in_specs=[
            pl.BlockSpec((tm, tk), lambda i, j, k: (i, k)),
            pl.BlockSpec((tk, tn), lambda i, j, k: (k, j)),
            pl.BlockSpec((1, tn), lambda i, j, k: (0, j)),
        ],
        out_specs=pl.BlockSpec((tm, tn), lambda i, j, k: (i, j)),
        scratch_shapes=[pltpu.VMEM((tm, tn), jnp.float32)],
        compiler_params=pltpu.CompilerParams(
            dimension_semantics=("parallel", "parallel", "arbitrary")),
    )(xp, wp, sp)
    return out[:M, :N]


def _im2col(x, k, stride, pad):
    """NHWC -> ([N*Ho*Wo, k*k*C], (N, Ho, Wo)); patch index = (dy*k+dx)*C + c."""
    # TODO(synk): for large resolutions, stream the k*k taps as K-axis grid steps
    #             instead of materializing the full patch matrix in HBM.
    N, H, W, C = x.shape
    xp = jnp.pad(x, ((0, 0), (pad, pad), (pad, pad), (0, 0)))
    Ho = (H + 2 * pad - k) // stride + 1
    Wo = (W + 2 * pad - k) // stride + 1
    cols = [xp[:, dy:dy + stride * Ho:stride, dx:dx + stride * Wo:stride, :]
            for dy in range(k) for dx in range(k)]
    patches = jnp.concatenate(cols, axis=-1)
    return patches.reshape(N * Ho * Wo, k * k * C), (N, Ho, Wo)


# --------------------------------------------------------------------------- #
# Kernel 2: fused depthwise-3x3 + pointwise-1x1 + folded BN (+ ReLU).
# --------------------------------------------------------------------------- #
def _dsc_kernel(xp_ref, wdw_ref, wpw_ref, shift_ref, o_ref, dw_ref, *, H, W, relu):
    Cp = xp_ref.shape[-1]
    wdw = wdw_ref[...]                               # (9, Cp) f32

    # depthwise 3x3 (stride 1): 9 shifted in-VMEM slices, lazy bf16->f32 cast inside
    # the FMA (no full f32 copy of the input block), f32 accumulation.
    acc = jnp.zeros((H, W, Cp), jnp.float32)
    for dy in range(3):
        for dx in range(3):
            t = dy * 3 + dx
            acc = acc + xp_ref[0, dy:dy + H, dx:dx + W, :] * wdw[t:t + 1, :]

    # Flatten (H, W, Cp) -> (H*W, Cp) through a small VMEM scratch (unit-stride row
    # stores; avoids any vreg relayout) so the pointwise conv is ONE batched matmul.
    for y in range(H):
        dw_ref[y * W:(y + 1) * W, :] = acc[y].astype(jnp.bfloat16)

    # pointwise 1x1 (+ folded BN) on the MXU: single (H*W, Cp) @ (Cp, tn) matmul,
    # single unmasked lane-dense store.
    out = jnp.dot(dw_ref[...], wpw_ref[...],
                  preferred_element_type=jnp.float32) + shift_ref[...]
    if relu:
        out = jnp.maximum(out, 0.0)
    o_ref[0] = out.astype(o_ref.dtype)


def fused_dsc(x, wdw, wpw, shift, *, relu):
    """depthwiseSeparableConv('original') + folded BatchNorm + optional ReLU."""
    # TODO(synk): tile the H axis (with a 1-row halo) for large spatial resolutions
    #             (v7x VMEM); at these sizes one image per grid step fits comfortably.
    # TODO(synk): for CoutP > 512 the depthwise is recomputed per output-channel tile;
    #             cache it in a VMEM scratch under @pl.when(j == 0) if that case matters.
    N, H, W, Cp = x.shape
    CoutP = wpw.shape[1]
    if CoutP <= 512:
        tn = CoutP
    else:
        tn = next(c for c in (512, 384, 256, 128) if CoutP % c == 0)
    xp = jnp.pad(x, ((0, 0), (1, 1), (1, 1), (0, 0)))
    out = pl.pallas_call(
        functools.partial(_dsc_kernel, H=H, W=W, relu=relu),
        out_shape=jax.ShapeDtypeStruct((N, H * W, CoutP), jnp.bfloat16),
        grid=(N, CoutP // tn),
        in_specs=[
            pl.BlockSpec((1, H + 2, W + 2, Cp), lambda n, j: (n, 0, 0, 0)),
            pl.BlockSpec((9, Cp), lambda n, j: (0, 0)),
            pl.BlockSpec((Cp, tn), lambda n, j: (0, j)),
            pl.BlockSpec((1, tn), lambda n, j: (0, j)),
        ],
        out_specs=pl.BlockSpec((1, H * W, tn), lambda n, j: (n, 0, j)),
        scratch_shapes=[pltpu.VMEM((H * W, Cp), jnp.bfloat16)],
        compiler_params=pltpu.CompilerParams(
            dimension_semantics=("parallel", "parallel")),
    )(xp, wdw, wpw, shift)
    return out.reshape(N, H, W, CoutP)


# --------------------------------------------------------------------------- #
# Kernel 3: fused block tail = MaxPool(3,2,1) + 1x1/s2 residual conv + add + ReLU.
#
# The pool input arrives with W-column parity folded into the lane dim (a FREE wrapper
# reshape), so every stride-2 tap is a unit-stride slice; the maxpool runs in bf16.
# --------------------------------------------------------------------------- #
def _tail_kernel(hp2_ref, x2_ref, wres_ref, shift_ref, o_ref, m_ref, xs_ref,
                 *, Ho, Wo, Cp, CinP, relu):
    # hp2_ref: (1, 2*Ho+2, Wo+1, 2*Cp) bf16, spatially padded with NEG_LARGE;
    #          lanes [0:Cp] = even padded columns, [Cp:2Cp] = odd padded columns.
    hb = hp2_ref[0]
    he = hb[:, :, :Cp]
    ho = hb[:, :, Cp:]
    # column reduction of the 3x3 window: padded cols {2x, 2x+1, 2x+2}
    c0 = he[:, 0:Wo, :]
    c1 = ho[:, 0:Wo, :]
    c2 = he[:, 1:Wo + 1, :]
    cmax = jnp.maximum(jnp.maximum(c0, c1), c2)        # (2*Ho+2, Wo, Cp) bf16

    for y in range(Ho):
        # row reduction: padded rows {2y, 2y+1, 2y+2}
        m_row = jnp.maximum(jnp.maximum(cmax[2 * y], cmax[2 * y + 1]),
                            cmax[2 * y + 2])           # (Wo, Cp)
        m_ref[y * Wo:(y + 1) * Wo, :] = m_row
        # stride-2 subsample of x_in for the 1x1/s2 residual conv:
        # even rows (2y) and even columns (lanes [0:CinP] of the parity-folded layout)
        xs_ref[y * Wo:(y + 1) * Wo, :] = x2_ref[0, 2 * y, :, 0:CinP]

    # residual conv as ONE (Ho*Wo, CinP) @ (CinP, Cp) MXU matmul; single unmasked store
    res = jnp.dot(xs_ref[...], wres_ref[...],
                  preferred_element_type=jnp.float32) + shift_ref[...]
    out = m_ref[...].astype(jnp.float32) + res
    if relu:
        out = jnp.maximum(out, 0.0)
    o_ref[0] = out.astype(o_ref.dtype)


def fused_pool_residual(h, x_in, w_res, shift_res, *, relu):
    """relu?(maxpool3x3_s2_p1(h) + conv1x1_s2(x_in) + bias)."""
    N, H, W, Cp = h.shape
    assert H % 2 == 0 and W % 2 == 0
    CinP = x_in.shape[-1]
    Ho, Wo = H // 2, W // 2
    Hp, Whp = H + 2, (W + 2) // 2
    hp = jnp.pad(h, ((0, 0), (1, 1), (1, 1), (0, 0)), constant_values=NEG_LARGE)
    hp2 = hp.reshape(N, Hp, Whp, 2 * Cp)         # free: fold W parity into lanes
    x2 = x_in.reshape(N, H, Wo, 2 * CinP)        # free: fold W parity into lanes
    out = pl.pallas_call(
        functools.partial(_tail_kernel, Ho=Ho, Wo=Wo, Cp=Cp, CinP=CinP, relu=relu),
        out_shape=jax.ShapeDtypeStruct((N, Ho * Wo, Cp), jnp.bfloat16),
        grid=(N,),
        in_specs=[
            pl.BlockSpec((1, Hp, Whp, 2 * Cp), lambda n: (n, 0, 0, 0)),
            pl.BlockSpec((1, H, Wo, 2 * CinP), lambda n: (n, 0, 0, 0)),
            pl.BlockSpec((CinP, Cp), lambda n: (0, 0)),
            pl.BlockSpec((1, Cp), lambda n: (0, 0)),
        ],
        out_specs=pl.BlockSpec((1, Ho * Wo, Cp), lambda n: (n, 0, 0)),
        scratch_shapes=[pltpu.VMEM((Ho * Wo, Cp), jnp.bfloat16),
                        pltpu.VMEM((Ho * Wo, CinP), jnp.bfloat16)],
        compiler_params=pltpu.CompilerParams(dimension_semantics=("parallel",)),
    )(hp2, x2, w_res, shift_res)
    return out.reshape(N, Ho, Wo, Cp)


# ----------------------------- parameter folding ---------------------------- #

def _fold_bn(bn, cout):
    if bn is None:
        return jnp.ones((cout,), jnp.float32), jnp.zeros((cout,), jnp.float32)
    gamma, beta, mean, var = bn
    scale = gamma / jnp.sqrt(var + BN_EPS)
    return scale, beta - mean * scale


def _prep_conv(w_pt, bias, bn, cin_pad, cout_pad):
    """Fold conv bias + eval-mode BN into (im2col weight, shift); pad channels."""
    cout, cin, k, _ = w_pt.shape
    scale, shift = _fold_bn(bn, cout)
    if bias is not None:
        shift = shift + bias * scale
    w = jnp.transpose(w_pt, (2, 3, 1, 0)) * scale                     # (k,k,cin,cout)
    w = jnp.pad(w, ((0, 0), (0, 0), (0, cin_pad - cin), (0, cout_pad - cout)))
    w2d = w.reshape(k * k * cin_pad, cout_pad).astype(jnp.bfloat16)
    shift = jnp.pad(shift, (0, cout_pad - cout)).reshape(1, cout_pad).astype(jnp.float32)
    return w2d, shift


def _prep_dsc(dw_pt, pw_pt, bn, cin_pad, cout_pad):
    cin, cout = dw_pt.shape[0], pw_pt.shape[0]
    scale, shift = _fold_bn(bn, cout)
    wdw = jnp.transpose(dw_pt[:, 0], (1, 2, 0)).reshape(9, cin)       # (9, cin)
    wdw = jnp.pad(wdw, ((0, 0), (0, cin_pad - cin))).astype(jnp.float32)
    wpw = pw_pt[:, :, 0, 0].T * scale                                  # (cin, cout)
    wpw = jnp.pad(wpw, ((0, cin_pad - cin), (0, cout_pad - cout))).astype(jnp.bfloat16)
    shift = jnp.pad(shift, (0, cout_pad - cout)).reshape(1, cout_pad).astype(jnp.float32)
    return wdw, wpw, shift


def _prep_res(w_pt, bias, cin_pad, cout_pad):
    cout, cin = w_pt.shape[:2]
    w = jnp.pad(w_pt[:, :, 0, 0].T,
                ((0, cin_pad - cin), (0, cout_pad - cout))).astype(jnp.bfloat16)
    shift = jnp.pad(bias, (0, cout_pad - cout)).reshape(1, cout_pad).astype(jnp.float32)
    return w, shift


# ------------------------------ parameters ---------------------------------- #

def init_entry_flow_params(key, input_channel, widen_factor):
    keys = iter(jax.random.split(key, 64))
    nk = lambda: next(keys)

    def conv_w(cout, cin, k):
        return 0.1 * jax.random.normal(nk(), (cout, cin, k, k), jnp.float32)

    def conv_b(cout):
        return 0.05 * jax.random.normal(nk(), (cout,), jnp.float32)

    def dw_w(c):
        return 0.1 * jax.random.normal(nk(), (c, 1, 3, 3), jnp.float32)

    def bn(c):
        gamma = 1.0 + 0.1 * jax.random.normal(nk(), (c,), jnp.float32)
        beta = 0.05 * jax.random.normal(nk(), (c,), jnp.float32)
        mean = 0.1 * jax.random.normal(nk(), (c,), jnp.float32)
        var = 0.5 + jax.random.uniform(nk(), (c,), jnp.float32)
        return (gamma, beta, mean, var)

    w = widen_factor
    c1, c2, c3, c4, c5 = 4 * w, 8 * w, 16 * w, 32 * w, 91 * w
    p = {}
    # block_1
    p["b1_conv1_w"] = conv_w(c1, input_channel, 3)            # bias=False
    p["b1_bn1"] = bn(c1)
    p["b1_conv2_w"] = conv_w(c2, c1, 3)
    p["b1_conv2_b"] = conv_b(c2)                               # bias=True (default)
    p["b1_bn2"] = bn(c2)
    # block_2  ('original' dsc: depthwise then pointwise, no bias)
    p["b2_dsc1_dw"] = dw_w(c2); p["b2_dsc1_pw"] = conv_w(c3, c2, 1)
    p["b2_bn1"] = bn(c3)
    p["b2_dsc2_dw"] = dw_w(c3); p["b2_dsc2_pw"] = conv_w(c3, c3, 1)
    p["b2_bn2"] = bn(c3)
    p["b2_res_w"] = conv_w(c3, c2, 1); p["b2_res_b"] = conv_b(c3)
    # block_3
    p["b3_dsc1_dw"] = dw_w(c3); p["b3_dsc1_pw"] = conv_w(c4, c3, 1)
    p["b3_bn1"] = bn(c4)
    p["b3_dsc2_dw"] = dw_w(c4); p["b3_dsc2_pw"] = conv_w(c4, c4, 1)
    p["b3_bn2"] = bn(c4)
    p["b3_res_w"] = conv_w(c4, c3, 1); p["b3_res_b"] = conv_b(c4)
    # block_4
    p["b4_dsc1_dw"] = dw_w(c4); p["b4_dsc1_pw"] = conv_w(c5, c4, 1)
    p["b4_bn1"] = bn(c5)
    p["b4_dsc2_dw"] = dw_w(c5); p["b4_dsc2_pw"] = conv_w(c5, c5, 1)
    p["b4_bn2"] = bn(c5)
    p["b4_res_w"] = conv_w(c5, c4, 1); p["b4_res_b"] = conv_b(c5)
    return p


# ------------------------------- forward ------------------------------------ #

def entry_flow_forward(p, x_nchw):
    x = jnp.transpose(x_nchw, (0, 2, 3, 1)).astype(jnp.bfloat16)      # NCHW -> NHWC
    cin = x.shape[-1]
    c1, c2 = p["b1_conv1_w"].shape[0], p["b1_conv2_w"].shape[0]
    c3, c4, c5 = p["b2_dsc1_pw"].shape[0], p["b3_dsc1_pw"].shape[0], p["b4_dsc1_pw"].shape[0]
    c1p, c2p, c3p, c4p, c5p = map(_cpad, (c1, c2, c3, c4, c5))

    # ---- block 1: two full 3x3 convs (im2col + tiled fused MXU matmul) ----
    w, s = _prep_conv(p["b1_conv1_w"], None, p["b1_bn1"], cin, c1p)
    patches, (N, H, W) = _im2col(x, 3, 2, 1)
    h = fused_matmul(patches, w, s, relu=True).reshape(N, H, W, c1p)

    w, s = _prep_conv(p["b1_conv2_w"], p["b1_conv2_b"], p["b1_bn2"], c1p, c2p)
    patches, (N, H, W) = _im2col(h, 3, 1, 1)
    out1 = fused_matmul(patches, w, s, relu=True).reshape(N, H, W, c2p)

    # ---- block 2 + residual ----
    wdw, wpw, s = _prep_dsc(p["b2_dsc1_dw"], p["b2_dsc1_pw"], p["b2_bn1"], c2p, c3p)
    h = fused_dsc(out1, wdw, wpw, s, relu=True)
    wdw, wpw, s = _prep_dsc(p["b2_dsc2_dw"], p["b2_dsc2_pw"], p["b2_bn2"], c3p, c3p)
    h = fused_dsc(h, wdw, wpw, s, relu=False)
    wr, sr = _prep_res(p["b2_res_w"], p["b2_res_b"], c2p, c3p)
    # block_3 starts with nn.ReLU(inplace=True): it mutates out2 before the residual
    # branch reads it, so relu(out2) feeds BOTH paths of block 3.
    r2 = fused_pool_residual(h, out1, wr, sr, relu=True)

    # ---- block 3 + residual ----
    wdw, wpw, s = _prep_dsc(p["b3_dsc1_dw"], p["b3_dsc1_pw"], p["b3_bn1"], c3p, c4p)
    h = fused_dsc(r2, wdw, wpw, s, relu=True)
    wdw, wpw, s = _prep_dsc(p["b3_dsc2_dw"], p["b3_dsc2_pw"], p["b3_bn2"], c4p, c4p)
    h = fused_dsc(h, wdw, wpw, s, relu=False)
    wr, sr = _prep_res(p["b3_res_w"], p["b3_res_b"], c3p, c4p)
    r3 = fused_pool_residual(h, r2, wr, sr, relu=True)     # block_4's in-place ReLU

    # ---- block 4 + residual (no trailing ReLU) ----
    wdw, wpw, s = _prep_dsc(p["b4_dsc1_dw"], p["b4_dsc1_pw"], p["b4_bn1"], c4p, c5p)
    h = fused_dsc(r3, wdw, wpw, s, relu=True)
    wdw, wpw, s = _prep_dsc(p["b4_dsc2_dw"], p["b4_dsc2_pw"], p["b4_bn2"], c5p, c5p)
    h = fused_dsc(h, wdw, wpw, s, relu=False)
    wr, sr = _prep_res(p["b4_res_w"], p["b4_res_b"], c4p, c5p)
    out = fused_pool_residual(h, r3, wr, sr, relu=False)

    out = out[..., :c5].astype(jnp.float32)                 # drop padded lanes
    return jnp.transpose(out, (0, 3, 1, 2))                 # NHWC -> NCHW


# --------------------------- pure-JAX reference ------------------------------ #

def _ref_conv(x, w_pt, b, stride, pad):
    w = jnp.transpose(w_pt, (2, 3, 1, 0))  # HWIO
    out = jax.lax.conv_general_dilated(
        x, w, (stride, stride), [(pad, pad), (pad, pad)],
        dimension_numbers=('NHWC', 'HWIO', 'NHWC'),
        precision=jax.lax.Precision.HIGHEST)
    return out if b is None else out + b


def _ref_dw(x, w_pt):
    C = x.shape[-1]
    w = jnp.transpose(w_pt, (2, 3, 1, 0))  # (3,3,1,C)
    return jax.lax.conv_general_dilated(
        x, w, (1, 1), [(1, 1), (1, 1)],
        dimension_numbers=('NHWC', 'HWIO', 'NHWC'),
        feature_group_count=C, precision=jax.lax.Precision.HIGHEST)


def _ref_bn(x, bn):
    gamma, beta, mean, var = bn
    return gamma * (x - mean) / jnp.sqrt(var + BN_EPS) + beta


def _ref_maxpool(x):
    return jax.lax.reduce_window(x, -jnp.inf, jax.lax.max,
                                 (1, 3, 3, 1), (1, 2, 2, 1),
                                 [(0, 0), (1, 1), (1, 1), (0, 0)])


def entry_flow_reference(p, x_nchw):
    x = jnp.transpose(x_nchw, (0, 2, 3, 1)).astype(jnp.float32)
    relu = lambda v: jnp.maximum(v, 0.0)
    h = relu(_ref_bn(_ref_conv(x, p["b1_conv1_w"], None, 2, 1), p["b1_bn1"]))
    out1 = relu(_ref_bn(_ref_conv(h, p["b1_conv2_w"], p["b1_conv2_b"], 1, 1), p["b1_bn2"]))

    h = _ref_conv(_ref_dw(out1, p["b2_dsc1_dw"]), p["b2_dsc1_pw"], None, 1, 0)
    h = relu(_ref_bn(h, p["b2_bn1"]))
    h = _ref_conv(_ref_dw(h, p["b2_dsc2_dw"]), p["b2_dsc2_pw"], None, 1, 0)
    h = _ref_maxpool(_ref_bn(h, p["b2_bn2"]))
    r2 = relu(h + _ref_conv(out1, p["b2_res_w"], p["b2_res_b"], 2, 0))

    h = _ref_conv(_ref_dw(r2, p["b3_dsc1_dw"]), p["b3_dsc1_pw"], None, 1, 0)
    h = relu(_ref_bn(h, p["b3_bn1"]))
    h = _ref_conv(_ref_dw(h, p["b3_dsc2_dw"]), p["b3_dsc2_pw"], None, 1, 0)
    h = _ref_maxpool(_ref_bn(h, p["b3_bn2"]))
    r3 = relu(h + _ref_conv(r2, p["b3_res_w"], p["b3_res_b"], 2, 0))

    h = _ref_conv(_ref_dw(r3, p["b4_dsc1_dw"]), p["b4_dsc1_pw"], None, 1, 0)
    h = relu(_ref_bn(h, p["b4_bn1"]))
    h = _ref_conv(_ref_dw(h, p["b4_dsc2_dw"]), p["b4_dsc2_pw"], None, 1, 0)
    h = _ref_maxpool(_ref_bn(h, p["b4_bn2"]))
    out = h + _ref_conv(r3, p["b4_res_w"], p["b4_res_b"], 2, 0)
    return jnp.transpose(out, (0, 3, 1, 2))


# --------------------------------- main -------------------------------------- #

if __name__ == "__main__":
    batch, input_channel, spatial, widen_factor = 2, 3, 16, 1

    key = jax.random.PRNGKey(0)
    x_key, p_key = jax.random.split(key)
    x = jax.random.normal(x_key, (batch, input_channel, spatial, spatial), jnp.float32)
    params = init_entry_flow_params(p_key, input_channel, widen_factor)

    fwd = jax.jit(entry_flow_forward)
    out = jax.block_until_ready(fwd(params, x))

    assert out.shape == (batch, 91 * widen_factor, spatial // 16, spatial // 16), out.shape

    ref = jax.block_until_ready(entry_flow_reference(params, x))
    # bf16 MXU inputs / bf16 activations introduce ~1% relative error vs the f32 reference.
    np.testing.assert_allclose(np.asarray(out), np.asarray(ref), rtol=5e-2, atol=5e-2)

    print("KERNEL_OK")
</pallas_src>

<mosaic_0001>
module attributes {stable_mosaic.version = 11 : i64} {
  func.func @_matmul_kernel(%arg0: i32, %arg1: i32, %arg2: i32, %arg3: memref<64x128xbf16, #tpu.memory_space<vmem>>, %arg4: memref<128x128xbf16, #tpu.memory_space<vmem>>, %arg5: memref<1x128xf32, #tpu.memory_space<vmem>>, %arg6: memref<64x128xbf16, #tpu.memory_space<vmem>>, %arg7: memref<64x128xf32, #tpu.memory_space<vmem>>) attributes {dimension_semantics = [#tpu.dimension_semantics<parallel>, #tpu.dimension_semantics<parallel>, #tpu.dimension_semantics<arbitrary>], iteration_bounds = array<i64: 2, 1, 1>, scalar_prefetch = 0 : i64, scratch_operands = 1 : i64, tpu.core_type = #tpu.core_type<tc>, window_params = [{transform_indices = @transform_0, window_bounds = array<i64: 64, 128>}, {transform_indices = @transform_1, window_bounds = array<i64: 128, 128>}, {transform_indices = @transform_2, window_bounds = array<i64: 1, 128>}, {transform_indices = @transform_3, window_bounds = array<i64: 64, 128>}]} {
    %c0_i32 = arith.constant 0 : i32
    %0 = arith.cmpi eq, %arg2, %c0_i32 : i32
    %1 = arith.extui %0 : i1 to i32
    %c0_i32_0 = arith.constant 0 : i32
    %2 = arith.cmpi ne, %1, %c0_i32_0 : i32
    scf.if %2 {
      %cst_10 = arith.constant 0.000000e+00 : f32
      %12 = vector.broadcast %cst_10 : f32 to vector<64x128xf32>
      %c0_11 = arith.constant 0 : index
      %c0_12 = arith.constant 0 : index
      %13 = vector.load %arg7[%c0_11, %c0_12] : memref<64x128xf32, #tpu.memory_space<vmem>>, vector<64x128xf32>
      tpu.vector_store %arg7[%c0_11, %c0_12], %12 {strides = array<i32>} : memref<64x128xf32, #tpu.memory_space<vmem>>, vector<64x128xf32>,
    } else {
    }
    %c0 = arith.constant 0 : index
    %c0_1 = arith.constant 0 : index
    %3 = vector.load %arg7[%c0, %c0_1] : memref<64x128xf32, #tpu.memory_space<vmem>>, vector<64x128xf32>
    %c0_2 = arith.constant 0 : index
    %c0_3 = arith.constant 0 : index
    %4 = vector.load %arg3[%c0_2, %c0_3] : memref<64x128xbf16, #tpu.memory_space<vmem>>, vector<64x128xbf16>
    %c0_4 = arith.constant 0 : index
    %c0_5 = arith.constant 0 : index
    %5 = vector.load %arg4[%c0_4, %c0_5] : memref<128x128xbf16, #tpu.memory_space<vmem>>, vector<128x128xbf16>
    %cst = arith.constant dense<0.000000e+00> : vector<64x128xf32>
    %6 = tpu.matmul %4, %5, %cst {dimension_numbers = #tpu.dot_dimension_numbers<[1], [0], [0], [1], [0, 0, 1, 1], [], []>} : vector<64x128xbf16>, vector<128x128xbf16>, vector<64x128xf32> -> vector<64x128xf32>
    %7 = arith.addf %3, %6 : vector<64x128xf32>
    %c0_6 = arith.constant 0 : index
    %c0_7 = arith.constant 0 : index
    %8 = vector.load %arg7[%c0_6, %c0_7] : memref<64x128xf32, #tpu.memory_space<vmem>>, vector<64x128xf32>
    tpu.vector_store %arg7[%c0_6, %c0_7], %7 {strides = array<i32>} : memref<64x128xf32, #tpu.memory_space<vmem>>, vector<64x128xf32>,
    %c0_i32_8 = arith.constant 0 : i32
    %9 = arith.cmpi eq, %arg2, %c0_i32_8 : i32
    %10 = arith.extui %9 : i1 to i32
    %c0_i32_9 = arith.constant 0 : i32
    %11 = arith.cmpi ne, %10, %c0_i32_9 : i32
    scf.if %11 {
      %c0_10 = arith.constant 0 : index
      %c0_11 = arith.constant 0 : index
      %12 = vector.load %arg7[%c0_10, %c0_11] : memref<64x128xf32, #tpu.memory_space<vmem>>, vector<64x128xf32>
      %c0_12 = arith.constant 0 : index
      %c0_13 = arith.constant 0 : index
      %13 = vector.load %arg5[%c0_12, %c0_13] : memref<1x128xf32, #tpu.memory_space<vmem>>, vector<1x128xf32>
      %14 = vector.broadcast %13 : vector<1x128xf32> to vector<64x128xf32>
      %15 = arith.addf %12, %14 : vector<64x128xf32>
      %cst_14 = arith.constant 0.000000e+00 : f32
      %16 = vector.broadcast %cst_14 : f32 to vector<64x128xf32>
      %17 = arith.maximumf %15, %16 : vector<64x128xf32>
      %18 = arith.truncf %17 : vector<64x128xf32> to vector<64x128xbf16>
      %c0_15 = arith.constant 0 : index
      %c0_16 = arith.constant 0 : index
      %19 = vector.load %arg6[%c0_15, %c0_16] : memref<64x128xbf16, #tpu.memory_space<vmem>>, vector<64x128xbf16>
      tpu.vector_store %arg6[%c0_15, %c0_16], %18 {strides = array<i32>} : memref<64x128xbf16, #tpu.memory_space<vmem>>, vector<64x128xbf16>,
    } else {
    }
    return
  }
  func.func @transform_0(%arg0: i32, %arg1: i32, %arg2: i32) -> (i32, i32) {
    %c0_i32 = arith.constant 0 : i32
    return %arg0, %arg2 : i32, i32
  }
  func.func @transform_1(%arg0: i32, %arg1: i32, %arg2: i32) -> (i32, i32) {
    %c0_i32 = arith.constant 0 : i32
    return %arg2, %arg1 : i32, i32
  }
  func.func @transform_2(%arg0: i32, %arg1: i32, %arg2: i32) -> (i32, i32) {
    %c0_i32 = arith.constant 0 : i32
    %c0_i32_0 = arith.constant 0 : i32
    return %c0_i32, %arg1 : i32, i32
  }
  func.func @transform_3(%arg0: i32, %arg1: i32, %arg2: i32) -> (i32, i32) {
    %c0_i32 = arith.constant 0 : i32
    return %arg0, %arg1 : i32, i32
  }
}

module attributes {stable_mosaic.version = 11 : i64} {
  func.func @_matmul_kernel(%arg0: i32, %arg1: i32, %arg2: i32, %arg3: memref<64x384xbf16, #tpu.memory_space<vmem>>, %arg4: memref<384x128xbf16, #tpu.memory_space<vmem>>, %arg5: memref<1x128xf32, #tpu.memory_space<vmem>>, %arg6: memref<64x128xbf16, #tpu.memory_space<vmem>>, %arg7: memref<64x128xf32, #tpu.memory_space<vmem>>) attributes {dimension_semantics = [#tpu.dimension_semantics<parallel>, #tpu.dimension_semantics<parallel>, #tpu.dimension_semantics<arbitrary>], iteration_bounds = array<i64: 2, 1, 3>, scalar_prefetch = 0 : i64, scratch_operands = 1 : i64, tpu.core_type = #tpu.core_type<tc>, window_params = [{transform_indices = @transform_0, window_bounds = array<i64: 64, 384>}, {transform_indices = @transform_1, window_bounds = array<i64: 384, 128>}, {transform_indices = @transform_2, window_bounds = array<i64: 1, 128>}, {transform_indices = @transform_3, window_bounds = array<i64: 64, 128>}]} {
    %c0_i32 = arith.constant 0 : i32
    %0 = arith.cmpi eq, %arg2, %c0_i32 : i32
    %1 = arith.extui %0 : i1 to i32
    %c0_i32_0 = arith.constant 0 : i32
    %2 = arith.cmpi ne, %1, %c0_i32_0 : i32
    scf.if %2 {
      %cst_9 = arith.constant 0.000000e+00 : f32
      %12 = vector.broadcast %cst_9 : f32 to vector<64x128xf32>
      %c0_10 = arith.constant 0 : index
      %c0_11 = arith.constant 0 : index
      %13 = vector.load %arg7[%c0_10, %c0_11] : memref<64x128xf32, #tpu.memory_space<vmem>>, vector<64x128xf32>
      tpu.vector_store %arg7[%c0_10, %c0_11], %12 {strides = array<i32>} : memref<64x128xf32, #tpu.memory_space<vmem>>, vector<64x128xf32>,
    } else {
    }
    %c0 = arith.constant 0 : index
    %c0_1 = arith.constant 0 : index
    %3 = vector.load %arg7[%c0, %c0_1] : memref<64x128xf32, #tpu.memory_space<vmem>>, vector<64x128xf32>
    %c0_2 = arith.constant 0 : index
    %c0_3 = arith.constant 0 : index
    %4 = vector.load %arg3[%c0_2, %c0_3] : memref<64x384xbf16, #tpu.memory_space<vmem>>, vector<64x384xbf16>
    %c0_4 = arith.constant 0 : index
    %c0_5 = arith.constant 0 : index
    %5 = vector.load %arg4[%c0_4, %c0_5] : memref<384x128xbf16, #tpu.memory_space<vmem>>, vector<384x128xbf16>
    %cst = arith.constant dense<0.000000e+00> : vector<64x128xf32>
    %6 = tpu.matmul %4, %5, %cst {dimension_numbers = #tpu.dot_dimension_numbers<[1], [0], [0], [1], [0, 0, 1, 1], [], []>} : vector<64x384xbf16>, vector<384x128xbf16>, vector<64x128xf32> -> vector<64x128xf32>
    %7 = arith.addf %3, %6 : vector<64x128xf32>
    %c0_6 = arith.constant 0 : index
    %c0_7 = arith.constant 0 : index
    %8 = vector.load %arg7[%c0_6, %c0_7] : memref<64x128xf32, #tpu.memory_space<vmem>>, vector<64x128xf32>
    tpu.vector_store %arg7[%c0_6, %c0_7], %7 {strides = array<i32>} : memref<64x128xf32, #tpu.memory_space<vmem>>, vector<64x128xf32>,
    %c2_i32 = arith.constant 2 : i32
    %9 = arith.cmpi eq, %arg2, %c2_i32 : i32
    %10 = arith.extui %9 : i1 to i32
    %c0_i32_8 = arith.constant 0 : i32
    %11 = arith.cmpi ne, %10, %c0_i32_8 : i32
    scf.if %11 {
      %c0_9 = arith.constant 0 : index
      %c0_10 = arith.constant 0 : index
      %12 = vector.load %arg7[%c0_9, %c0_10] : memref<64x128xf32, #tpu.memory_space<vmem>>, vector<64x128xf32>
      %c0_11 = arith.constant 0 : index
      %c0_12 = arith.constant 0 : index
      %13 = vector.load %arg5[%c0_11, %c0_12] : memref<1x128xf32, #tpu.memory_space<vmem>>, vector<1x128xf32>
      %14 = vector.broadcast %13 : vector<1x128xf32> to vector<64x128xf32>
      %15 = arith.addf %12, %14 : vector<64x128xf32>
      %cst_13 = arith.constant 0.000000e+00 : f32
      %16 = vector.broadcast %cst_13 : f32 to vector<64x128xf32>
      %17 = arith.maximumf %15, %16 : vector<64x128xf32>
      %18 = arith.truncf %17 : vector<64x128xf32> to vector<64x128xbf16>
      %c0_14 = arith.constant 0 : index
      %c0_15 = arith.constant 0 : index
      %19 = vector.load %arg6[%c0_14, %c0_15] : memref<64x128xbf16, #tpu.memory_space<vmem>>, vector<64x128xbf16>
      tpu.vector_store %arg6[%c0_14, %c0_15], %18 {strides = array<i32>} : memref<64x128xbf16, #tpu.memory_space<vmem>>, vector<64x128xbf16>,
    } else {
    }
    return
  }
  func.func @transform_0(%arg0: i32, %arg1: i32, %arg2: i32) -> (i32, i32) {
    %c0_i32 = arith.constant 0 : i32
    return %arg0, %arg2 : i32, i32
  }
  func.func @transform_1(%arg0: i32, %arg1: i32, %arg2: i32) -> (i32, i32) {
    %c0_i32 = arith.constant 0 : i32
    return %arg2, %arg1 : i32, i32
  }
  func.func @transform_2(%arg0: i32, %arg1: i32, %arg2: i32) -> (i32, i32) {
    %c0_i32 = arith.constant 0 : i32
    %c0_i32_0 = arith.constant 0 : i32
    return %c0_i32, %arg1 : i32, i32
  }
  func.func @transform_3(%arg0: i32, %arg1: i32, %arg2: i32) -> (i32, i32) {
    %c0_i32 = arith.constant 0 : i32
    return %arg0, %arg1 : i32, i32
  }
}

module attributes {stable_mosaic.version = 11 : i64} {
  func.func @_dsc_kernel(%arg0: i32, %arg1: i32, %arg2: memref<1x10x10x128xbf16, #tpu.memory_space<vmem>>, %arg3: memref<9x128xf32, #tpu.memory_space<vmem>>, %arg4: memref<128x128xbf16, #tpu.memory_space<vmem>>, %arg5: memref<1x128xf32, #tpu.memory_space<vmem>>, %arg6: memref<1x64x128xbf16, #tpu.memory_space<vmem>>, %arg7: memref<64x128xbf16, #tpu.memory_space<vmem>>) attributes {dimension_semantics = [#tpu.dimension_semantics<parallel>, #tpu.dimension_semantics<parallel>], iteration_bounds = array<i64: 2, 1>, scalar_prefetch = 0 : i64, scratch_operands = 1 : i64, tpu.core_type = #tpu.core_type<tc>, window_params = [{transform_indices = @transform_0, window_bounds = array<i64: 1, 10, 10, 128>}, {pipeline_mode = #tpu.pipeline_mode<synchronous>, transform_indices = @transform_1, window_bounds = array<i64: 9, 128>}, {transform_indices = @transform_2, window_bounds = array<i64: 128, 128>}, {transform_indices = @transform_3, window_bounds = array<i64: 1, 128>}, {transform_indices = @transform_4, window_bounds = array<i64: 1, 64, 128>}]} {
    %c0 = arith.constant 0 : index
    %c0_0 = arith.constant 0 : index
    %0 = vector.load %arg3[%c0, %c0_0] : memref<9x128xf32, #tpu.memory_space<vmem>>, vector<9x128xf32>
    %cst = arith.constant 0.000000e+00 : f32
    %1 = vector.broadcast %cst : f32 to vector<8x8x128xf32>
    %c0_1 = arith.constant 0 : index
    %c0_2 = arith.constant 0 : index
    %c0_3 = arith.constant 0 : index
    %c0_4 = arith.constant 0 : index
    %2 = vector.load %arg2[%c0_1, %c0_2, %c0_3, %c0_4] : memref<1x10x10x128xbf16, #tpu.memory_space<vmem>>, vector<1x8x8x128xbf16>
    %3 = vector.shape_cast %2 : vector<1x8x8x128xbf16> to vector<8x8x128xbf16>
    %4 = vector.extract_strided_slice %0 {offsets = [0, 0], sizes = [1, 128], strides = [1, 1]} : vector<9x128xf32> to vector<1x128xf32>
    %5 = arith.extf %3 : vector<8x8x128xbf16> to vector<8x8x128xf32>
    %6 = vector.shape_cast %4 : vector<1x128xf32> to vector<1x1x128xf32>
    %7 = vector.broadcast %6 : vector<1x1x128xf32> to vector<8x8x128xf32>
    %8 = arith.mulf %5, %7 : vector<8x8x128xf32>
    %9 = arith.addf %1, %8 : vector<8x8x128xf32>
    %c0_5 = arith.constant 0 : index
    %c0_6 = arith.constant 0 : index
    %c1 = arith.constant 1 : index
    %c0_7 = arith.constant 0 : index
    %10 = vector.load %arg2[%c0_5, %c0_6, %c1, %c0_7] : memref<1x10x10x128xbf16, #tpu.memory_space<vmem>>, vector<1x8x8x128xbf16>
    %11 = vector.shape_cast %10 : vector<1x8x8x128xbf16> to vector<8x8x128xbf16>
    %12 = vector.extract_strided_slice %0 {offsets = [1, 0], sizes = [1, 128], strides = [1, 1]} : vector<9x128xf32> to vector<1x128xf32>
    %13 = arith.extf %11 : vector<8x8x128xbf16> to vector<8x8x128xf32>
    %14 = vector.shape_cast %12 : vector<1x128xf32> to vector<1x1x128xf32>
    %15 = vector.broadcast %14 : vector<1x1x128xf32> to vector<8x8x128xf32>
    %16 = arith.mulf %13, %15 : vector<8x8x128xf32>
    %17 = arith.addf %9, %16 : vector<8x8x128xf32>
    %c0_8 = arith.constant 0 : index
    %c0_9 = arith.constant 0 : index
    %c2 = arith.constant 2 : index
    %c0_10 = arith.constant 0 : index
    %18 = vector.load %arg2[%c0_8, %c0_9, %c2, %c0_10] : memref<1x10x10x128xbf16, #tpu.memory_space<vmem>>, vector<1x8x8x128xbf16>
    %19 = vector.shape_cast %18 : vector<1x8x8x128xbf16> to vector<8x8x128xbf16>
    %20 = vector.extract_strided_slice %0 {offsets = [2, 0], sizes = [1, 128], strides = [1, 1]} : vector<9x128xf32> to vector<1x128xf32>
    %21 = arith.extf %19 : vector<8x8x128xbf16> to vector<8x8x128xf32>
    %22 = vector.shape_cast %20 : vector<1x128xf32> to vector<1x1x128xf32>
    %23 = vector.broadcast %22 : vector<1x1x128xf32> to vector<8x8x128xf32>
    %24 = arith.mulf %21, %23 : vector<8x8x128xf32>
    %25 = arith.addf %17, %24 : vector<8x8x128xf32>
    %c0_11 = arith.constant 0 : index
    %c1_12 = arith.constant 1 : index
    %c0_13 = arith.constant 0 : index
    %c0_14 = arith.constant 0 : index
    %26 = vector.load %arg2[%c0_11, %c1_12, %c0_13, %c0_14] : memref<1x10x10x128xbf16, #tpu.memory_space<vmem>>, vector<1x8x8x128xbf16>
    %27 = vector.shape_cast %26 : vector<1x8x8x128xbf16> to vector<8x8x128xbf16>
    %28 = vector.extract_strided_slice %0 {offsets = [3, 0], sizes = [1, 128], strides = [1, 1]} : vector<9x128xf32> to vector<1x128xf32>
    %29 = arith.extf %27 : vector<8x8x128xbf16> to vector<8x8x128xf32>
    %30 = vector.shape_cast %28 : vector<1x128xf32> to vector<1x1x128xf32>
    %31 = vector.broadcast %30 : vector<1x1x128xf32> to vector<8x8x128xf32>
    %32 = arith.mulf %29, %31 : vector<8x8x128xf32>
    %33 = arith.addf %25, %32 : vector<8x8x128xf32>
    %c0_15 = arith.constant 0 : index
    %c1_16 = arith.constant 1 : index
    %c1_17 = arith.constant 1 : index
    %c0_18 = arith.constant 0 : index
    %34 = vector.load %arg2[%c0_15, %c1_16, %c1_17, %c0_18] : memref<1x10x10x128xbf16, #tpu.memory_space<vmem>>, vector<1x8x8x128xbf16>
    %35 = vector.shape_cast %34 : vector<1x8x8x128xbf16> to vector<8x8x128xbf16>
    %36 = vector.extract_strided_slice %0 {offsets = [4, 0], sizes = [1, 128], strides = [1, 1]} : vector<9x128xf32> to vector<1x128xf32>
    %37 = arith.extf %35 : vector<8x8x128xbf16> to vector<8x8x128xf32>
    %38 = vector.shape_cast %36 : vector<1x128xf32> to vector<1x1x128xf32>
    %39 = vector.broadcast %38 : vector<1x1x128xf32> to vector<8x8x128xf32>
    %40 = arith.mulf %37, %39 : vector<8x8x128xf32>
    %41 = arith.addf %33, %40 : vector<8x8x128xf32>
    %c0_19 = arith.constant 0 : index
    %c1_20 = arith.constant 1 : index
    %c2_21 = arith.constant 2 : index
    %c0_22 = arith.constant 0 : index
    %42 = vector.load %arg2[%c0_19, %c1_20, %c2_21, %c0_22] : memref<1x10x10x128xbf16, #tpu.memory_space<vmem>>, vector<1x8x8x128xbf16>
    %43 = vector.shape_cast %42 : vector<1x8x8x128xbf16> to vector<8x8x128xbf16>
    %44 = vector.extract_strided_slice %0 {offsets = [5, 0], sizes = [1, 128], strides = [1, 1]} : vector<9x128xf32> to vector<1x128xf32>
    %45 = arith.extf %43 : vector<8x8x128xbf16> to vector<8x8x128xf32>
    %46 = vector.shape_cast %44 : vector<1x128xf32> to vector<1x1x128xf32>
    %47 = vector.broadcast %46 : vector<1x1x128xf32> to vector<8x8x128xf32>
    %48 = arith.mulf %45, %47 : vector<8x8x128xf32>
    %49 = arith.addf %41, %48 : vector<8x8x128xf32>
    %c0_23 = arith.constant 0 : index
    %c2_24 = arith.constant 2 : index
    %c0_25 = arith.constant 0 : index
    %c0_26 = arith.constant 0 : index
    %50 = vector.load %arg2[%c0_23, %c2_24, %c0_25, %c0_26] : memref<1x10x10x128xbf16, #tpu.memory_space<vmem>>, vector<1x8x8x128xbf16>
    %51 = vector.shape_cast %50 : vector<1x8x8x128xbf16> to vector<8x8x128xbf16>
    %52 = vector.extract_strided_slice %0 {offsets = [6, 0], sizes = [1, 128], strides = [1, 1]} : vector<9x128xf32> to vector<1x128xf32>
    %53 = arith.extf %51 : vector<8x8x128xbf16> to vector<8x8x128xf32>
    %54 = vector.shape_cast %52 : vector<1x128xf32> to vector<1x1x128xf32>
    %55 = vector.broadcast %54 : vector<1x1x128xf32> to vector<8x8x128xf32>
    %56 = arith.mulf %53, %55 : vector<8x8x128xf32>
    %57 = arith.addf %49, %56 : vector<8x8x128xf32>
    %c0_27 = arith.constant 0 : index
    %c2_28 = arith.constant 2 : index
    %c1_29 = arith.constant 1 : index
    %c0_30 = arith.constant 0 : index
    %58 = vector.load %arg2[%c0_27, %c2_28, %c1_29, %c0_30] : memref<1x10x10x128xbf16, #tpu.memory_space<vmem>>, vector<1x8x8x128xbf16>
    %59 = vector.shape_cast %58 : vector<1x8x8x128xbf16> to vector<8x8x128xbf16>
    %60 = vector.extract_strided_slice %0 {offsets = [7, 0], sizes = [1, 128], strides = [1, 1]} : vector<9x128xf32> to vector<1x128xf32>
    %61 = arith.extf %59 : vector<8x8x128xbf16> to vector<8x8x128xf32>
    %62 = vector.shape_cast %60 : vector<1x128xf32> to vector<1x1x128xf32>
    %63 = vector.broadcast %62 : vector<1x1x128xf32> to vector<8x8x128xf32>
    %64 = arith.mulf %61, %63 : vector<8x8x128xf32>
    %65 = arith.addf %57, %64 : vector<8x8x128xf32>
    %c0_31 = arith.constant 0 : index
    %c2_32 = arith.constant 2 : index
    %c2_33 = arith.constant 2 : index
    %c0_34 = arith.constant 0 : index
    %66 = vector.load %arg2[%c0_31, %c2_32, %c2_33, %c0_34] : memref<1x10x10x128xbf16, #tpu.memory_space<vmem>>, vector<1x8x8x128xbf16>
    %67 = vector.shape_cast %66 : vector<1x8x8x128xbf16> to vector<8x8x128xbf16>
    %68 = vector.extract_strided_slice %0 {offsets = [8, 0], sizes = [1, 128], strides = [1, 1]} : vector<9x128xf32> to vector<1x128xf32>
    %69 = arith.extf %67 : vector<8x8x128xbf16> to vector<8x8x128xf32>
    %70 = vector.shape_cast %68 : vector<1x128xf32> to vector<1x1x128xf32>
    %71 = vector.broadcast %70 : vector<1x1x128xf32> to vector<8x8x128xf32>
    %72 = arith.mulf %69, %71 : vector<8x8x128xf32>
    %73 = arith.addf %65, %72 : vector<8x8x128xf32>
    %74 = vector.extract_strided_slice %73 {offsets = [0, 0, 0], sizes = [1, 8, 128], strides = [1, 1, 1]} : vector<8x8x128xf32> to vector<1x8x128xf32>
    %75 = vector.shape_cast %74 : vector<1x8x128xf32> to vector<8x128xf32>
    %76 = arith.truncf %75 : vector<8x128xf32> to vector<8x128xbf16>
    %c0_35 = arith.constant 0 : index
    %c0_36 = arith.constant 0 : index
    %77 = vector.load %arg7[%c0_35, %c0_36] : memref<64x128xbf16, #tpu.memory_space<vmem>>, vector<8x128xbf16>
    tpu.vector_store %arg7[%c0_35, %c0_36], %76 {strides = array<i32>} : memref<64x128xbf16, #tpu.memory_space<vmem>>, vector<8x128xbf16>,
    %78 = vector.extract_strided_slice %73 {offsets = [1, 0, 0], sizes = [1, 8, 128], strides = [1, 1, 1]} : vector<8x8x128xf32> to vector<1x8x128xf32>
    %79 = vector.shape_cast %78 : vector<1x8x128xf32> to vector<8x128xf32>
    %80 = arith.truncf %79 : vector<8x128xf32> to vector<8x128xbf16>
    %c8 = arith.constant 8 : index
    %c0_37 = arith.constant 0 : index
    %81 = vector.load %arg7[%c8, %c0_37] : memref<64x128xbf16, #tpu.memory_space<vmem>>, vector<8x128xbf16>
    tpu.vector_store %arg7[%c8, %c0_37], %80 {strides = array<i32>} : memref<64x128xbf16, #tpu.memory_space<vmem>>, vector<8x128xbf16>,
    %82 = vector.extract_strided_slice %73 {offsets = [2, 0, 0], sizes = [1, 8, 128], strides = [1, 1, 1]} : vector<8x8x128xf32> to vector<1x8x128xf32>
    %83 = vector.shape_cast %82 : vector<1x8x128xf32> to vector<8x128xf32>
    %84 = arith.truncf %83 : vector<8x128xf32> to vector<8x128xbf16>
    %c16 = arith.constant 16 : index
    %c0_38 = arith.constant 0 : index
    %85 = vector.load %arg7[%c16, %c0_38] : memref<64x128xbf16, #tpu.memory_space<vmem>>, vector<8x128xbf16>
    tpu.vector_store %arg7[%c16, %c0_38], %84 {strides = array<i32>} : memref<64x128xbf16, #tpu.memory_space<vmem>>, vector<8x128xbf16>,
    %86 = vector.extract_strided_slice %73 {offsets = [3, 0, 0], sizes = [1, 8, 128], strides = [1, 1, 1]} : vector<8x8x128xf32> to vector<1x8x128xf32>
    %87 = vector.shape_cast %86 : vector<1x8x128xf32> to vector<8x128xf32>
    %88 = arith.truncf %87 : vector<8x128xf32> to vector<8x128xbf16>
    %c24 = arith.constant 24 : index
    %c0_39 = arith.constant 0 : index
    %89 = vector.load %arg7[%c24, %c0_39] : memref<64x128xbf16, #tpu.memory_space<vmem>>, vector<8x128xbf16>
    tpu.vector_store %arg7[%c24, %c0_39], %88 {strides = array<i32>} : memref<64x128xbf16, #tpu.memory_space<vmem>>, vector<8x128xbf16>,
    %90 = vector.extract_strided_slice %73 {offsets = [4, 0, 0], sizes = [1, 8, 128], strides = [1, 1, 1]} : vector<8x8x128xf32> to vector<1x8x128xf32>
    %91 = vector.shape_cast %90 : vector<1x8x128xf32> to vector<8x128xf32>
    %92 = arith.truncf %91 : vector<8x128xf32> to vector<8x128xbf16>
    %c32 = arith.constant 32 : index
    %c0_40 = arith.constant 0 : index
    %93 = vector.load %arg7[%c32, %c0_40] : memref<64x128xbf16, #tpu.memory_space<vmem>>, vector<8x128xbf16>
    tpu.vector_store %arg7[%c32, %c0_40], %92 {strides = array<i32>} : memref<64x128xbf16, #tpu.memory_space<vmem>>, vector<8x128xbf16>,
    %94 = vector.extract_strided_slice %73 {offsets = [5, 0, 0], sizes = [1, 8, 128], strides = [1, 1, 1]} : vector<8x8x128xf32> to vector<1x8x128xf32>
    %95 = vector.shape_cast %94 : vector<1x8x128xf32> to vector<8x128xf32>
    %96 = arith.truncf %95 : vector<8x128xf32> to vector<8x128xbf16>
    %c40 = arith.constant 40 : index
    %c0_41 = arith.constant 0 : index
    %97 = vector.load %arg7[%c40, %c0_41] : memref<64x128xbf16, #tpu.memory_space<vmem>>, vector<8x128xbf16>
    tpu.vector_store %arg7[%c40, %c0_41], %96 {strides = array<i32>} : memref<64x128xbf16, #tpu.memory_space<vmem>>, vector<8x128xbf16>,
    %98 = vector.extract_strided_slice %73 {offsets = [6, 0, 0], sizes = [1, 8, 128], strides = [1, 1, 1]} : vector<8x8x128xf32> to vector<1x8x128xf32>
    %99 = vector.shape_cast %98 : vector<1x8x128xf32> to vector<8x128xf32>
    %100 = arith.truncf %99 : vector<8x128xf32> to vector<8x128xbf16>
    %c48 = arith.constant 48 : index
    %c0_42 = arith.constant 0 : index
    %101 = vector.load %arg7[%c48, %c0_42] : memref<64x128xbf16, #tpu.memory_space<vmem>>, vector<8x128xbf16>
    tpu.vector_store %arg7[%c48, %c0_42], %100 {strides = array<i32>} : memref<64x128xbf16, #tpu.memory_space<vmem>>, vector<8x128xbf16>,
    %102 = vector.extract_strided_slice %73 {offsets = [7, 0, 0], sizes = [1, 8, 128], strides = [1, 1, 1]} : vector<8x8x128xf32> to vector<1x8x128xf32>
    %103 = vector.shape_cast %102 : vector<1x8x128xf32> to vector<8x128xf32>
    %104 = arith.truncf %103 : vector<8x128xf32> to vector<8x128xbf16>
    %c56 = arith.constant 56 : index
    %c0_43 = arith.constant 0 : index
    %105 = vector.load %arg7[%c56, %c0_43] : memref<64x128xbf16, #tpu.memory_space<vmem>>, vector<8x128xbf16>
    tpu.vector_store %arg7[%c56, %c0_43], %104 {strides = array<i32>} : memref<64x128xbf16, #tpu.memory_space<vmem>>, vector<8x128xbf16>,
    %c0_44 = arith.constant 0 : index
    %c0_45 = arith.constant 0 : index
    %106 = vector.load %arg7[%c0_44, %c0_45] : memref<64x128xbf16, #tpu.memory_space<vmem>>, vector<64x128xbf16>
    %c0_46 = arith.constant 0 : index
    %c0_47 = arith.constant 0 : index
    %107 = vector.load %arg4[%c0_46, %c0_47] : memref<128x128xbf16, #tpu.memory_space<vmem>>, vector<128x128xbf16>
    %cst_48 = arith.constant dense<0.000000e+00> : vector<64x128xf32>
    %108 = tpu.matmul %106, %107, %cst_48 {dimension_numbers = #tpu.dot_dimension_numbers<[1], [0], [0], [1], [0, 0, 1, 1], [], []>} : vector<64x128xbf16>, vector<128x128xbf16>, vector<64x128xf32> -> vector<64x128xf32>
    %c0_49 = arith.constant 0 : index
    %c0_50 = arith.constant 0 : index
    %109 = vector.load %arg5[%c0_49, %c0_50] : memref<1x128xf32, #tpu.memory_space<vmem>>, vector<1x128xf32>
    %110 = vector.broadcast %109 : vector<1x128xf32> to vector<64x128xf32>
    %111 = arith.addf %108, %110 : vector<64x128xf32>
    %cst_51 = arith.constant 0.000000e+00 : f32
    %112 = vector.broadcast %cst_51 : f32 to vector<64x128xf32>
    %113 = arith.maximumf %111, %112 : vector<64x128xf32>
    %114 = arith.truncf %113 : vector<64x128xf32> to vector<64x128xbf16>
    %c0_52 = arith.constant 0 : index
    %c0_53 = arith.constant 0 : index
    %c0_54 = arith.constant 0 : index
    %115 = vector.load %arg6[%c0_52, %c0_53, %c0_54] : memref<1x64x128xbf16, #tpu.memory_space<vmem>>, vector<1x64x128xbf16>
    %116 = vector.shape_cast %115 : vector<1x64x128xbf16> to vector<64x128xbf16>
    %117 = vector.shape_cast %114 : vector<64x128xbf16> to vector<1x64x128xbf16>
    tpu.vector_store %arg6[%c0_52, %c0_53, %c0_54], %117 {strides = array<i32>} : memref<1x64x128xbf16, #tpu.memory_space<vmem>>, vector<1x64x128xbf16>,
    return
  }
  func.func @transform_0(%arg0: i32, %arg1: i32) -> (i32, i32, i32, i32) {
    %c0_i32 = arith.constant 0 : i32
    %c0_i32_0 = arith.constant 0 : i32
    %c0_i32_1 = arith.constant 0 : i32
    %c0_i32_2 = arith.constant 0 : i32
    return %arg0, %c0_i32, %c0_i32_0, %c0_i32_1 : i32, i32, i32, i32
  }
  func.func @transform_1(%arg0: i32, %arg1: i32) -> (i32, i32) {
    %c0_i32 = arith.constant 0 : i32
    %c0_i32_0 = arith.constant 0 : i32
    %c0_i32_1 = arith.constant 0 : i32
    return %c0_i32, %c0_i32_0 : i32, i32
  }
  func.func @transform_2(%arg0: i32, %arg1: i32) -> (i32, i32) {
    %c0_i32 = arith.constant 0 : i32
    %c0_i32_0 = arith.constant 0 : i32
    return %c0_i32, %arg1 : i32, i32
  }
  func.func @transform_3(%arg0: i32, %arg1: i32) -> (i32, i32) {
    %c0_i32 = arith.constant 0 : i32
    %c0_i32_0 = arith.constant 0 : i32
    return %c0_i32, %arg1 : i32, i32
  }
  func.func @transform_4(%arg0: i32, %arg1: i32) -> (i32, i32, i32) {
    %c0_i32 = arith.constant 0 : i32
    %c0_i32_0 = arith.constant 0 : i32
    return %arg0, %c0_i32, %arg1 : i32, i32, i32
  }
}

module attributes {stable_mosaic.version = 11 : i64} {
  func.func @_dsc_kernel(%arg0: i32, %arg1: i32, %arg2: memref<1x10x10x128xbf16, #tpu.memory_space<vmem>>, %arg3: memref<9x128xf32, #tpu.memory_space<vmem>>, %arg4: memref<128x128xbf16, #tpu.memory_space<vmem>>, %arg5: memref<1x128xf32, #tpu.memory_space<vmem>>, %arg6: memref<1x64x128xbf16, #tpu.memory_space<vmem>>, %arg7: memref<64x128xbf16, #tpu.memory_space<vmem>>) attributes {dimension_semantics = [#tpu.dimension_semantics<parallel>, #tpu.dimension_semantics<parallel>], iteration_bounds = array<i64: 2, 1>, scalar_prefetch = 0 : i64, scratch_operands = 1 : i64, tpu.core_type = #tpu.core_type<tc>, window_params = [{transform_indices = @transform_0, window_bounds = array<i64: 1, 10, 10, 128>}, {pipeline_mode = #tpu.pipeline_mode<synchronous>, transform_indices = @transform_1, window_bounds = array<i64: 9, 128>}, {transform_indices = @transform_2, window_bounds = array<i64: 128, 128>}, {transform_indices = @transform_3, window_bounds = array<i64: 1, 128>}, {transform_indices = @transform_4, window_bounds = array<i64: 1, 64, 128>}]} {
    %c0 = arith.constant 0 : index
    %c0_0 = arith.constant 0 : index
    %0 = vector.load %arg3[%c0, %c0_0] : memref<9x128xf32, #tpu.memory_space<vmem>>, vector<9x128xf32>
    %cst = arith.constant 0.000000e+00 : f32
    %1 = vector.broadcast %cst : f32 to vector<8x8x128xf32>
    %c0_1 = arith.constant 0 : index
    %c0_2 = arith.constant 0 : index
    %c0_3 = arith.constant 0 : index
    %c0_4 = arith.constant 0 : index
    %2 = vector.load %arg2[%c0_1, %c0_2, %c0_3, %c0_4] : memref<1x10x10x128xbf16, #tpu.memory_space<vmem>>, vector<1x8x8x128xbf16>
    %3 = vector.shape_cast %2 : vector<1x8x8x128xbf16> to vector<8x8x128xbf16>
    %4 = vector.extract_strided_slice %0 {offsets = [0, 0], sizes = [1, 128], strides = [1, 1]} : vector<9x128xf32> to vector<1x128xf32>
    %5 = arith.extf %3 : vector<8x8x128xbf16> to vector<8x8x128xf32>
    %6 = vector.shape_cast %4 : vector<1x128xf32> to vector<1x1x128xf32>
    %7 = vector.broadcast %6 : vector<1x1x128xf32> to vector<8x8x128xf32>
    %8 = arith.mulf %5, %7 : vector<8x8x128xf32>
    %9 = arith.addf %1, %8 : vector<8x8x128xf32>
    %c0_5 = arith.constant 0 : index
    %c0_6 = arith.constant 0 : index
    %c1 = arith.constant 1 : index
    %c0_7 = arith.constant 0 : index
    %10 = vector.load %arg2[%c0_5, %c0_6, %c1, %c0_7] : memref<1x10x10x128xbf16, #tpu.memory_space<vmem>>, vector<1x8x8x128xbf16>
    %11 = vector.shape_cast %10 : vector<1x8x8x128xbf16> to vector<8x8x128xbf16>
    %12 = vector.extract_strided_slice %0 {offsets = [1, 0], sizes = [1, 128], strides = [1, 1]} : vector<9x128xf32> to vector<1x128xf32>
    %13 = arith.extf %11 : vector<8x8x128xbf16> to vector<8x8x128xf32>
    %14 = vector.shape_cast %12 : vector<1x128xf32> to vector<1x1x128xf32>
    %15 = vector.broadcast %14 : vector<1x1x128xf32> to vector<8x8x128xf32>
    %16 = arith.mulf %13, %15 : vector<8x8x128xf32>
    %17 = arith.addf %9, %16 : vector<8x8x128xf32>
    %c0_8 = arith.constant 0 : index
    %c0_9 = arith.constant 0 : index
    %c2 = arith.constant 2 : index
    %c0_10 = arith.constant 0 : index
    %18 = vector.load %arg2[%c0_8, %c0_9, %c2, %c0_10] : memref<1x10x10x128xbf16, #tpu.memory_space<vmem>>, vector<1x8x8x128xbf16>
    %19 = vector.shape_cast %18 : vector<1x8x8x128xbf16> to vector<8x8x128xbf16>
    %20 = vector.extract_strided_slice %0 {offsets = [2, 0], sizes = [1, 128], strides = [1, 1]} : vector<9x128xf32> to vector<1x128xf32>
    %21 = arith.extf %19 : vector<8x8x128xbf16> to vector<8x8x128xf32>
    %22 = vector.shape_cast %20 : vector<1x128xf32> to vector<1x1x128xf32>
    %23 = vector.broadcast %22 : vector<1x1x128xf32> to vector<8x8x128xf32>
    %24 = arith.mulf %21, %23 : vector<8x8x128xf32>
    %25 = arith.addf %17, %24 : vector<8x8x128xf32>
    %c0_11 = arith.constant 0 : index
    %c1_12 = arith.constant 1 : index
    %c0_13 = arith.constant 0 : index
    %c0_14 = arith.constant 0 : index
    %26 = vector.load %arg2[%c0_11, %c1_12, %c0_13, %c0_14] : memref<1x10x10x128xbf16, #tpu.memory_space<vmem>>, vector<1x8x8x128xbf16>
    %27 = vector.shape_cast %26 : vector<1x8x8x128xbf16> to vector<8x8x128xbf16>
    %28 = vector.extract_strided_slice %0 {offsets = [3, 0], sizes = [1, 128], strides = [1, 1]} : vector<9x128xf32> to vector<1x128xf32>
    %29 = arith.extf %27 : vector<8x8x128xbf16> to vector<8x8x128xf32>
    %30 = vector.shape_cast %28 : vector<1x128xf32> to vector<1x1x128xf32>
    %31 = vector.broadcast %30 : vector<1x1x128xf32> to vector<8x8x128xf32>
    %32 = arith.mulf %29, %31 : vector<8x8x128xf32>
    %33 = arith.addf %25, %32 : vector<8x8x128xf32>
    %c0_15 = arith.constant 0 : index
    %c1_16 = arith.constant 1 : index
    %c1_17 = arith.constant 1 : index
    %c0_18 = arith.constant 0 : index
    %34 = vector.load %arg2[%c0_15, %c1_16, %c1_17, %c0_18] : memref<1x10x10x128xbf16, #tpu.memory_space<vmem>>, vector<1x8x8x128xbf16>
    %35 = vector.shape_cast %34 : vector<1x8x8x128xbf16> to vector<8x8x128xbf16>
    %36 = vector.extract_strided_slice %0 {offsets = [4, 0], sizes = [1, 128], strides = [1, 1]} : vector<9x128xf32> to vector<1x128xf32>
    %37 = arith.extf %35 : vector<8x8x128xbf16> to vector<8x8x128xf32>
    %38 = vector.shape_cast %36 : vector<1x128xf32> to vector<1x1x128xf32>
    %39 = vector.broadcast %38 : vector<1x1x128xf32> to vector<8x8x128xf32>
    %40 = arith.mulf %37, %39 : vector<8x8x128xf32>
    %41 = arith.addf %33, %40 : vector<8x8x128xf32>
    %c0_19 = arith.constant 0 : index
    %c1_20 = arith.constant 1 : index
    %c2_21 = arith.constant 2 : index
    %c0_22 = arith.constant 0 : index
    %42 = vector.load %arg2[%c0_19, %c1_20, %c2_21, %c0_22] : memref<1x10x10x128xbf16, #tpu.memory_space<vmem>>, vector<1x8x8x128xbf16>
    %43 = vector.shape_cast %42 : vector<1x8x8x128xbf16> to vector<8x8x128xbf16>
    %44 = vector.extract_strided_slice %0 {offsets = [5, 0], sizes = [1, 128], strides = [1, 1]} : vector<9x128xf32> to vector<1x128xf32>
    %45 = arith.extf %43 : vector<8x8x128xbf16> to vector<8x8x128xf32>
    %46 = vector.shape_cast %44 : vector<1x128xf32> to vector<1x1x128xf32>
    %47 = vector.broadcast %46 : vector<1x1x128xf32> to vector<8x8x128xf32>
    %48 = arith.mulf %45, %47 : vector<8x8x128xf32>
    %49 = arith.addf %41, %48 : vector<8x8x128xf32>
    %c0_23 = arith.constant 0 : index
    %c2_24 = arith.constant 2 : index
    %c0_25 = arith.constant 0 : index
    %c0_26 = arith.constant 0 : index
    %50 = vector.load %arg2[%c0_23, %c2_24, %c0_25, %c0_26] : memref<1x10x10x128xbf16, #tpu.memory_space<vmem>>, vector<1x8x8x128xbf16>
    %51 = vector.shape_cast %50 : vector<1x8x8x128xbf16> to vector<8x8x128xbf16>
    %52 = vector.extract_strided_slice %0 {offsets = [6, 0], sizes = [1, 128], strides = [1, 1]} : vector<9x128xf32> to vector<1x128xf32>
    %53 = arith.extf %51 : vector<8x8x128xbf16> to vector<8x8x128xf32>
    %54 = vector.shape_cast %52 : vector<1x128xf32> to vector<1x1x128xf32>
    %55 = vector.broadcast %54 : vector<1x1x128xf32> to vector<8x8x128xf32>
    %56 = arith.mulf %53, %55 : vector<8x8x128xf32>
    %57 = arith.addf %49, %56 : vector<8x8x128xf32>
    %c0_27 = arith.constant 0 : index
    %c2_28 = arith.constant 2 : index
    %c1_29 = arith.constant 1 : index
    %c0_30 = arith.constant 0 : index
    %58 = vector.load %arg2[%c0_27, %c2_28, %c1_29, %c0_30] : memref<1x10x10x128xbf16, #tpu.memory_space<vmem>>, vector<1x8x8x128xbf16>
    %59 = vector.shape_cast %58 : vector<1x8x8x128xbf16> to vector<8x8x128xbf16>
    %60 = vector.extract_strided_slice %0 {offsets = [7, 0], sizes = [1, 128], strides = [1, 1]} : vector<9x128xf32> to vector<1x128xf32>
    %61 = arith.extf %59 : vector<8x8x128xbf16> to vector<8x8x128xf32>
    %62 = vector.shape_cast %60 : vector<1x128xf32> to vector<1x1x128xf32>
    %63 = vector.broadcast %62 : vector<1x1x128xf32> to vector<8x8x128xf32>
    %64 = arith.mulf %61, %63 : vector<8x8x128xf32>
    %65 = arith.addf %57, %64 : vector<8x8x128xf32>
    %c0_31 = arith.constant 0 : index
    %c2_32 = arith.constant 2 : index
    %c2_33 = arith.constant 2 : index
    %c0_34 = arith.constant 0 : index
    %66 = vector.load %arg2[%c0_31, %c2_32, %c2_33, %c0_34] : memref<1x10x10x128xbf16, #tpu.memory_space<vmem>>, vector<1x8x8x128xbf16>
    %67 = vector.shape_cast %66 : vector<1x8x8x128xbf16> to vector<8x8x128xbf16>
    %68 = vector.extract_strided_slice %0 {offsets = [8, 0], sizes = [1, 128], strides = [1, 1]} : vector<9x128xf32> to vector<1x128xf32>
    %69 = arith.extf %67 : vector<8x8x128xbf16> to vector<8x8x128xf32>
    %70 = vector.shape_cast %68 : vector<1x128xf32> to vector<1x1x128xf32>
    %71 = vector.broadcast %70 : vector<1x1x128xf32> to vector<8x8x128xf32>
    %72 = arith.mulf %69, %71 : vector<8x8x128xf32>
    %73 = arith.addf %65, %72 : vector<8x8x128xf32>
    %74 = vector.extract_strided_slice %73 {offsets = [0, 0, 0], sizes = [1, 8, 128], strides = [1, 1, 1]} : vector<8x8x128xf32> to vector<1x8x128xf32>
    %75 = vector.shape_cast %74 : vector<1x8x128xf32> to vector<8x128xf32>
    %76 = arith.truncf %75 : vector<8x128xf32> to vector<8x128xbf16>
    %c0_35 = arith.constant 0 : index
    %c0_36 = arith.constant 0 : index
    %77 = vector.load %arg7[%c0_35, %c0_36] : memref<64x128xbf16, #tpu.memory_space<vmem>>, vector<8x128xbf16>
    tpu.vector_store %arg7[%c0_35, %c0_36], %76 {strides = array<i32>} : memref<64x128xbf16, #tpu.memory_space<vmem>>, vector<8x128xbf16>,
    %78 = vector.extract_strided_slice %73 {offsets = [1, 0, 0], sizes = [1, 8, 128], strides = [1, 1, 1]} : vector<8x8x128xf32> to vector<1x8x128xf32>
    %79 = vector.shape_cast %78 : vector<1x8x128xf32> to vector<8x128xf32>
    %80 = arith.truncf %79 : vector<8x128xf32> to vector<8x128xbf16>
    %c8 = arith.constant 8 : index
    %c0_37 = arith.constant 0 : index
    %81 = vector.load %arg7[%c8, %c0_37] : memref<64x128xbf16, #tpu.memory_space<vmem>>, vector<8x128xbf16>
    tpu.vector_store %arg7[%c8, %c0_37], %80 {strides = array<i32>} : memref<64x128xbf16, #tpu.memory_space<vmem>>, vector<8x128xbf16>,
    %82 = vector.extract_strided_slice %73 {offsets = [2, 0, 0], sizes = [1, 8, 128], strides = [1, 1, 1]} : vector<8x8x128xf32> to vector<1x8x128xf32>
    %83 = vector.shape_cast %82 : vector<1x8x128xf32> to vector<8x128xf32>
    %84 = arith.truncf %83 : vector<8x128xf32> to vector<8x128xbf16>
    %c16 = arith.constant 16 : index
    %c0_38 = arith.constant 0 : index
    %85 = vector.load %arg7[%c16, %c0_38] : memref<64x128xbf16, #tpu.memory_space<vmem>>, vector<8x128xbf16>
    tpu.vector_store %arg7[%c16, %c0_38], %84 {strides = array<i32>} : memref<64x128xbf16, #tpu.memory_space<vmem>>, vector<8x128xbf16>,
    %86 = vector.extract_strided_slice %73 {offsets = [3, 0, 0], sizes = [1, 8, 128], strides = [1, 1, 1]} : vector<8x8x128xf32> to vector<1x8x128xf32>
    %87 = vector.shape_cast %86 : vector<1x8x128xf32> to vector<8x128xf32>
    %88 = arith.truncf %87 : vector<8x128xf32> to vector<8x128xbf16>
    %c24 = arith.constant 24 : index
    %c0_39 = arith.constant 0 : index
    %89 = vector.load %arg7[%c24, %c0_39] : memref<64x128xbf16, #tpu.memory_space<vmem>>, vector<8x128xbf16>
    tpu.vector_store %arg7[%c24, %c0_39], %88 {strides = array<i32>} : memref<64x128xbf16, #tpu.memory_space<vmem>>, vector<8x128xbf16>,
    %90 = vector.extract_strided_slice %73 {offsets = [4, 0, 0], sizes = [1, 8, 128], strides = [1, 1, 1]} : vector<8x8x128xf32> to vector<1x8x128xf32>
    %91 = vector.shape_cast %90 : vector<1x8x128xf32> to vector<8x128xf32>
    %92 = arith.truncf %91 : vector<8x128xf32> to vector<8x128xbf16>
    %c32 = arith.constant 32 : index
    %c0_40 = arith.constant 0 : index
    %93 = vector.load %arg7[%c32, %c0_40] : memref<64x128xbf16, #tpu.memory_space<vmem>>, vector<8x128xbf16>
    tpu.vector_store %arg7[%c32, %c0_40], %92 {strides = array<i32>} : memref<64x128xbf16, #tpu.memory_space<vmem>>, vector<8x128xbf16>,
    %94 = vector.extract_strided_slice %73 {offsets = [5, 0, 0], sizes = [1, 8, 128], strides = [1, 1, 1]} : vector<8x8x128xf32> to vector<1x8x128xf32>
    %95 = vector.shape_cast %94 : vector<1x8x128xf32> to vector<8x128xf32>
    %96 = arith.truncf %95 : vector<8x128xf32> to vector<8x128xbf16>
    %c40 = arith.constant 40 : index
    %c0_41 = arith.constant 0 : index
    %97 = vector.load %arg7[%c40, %c0_41] : memref<64x128xbf16, #tpu.memory_space<vmem>>, vector<8x128xbf16>
    tpu.vector_store %arg7[%c40, %c0_41], %96 {strides = array<i32>} : memref<64x128xbf16, #tpu.memory_space<vmem>>, vector<8x128xbf16>,
    %98 = vector.extract_strided_slice %73 {offsets = [6, 0, 0], sizes = [1, 8, 128], strides = [1, 1, 1]} : vector<8x8x128xf32> to vector<1x8x128xf32>
    %99 = vector.shape_cast %98 : vector<1x8x128xf32> to vector<8x128xf32>
    %100 = arith.truncf %99 : vector<8x128xf32> to vector<8x128xbf16>
    %c48 = arith.constant 48 : index
    %c0_42 = arith.constant 0 : index
    %101 = vector.load %arg7[%c48, %c0_42] : memref<64x128xbf16, #tpu.memory_space<vmem>>, vector<8x128xbf16>
    tpu.vector_store %arg7[%c48, %c0_42], %100 {strides = array<i32>} : memref<64x128xbf16, #tpu.memory_space<vmem>>, vector<8x128xbf16>,
    %102 = vector.extract_strided_slice %73 {offsets = [7, 0, 0], sizes = [1, 8, 128], strides = [1, 1, 1]} : vector<8x8x128xf32> to vector<1x8x128xf32>
    %103 = vector.shape_cast %102 : vector<1x8x128xf32> to vector<8x128xf32>
    %104 = arith.truncf %103 : vector<8x128xf32> to vector<8x128xbf16>
    %c56 = arith.constant 56 : index
    %c0_43 = arith.constant 0 : index
    %105 = vector.load %arg7[%c56, %c0_43] : memref<64x128xbf16, #tpu.memory_space<vmem>>, vector<8x128xbf16>
    tpu.vector_store %arg7[%c56, %c0_43], %104 {strides = array<i32>} : memref<64x128xbf16, #tpu.memory_space<vmem>>, vector<8x128xbf16>,
    %c0_44 = arith.constant 0 : index
    %c0_45 = arith.constant 0 : index
    %106 = vector.load %arg7[%c0_44, %c0_45] : memref<64x128xbf16, #tpu.memory_space<vmem>>, vector<64x128xbf16>
    %c0_46 = arith.constant 0 : index
    %c0_47 = arith.constant 0 : index
    %107 = vector.load %arg4[%c0_46, %c0_47] : memref<128x128xbf16, #tpu.memory_space<vmem>>, vector<128x128xbf16>
    %cst_48 = arith.constant dense<0.000000e+00> : vector<64x128xf32>
    %108 = tpu.matmul %106, %107, %cst_48 {dimension_numbers = #tpu.dot_dimension_numbers<[1], [0], [0], [1], [0, 0, 1, 1], [], []>} : vector<64x128xbf16>, vector<128x128xbf16>, vector<64x128xf32> -> vector<64x128xf32>
    %c0_49 = arith.constant 0 : index
    %c0_50 = arith.constant 0 : index
    %109 = vector.load %arg5[%c0_49, %c0_50] : memref<1x128xf32, #tpu.memory_space<vmem>>, vector<1x128xf32>
    %110 = vector.broadcast %109 : vector<1x128xf32> to vector<64x128xf32>
    %111 = arith.addf %108, %110 : vector<64x128xf32>
    %112 = arith.truncf %111 : vector<64x128xf32> to vector<64x128xbf16>
    %c0_51 = arith.constant 0 : index
    %c0_52 = arith.constant 0 : index
    %c0_53 = arith.constant 0 : index
    %113 = vector.load %arg6[%c0_51, %c0_52, %c0_53] : memref<1x64x128xbf16, #tpu.memory_space<vmem>>, vector<1x64x128xbf16>
    %114 = vector.shape_cast %113 : vector<1x64x128xbf16> to vector<64x128xbf16>
    %115 = vector.shape_cast %112 : vector<64x128xbf16> to vector<1x64x128xbf16>
    tpu.vector_store %arg6[%c0_51, %c0_52, %c0_53], %115 {strides = array<i32>} : memref<1x64x128xbf16, #tpu.memory_space<vmem>>, vector<1x64x128xbf16>,
    return
  }
  func.func @transform_0(%arg0: i32, %arg1: i32) -> (i32, i32, i32, i32) {
    %c0_i32 = arith.constant 0 : i32
    %c0_i32_0 = arith.constant 0 : i32
    %c0_i32_1 = arith.constant 0 : i32
    %c0_i32_2 = arith.constant 0 : i32
    return %arg0, %c0_i32, %c0_i32_0, %c0_i32_1 : i32, i32, i32, i32
  }
  func.func @transform_1(%arg0: i32, %arg1: i32) -> (i32, i32) {
    %c0_i32 = arith.constant 0 : i32
    %c0_i32_0 = arith.constant 0 : i32
    %c0_i32_1 = arith.constant 0 : i32
    return %c0_i32, %c0_i32_0 : i32, i32
  }
  func.func @transform_2(%arg0: i32, %arg1: i32) -> (i32, i32) {
    %c0_i32 = arith.constant 0 : i32
    %c0_i32_0 = arith.constant 0 : i32
    return %c0_i32, %arg1 : i32, i32
  }
  func.func @transform_3(%arg0: i32, %arg1: i32) -> (i32, i32) {
    %c0_i32 = arith.constant 0 : i32
    %c0_i32_0 = arith.constant 0 : i32
    return %c0_i32, %arg1 : i32, i32
  }
  func.func @transform_4(%arg0: i32, %arg1: i32) -> (i32, i32, i32) {
    %c0_i32 = arith.constant 0 : i32
    %c0_i32_0 = arith.constant 0 : i32
    return %arg0, %c0_i32, %arg1 : i32, i32, i32
  }
}

module attributes {stable_mosaic.version = 11 : i64} {
  func.func @_tail_kernel(%arg0: i32, %arg1: memref<1x10x5x256xbf16, #tpu.memory_space<vmem>>, %arg2: memref<1x8x4x256xbf16, #tpu.memory_space<vmem>>, %arg3: memref<128x128xbf16, #tpu.memory_space<vmem>>, %arg4: memref<1x128xf32, #tpu.memory_space<vmem>>, %arg5: memref<1x16x128xbf16, #tpu.memory_space<vmem>>, %arg6: memref<16x128xbf16, #tpu.memory_space<vmem>>, %arg7: memref<16x128xbf16, #tpu.memory_space<vmem>>) attributes {dimension_semantics = [#tpu.dimension_semantics<parallel>], iteration_bounds = array<i64: 2>, scalar_prefetch = 0 : i64, scratch_operands = 2 : i64, tpu.core_type = #tpu.core_type<tc>, window_params = [{transform_indices = @transform_0, window_bounds = array<i64: 1, 10, 5, 256>}, {transform_indices = @transform_1, window_bounds = array<i64: 1, 8, 4, 256>}, {pipeline_mode = #tpu.pipeline_mode<synchronous>, transform_indices = @transform_2, window_bounds = array<i64: 128, 128>}, {pipeline_mode = #tpu.pipeline_mode<synchronous>, transform_indices = @transform_3, window_bounds = array<i64: 1, 128>}, {transform_indices = @transform_4, window_bounds = array<i64: 1, 16, 128>}]} {
    %c0 = arith.constant 0 : index
    %c0_0 = arith.constant 0 : index
    %c0_1 = arith.constant 0 : index
    %c0_2 = arith.constant 0 : index
    %0 = vector.load %arg1[%c0, %c0_0, %c0_1, %c0_2] : memref<1x10x5x256xbf16, #tpu.memory_space<vmem>>, vector<1x10x5x256xbf16>
    %1 = vector.shape_cast %0 : vector<1x10x5x256xbf16> to vector<10x5x256xbf16>
    %2 = vector.extract_strided_slice %1 {offsets = [0, 0, 0], sizes = [10, 5, 128], strides = [1, 1, 1]} : vector<10x5x256xbf16> to vector<10x5x128xbf16>
    %3 = vector.extract_strided_slice %1 {offsets = [0, 0, 128], sizes = [10, 5, 128], strides = [1, 1, 1]} : vector<10x5x256xbf16> to vector<10x5x128xbf16>
    %4 = vector.extract_strided_slice %2 {offsets = [0, 0, 0], sizes = [10, 4, 128], strides = [1, 1, 1]} : vector<10x5x128xbf16> to vector<10x4x128xbf16>
    %5 = vector.extract_strided_slice %3 {offsets = [0, 0, 0], sizes = [10, 4, 128], strides = [1, 1, 1]} : vector<10x5x128xbf16> to vector<10x4x128xbf16>
    %6 = vector.extract_strided_slice %2 {offsets = [0, 1, 0], sizes = [10, 4, 128], strides = [1, 1, 1]} : vector<10x5x128xbf16> to vector<10x4x128xbf16>
    %7 = arith.maximumf %4, %5 : vector<10x4x128xbf16>
    %8 = arith.maximumf %7, %6 : vector<10x4x128xbf16>
    %9 = vector.extract_strided_slice %8 {offsets = [0, 0, 0], sizes = [1, 4, 128], strides = [1, 1, 1]} : vector<10x4x128xbf16> to vector<1x4x128xbf16>
    %10 = vector.shape_cast %9 : vector<1x4x128xbf16> to vector<4x128xbf16>
    %11 = vector.extract_strided_slice %8 {offsets = [1, 0, 0], sizes = [1, 4, 128], strides = [1, 1, 1]} : vector<10x4x128xbf16> to vector<1x4x128xbf16>
    %12 = vector.shape_cast %11 : vector<1x4x128xbf16> to vector<4x128xbf16>
    %13 = arith.maximumf %10, %12 : vector<4x128xbf16>
    %14 = vector.extract_strided_slice %8 {offsets = [2, 0, 0], sizes = [1, 4, 128], strides = [1, 1, 1]} : vector<10x4x128xbf16> to vector<1x4x128xbf16>
    %15 = vector.shape_cast %14 : vector<1x4x128xbf16> to vector<4x128xbf16>
    %16 = arith.maximumf %13, %15 : vector<4x128xbf16>
    %c0_3 = arith.constant 0 : index
    %c0_4 = arith.constant 0 : index
    %17 = vector.load %arg6[%c0_3, %c0_4] : memref<16x128xbf16, #tpu.memory_space<vmem>>, vector<4x128xbf16>
    tpu.vector_store %arg6[%c0_3, %c0_4], %16 {strides = array<i32>} : memref<16x128xbf16, #tpu.memory_space<vmem>>, vector<4x128xbf16>,
    %c0_5 = arith.constant 0 : index
    %c0_6 = arith.constant 0 : index
    %c0_7 = arith.constant 0 : index
    %c0_8 = arith.constant 0 : index
    %18 = vector.load %arg2[%c0_5, %c0_6, %c0_7, %c0_8] : memref<1x8x4x256xbf16, #tpu.memory_space<vmem>>, vector<1x1x4x128xbf16>
    %19 = vector.shape_cast %18 : vector<1x1x4x128xbf16> to vector<4x128xbf16>
    %c0_9 = arith.constant 0 : index
    %c0_10 = arith.constant 0 : index
    %20 = vector.load %arg7[%c0_9, %c0_10] : memref<16x128xbf16, #tpu.memory_space<vmem>>, vector<4x128xbf16>
    tpu.vector_store %arg7[%c0_9, %c0_10], %19 {strides = array<i32>} : memref<16x128xbf16, #tpu.memory_space<vmem>>, vector<4x128xbf16>,
    %21 = vector.extract_strided_slice %8 {offsets = [2, 0, 0], sizes = [1, 4, 128], strides = [1, 1, 1]} : vector<10x4x128xbf16> to vector<1x4x128xbf16>
    %22 = vector.shape_cast %21 : vector<1x4x128xbf16> to vector<4x128xbf16>
    %23 = vector.extract_strided_slice %8 {offsets = [3, 0, 0], sizes = [1, 4, 128], strides = [1, 1, 1]} : vector<10x4x128xbf16> to vector<1x4x128xbf16>
    %24 = vector.shape_cast %23 : vector<1x4x128xbf16> to vector<4x128xbf16>
    %25 = arith.maximumf %22, %24 : vector<4x128xbf16>
    %26 = vector.extract_strided_slice %8 {offsets = [4, 0, 0], sizes = [1, 4, 128], strides = [1, 1, 1]} : vector<10x4x128xbf16> to vector<1x4x128xbf16>
    %27 = vector.shape_cast %26 : vector<1x4x128xbf16> to vector<4x128xbf16>
    %28 = arith.maximumf %25, %27 : vector<4x128xbf16>
    %c4 = arith.constant 4 : index
    %c0_11 = arith.constant 0 : index
    %29 = vector.load %arg6[%c4, %c0_11] : memref<16x128xbf16, #tpu.memory_space<vmem>>, vector<4x128xbf16>
    tpu.vector_store %arg6[%c4, %c0_11], %28 {strides = array<i32>} : memref<16x128xbf16, #tpu.memory_space<vmem>>, vector<4x128xbf16>,
    %c0_12 = arith.constant 0 : index
    %c2 = arith.constant 2 : index
    %c0_13 = arith.constant 0 : index
    %c0_14 = arith.constant 0 : index
    %30 = vector.load %arg2[%c0_12, %c2, %c0_13, %c0_14] : memref<1x8x4x256xbf16, #tpu.memory_space<vmem>>, vector<1x1x4x128xbf16>
    %31 = vector.shape_cast %30 : vector<1x1x4x128xbf16> to vector<4x128xbf16>
    %c4_15 = arith.constant 4 : index
    %c0_16 = arith.constant 0 : index
    %32 = vector.load %arg7[%c4_15, %c0_16] : memref<16x128xbf16, #tpu.memory_space<vmem>>, vector<4x128xbf16>
    tpu.vector_store %arg7[%c4_15, %c0_16], %31 {strides = array<i32>} : memref<16x128xbf16, #tpu.memory_space<vmem>>, vector<4x128xbf16>,
    %33 = vector.extract_strided_slice %8 {offsets = [4, 0, 0], sizes = [1, 4, 128], strides = [1, 1, 1]} : vector<10x4x128xbf16> to vector<1x4x128xbf16>
    %34 = vector.shape_cast %33 : vector<1x4x128xbf16> to vector<4x128xbf16>
    %35 = vector.extract_strided_slice %8 {offsets = [5, 0, 0], sizes = [1, 4, 128], strides = [1, 1, 1]} : vector<10x4x128xbf16> to vector<1x4x128xbf16>
    %36 = vector.shape_cast %35 : vector<1x4x128xbf16> to vector<4x128xbf16>
    %37 = arith.maximumf %34, %36 : vector<4x128xbf16>
    %38 = vector.extract_strided_slice %8 {offsets = [6, 0, 0], sizes = [1, 4, 128], strides = [1, 1, 1]} : vector<10x4x128xbf16> to vector<1x4x128xbf16>
    %39 = vector.shape_cast %38 : vector<1x4x128xbf16> to vector<4x128xbf16>
    %40 = arith.maximumf %37, %39 : vector<4x128xbf16>
    %c8 = arith.constant 8 : index
    %c0_17 = arith.constant 0 : index
    %41 = vector.load %arg6[%c8, %c0_17] : memref<16x128xbf16, #tpu.memory_space<vmem>>, vector<4x128xbf16>
    tpu.vector_store %arg6[%c8, %c0_17], %40 {strides = array<i32>} : memref<16x128xbf16, #tpu.memory_space<vmem>>, vector<4x128xbf16>,
    %c0_18 = arith.constant 0 : index
    %c4_19 = arith.constant 4 : index
    %c0_20 = arith.constant 0 : index
    %c0_21 = arith.constant 0 : index
    %42 = vector.load %arg2[%c0_18, %c4_19, %c0_20, %c0_21] : memref<1x8x4x256xbf16, #tpu.memory_space<vmem>>, vector<1x1x4x128xbf16>
    %43 = vector.shape_cast %42 : vector<1x1x4x128xbf16> to vector<4x128xbf16>
    %c8_22 = arith.constant 8 : index
    %c0_23 = arith.constant 0 : index
    %44 = vector.load %arg7[%c8_22, %c0_23] : memref<16x128xbf16, #tpu.memory_space<vmem>>, vector<4x128xbf16>
    tpu.vector_store %arg7[%c8_22, %c0_23], %43 {strides = array<i32>} : memref<16x128xbf16, #tpu.memory_space<vmem>>, vector<4x128xbf16>,
    %45 = vector.extract_strided_slice %8 {offsets = [6, 0, 0], sizes = [1, 4, 128], strides = [1, 1, 1]} : vector<10x4x128xbf16> to vector<1x4x128xbf16>
    %46 = vector.shape_cast %45 : vector<1x4x128xbf16> to vector<4x128xbf16>
    %47 = vector.extract_strided_slice %8 {offsets = [7, 0, 0], sizes = [1, 4, 128], strides = [1, 1, 1]} : vector<10x4x128xbf16> to vector<1x4x128xbf16>
    %48 = vector.shape_cast %47 : vector<1x4x128xbf16> to vector<4x128xbf16>
    %49 = arith.maximumf %46, %48 : vector<4x128xbf16>
    %50 = vector.extract_strided_slice %8 {offsets = [8, 0, 0], sizes = [1, 4, 128], strides = [1, 1, 1]} : vector<10x4x128xbf16> to vector<1x4x128xbf16>
    %51 = vector.shape_cast %50 : vector<1x4x128xbf16> to vector<4x128xbf16>
    %52 = arith.maximumf %49, %51 : vector<4x128xbf16>
    %c12 = arith.constant 12 : index
    %c0_24 = arith.constant 0 : index
    %53 = vector.load %arg6[%c12, %c0_24] : memref<16x128xbf16, #tpu.memory_space<vmem>>, vector<4x128xbf16>
    tpu.vector_store %arg6[%c12, %c0_24], %52 {strides = array<i32>} : memref<16x128xbf16, #tpu.memory_space<vmem>>, vector<4x128xbf16>,
    %c0_25 = arith.constant 0 : index
    %c6 = arith.constant 6 : index
    %c0_26 = arith.constant 0 : index
    %c0_27 = arith.constant 0 : index
    %54 = vector.load %arg2[%c0_25, %c6, %c0_26, %c0_27] : memref<1x8x4x256xbf16, #tpu.memory_space<vmem>>, vector<1x1x4x128xbf16>
    %55 = vector.shape_cast %54 : vector<1x1x4x128xbf16> to vector<4x128xbf16>
    %c12_28 = arith.constant 12 : index
    %c0_29 = arith.constant 0 : index
    %56 = vector.load %arg7[%c12_28, %c0_29] : memref<16x128xbf16, #tpu.memory_space<vmem>>, vector<4x128xbf16>
    tpu.vector_store %arg7[%c12_28, %c0_29], %55 {strides = array<i32>} : memref<16x128xbf16, #tpu.memory_space<vmem>>, vector<4x128xbf16>,
    %c0_30 = arith.constant 0 : index
    %c0_31 = arith.constant 0 : index
    %57 = vector.load %arg7[%c0_30, %c0_31] : memref<16x128xbf16, #tpu.memory_space<vmem>>, vector<16x128xbf16>
    %c0_32 = arith.constant 0 : index
    %c0_33 = arith.constant 0 : index
    %58 = vector.load %arg3[%c0_32, %c0_33] : memref<128x128xbf16, #tpu.memory_space<vmem>>, vector<128x128xbf16>
    %cst = arith.constant dense<0.000000e+00> : vector<16x128xf32>
    %59 = tpu.matmul %57, %58, %cst {dimension_numbers = #tpu.dot_dimension_numbers<[1], [0], [0], [1], [0, 0, 1, 1], [], []>} : vector<16x128xbf16>, vector<128x128xbf16>, vector<16x128xf32> -> vector<16x128xf32>
    %c0_34 = arith.constant 0 : index
    %c0_35 = arith.constant 0 : index
    %60 = vector.load %arg4[%c0_34, %c0_35] : memref<1x128xf32, #tpu.memory_space<vmem>>, vector<1x128xf32>
    %61 = vector.broadcast %60 : vector<1x128xf32> to vector<16x128xf32>
    %62 = arith.addf %59, %61 : vector<16x128xf32>
    %c0_36 = arith.constant 0 : index
    %c0_37 = arith.constant 0 : index
    %63 = vector.load %arg6[%c0_36, %c0_37] : memref<16x128xbf16, #tpu.memory_space<vmem>>, vector<16x128xbf16>
    %64 = arith.extf %63 : vector<16x128xbf16> to vector<16x128xf32>
    %65 = arith.addf %64, %62 : vector<16x128xf32>
    %cst_38 = arith.constant 0.000000e+00 : f32
    %66 = vector.broadcast %cst_38 : f32 to vector<16x128xf32>
    %67 = arith.maximumf %65, %66 : vector<16x128xf32>
    %68 = arith.truncf %67 : vector<16x128xf32> to vector<16x128xbf16>
    %c0_39 = arith.constant 0 : index
    %c0_40 = arith.constant 0 : index
    %c0_41 = arith.constant 0 : index
    %69 = vector.load %arg5[%c0_39, %c0_40, %c0_41] : memref<1x16x128xbf16, #tpu.memory_space<vmem>>, vector<1x16x128xbf16>
    %70 = vector.shape_cast %69 : vector<1x16x128xbf16> to vector<16x128xbf16>
    %71 = vector.shape_cast %68 : vector<16x128xbf16> to vector<1x16x128xbf16>
    tpu.vector_store %arg5[%c0_39, %c0_40, %c0_41], %71 {strides = array<i32>} : memref<1x16x128xbf16, #tpu.memory_space<vmem>>, vector<1x16x128xbf16>,
    return
  }
  func.func @transform_0(%arg0: i32) -> (i32, i32, i32, i32) {
    %c0_i32 = arith.constant 0 : i32
    %c0_i32_0 = arith.constant 0 : i32
    %c0_i32_1 = arith.constant 0 : i32
    %c0_i32_2 = arith.constant 0 : i32
    return %arg0, %c0_i32, %c0_i32_0, %c0_i32_1 : i32, i32, i32, i32
  }
  func.func @transform_1(%arg0: i32) -> (i32, i32, i32, i32) {
    %c0_i32 = arith.constant 0 : i32
    %c0_i32_0 = arith.constant 0 : i32
    %c0_i32_1 = arith.constant 0 : i32
    %c0_i32_2 = arith.constant 0 : i32
    return %arg0, %c0_i32, %c0_i32_0, %c0_i32_1 : i32, i32, i32, i32
  }
  func.func @transform_2(%arg0: i32) -> (i32, i32) {
    %c0_i32 = arith.constant 0 : i32
    %c0_i32_0 = arith.constant 0 : i32
    %c0_i32_1 = arith.constant 0 : i32
    return %c0_i32, %c0_i32_0 : i32, i32
  }
  func.func @transform_3(%arg0: i32) -> (i32, i32) {
    %c0_i32 = arith.constant 0 : i32
    %c0_i32_0 = arith.constant 0 : i32
    %c0_i32_1 = arith.constant 0 : i32
    return %c0_i32, %c0_i32_0 : i32, i32
  }
  func.func @transform_4(%arg0: i32) -> (i32, i32, i32) {
    %c0_i32 = arith.constant 0 : i32
    %c0_i32_0 = arith.constant 0 : i32
    %c0_i32_1 = arith.constant 0 : i32
    return %arg0, %c0_i32, %c0_i32_0 : i32, i32, i32
  }
}

module attributes {stable_mosaic.version = 11 : i64} {
  func.func @_dsc_kernel(%arg0: i32, %arg1: i32, %arg2: memref<1x6x6x128xbf16, #tpu.memory_space<vmem>>, %arg3: memref<9x128xf32, #tpu.memory_space<vmem>>, %arg4: memref<128x128xbf16, #tpu.memory_space<vmem>>, %arg5: memref<1x128xf32, #tpu.memory_space<vmem>>, %arg6: memref<1x16x128xbf16, #tpu.memory_space<vmem>>, %arg7: memref<16x128xbf16, #tpu.memory_space<vmem>>) attributes {dimension_semantics = [#tpu.dimension_semantics<parallel>, #tpu.dimension_semantics<parallel>], iteration_bounds = array<i64: 2, 1>, scalar_prefetch = 0 : i64, scratch_operands = 1 : i64, tpu.core_type = #tpu.core_type<tc>, window_params = [{transform_indices = @transform_0, window_bounds = array<i64: 1, 6, 6, 128>}, {pipeline_mode = #tpu.pipeline_mode<synchronous>, transform_indices = @transform_1, window_bounds = array<i64: 9, 128>}, {transform_indices = @transform_2, window_bounds = array<i64: 128, 128>}, {transform_indices = @transform_3, window_bounds = array<i64: 1, 128>}, {transform_indices = @transform_4, window_bounds = array<i64: 1, 16, 128>}]} {
    %c0 = arith.constant 0 : index
    %c0_0 = arith.constant 0 : index
    %0 = vector.load %arg3[%c0, %c0_0] : memref<9x128xf32, #tpu.memory_space<vmem>>, vector<9x128xf32>
    %cst = arith.constant 0.000000e+00 : f32
    %1 = vector.broadcast %cst : f32 to vector<4x4x128xf32>
    %c0_1 = arith.constant 0 : index
    %c0_2 = arith.constant 0 : index
    %c0_3 = arith.constant 0 : index
    %c0_4 = arith.constant 0 : index
    %2 = vector.load %arg2[%c0_1, %c0_2, %c0_3, %c0_4] : memref<1x6x6x128xbf16, #tpu.memory_space<vmem>>, vector<1x4x4x128xbf16>
    %3 = vector.shape_cast %2 : vector<1x4x4x128xbf16> to vector<4x4x128xbf16>
    %4 = vector.extract_strided_slice %0 {offsets = [0, 0], sizes = [1, 128], strides = [1, 1]} : vector<9x128xf32> to vector<1x128xf32>
    %5 = arith.extf %3 : vector<4x4x128xbf16> to vector<4x4x128xf32>
    %6 = vector.shape_cast %4 : vector<1x128xf32> to vector<1x1x128xf32>
    %7 = vector.broadcast %6 : vector<1x1x128xf32> to vector<4x4x128xf32>
    %8 = arith.mulf %5, %7 : vector<4x4x128xf32>
    %9 = arith.addf %1, %8 : vector<4x4x128xf32>
    %c0_5 = arith.constant 0 : index
    %c0_6 = arith.constant 0 : index
    %c1 = arith.constant 1 : index
    %c0_7 = arith.constant 0 : index
    %10 = vector.load %arg2[%c0_5, %c0_6, %c1, %c0_7] : memref<1x6x6x128xbf16, #tpu.memory_space<vmem>>, vector<1x4x4x128xbf16>
    %11 = vector.shape_cast %10 : vector<1x4x4x128xbf16> to vector<4x4x128xbf16>
    %12 = vector.extract_strided_slice %0 {offsets = [1, 0], sizes = [1, 128], strides = [1, 1]} : vector<9x128xf32> to vector<1x128xf32>
    %13 = arith.extf %11 : vector<4x4x128xbf16> to vector<4x4x128xf32>
    %14 = vector.shape_cast %12 : vector<1x128xf32> to vector<1x1x128xf32>
    %15 = vector.broadcast %14 : vector<1x1x128xf32> to vector<4x4x128xf32>
    %16 = arith.mulf %13, %15 : vector<4x4x128xf32>
    %17 = arith.addf %9, %16 : vector<4x4x128xf32>
    %c0_8 = arith.constant 0 : index
    %c0_9 = arith.constant 0 : index
    %c2 = arith.constant 2 : index
    %c0_10 = arith.constant 0 : index
    %18 = vector.load %arg2[%c0_8, %c0_9, %c2, %c0_10] : memref<1x6x6x128xbf16, #tpu.memory_space<vmem>>, vector<1x4x4x128xbf16>
    %19 = vector.shape_cast %18 : vector<1x4x4x128xbf16> to vector<4x4x128xbf16>
    %20 = vector.extract_strided_slice %0 {offsets = [2, 0], sizes = [1, 128], strides = [1, 1]} : vector<9x128xf32> to vector<1x128xf32>
    %21 = arith.extf %19 : vector<4x4x128xbf16> to vector<4x4x128xf32>
    %22 = vector.shape_cast %20 : vector<1x128xf32> to vector<1x1x128xf32>
    %23 = vector.broadcast %22 : vector<1x1x128xf32> to vector<4x4x128xf32>
    %24 = arith.mulf %21, %23 : vector<4x4x128xf32>
    %25 = arith.addf %17, %24 : vector<4x4x128xf32>
    %c0_11 = arith.constant 0 : index
    %c1_12 = arith.constant 1 : index
    %c0_13 = arith.constant 0 : index
    %c0_14 = arith.constant 0 : index
    %26 = vector.load %arg2[%c0_11, %c1_12, %c0_13, %c0_14] : memref<1x6x6x128xbf16, #tpu.memory_space<vmem>>, vector<1x4x4x128xbf16>
    %27 = vector.shape_cast %26 : vector<1x4x4x128xbf16> to vector<4x4x128xbf16>
    %28 = vector.extract_strided_slice %0 {offsets = [3, 0], sizes = [1, 128], strides = [1, 1]} : vector<9x128xf32> to vector<1x128xf32>
    %29 = arith.extf %27 : vector<4x4x128xbf16> to vector<4x4x128xf32>
    %30 = vector.shape_cast %28 : vector<1x128xf32> to vector<1x1x128xf32>
    %31 = vector.broadcast %30 : vector<1x1x128xf32> to vector<4x4x128xf32>
    %32 = arith.mulf %29, %31 : vector<4x4x128xf32>
    %33 = arith.addf %25, %32 : vector<4x4x128xf32>
    %c0_15 = arith.constant 0 : index
    %c1_16 = arith.constant 1 : index
    %c1_17 = arith.constant 1 : index
    %c0_18 = arith.constant 0 : index
    %34 = vector.load %arg2[%c0_15, %c1_16, %c1_17, %c0_18] : memref<1x6x6x128xbf16, #tpu.memory_space<vmem>>, vector<1x4x4x128xbf16>
    %35 = vector.shape_cast %34 : vector<1x4x4x128xbf16> to vector<4x4x128xbf16>
    %36 = vector.extract_strided_slice %0 {offsets = [4, 0], sizes = [1, 128], strides = [1, 1]} : vector<9x128xf32> to vector<1x128xf32>
    %37 = arith.extf %35 : vector<4x4x128xbf16> to vector<4x4x128xf32>
    %38 = vector.shape_cast %36 : vector<1x128xf32> to vector<1x1x128xf32>
    %39 = vector.broadcast %38 : vector<1x1x128xf32> to vector<4x4x128xf32>
    %40 = arith.mulf %37, %39 : vector<4x4x128xf32>
    %41 = arith.addf %33, %40 : vector<4x4x128xf32>
    %c0_19 = arith.constant 0 : index
    %c1_20 = arith.constant 1 : index
    %c2_21 = arith.constant 2 : index
    %c0_22 = arith.constant 0 : index
    %42 = vector.load %arg2[%c0_19, %c1_20, %c2_21, %c0_22] : memref<1x6x6x128xbf16, #tpu.memory_space<vmem>>, vector<1x4x4x128xbf16>
    %43 = vector.shape_cast %42 : vector<1x4x4x128xbf16> to vector<4x4x128xbf16>
    %44 = vector.extract_strided_slice %0 {offsets = [5, 0], sizes = [1, 128], strides = [1, 1]} : vector<9x128xf32> to vector<1x128xf32>
    %45 = arith.extf %43 : vector<4x4x128xbf16> to vector<4x4x128xf32>
    %46 = vector.shape_cast %44 : vector<1x128xf32> to vector<1x1x128xf32>
    %47 = vector.broadcast %46 : vector<1x1x128xf32> to vector<4x4x128xf32>
    %48 = arith.mulf %45, %47 : vector<4x4x128xf32>
    %49 = arith.addf %41, %48 : vector<4x4x128xf32>
    %c0_23 = arith.constant 0 : index
    %c2_24 = arith.constant 2 : index
    %c0_25 = arith.constant 0 : index
    %c0_26 = arith.constant 0 : index
    %50 = vector.load %arg2[%c0_23, %c2_24, %c0_25, %c0_26] : memref<1x6x6x128xbf16, #tpu.memory_space<vmem>>, vector<1x4x4x128xbf16>
    %51 = vector.shape_cast %50 : vector<1x4x4x128xbf16> to vector<4x4x128xbf16>
    %52 = vector.extract_strided_slice %0 {offsets = [6, 0], sizes = [1, 128], strides = [1, 1]} : vector<9x128xf32> to vector<1x128xf32>
    %53 = arith.extf %51 : vector<4x4x128xbf16> to vector<4x4x128xf32>
    %54 = vector.shape_cast %52 : vector<1x128xf32> to vector<1x1x128xf32>
    %55 = vector.broadcast %54 : vector<1x1x128xf32> to vector<4x4x128xf32>
    %56 = arith.mulf %53, %55 : vector<4x4x128xf32>
    %57 = arith.addf %49, %56 : vector<4x4x128xf32>
    %c0_27 = arith.constant 0 : index
    %c2_28 = arith.constant 2 : index
    %c1_29 = arith.constant 1 : index
    %c0_30 = arith.constant 0 : index
    %58 = vector.load %arg2[%c0_27, %c2_28, %c1_29, %c0_30] : memref<1x6x6x128xbf16, #tpu.memory_space<vmem>>, vector<1x4x4x128xbf16>
    %59 = vector.shape_cast %58 : vector<1x4x4x128xbf16> to vector<4x4x128xbf16>
    %60 = vector.extract_strided_slice %0 {offsets = [7, 0], sizes = [1, 128], strides = [1, 1]} : vector<9x128xf32> to vector<1x128xf32>
    %61 = arith.extf %59 : vector<4x4x128xbf16> to vector<4x4x128xf32>
    %62 = vector.shape_cast %60 : vector<1x128xf32> to vector<1x1x128xf32>
    %63 = vector.broadcast %62 : vector<1x1x128xf32> to vector<4x4x128xf32>
    %64 = arith.mulf %61, %63 : vector<4x4x128xf32>
    %65 = arith.addf %57, %64 : vector<4x4x128xf32>
    %c0_31 = arith.constant 0 : index
    %c2_32 = arith.constant 2 : index
    %c2_33 = arith.constant 2 : index
    %c0_34 = arith.constant 0 : index
    %66 = vector.load %arg2[%c0_31, %c2_32, %c2_33, %c0_34] : memref<1x6x6x128xbf16, #tpu.memory_space<vmem>>, vector<1x4x4x128xbf16>
    %67 = vector.shape_cast %66 : vector<1x4x4x128xbf16> to vector<4x4x128xbf16>
    %68 = vector.extract_strided_slice %0 {offsets = [8, 0], sizes = [1, 128], strides = [1, 1]} : vector<9x128xf32> to vector<1x128xf32>
    %69 = arith.extf %67 : vector<4x4x128xbf16> to vector<4x4x128xf32>
    %70 = vector.shape_cast %68 : vector<1x128xf32> to vector<1x1x128xf32>
    %71 = vector.broadcast %70 : vector<1x1x128xf32> to vector<4x4x128xf32>
    %72 = arith.mulf %69, %71 : vector<4x4x128xf32>
    %73 = arith.addf %65, %72 : vector<4x4x128xf32>
    %74 = vector.extract_strided_slice %73 {offsets = [0, 0, 0], sizes = [1, 4, 128], strides = [1, 1, 1]} : vector<4x4x128xf32> to vector<1x4x128xf32>
    %75 = vector.shape_cast %74 : vector<1x4x128xf32> to vector<4x128xf32>
    %76 = arith.truncf %75 : vector<4x128xf32> to vector<4x128xbf16>
    %c0_35 = arith.constant 0 : index
    %c0_36 = arith.constant 0 : index
    %77 = vector.load %arg7[%c0_35, %c0_36] : memref<16x128xbf16, #tpu.memory_space<vmem>>, vector<4x128xbf16>
    tpu.vector_store %arg7[%c0_35, %c0_36], %76 {strides = array<i32>} : memref<16x128xbf16, #tpu.memory_space<vmem>>, vector<4x128xbf16>,
    %78 = vector.extract_strided_slice %73 {offsets = [1, 0, 0], sizes = [1, 4, 128], strides = [1, 1, 1]} : vector<4x4x128xf32> to vector<1x4x128xf32>
    %79 = vector.shape_cast %78 : vector<1x4x128xf32> to vector<4x128xf32>
    %80 = arith.truncf %79 : vector<4x128xf32> to vector<4x128xbf16>
    %c4 = arith.constant 4 : index
    %c0_37 = arith.constant 0 : index
    %81 = vector.load %arg7[%c4, %c0_37] : memref<16x128xbf16, #tpu.memory_space<vmem>>, vector<4x128xbf16>
    tpu.vector_store %arg7[%c4, %c0_37], %80 {strides = array<i32>} : memref<16x128xbf16, #tpu.memory_space<vmem>>, vector<4x128xbf16>,
    %82 = vector.extract_strided_slice %73 {offsets = [2, 0, 0], sizes = [1, 4, 128], strides = [1, 1, 1]} : vector<4x4x128xf32> to vector<1x4x128xf32>
    %83 = vector.shape_cast %82 : vector<1x4x128xf32> to vector<4x128xf32>
    %84 = arith.truncf %83 : vector<4x128xf32> to vector<4x128xbf16>
    %c8 = arith.constant 8 : index
    %c0_38 = arith.constant 0 : index
    %85 = vector.load %arg7[%c8, %c0_38] : memref<16x128xbf16, #tpu.memory_space<vmem>>, vector<4x128xbf16>
    tpu.vector_store %arg7[%c8, %c0_38], %84 {strides = array<i32>} : memref<16x128xbf16, #tpu.memory_space<vmem>>, vector<4x128xbf16>,
    %86 = vector.extract_strided_slice %73 {offsets = [3, 0, 0], sizes = [1, 4, 128], strides = [1, 1, 1]} : vector<4x4x128xf32> to vector<1x4x128xf32>
    %87 = vector.shape_cast %86 : vector<1x4x128xf32> to vector<4x128xf32>
    %88 = arith.truncf %87 : vector<4x128xf32> to vector<4x128xbf16>
    %c12 = arith.constant 12 : index
    %c0_39 = arith.constant 0 : index
    %89 = vector.load %arg7[%c12, %c0_39] : memref<16x128xbf16, #tpu.memory_space<vmem>>, vector<4x128xbf16>
    tpu.vector_store %arg7[%c12, %c0_39], %88 {strides = array<i32>} : memref<16x128xbf16, #tpu.memory_space<vmem>>, vector<4x128xbf16>,
    %c0_40 = arith.constant 0 : index
    %c0_41 = arith.constant 0 : index
    %90 = vector.load %arg7[%c0_40, %c0_41] : memref<16x128xbf16, #tpu.memory_space<vmem>>, vector<16x128xbf16>
    %c0_42 = arith.constant 0 : index
    %c0_43 = arith.constant 0 : index
    %91 = vector.load %arg4[%c0_42, %c0_43] : memref<128x128xbf16, #tpu.memory_space<vmem>>, vector<128x128xbf16>
    %cst_44 = arith.constant dense<0.000000e+00> : vector<16x128xf32>
    %92 = tpu.matmul %90, %91, %cst_44 {dimension_numbers = #tpu.dot_dimension_numbers<[1], [0], [0], [1], [0, 0, 1, 1], [], []>} : vector<16x128xbf16>, vector<128x128xbf16>, vector<16x128xf32> -> vector<16x128xf32>
    %c0_45 = arith.constant 0 : index
    %c0_46 = arith.constant 0 : index
    %93 = vector.load %arg5[%c0_45, %c0_46] : memref<1x128xf32, #tpu.memory_space<vmem>>, vector<1x128xf32>
    %94 = vector.broadcast %93 : vector<1x128xf32> to vector<16x128xf32>
    %95 = arith.addf %92, %94 : vector<16x128xf32>
    %cst_47 = arith.constant 0.000000e+00 : f32
    %96 = vector.broadcast %cst_47 : f32 to vector<16x128xf32>
    %97 = arith.maximumf %95, %96 : vector<16x128xf32>
    %98 = arith.truncf %97 : vector<16x128xf32> to vector<16x128xbf16>
    %c0_48 = arith.constant 0 : index
    %c0_49 = arith.constant 0 : index
    %c0_50 = arith.constant 0 : index
    %99 = vector.load %arg6[%c0_48, %c0_49, %c0_50] : memref<1x16x128xbf16, #tpu.memory_space<vmem>>, vector<1x16x128xbf16>
    %100 = vector.shape_cast %99 : vector<1x16x128xbf16> to vector<16x128xbf16>
    %101 = vector.shape_cast %98 : vector<16x128xbf16> to vector<1x16x128xbf16>
    tpu.vector_store %arg6[%c0_48, %c0_49, %c0_50], %101 {strides = array<i32>} : memref<1x16x128xbf16, #tpu.memory_space<vmem>>, vector<1x16x128xbf16>,
    return
  }
  func.func @transform_0(%arg0: i32, %arg1: i32) -> (i32, i32, i32, i32) {
    %c0_i32 = arith.constant 0 : i32
    %c0_i32_0 = arith.constant 0 : i32
    %c0_i32_1 = arith.constant 0 : i32
    %c0_i32_2 = arith.constant 0 : i32
    return %arg0, %c0_i32, %c0_i32_0, %c0_i32_1 : i32, i32, i32, i32
  }
  func.func @transform_1(%arg0: i32, %arg1: i32) -> (i32, i32) {
    %c0_i32 = arith.constant 0 : i32
    %c0_i32_0 = arith.constant 0 : i32
    %c0_i32_1 = arith.constant 0 : i32
    return %c0_i32, %c0_i32_0 : i32, i32
  }
  func.func @transform_2(%arg0: i32, %arg1: i32) -> (i32, i32) {
    %c0_i32 = arith.constant 0 : i32
    %c0_i32_0 = arith.constant 0 : i32
    return %c0_i32, %arg1 : i32, i32
  }
  func.func @transform_3(%arg0: i32, %arg1: i32) -> (i32, i32) {
    %c0_i32 = arith.constant 0 : i32
    %c0_i32_0 = arith.constant 0 : i32
    return %c0_i32, %arg1 : i32, i32
  }
  func.func @transform_4(%arg0: i32, %arg1: i32) -> (i32, i32, i32) {
    %c0_i32 = arith.constant 0 : i32
    %c0_i32_0 = arith.constant 0 : i32
    return %arg0, %c0_i32, %arg1 : i32, i32, i32
  }
}

module attributes {stable_mosaic.version = 11 : i64} {
  func.func @_dsc_kernel(%arg0: i32, %arg1: i32, %arg2: memref<1x6x6x128xbf16, #tpu.memory_space<vmem>>, %arg3: memref<9x128xf32, #tpu.memory_space<vmem>>, %arg4: memref<128x128xbf16, #tpu.memory_space<vmem>>, %arg5: memref<1x128xf32, #tpu.memory_space<vmem>>, %arg6: memref<1x16x128xbf16, #tpu.memory_space<vmem>>, %arg7: memref<16x128xbf16, #tpu.memory_space<vmem>>) attributes {dimension_semantics = [#tpu.dimension_semantics<parallel>, #tpu.dimension_semantics<parallel>], iteration_bounds = array<i64: 2, 1>, scalar_prefetch = 0 : i64, scratch_operands = 1 : i64, tpu.core_type = #tpu.core_type<tc>, window_params = [{transform_indices = @transform_0, window_bounds = array<i64: 1, 6, 6, 128>}, {pipeline_mode = #tpu.pipeline_mode<synchronous>, transform_indices = @transform_1, window_bounds = array<i64: 9, 128>}, {transform_indices = @transform_2, window_bounds = array<i64: 128, 128>}, {transform_indices = @transform_3, window_bounds = array<i64: 1, 128>}, {transform_indices = @transform_4, window_bounds = array<i64: 1, 16, 128>}]} {
    %c0 = arith.constant 0 : index
    %c0_0 = arith.constant 0 : index
    %0 = vector.load %arg3[%c0, %c0_0] : memref<9x128xf32, #tpu.memory_space<vmem>>, vector<9x128xf32>
    %cst = arith.constant 0.000000e+00 : f32
    %1 = vector.broadcast %cst : f32 to vector<4x4x128xf32>
    %c0_1 = arith.constant 0 : index
    %c0_2 = arith.constant 0 : index
    %c0_3 = arith.constant 0 : index
    %c0_4 = arith.constant 0 : index
    %2 = vector.load %arg2[%c0_1, %c0_2, %c0_3, %c0_4] : memref<1x6x6x128xbf16, #tpu.memory_space<vmem>>, vector<1x4x4x128xbf16>
    %3 = vector.shape_cast %2 : vector<1x4x4x128xbf16> to vector<4x4x128xbf16>
    %4 = vector.extract_strided_slice %0 {offsets = [0, 0], sizes = [1, 128], strides = [1, 1]} : vector<9x128xf32> to vector<1x128xf32>
    %5 = arith.extf %3 : vector<4x4x128xbf16> to vector<4x4x128xf32>
    %6 = vector.shape_cast %4 : vector<1x128xf32> to vector<1x1x128xf32>
    %7 = vector.broadcast %6 : vector<1x1x128xf32> to vector<4x4x128xf32>
    %8 = arith.mulf %5, %7 : vector<4x4x128xf32>
    %9 = arith.addf %1, %8 : vector<4x4x128xf32>
    %c0_5 = arith.constant 0 : index
    %c0_6 = arith.constant 0 : index
    %c1 = arith.constant 1 : index
    %c0_7 = arith.constant 0 : index
    %10 = vector.load %arg2[%c0_5, %c0_6, %c1, %c0_7] : memref<1x6x6x128xbf16, #tpu.memory_space<vmem>>, vector<1x4x4x128xbf16>
    %11 = vector.shape_cast %10 : vector<1x4x4x128xbf16> to vector<4x4x128xbf16>
    %12 = vector.extract_strided_slice %0 {offsets = [1, 0], sizes = [1, 128], strides = [1, 1]} : vector<9x128xf32> to vector<1x128xf32>
    %13 = arith.extf %11 : vector<4x4x128xbf16> to vector<4x4x128xf32>
    %14 = vector.shape_cast %12 : vector<1x128xf32> to vector<1x1x128xf32>
    %15 = vector.broadcast %14 : vector<1x1x128xf32> to vector<4x4x128xf32>
    %16 = arith.mulf %13, %15 : vector<4x4x128xf32>
    %17 = arith.addf %9, %16 : vector<4x4x128xf32>
    %c0_8 = arith.constant 0 : index
    %c0_9 = arith.constant 0 : index
    %c2 = arith.constant 2 : index
    %c0_10 = arith.constant 0 : index
    %18 = vector.load %arg2[%c0_8, %c0_9, %c2, %c0_10] : memref<1x6x6x128xbf16, #tpu.memory_space<vmem>>, vector<1x4x4x128xbf16>
    %19 = vector.shape_cast %18 : vector<1x4x4x128xbf16> to vector<4x4x128xbf16>
    %20 = vector.extract_strided_slice %0 {offsets = [2, 0], sizes = [1, 128], strides = [1, 1]} : vector<9x128xf32> to vector<1x128xf32>
    %21 = arith.extf %19 : vector<4x4x128xbf16> to vector<4x4x128xf32>
    %22 = vector.shape_cast %20 : vector<1x128xf32> to vector<1x1x128xf32>
    %23 = vector.broadcast %22 : vector<1x1x128xf32> to vector<4x4x128xf32>
    %24 = arith.mulf %21, %23 : vector<4x4x128xf32>
    %25 = arith.addf %17, %24 : vector<4x4x128xf32>
    %c0_11 = arith.constant 0 : index
    %c1_12 = arith.constant 1 : index
    %c0_13 = arith.constant 0 : index
    %c0_14 = arith.constant 0 : index
    %26 = vector.load %arg2[%c0_11, %c1_12, %c0_13, %c0_14] : memref<1x6x6x128xbf16, #tpu.memory_space<vmem>>, vector<1x4x4x128xbf16>
    %27 = vector.shape_cast %26 : vector<1x4x4x128xbf16> to vector<4x4x128xbf16>
    %28 = vector.extract_strided_slice %0 {offsets = [3, 0], sizes = [1, 128], strides = [1, 1]} : vector<9x128xf32> to vector<1x128xf32>
    %29 = arith.extf %27 : vector<4x4x128xbf16> to vector<4x4x128xf32>
    %30 = vector.shape_cast %28 : vector<1x128xf32> to vector<1x1x128xf32>
    %31 = vector.broadcast %30 : vector<1x1x128xf32> to vector<4x4x128xf32>
    %32 = arith.mulf %29, %31 : vector<4x4x128xf32>
    %33 = arith.addf %25, %32 : vector<4x4x128xf32>
    %c0_15 = arith.constant 0 : index
    %c1_16 = arith.constant 1 : index
    %c1_17 = arith.constant 1 : index
    %c0_18 = arith.constant 0 : index
    %34 = vector.load %arg2[%c0_15, %c1_16, %c1_17, %c0_18] : memref<1x6x6x128xbf16, #tpu.memory_space<vmem>>, vector<1x4x4x128xbf16>
    %35 = vector.shape_cast %34 : vector<1x4x4x128xbf16> to vector<4x4x128xbf16>
    %36 = vector.extract_strided_slice %0 {offsets = [4, 0], sizes = [1, 128], strides = [1, 1]} : vector<9x128xf32> to vector<1x128xf32>
    %37 = arith.extf %35 : vector<4x4x128xbf16> to vector<4x4x128xf32>
    %38 = vector.shape_cast %36 : vector<1x128xf32> to vector<1x1x128xf32>
    %39 = vector.broadcast %38 : vector<1x1x128xf32> to vector<4x4x128xf32>
    %40 = arith.mulf %37, %39 : vector<4x4x128xf32>
    %41 = arith.addf %33, %40 : vector<4x4x128xf32>
    %c0_19 = arith.constant 0 : index
    %c1_20 = arith.constant 1 : index
    %c2_21 = arith.constant 2 : index
    %c0_22 = arith.constant 0 : index
    %42 = vector.load %arg2[%c0_19, %c1_20, %c2_21, %c0_22] : memref<1x6x6x128xbf16, #tpu.memory_space<vmem>>, vector<1x4x4x128xbf16>
    %43 = vector.shape_cast %42 : vector<1x4x4x128xbf16> to vector<4x4x128xbf16>
    %44 = vector.extract_strided_slice %0 {offsets = [5, 0], sizes = [1, 128], strides = [1, 1]} : vector<9x128xf32> to vector<1x128xf32>
    %45 = arith.extf %43 : vector<4x4x128xbf16> to vector<4x4x128xf32>
    %46 = vector.shape_cast %44 : vector<1x128xf32> to vector<1x1x128xf32>
    %47 = vector.broadcast %46 : vector<1x1x128xf32> to vector<4x4x128xf32>
    %48 = arith.mulf %45, %47 : vector<4x4x128xf32>
    %49 = arith.addf %41, %48 : vector<4x4x128xf32>
    %c0_23 = arith.constant 0 : index
    %c2_24 = arith.constant 2 : index
    %c0_25 = arith.constant 0 : index
    %c0_26 = arith.constant 0 : index
    %50 = vector.load %arg2[%c0_23, %c2_24, %c0_25, %c0_26] : memref<1x6x6x128xbf16, #tpu.memory_space<vmem>>, vector<1x4x4x128xbf16>
    %51 = vector.shape_cast %50 : vector<1x4x4x128xbf16> to vector<4x4x128xbf16>
    %52 = vector.extract_strided_slice %0 {offsets = [6, 0], sizes = [1, 128], strides = [1, 1]} : vector<9x128xf32> to vector<1x128xf32>
    %53 = arith.extf %51 : vector<4x4x128xbf16> to vector<4x4x128xf32>
    %54 = vector.shape_cast %52 : vector<1x128xf32> to vector<1x1x128xf32>
    %55 = vector.broadcast %54 : vector<1x1x128xf32> to vector<4x4x128xf32>
    %56 = arith.mulf %53, %55 : vector<4x4x128xf32>
    %57 = arith.addf %49, %56 : vector<4x4x128xf32>
    %c0_27 = arith.constant 0 : index
    %c2_28 = arith.constant 2 : index
    %c1_29 = arith.constant 1 : index
    %c0_30 = arith.constant 0 : index
    %58 = vector.load %arg2[%c0_27, %c2_28, %c1_29, %c0_30] : memref<1x6x6x128xbf16, #tpu.memory_space<vmem>>, vector<1x4x4x128xbf16>
    %59 = vector.shape_cast %58 : vector<1x4x4x128xbf16> to vector<4x4x128xbf16>
    %60 = vector.extract_strided_slice %0 {offsets = [7, 0], sizes = [1, 128], strides = [1, 1]} : vector<9x128xf32> to vector<1x128xf32>
    %61 = arith.extf %59 : vector<4x4x128xbf16> to vector<4x4x128xf32>
    %62 = vector.shape_cast %60 : vector<1x128xf32> to vector<1x1x128xf32>
    %63 = vector.broadcast %62 : vector<1x1x128xf32> to vector<4x4x128xf32>
    %64 = arith.mulf %61, %63 : vector<4x4x128xf32>
    %65 = arith.addf %57, %64 : vector<4x4x128xf32>
    %c0_31 = arith.constant 0 : index
    %c2_32 = arith.constant 2 : index
    %c2_33 = arith.constant 2 : index
    %c0_34 = arith.constant 0 : index
    %66 = vector.load %arg2[%c0_31, %c2_32, %c2_33, %c0_34] : memref<1x6x6x128xbf16, #tpu.memory_space<vmem>>, vector<1x4x4x128xbf16>
    %67 = vector.shape_cast %66 : vector<1x4x4x128xbf16> to vector<4x4x128xbf16>
    %68 = vector.extract_strided_slice %0 {offsets = [8, 0], sizes = [1, 128], strides = [1, 1]} : vector<9x128xf32> to vector<1x128xf32>
    %69 = arith.extf %67 : vector<4x4x128xbf16> to vector<4x4x128xf32>
    %70 = vector.shape_cast %68 : vector<1x128xf32> to vector<1x1x128xf32>
    %71 = vector.broadcast %70 : vector<1x1x128xf32> to vector<4x4x128xf32>
    %72 = arith.mulf %69, %71 : vector<4x4x128xf32>
    %73 = arith.addf %65, %72 : vector<4x4x128xf32>
    %74 = vector.extract_strided_slice %73 {offsets = [0, 0, 0], sizes = [1, 4, 128], strides = [1, 1, 1]} : vector<4x4x128xf32> to vector<1x4x128xf32>
    %75 = vector.shape_cast %74 : vector<1x4x128xf32> to vector<4x128xf32>
    %76 = arith.truncf %75 : vector<4x128xf32> to vector<4x128xbf16>
    %c0_35 = arith.constant 0 : index
    %c0_36 = arith.constant 0 : index
    %77 = vector.load %arg7[%c0_35, %c0_36] : memref<16x128xbf16, #tpu.memory_space<vmem>>, vector<4x128xbf16>
    tpu.vector_store %arg7[%c0_35, %c0_36], %76 {strides = array<i32>} : memref<16x128xbf16, #tpu.memory_space<vmem>>, vector<4x128xbf16>,
    %78 = vector.extract_strided_slice %73 {offsets = [1, 0, 0], sizes = [1, 4, 128], strides = [1, 1, 1]} : vector<4x4x128xf32> to vector<1x4x128xf32>
    %79 = vector.shape_cast %78 : vector<1x4x128xf32> to vector<4x128xf32>
    %80 = arith.truncf %79 : vector<4x128xf32> to vector<4x128xbf16>
    %c4 = arith.constant 4 : index
    %c0_37 = arith.constant 0 : index
    %81 = vector.load %arg7[%c4, %c0_37] : memref<16x128xbf16, #tpu.memory_space<vmem>>, vector<4x128xbf16>
    tpu.vector_store %arg7[%c4, %c0_37], %80 {strides = array<i32>} : memref<16x128xbf16, #tpu.memory_space<vmem>>, vector<4x128xbf16>,
    %82 = vector.extract_strided_slice %73 {offsets = [2, 0, 0], sizes = [1, 4, 128], strides = [1, 1, 1]} : vector<4x4x128xf32> to vector<1x4x128xf32>
    %83 = vector.shape_cast %82 : vector<1x4x128xf32> to vector<4x128xf32>
    %84 = arith.truncf %83 : vector<4x128xf32> to vector<4x128xbf16>
    %c8 = arith.constant 8 : index
    %c0_38 = arith.constant 0 : index
    %85 = vector.load %arg7[%c8, %c0_38] : memref<16x128xbf16, #tpu.memory_space<vmem>>, vector<4x128xbf16>
    tpu.vector_store %arg7[%c8, %c0_38], %84 {strides = array<i32>} : memref<16x128xbf16, #tpu.memory_space<vmem>>, vector<4x128xbf16>,
    %86 = vector.extract_strided_slice %73 {offsets = [3, 0, 0], sizes = [1, 4, 128], strides = [1, 1, 1]} : vector<4x4x128xf32> to vector<1x4x128xf32>
    %87 = vector.shape_cast %86 : vector<1x4x128xf32> to vector<4x128xf32>
    %88 = arith.truncf %87 : vector<4x128xf32> to vector<4x128xbf16>
    %c12 = arith.constant 12 : index
    %c0_39 = arith.constant 0 : index
    %89 = vector.load %arg7[%c12, %c0_39] : memref<16x128xbf16, #tpu.memory_space<vmem>>, vector<4x128xbf16>
    tpu.vector_store %arg7[%c12, %c0_39], %88 {strides = array<i32>} : memref<16x128xbf16, #tpu.memory_space<vmem>>, vector<4x128xbf16>,
    %c0_40 = arith.constant 0 : index
    %c0_41 = arith.constant 0 : index
    %90 = vector.load %arg7[%c0_40, %c0_41] : memref<16x128xbf16, #tpu.memory_space<vmem>>, vector<16x128xbf16>
    %c0_42 = arith.constant 0 : index
    %c0_43 = arith.constant 0 : index
    %91 = vector.load %arg4[%c0_42, %c0_43] : memref<128x128xbf16, #tpu.memory_space<vmem>>, vector<128x128xbf16>
    %cst_44 = arith.constant dense<0.000000e+00> : vector<16x128xf32>
    %92 = tpu.matmul %90, %91, %cst_44 {dimension_numbers = #tpu.dot_dimension_numbers<[1], [0], [0], [1], [0, 0, 1, 1], [], []>} : vector<16x128xbf16>, vector<128x128xbf16>, vector<16x128xf32> -> vector<16x128xf32>
    %c0_45 = arith.constant 0 : index
    %c0_46 = arith.constant 0 : index
    %93 = vector.load %arg5[%c0_45, %c0_46] : memref<1x128xf32, #tpu.memory_space<vmem>>, vector<1x128xf32>
    %94 = vector.broadcast %93 : vector<1x128xf32> to vector<16x128xf32>
    %95 = arith.addf %92, %94 : vector<16x128xf32>
    %96 = arith.truncf %95 : vector<16x128xf32> to vector<16x128xbf16>
    %c0_47 = arith.constant 0 : index
    %c0_48 = arith.constant 0 : index
    %c0_49 = arith.constant 0 : index
    %97 = vector.load %arg6[%c0_47, %c0_48, %c0_49] : memref<1x16x128xbf16, #tpu.memory_space<vmem>>, vector<1x16x128xbf16>
    %98 = vector.shape_cast %97 : vector<1x16x128xbf16> to vector<16x128xbf16>
    %99 = vector.shape_cast %96 : vector<16x128xbf16> to vector<1x16x128xbf16>
    tpu.vector_store %arg6[%c0_47, %c0_48, %c0_49], %99 {strides = array<i32>} : memref<1x16x128xbf16, #tpu.memory_space<vmem>>, vector<1x16x128xbf16>,
    return
  }
  func.func @transform_0(%arg0: i32, %arg1: i32) -> (i32, i32, i32, i32) {
    %c0_i32 = arith.constant 0 : i32
    %c0_i32_0 = arith.constant 0 : i32
    %c0_i32_1 = arith.constant 0 : i32
    %c0_i32_2 = arith.constant 0 : i32
    return %arg0, %c0_i32, %c0_i32_0, %c0_i32_1 : i32, i32, i32, i32
  }
  func.func @transform_1(%arg0: i32, %arg1: i32) -> (i32, i32) {
    %c0_i32 = arith.constant 0 : i32
    %c0_i32_0 = arith.constant 0 : i32
    %c0_i32_1 = arith.constant 0 : i32
    return %c0_i32, %c0_i32_0 : i32, i32
  }
  func.func @transform_2(%arg0: i32, %arg1: i32) -> (i32, i32) {
    %c0_i32 = arith.constant 0 : i32
    %c0_i32_0 = arith.constant 0 : i32
    return %c0_i32, %arg1 : i32, i32
  }
  func.func @transform_3(%arg0: i32, %arg1: i32) -> (i32, i32) {
    %c0_i32 = arith.constant 0 : i32
    %c0_i32_0 = arith.constant 0 : i32
    return %c0_i32, %arg1 : i32, i32
  }
  func.func @transform_4(%arg0: i32, %arg1: i32) -> (i32, i32, i32) {
    %c0_i32 = arith.constant 0 : i32
    %c0_i32_0 = arith.constant 0 : i32
    return %arg0, %c0_i32, %arg1 : i32, i32, i32
  }
}

module attributes {stable_mosaic.version = 11 : i64} {
  func.func @_tail_kernel(%arg0: i32, %arg1: memref<1x6x3x256xbf16, #tpu.memory_space<vmem>>, %arg2: memref<1x4x2x256xbf16, #tpu.memory_space<vmem>>, %arg3: memref<128x128xbf16, #tpu.memory_space<vmem>>, %arg4: memref<1x128xf32, #tpu.memory_space<vmem>>, %arg5: memref<1x4x128xbf16, #tpu.memory_space<vmem>>, %arg6: memref<4x128xbf16, #tpu.memory_space<vmem>>, %arg7: memref<4x128xbf16, #tpu.memory_space<vmem>>) attributes {dimension_semantics = [#tpu.dimension_semantics<parallel>], iteration_bounds = array<i64: 2>, scalar_prefetch = 0 : i64, scratch_operands = 2 : i64, tpu.core_type = #tpu.core_type<tc>, window_params = [{transform_indices = @transform_0, window_bounds = array<i64: 1, 6, 3, 256>}, {transform_indices = @transform_1, window_bounds = array<i64: 1, 4, 2, 256>}, {pipeline_mode = #tpu.pipeline_mode<synchronous>, transform_indices = @transform_2, window_bounds = array<i64: 128, 128>}, {pipeline_mode = #tpu.pipeline_mode<synchronous>, transform_indices = @transform_3, window_bounds = array<i64: 1, 128>}, {transform_indices = @transform_4, window_bounds = array<i64: 1, 4, 128>}]} {
    %c0 = arith.constant 0 : index
    %c0_0 = arith.constant 0 : index
    %c0_1 = arith.constant 0 : index
    %c0_2 = arith.constant 0 : index
    %0 = vector.load %arg1[%c0, %c0_0, %c0_1, %c0_2] : memref<1x6x3x256xbf16, #tpu.memory_space<vmem>>, vector<1x6x3x256xbf16>
    %1 = vector.shape_cast %0 : vector<1x6x3x256xbf16> to vector<6x3x256xbf16>
    %2 = vector.extract_strided_slice %1 {offsets = [0, 0, 0], sizes = [6, 3, 128], strides = [1, 1, 1]} : vector<6x3x256xbf16> to vector<6x3x128xbf16>
    %3 = vector.extract_strided_slice %1 {offsets = [0, 0, 128], sizes = [6, 3, 128], strides = [1, 1, 1]} : vector<6x3x256xbf16> to vector<6x3x128xbf16>
    %4 = vector.extract_strided_slice %2 {offsets = [0, 0, 0], sizes = [6, 2, 128], strides = [1, 1, 1]} : vector<6x3x128xbf16> to vector<6x2x128xbf16>
    %5 = vector.extract_strided_slice %3 {offsets = [0, 0, 0], sizes = [6, 2, 128], strides = [1, 1, 1]} : vector<6x3x128xbf16> to vector<6x2x128xbf16>
    %6 = vector.extract_strided_slice %2 {offsets = [0, 1, 0], sizes = [6, 2, 128], strides = [1, 1, 1]} : vector<6x3x128xbf16> to vector<6x2x128xbf16>
    %7 = arith.maximumf %4, %5 : vector<6x2x128xbf16>
    %8 = arith.maximumf %7, %6 : vector<6x2x128xbf16>
    %9 = vector.extract_strided_slice %8 {offsets = [0, 0, 0], sizes = [1, 2, 128], strides = [1, 1, 1]} : vector<6x2x128xbf16> to vector<1x2x128xbf16>
    %10 = vector.shape_cast %9 : vector<1x2x128xbf16> to vector<2x128xbf16>
    %11 = vector.extract_strided_slice %8 {offsets = [1, 0, 0], sizes = [1, 2, 128], strides = [1, 1, 1]} : vector<6x2x128xbf16> to vector<1x2x128xbf16>
    %12 = vector.shape_cast %11 : vector<1x2x128xbf16> to vector<2x128xbf16>
    %13 = arith.maximumf %10, %12 : vector<2x128xbf16>
    %14 = vector.extract_strided_slice %8 {offsets = [2, 0, 0], sizes = [1, 2, 128], strides = [1, 1, 1]} : vector<6x2x128xbf16> to vector<1x2x128xbf16>
    %15 = vector.shape_cast %14 : vector<1x2x128xbf16> to vector<2x128xbf16>
    %16 = arith.maximumf %13, %15 : vector<2x128xbf16>
    %c0_3 = arith.constant 0 : index
    %c0_4 = arith.constant 0 : index
    %17 = vector.load %arg6[%c0_3, %c0_4] : memref<4x128xbf16, #tpu.memory_space<vmem>>, vector<2x128xbf16>
    tpu.vector_store %arg6[%c0_3, %c0_4], %16 {strides = array<i32>} : memref<4x128xbf16, #tpu.memory_space<vmem>>, vector<2x128xbf16>,
    %c0_5 = arith.constant 0 : index
    %c0_6 = arith.constant 0 : index
    %c0_7 = arith.constant 0 : index
    %c0_8 = arith.constant 0 : index
    %18 = vector.load %arg2[%c0_5, %c0_6, %c0_7, %c0_8] : memref<1x4x2x256xbf16, #tpu.memory_space<vmem>>, vector<1x1x2x128xbf16>
    %19 = vector.shape_cast %18 : vector<1x1x2x128xbf16> to vector<2x128xbf16>
    %c0_9 = arith.constant 0 : index
    %c0_10 = arith.constant 0 : index
    %20 = vector.load %arg7[%c0_9, %c0_10] : memref<4x128xbf16, #tpu.memory_space<vmem>>, vector<2x128xbf16>
    tpu.vector_store %arg7[%c0_9, %c0_10], %19 {strides = array<i32>} : memref<4x128xbf16, #tpu.memory_space<vmem>>, vector<2x128xbf16>,
    %21 = vector.extract_strided_slice %8 {offsets = [2, 0, 0], sizes = [1, 2, 128], strides = [1, 1, 1]} : vector<6x2x128xbf16> to vector<1x2x128xbf16>
    %22 = vector.shape_cast %21 : vector<1x2x128xbf16> to vector<2x128xbf16>
    %23 = vector.extract_strided_slice %8 {offsets = [3, 0, 0], sizes = [1, 2, 128], strides = [1, 1, 1]} : vector<6x2x128xbf16> to vector<1x2x128xbf16>
    %24 = vector.shape_cast %23 : vector<1x2x128xbf16> to vector<2x128xbf16>
    %25 = arith.maximumf %22, %24 : vector<2x128xbf16>
    %26 = vector.extract_strided_slice %8 {offsets = [4, 0, 0], sizes = [1, 2, 128], strides = [1, 1, 1]} : vector<6x2x128xbf16> to vector<1x2x128xbf16>
    %27 = vector.shape_cast %26 : vector<1x2x128xbf16> to vector<2x128xbf16>
    %28 = arith.maximumf %25, %27 : vector<2x128xbf16>
    %c2 = arith.constant 2 : index
    %c0_11 = arith.constant 0 : index
    %29 = vector.load %arg6[%c2, %c0_11] : memref<4x128xbf16, #tpu.memory_space<vmem>>, vector<2x128xbf16>
    tpu.vector_store %arg6[%c2, %c0_11], %28 {strides = array<i32>} : memref<4x128xbf16, #tpu.memory_space<vmem>>, vector<2x128xbf16>,
    %c0_12 = arith.constant 0 : index
    %c2_13 = arith.constant 2 : index
    %c0_14 = arith.constant 0 : index
    %c0_15 = arith.constant 0 : index
    %30 = vector.load %arg2[%c0_12, %c2_13, %c0_14, %c0_15] : memref<1x4x2x256xbf16, #tpu.memory_space<vmem>>, vector<1x1x2x128xbf16>
    %31 = vector.shape_cast %30 : vector<1x1x2x128xbf16> to vector<2x128xbf16>
    %c2_16 = arith.constant 2 : index
    %c0_17 = arith.constant 0 : index
    %32 = vector.load %arg7[%c2_16, %c0_17] : memref<4x128xbf16, #tpu.memory_space<vmem>>, vector<2x128xbf16>
    tpu.vector_store %arg7[%c2_16, %c0_17], %31 {strides = array<i32>} : memref<4x128xbf16, #tpu.memory_space<vmem>>, vector<2x128xbf16>,
    %c0_18 = arith.constant 0 : index
    %c0_19 = arith.constant 0 : index
    %33 = vector.load %arg7[%c0_18, %c0_19] : memref<4x128xbf16, #tpu.memory_space<vmem>>, vector<4x128xbf16>
    %c0_20 = arith.constant 0 : index
    %c0_21 = arith.constant 0 : index
    %34 = vector.load %arg3[%c0_20, %c0_21] : memref<128x128xbf16, #tpu.memory_space<vmem>>, vector<128x128xbf16>
    %cst = arith.constant dense<0.000000e+00> : vector<4x128xf32>
    %35 = tpu.matmul %33, %34, %cst {dimension_numbers = #tpu.dot_dimension_numbers<[1], [0], [0], [1], [0, 0, 1, 1], [], []>} : vector<4x128xbf16>, vector<128x128xbf16>, vector<4x128xf32> -> vector<4x128xf32>
    %c0_22 = arith.constant 0 : index
    %c0_23 = arith.constant 0 : index
    %36 = vector.load %arg4[%c0_22, %c0_23] : memref<1x128xf32, #tpu.memory_space<vmem>>, vector<1x128xf32>
    %37 = vector.broadcast %36 : vector<1x128xf32> to vector<4x128xf32>
    %38 = arith.addf %35, %37 : vector<4x128xf32>
    %c0_24 = arith.constant 0 : index
    %c0_25 = arith.constant 0 : index
    %39 = vector.load %arg6[%c0_24, %c0_25] : memref<4x128xbf16, #tpu.memory_space<vmem>>, vector<4x128xbf16>
    %40 = arith.extf %39 : vector<4x128xbf16> to vector<4x128xf32>
    %41 = arith.addf %40, %38 : vector<4x128xf32>
    %cst_26 = arith.constant 0.000000e+00 : f32
    %42 = vector.broadcast %cst_26 : f32 to vector<4x128xf32>
    %43 = arith.maximumf %41, %42 : vector<4x128xf32>
    %44 = arith.truncf %43 : vector<4x128xf32> to vector<4x128xbf16>
    %c0_27 = arith.constant 0 : index
    %c0_28 = arith.constant 0 : index
    %c0_29 = arith.constant 0 : index
    %45 = vector.load %arg5[%c0_27, %c0_28, %c0_29] : memref<1x4x128xbf16, #tpu.memory_space<vmem>>, vector<1x4x128xbf16>
    %46 = vector.shape_cast %45 : vector<1x4x128xbf16> to vector<4x128xbf16>
    %47 = vector.shape_cast %44 : vector<4x128xbf16> to vector<1x4x128xbf16>
    tpu.vector_store %arg5[%c0_27, %c0_28, %c0_29], %47 {strides = array<i32>} : memref<1x4x128xbf16, #tpu.memory_space<vmem>>, vector<1x4x128xbf16>,
    return
  }
  func.func @transform_0(%arg0: i32) -> (i32, i32, i32, i32) {
    %c0_i32 = arith.constant 0 : i32
    %c0_i32_0 = arith.constant 0 : i32
    %c0_i32_1 = arith.constant 0 : i32
    %c0_i32_2 = arith.constant 0 : i32
    return %arg0, %c0_i32, %c0_i32_0, %c0_i32_1 : i32, i32, i32, i32
  }
  func.func @transform_1(%arg0: i32) -> (i32, i32, i32, i32) {
    %c0_i32 = arith.constant 0 : i32
    %c0_i32_0 = arith.constant 0 : i32
    %c0_i32_1 = arith.constant 0 : i32
    %c0_i32_2 = arith.constant 0 : i32
    return %arg0, %c0_i32, %c0_i32_0, %c0_i32_1 : i32, i32, i32, i32
  }
  func.func @transform_2(%arg0: i32) -> (i32, i32) {
    %c0_i32 = arith.constant 0 : i32
    %c0_i32_0 = arith.constant 0 : i32
    %c0_i32_1 = arith.constant 0 : i32
    return %c0_i32, %c0_i32_0 : i32, i32
  }
  func.func @transform_3(%arg0: i32) -> (i32, i32) {
    %c0_i32 = arith.constant 0 : i32
    %c0_i32_0 = arith.constant 0 : i32
    %c0_i32_1 = arith.constant 0 : i32
    return %c0_i32, %c0_i32_0 : i32, i32
  }
  func.func @transform_4(%arg0: i32) -> (i32, i32, i32) {
    %c0_i32 = arith.constant 0 : i32
    %c0_i32_0 = arith.constant 0 : i32
    %c0_i32_1 = arith.constant 0 : i32
    return %arg0, %c0_i32, %c0_i32_0 : i32, i32, i32
  }
}

module attributes {stable_mosaic.version = 11 : i64} {
  func.func @_dsc_kernel(%arg0: i32, %arg1: i32, %arg2: memref<1x4x4x128xbf16, #tpu.memory_space<vmem>>, %arg3: memref<9x128xf32, #tpu.memory_space<vmem>>, %arg4: memref<128x128xbf16, #tpu.memory_space<vmem>>, %arg5: memref<1x128xf32, #tpu.memory_space<vmem>>, %arg6: memref<1x4x128xbf16, #tpu.memory_space<vmem>>, %arg7: memref<4x128xbf16, #tpu.memory_space<vmem>>) attributes {dimension_semantics = [#tpu.dimension_semantics<parallel>, #tpu.dimension_semantics<parallel>], iteration_bounds = array<i64: 2, 1>, scalar_prefetch = 0 : i64, scratch_operands = 1 : i64, tpu.core_type = #tpu.core_type<tc>, window_params = [{transform_indices = @transform_0, window_bounds = array<i64: 1, 4, 4, 128>}, {pipeline_mode = #tpu.pipeline_mode<synchronous>, transform_indices = @transform_1, window_bounds = array<i64: 9, 128>}, {transform_indices = @transform_2, window_bounds = array<i64: 128, 128>}, {transform_indices = @transform_3, window_bounds = array<i64: 1, 128>}, {transform_indices = @transform_4, window_bounds = array<i64: 1, 4, 128>}]} {
    %c0 = arith.constant 0 : index
    %c0_0 = arith.constant 0 : index
    %0 = vector.load %arg3[%c0, %c0_0] : memref<9x128xf32, #tpu.memory_space<vmem>>, vector<9x128xf32>
    %cst = arith.constant 0.000000e+00 : f32
    %1 = vector.broadcast %cst : f32 to vector<2x2x128xf32>
    %c0_1 = arith.constant 0 : index
    %c0_2 = arith.constant 0 : index
    %c0_3 = arith.constant 0 : index
    %c0_4 = arith.constant 0 : index
    %2 = vector.load %arg2[%c0_1, %c0_2, %c0_3, %c0_4] : memref<1x4x4x128xbf16, #tpu.memory_space<vmem>>, vector<1x2x2x128xbf16>
    %3 = vector.shape_cast %2 : vector<1x2x2x128xbf16> to vector<2x2x128xbf16>
    %4 = vector.extract_strided_slice %0 {offsets = [0, 0], sizes = [1, 128], strides = [1, 1]} : vector<9x128xf32> to vector<1x128xf32>
    %5 = arith.extf %3 : vector<2x2x128xbf16> to vector<2x2x128xf32>
    %6 = vector.shape_cast %4 : vector<1x128xf32> to vector<1x1x128xf32>
    %7 = vector.broadcast %6 : vector<1x1x128xf32> to vector<2x2x128xf32>
    %8 = arith.mulf %5, %7 : vector<2x2x128xf32>
    %9 = arith.addf %1, %8 : vector<2x2x128xf32>
    %c0_5 = arith.constant 0 : index
    %c0_6 = arith.constant 0 : index
    %c1 = arith.constant 1 : index
    %c0_7 = arith.constant 0 : index
    %10 = vector.load %arg2[%c0_5, %c0_6, %c1, %c0_7] : memref<1x4x4x128xbf16, #tpu.memory_space<vmem>>, vector<1x2x2x128xbf16>
    %11 = vector.shape_cast %10 : vector<1x2x2x128xbf16> to vector<2x2x128xbf16>
    %12 = vector.extract_strided_slice %0 {offsets = [1, 0], sizes = [1, 128], strides = [1, 1]} : vector<9x128xf32> to vector<1x128xf32>
    %13 = arith.extf %11 : vector<2x2x128xbf16> to vector<2x2x128xf32>
    %14 = vector.shape_cast %12 : vector<1x128xf32> to vector<1x1x128xf32>
    %15 = vector.broadcast %14 : vector<1x1x128xf32> to vector<2x2x128xf32>
    %16 = arith.mulf %13, %15 : vector<2x2x128xf32>
    %17 = arith.addf %9, %16 : vector<2x2x128xf32>
    %c0_8 = arith.constant 0 : index
    %c0_9 = arith.constant 0 : index
    %c2 = arith.constant 2 : index
    %c0_10 = arith.constant 0 : index
    %18 = vector.load %arg2[%c0_8, %c0_9, %c2, %c0_10] : memref<1x4x4x128xbf16, #tpu.memory_space<vmem>>, vector<1x2x2x128xbf16>
    %19 = vector.shape_cast %18 : vector<1x2x2x128xbf16> to vector<2x2x128xbf16>
    %20 = vector.extract_strided_slice %0 {offsets = [2, 0], sizes = [1, 128], strides = [1, 1]} : vector<9x128xf32> to vector<1x128xf32>
    %21 = arith.extf %19 : vector<2x2x128xbf16> to vector<2x2x128xf32>
    %22 = vector.shape_cast %20 : vector<1x128xf32> to vector<1x1x128xf32>
    %23 = vector.broadcast %22 : vector<1x1x128xf32> to vector<2x2x128xf32>
    %24 = arith.mulf %21, %23 : vector<2x2x128xf32>
    %25 = arith.addf %17, %24 : vector<2x2x128xf32>
    %c0_11 = arith.constant 0 : index
    %c1_12 = arith.constant 1 : index
    %c0_13 = arith.constant 0 : index
    %c0_14 = arith.constant 0 : index
    %26 = vector.load %arg2[%c0_11, %c1_12, %c0_13, %c0_14] : memref<1x4x4x128xbf16, #tpu.memory_space<vmem>>, vector<1x2x2x128xbf16>
    %27 = vector.shape_cast %26 : vector<1x2x2x128xbf16> to vector<2x2x128xbf16>
    %28 = vector.extract_strided_slice %0 {offsets = [3, 0], sizes = [1, 128], strides = [1, 1]} : vector<9x128xf32> to vector<1x128xf32>
    %29 = arith.extf %27 : vector<2x2x128xbf16> to vector<2x2x128xf32>
    %30 = vector.shape_cast %28 : vector<1x128xf32> to vector<1x1x128xf32>
    %31 = vector.broadcast %30 : vector<1x1x128xf32> to vector<2x2x128xf32>
    %32 = arith.mulf %29, %31 : vector<2x2x128xf32>
    %33 = arith.addf %25, %32 : vector<2x2x128xf32>
    %c0_15 = arith.constant 0 : index
    %c1_16 = arith.constant 1 : index
    %c1_17 = arith.constant 1 : index
    %c0_18 = arith.constant 0 : index
    %34 = vector.load %arg2[%c0_15, %c1_16, %c1_17, %c0_18] : memref<1x4x4x128xbf16, #tpu.memory_space<vmem>>, vector<1x2x2x128xbf16>
    %35 = vector.shape_cast %34 : vector<1x2x2x128xbf16> to vector<2x2x128xbf16>
    %36 = vector.extract_strided_slice %0 {offsets = [4, 0], sizes = [1, 128], strides = [1, 1]} : vector<9x128xf32> to vector<1x128xf32>
    %37 = arith.extf %35 : vector<2x2x128xbf16> to vector<2x2x128xf32>
    %38 = vector.shape_cast %36 : vector<1x128xf32> to vector<1x1x128xf32>
    %39 = vector.broadcast %38 : vector<1x1x128xf32> to vector<2x2x128xf32>
    %40 = arith.mulf %37, %39 : vector<2x2x128xf32>
    %41 = arith.addf %33, %40 : vector<2x2x128xf32>
    %c0_19 = arith.constant 0 : index
    %c1_20 = arith.constant 1 : index
    %c2_21 = arith.constant 2 : index
    %c0_22 = arith.constant 0 : index
    %42 = vector.load %arg2[%c0_19, %c1_20, %c2_21, %c0_22] : memref<1x4x4x128xbf16, #tpu.memory_space<vmem>>, vector<1x2x2x128xbf16>
    %43 = vector.shape_cast %42 : vector<1x2x2x128xbf16> to vector<2x2x128xbf16>
    %44 = vector.extract_strided_slice %0 {offsets = [5, 0], sizes = [1, 128], strides = [1, 1]} : vector<9x128xf32> to vector<1x128xf32>
    %45 = arith.extf %43 : vector<2x2x128xbf16> to vector<2x2x128xf32>
    %46 = vector.shape_cast %44 : vector<1x128xf32> to vector<1x1x128xf32>
    %47 = vector.broadcast %46 : vector<1x1x128xf32> to vector<2x2x128xf32>
    %48 = arith.mulf %45, %47 : vector<2x2x128xf32>
    %49 = arith.addf %41, %48 : vector<2x2x128xf32>
    %c0_23 = arith.constant 0 : index
    %c2_24 = arith.constant 2 : index
    %c0_25 = arith.constant 0 : index
    %c0_26 = arith.constant 0 : index
    %50 = vector.load %arg2[%c0_23, %c2_24, %c0_25, %c0_26] : memref<1x4x4x128xbf16, #tpu.memory_space<vmem>>, vector<1x2x2x128xbf16>
    %51 = vector.shape_cast %50 : vector<1x2x2x128xbf16> to vector<2x2x128xbf16>
    %52 = vector.extract_strided_slice %0 {offsets = [6, 0], sizes = [1, 128], strides = [1, 1]} : vector<9x128xf32> to vector<1x128xf32>
    %53 = arith.extf %51 : vector<2x2x128xbf16> to vector<2x2x128xf32>
    %54 = vector.shape_cast %52 : vector<1x128xf32> to vector<1x1x128xf32>
    %55 = vector.broadcast %54 : vector<1x1x128xf32> to vector<2x2x128xf32>
    %56 = arith.mulf %53, %55 : vector<2x2x128xf32>
    %57 = arith.addf %49, %56 : vector<2x2x128xf32>
    %c0_27 = arith.constant 0 : index
    %c2_28 = arith.constant 2 : index
    %c1_29 = arith.constant 1 : index
    %c0_30 = arith.constant 0 : index
    %58 = vector.load %arg2[%c0_27, %c2_28, %c1_29, %c0_30] : memref<1x4x4x128xbf16, #tpu.memory_space<vmem>>, vector<1x2x2x128xbf16>
    %59 = vector.shape_cast %58 : vector<1x2x2x128xbf16> to vector<2x2x128xbf16>
    %60 = vector.extract_strided_slice %0 {offsets = [7, 0], sizes = [1, 128], strides = [1, 1]} : vector<9x128xf32> to vector<1x128xf32>
    %61 = arith.extf %59 : vector<2x2x128xbf16> to vector<2x2x128xf32>
    %62 = vector.shape_cast %60 : vector<1x128xf32> to vector<1x1x128xf32>
    %63 = vector.broadcast %62 : vector<1x1x128xf32> to vector<2x2x128xf32>
    %64 = arith.mulf %61, %63 : vector<2x2x128xf32>
    %65 = arith.addf %57, %64 : vector<2x2x128xf32>
    %c0_31 = arith.constant 0 : index
    %c2_32 = arith.constant 2 : index
    %c2_33 = arith.constant 2 : index
    %c0_34 = arith.constant 0 : index
    %66 = vector.load %arg2[%c0_31, %c2_32, %c2_33, %c0_34] : memref<1x4x4x128xbf16, #tpu.memory_space<vmem>>, vector<1x2x2x128xbf16>
    %67 = vector.shape_cast %66 : vector<1x2x2x128xbf16> to vector<2x2x128xbf16>
    %68 = vector.extract_strided_slice %0 {offsets = [8, 0], sizes = [1, 128], strides = [1, 1]} : vector<9x128xf32> to vector<1x128xf32>
    %69 = arith.extf %67 : vector<2x2x128xbf16> to vector<2x2x128xf32>
    %70 = vector.shape_cast %68 : vector<1x128xf32> to vector<1x1x128xf32>
    %71 = vector.broadcast %70 : vector<1x1x128xf32> to vector<2x2x128xf32>
    %72 = arith.mulf %69, %71 : vector<2x2x128xf32>
    %73 = arith.addf %65, %72 : vector<2x2x128xf32>
    %74 = vector.extract_strided_slice %73 {offsets = [0, 0, 0], sizes = [1, 2, 128], strides = [1, 1, 1]} : vector<2x2x128xf32> to vector<1x2x128xf32>
    %75 = vector.shape_cast %74 : vector<1x2x128xf32> to vector<2x128xf32>
    %76 = arith.truncf %75 : vector<2x128xf32> to vector<2x128xbf16>
    %c0_35 = arith.constant 0 : index
    %c0_36 = arith.constant 0 : index
    %77 = vector.load %arg7[%c0_35, %c0_36] : memref<4x128xbf16, #tpu.memory_space<vmem>>, vector<2x128xbf16>
    tpu.vector_store %arg7[%c0_35, %c0_36], %76 {strides = array<i32>} : memref<4x128xbf16, #tpu.memory_space<vmem>>, vector<2x128xbf16>,
    %78 = vector.extract_strided_slice %73 {offsets = [1, 0, 0], sizes = [1, 2, 128], strides = [1, 1, 1]} : vector<2x2x128xf32> to vector<1x2x128xf32>
    %79 = vector.shape_cast %78 : vector<1x2x128xf32> to vector<2x128xf32>
    %80 = arith.truncf %79 : vector<2x128xf32> to vector<2x128xbf16>
    %c2_37 = arith.constant 2 : index
    %c0_38 = arith.constant 0 : index
    %81 = vector.load %arg7[%c2_37, %c0_38] : memref<4x128xbf16, #tpu.memory_space<vmem>>, vector<2x128xbf16>
    tpu.vector_store %arg7[%c2_37, %c0_38], %80 {strides = array<i32>} : memref<4x128xbf16, #tpu.memory_space<vmem>>, vector<2x128xbf16>,
    %c0_39 = arith.constant 0 : index
    %c0_40 = arith.constant 0 : index
    %82 = vector.load %arg7[%c0_39, %c0_40] : memref<4x128xbf16, #tpu.memory_space<vmem>>, vector<4x128xbf16>
    %c0_41 = arith.constant 0 : index
    %c0_42 = arith.constant 0 : index
    %83 = vector.load %arg4[%c0_41, %c0_42] : memref<128x128xbf16, #tpu.memory_space<vmem>>, vector<128x128xbf16>
    %cst_43 = arith.constant dense<0.000000e+00> : vector<4x128xf32>
    %84 = tpu.matmul %82, %83, %cst_43 {dimension_numbers = #tpu.dot_dimension_numbers<[1], [0], [0], [1], [0, 0, 1, 1], [], []>} : vector<4x128xbf16>, vector<128x128xbf16>, vector<4x128xf32> -> vector<4x128xf32>
    %c0_44 = arith.constant 0 : index
    %c0_45 = arith.constant 0 : index
    %85 = vector.load %arg5[%c0_44, %c0_45] : memref<1x128xf32, #tpu.memory_space<vmem>>, vector<1x128xf32>
    %86 = vector.broadcast %85 : vector<1x128xf32> to vector<4x128xf32>
    %87 = arith.addf %84, %86 : vector<4x128xf32>
    %cst_46 = arith.constant 0.000000e+00 : f32
    %88 = vector.broadcast %cst_46 : f32 to vector<4x128xf32>
    %89 = arith.maximumf %87, %88 : vector<4x128xf32>
    %90 = arith.truncf %89 : vector<4x128xf32> to vector<4x128xbf16>
    %c0_47 = arith.constant 0 : index
    %c0_48 = arith.constant 0 : index
    %c0_49 = arith.constant 0 : index
    %91 = vector.load %arg6[%c0_47, %c0_48, %c0_49] : memref<1x4x128xbf16, #tpu.memory_space<vmem>>, vector<1x4x128xbf16>
    %92 = vector.shape_cast %91 : vector<1x4x128xbf16> to vector<4x128xbf16>
    %93 = vector.shape_cast %90 : vector<4x128xbf16> to vector<1x4x128xbf16>
    tpu.vector_store %arg6[%c0_47, %c0_48, %c0_49], %93 {strides = array<i32>} : memref<1x4x128xbf16, #tpu.memory_space<vmem>>, vector<1x4x128xbf16>,
    return
  }
  func.func @transform_0(%arg0: i32, %arg1: i32) -> (i32, i32, i32, i32) {
    %c0_i32 = arith.constant 0 : i32
    %c0_i32_0 = arith.constant 0 : i32
    %c0_i32_1 = arith.constant 0 : i32
    %c0_i32_2 = arith.constant 0 : i32
    return %arg0, %c0_i32, %c0_i32_0, %c0_i32_1 : i32, i32, i32, i32
  }
  func.func @transform_1(%arg0: i32, %arg1: i32) -> (i32, i32) {
    %c0_i32 = arith.constant 0 : i32
    %c0_i32_0 = arith.constant 0 : i32
    %c0_i32_1 = arith.constant 0 : i32
    return %c0_i32, %c0_i32_0 : i32, i32
  }
  func.func @transform_2(%arg0: i32, %arg1: i32) -> (i32, i32) {
    %c0_i32 = arith.constant 0 : i32
    %c0_i32_0 = arith.constant 0 : i32
    return %c0_i32, %arg1 : i32, i32
  }
  func.func @transform_3(%arg0: i32, %arg1: i32) -> (i32, i32) {
    %c0_i32 = arith.constant 0 : i32
    %c0_i32_0 = arith.constant 0 : i32
    return %c0_i32, %arg1 : i32, i32
  }
  func.func @transform_4(%arg0: i32, %arg1: i32) -> (i32, i32, i32) {
    %c0_i32 = arith.constant 0 : i32
    %c0_i32_0 = arith.constant 0 : i32
    return %arg0, %c0_i32, %arg1 : i32, i32, i32
  }
}

module attributes {stable_mosaic.version = 11 : i64} {
  func.func @_dsc_kernel(%arg0: i32, %arg1: i32, %arg2: memref<1x4x4x128xbf16, #tpu.memory_space<vmem>>, %arg3: memref<9x128xf32, #tpu.memory_space<vmem>>, %arg4: memref<128x128xbf16, #tpu.memory_space<vmem>>, %arg5: memref<1x128xf32, #tpu.memory_space<vmem>>, %arg6: memref<1x4x128xbf16, #tpu.memory_space<vmem>>, %arg7: memref<4x128xbf16, #tpu.memory_space<vmem>>) attributes {dimension_semantics = [#tpu.dimension_semantics<parallel>, #tpu.dimension_semantics<parallel>], iteration_bounds = array<i64: 2, 1>, scalar_prefetch = 0 : i64, scratch_operands = 1 : i64, tpu.core_type = #tpu.core_type<tc>, window_params = [{transform_indices = @transform_0, window_bounds = array<i64: 1, 4, 4, 128>}, {pipeline_mode = #tpu.pipeline_mode<synchronous>, transform_indices = @transform_1, window_bounds = array<i64: 9, 128>}, {transform_indices = @transform_2, window_bounds = array<i64: 128, 128>}, {transform_indices = @transform_3, window_bounds = array<i64: 1, 128>}, {transform_indices = @transform_4, window_bounds = array<i64: 1, 4, 128>}]} {
    %c0 = arith.constant 0 : index
    %c0_0 = arith.constant 0 : index
    %0 = vector.load %arg3[%c0, %c0_0] : memref<9x128xf32, #tpu.memory_space<vmem>>, vector<9x128xf32>
    %cst = arith.constant 0.000000e+00 : f32
    %1 = vector.broadcast %cst : f32 to vector<2x2x128xf32>
    %c0_1 = arith.constant 0 : index
    %c0_2 = arith.constant 0 : index
    %c0_3 = arith.constant 0 : index
    %c0_4 = arith.constant 0 : index
    %2 = vector.load %arg2[%c0_1, %c0_2, %c0_3, %c0_4] : memref<1x4x4x128xbf16, #tpu.memory_space<vmem>>, vector<1x2x2x128xbf16>
    %3 = vector.shape_cast %2 : vector<1x2x2x128xbf16> to vector<2x2x128xbf16>
    %4 = vector.extract_strided_slice %0 {offsets = [0, 0], sizes = [1, 128], strides = [1, 1]} : vector<9x128xf32> to vector<1x128xf32>
    %5 = arith.extf %3 : vector<2x2x128xbf16> to vector<2x2x128xf32>
    %6 = vector.shape_cast %4 : vector<1x128xf32> to vector<1x1x128xf32>
    %7 = vector.broadcast %6 : vector<1x1x128xf32> to vector<2x2x128xf32>
    %8 = arith.mulf %5, %7 : vector<2x2x128xf32>
    %9 = arith.addf %1, %8 : vector<2x2x128xf32>
    %c0_5 = arith.constant 0 : index
    %c0_6 = arith.constant 0 : index
    %c1 = arith.constant 1 : index
    %c0_7 = arith.constant 0 : index
    %10 = vector.load %arg2[%c0_5, %c0_6, %c1, %c0_7] : memref<1x4x4x128xbf16, #tpu.memory_space<vmem>>, vector<1x2x2x128xbf16>
    %11 = vector.shape_cast %10 : vector<1x2x2x128xbf16> to vector<2x2x128xbf16>
    %12 = vector.extract_strided_slice %0 {offsets = [1, 0], sizes = [1, 128], strides = [1, 1]} : vector<9x128xf32> to vector<1x128xf32>
    %13 = arith.extf %11 : vector<2x2x128xbf16> to vector<2x2x128xf32>
    %14 = vector.shape_cast %12 : vector<1x128xf32> to vector<1x1x128xf32>
    %15 = vector.broadcast %14 : vector<1x1x128xf32> to vector<2x2x128xf32>
    %16 = arith.mulf %13, %15 : vector<2x2x128xf32>
    %17 = arith.addf %9, %16 : vector<2x2x128xf32>
    %c0_8 = arith.constant 0 : index
    %c0_9 = arith.constant 0 : index
    %c2 = arith.constant 2 : index
    %c0_10 = arith.constant 0 : index
    %18 = vector.load %arg2[%c0_8, %c0_9, %c2, %c0_10] : memref<1x4x4x128xbf16, #tpu.memory_space<vmem>>, vector<1x2x2x128xbf16>
    %19 = vector.shape_cast %18 : vector<1x2x2x128xbf16> to vector<2x2x128xbf16>
    %20 = vector.extract_strided_slice %0 {offsets = [2, 0], sizes = [1, 128], strides = [1, 1]} : vector<9x128xf32> to vector<1x128xf32>
    %21 = arith.extf %19 : vector<2x2x128xbf16> to vector<2x2x128xf32>
    %22 = vector.shape_cast %20 : vector<1x128xf32> to vector<1x1x128xf32>
    %23 = vector.broadcast %22 : vector<1x1x128xf32> to vector<2x2x128xf32>
    %24 = arith.mulf %21, %23 : vector<2x2x128xf32>
    %25 = arith.addf %17, %24 : vector<2x2x128xf32>
    %c0_11 = arith.constant 0 : index
    %c1_12 = arith.constant 1 : index
    %c0_13 = arith.constant 0 : index
    %c0_14 = arith.constant 0 : index
    %26 = vector.load %arg2[%c0_11, %c1_12, %c0_13, %c0_14] : memref<1x4x4x128xbf16, #tpu.memory_space<vmem>>, vector<1x2x2x128xbf16>
    %27 = vector.shape_cast %26 : vector<1x2x2x128xbf16> to vector<2x2x128xbf16>
    %28 = vector.extract_strided_slice %0 {offsets = [3, 0], sizes = [1, 128], strides = [1, 1]} : vector<9x128xf32> to vector<1x128xf32>
    %29 = arith.extf %27 : vector<2x2x128xbf16> to vector<2x2x128xf32>
    %30 = vector.shape_cast %28 : vector<1x128xf32> to vector<1x1x128xf32>
    %31 = vector.broadcast %30 : vector<1x1x128xf32> to vector<2x2x128xf32>
    %32 = arith.mulf %29, %31 : vector<2x2x128xf32>
    %33 = arith.addf %25, %32 : vector<2x2x128xf32>
    %c0_15 = arith.constant 0 : index
    %c1_16 = arith.constant 1 : index
    %c1_17 = arith.constant 1 : index
    %c0_18 = arith.constant 0 : index
    %34 = vector.load %arg2[%c0_15, %c1_16, %c1_17, %c0_18] : memref<1x4x4x128xbf16, #tpu.memory_space<vmem>>, vector<1x2x2x128xbf16>
    %35 = vector.shape_cast %34 : vector<1x2x2x128xbf16> to vector<2x2x128xbf16>
    %36 = vector.extract_strided_slice %0 {offsets = [4, 0], sizes = [1, 128], strides = [1, 1]} : vector<9x128xf32> to vector<1x128xf32>
    %37 = arith.extf %35 : vector<2x2x128xbf16> to vector<2x2x128xf32>
    %38 = vector.shape_cast %36 : vector<1x128xf32> to vector<1x1x128xf32>
    %39 = vector.broadcast %38 : vector<1x1x128xf32> to vector<2x2x128xf32>
    %40 = arith.mulf %37, %39 : vector<2x2x128xf32>
    %41 = arith.addf %33, %40 : vector<2x2x128xf32>
    %c0_19 = arith.constant 0 : index
    %c1_20 = arith.constant 1 : index
    %c2_21 = arith.constant 2 : index
    %c0_22 = arith.constant 0 : index
    %42 = vector.load %arg2[%c0_19, %c1_20, %c2_21, %c0_22] : memref<1x4x4x128xbf16, #tpu.memory_space<vmem>>, vector<1x2x2x128xbf16>
    %43 = vector.shape_cast %42 : vector<1x2x2x128xbf16> to vector<2x2x128xbf16>
    %44 = vector.extract_strided_slice %0 {offsets = [5, 0], sizes = [1, 128], strides = [1, 1]} : vector<9x128xf32> to vector<1x128xf32>
    %45 = arith.extf %43 : vector<2x2x128xbf16> to vector<2x2x128xf32>
    %46 = vector.shape_cast %44 : vector<1x128xf32> to vector<1x1x128xf32>
    %47 = vector.broadcast %46 : vector<1x1x128xf32> to vector<2x2x128xf32>
    %48 = arith.mulf %45, %47 : vector<2x2x128xf32>
    %49 = arith.addf %41, %48 : vector<2x2x128xf32>
    %c0_23 = arith.constant 0 : index
    %c2_24 = arith.constant 2 : index
    %c0_25 = arith.constant 0 : index
    %c0_26 = arith.constant 0 : index
    %50 = vector.load %arg2[%c0_23, %c2_24, %c0_25, %c0_26] : memref<1x4x4x128xbf16, #tpu.memory_space<vmem>>, vector<1x2x2x128xbf16>
    %51 = vector.shape_cast %50 : vector<1x2x2x128xbf16> to vector<2x2x128xbf16>
    %52 = vector.extract_strided_slice %0 {offsets = [6, 0], sizes = [1, 128], strides = [1, 1]} : vector<9x128xf32> to vector<1x128xf32>
    %53 = arith.extf %51 : vector<2x2x128xbf16> to vector<2x2x128xf32>
    %54 = vector.shape_cast %52 : vector<1x128xf32> to vector<1x1x128xf32>
    %55 = vector.broadcast %54 : vector<1x1x128xf32> to vector<2x2x128xf32>
    %56 = arith.mulf %53, %55 : vector<2x2x128xf32>
    %57 = arith.addf %49, %56 : vector<2x2x128xf32>
    %c0_27 = arith.constant 0 : index
    %c2_28 = arith.constant 2 : index
    %c1_29 = arith.constant 1 : index
    %c0_30 = arith.constant 0 : index
    %58 = vector.load %arg2[%c0_27, %c2_28, %c1_29, %c0_30] : memref<1x4x4x128xbf16, #tpu.memory_space<vmem>>, vector<1x2x2x128xbf16>
    %59 = vector.shape_cast %58 : vector<1x2x2x128xbf16> to vector<2x2x128xbf16>
    %60 = vector.extract_strided_slice %0 {offsets = [7, 0], sizes = [1, 128], strides = [1, 1]} : vector<9x128xf32> to vector<1x128xf32>
    %61 = arith.extf %59 : vector<2x2x128xbf16> to vector<2x2x128xf32>
    %62 = vector.shape_cast %60 : vector<1x128xf32> to vector<1x1x128xf32>
    %63 = vector.broadcast %62 : vector<1x1x128xf32> to vector<2x2x128xf32>
    %64 = arith.mulf %61, %63 : vector<2x2x128xf32>
    %65 = arith.addf %57, %64 : vector<2x2x128xf32>
    %c0_31 = arith.constant 0 : index
    %c2_32 = arith.constant 2 : index
    %c2_33 = arith.constant 2 : index
    %c0_34 = arith.constant 0 : index
    %66 = vector.load %arg2[%c0_31, %c2_32, %c2_33, %c0_34] : memref<1x4x4x128xbf16, #tpu.memory_space<vmem>>, vector<1x2x2x128xbf16>
    %67 = vector.shape_cast %66 : vector<1x2x2x128xbf16> to vector<2x2x128xbf16>
    %68 = vector.extract_strided_slice %0 {offsets = [8, 0], sizes = [1, 128], strides = [1, 1]} : vector<9x128xf32> to vector<1x128xf32>
    %69 = arith.extf %67 : vector<2x2x128xbf16> to vector<2x2x128xf32>
    %70 = vector.shape_cast %68 : vector<1x128xf32> to vector<1x1x128xf32>
    %71 = vector.broadcast %70 : vector<1x1x128xf32> to vector<2x2x128xf32>
    %72 = arith.mulf %69, %71 : vector<2x2x128xf32>
    %73 = arith.addf %65, %72 : vector<2x2x128xf32>
    %74 = vector.extract_strided_slice %73 {offsets = [0, 0, 0], sizes = [1, 2, 128], strides = [1, 1, 1]} : vector<2x2x128xf32> to vector<1x2x128xf32>
    %75 = vector.shape_cast %74 : vector<1x2x128xf32> to vector<2x128xf32>
    %76 = arith.truncf %75 : vector<2x128xf32> to vector<2x128xbf16>
    %c0_35 = arith.constant 0 : index
    %c0_36 = arith.constant 0 : index
    %77 = vector.load %arg7[%c0_35, %c0_36] : memref<4x128xbf16, #tpu.memory_space<vmem>>, vector<2x128xbf16>
    tpu.vector_store %arg7[%c0_35, %c0_36], %76 {strides = array<i32>} : memref<4x128xbf16, #tpu.memory_space<vmem>>, vector<2x128xbf16>,
    %78 = vector.extract_strided_slice %73 {offsets = [1, 0, 0], sizes = [1, 2, 128], strides = [1, 1, 1]} : vector<2x2x128xf32> to vector<1x2x128xf32>
    %79 = vector.shape_cast %78 : vector<1x2x128xf32> to vector<2x128xf32>
    %80 = arith.truncf %79 : vector<2x128xf32> to vector<2x128xbf16>
    %c2_37 = arith.constant 2 : index
    %c0_38 = arith.constant 0 : index
    %81 = vector.load %arg7[%c2_37, %c0_38] : memref<4x128xbf16, #tpu.memory_space<vmem>>, vector<2x128xbf16>
    tpu.vector_store %arg7[%c2_37, %c0_38], %80 {strides = array<i32>} : memref<4x128xbf16, #tpu.memory_space<vmem>>, vector<2x128xbf16>,
    %c0_39 = arith.constant 0 : index
    %c0_40 = arith.constant 0 : index
    %82 = vector.load %arg7[%c0_39, %c0_40] : memref<4x128xbf16, #tpu.memory_space<vmem>>, vector<4x128xbf16>
    %c0_41 = arith.constant 0 : index
    %c0_42 = arith.constant 0 : index
    %83 = vector.load %arg4[%c0_41, %c0_42] : memref<128x128xbf16, #tpu.memory_space<vmem>>, vector<128x128xbf16>
    %cst_43 = arith.constant dense<0.000000e+00> : vector<4x128xf32>
    %84 = tpu.matmul %82, %83, %cst_43 {dimension_numbers = #tpu.dot_dimension_numbers<[1], [0], [0], [1], [0, 0, 1, 1], [], []>} : vector<4x128xbf16>, vector<128x128xbf16>, vector<4x128xf32> -> vector<4x128xf32>
    %c0_44 = arith.constant 0 : index
    %c0_45 = arith.constant 0 : index
    %85 = vector.load %arg5[%c0_44, %c0_45] : memref<1x128xf32, #tpu.memory_space<vmem>>, vector<1x128xf32>
    %86 = vector.broadcast %85 : vector<1x128xf32> to vector<4x128xf32>
    %87 = arith.addf %84, %86 : vector<4x128xf32>
    %88 = arith.truncf %87 : vector<4x128xf32> to vector<4x128xbf16>
    %c0_46 = arith.constant 0 : index
    %c0_47 = arith.constant 0 : index
    %c0_48 = arith.constant 0 : index
    %89 = vector.load %arg6[%c0_46, %c0_47, %c0_48] : memref<1x4x128xbf16, #tpu.memory_space<vmem>>, vector<1x4x128xbf16>
    %90 = vector.shape_cast %89 : vector<1x4x128xbf16> to vector<4x128xbf16>
    %91 = vector.shape_cast %88 : vector<4x128xbf16> to vector<1x4x128xbf16>
    tpu.vector_store %arg6[%c0_46, %c0_47, %c0_48], %91 {strides = array<i32>} : memref<1x4x128xbf16, #tpu.memory_space<vmem>>, vector<1x4x128xbf16>,
    return
  }
  func.func @transform_0(%arg0: i32, %arg1: i32) -> (i32, i32, i32, i32) {
    %c0_i32 = arith.constant 0 : i32
    %c0_i32_0 = arith.constant 0 : i32
    %c0_i32_1 = arith.constant 0 : i32
    %c0_i32_2 = arith.constant 0 : i32
    return %arg0, %c0_i32, %c0_i32_0, %c0_i32_1 : i32, i32, i32, i32
  }
  func.func @transform_1(%arg0: i32, %arg1: i32) -> (i32, i32) {
    %c0_i32 = arith.constant 0 : i32
    %c0_i32_0 = arith.constant 0 : i32
    %c0_i32_1 = arith.constant 0 : i32
    return %c0_i32, %c0_i32_0 : i32, i32
  }
  func.func @transform_2(%arg0: i32, %arg1: i32) -> (i32, i32) {
    %c0_i32 = arith.constant 0 : i32
    %c0_i32_0 = arith.constant 0 : i32
    return %c0_i32, %arg1 : i32, i32
  }
  func.func @transform_3(%arg0: i32, %arg1: i32) -> (i32, i32) {
    %c0_i32 = arith.constant 0 : i32
    %c0_i32_0 = arith.constant 0 : i32
    return %c0_i32, %arg1 : i32, i32
  }
  func.func @transform_4(%arg0: i32, %arg1: i32) -> (i32, i32, i32) {
    %c0_i32 = arith.constant 0 : i32
    %c0_i32_0 = arith.constant 0 : i32
    return %arg0, %c0_i32, %arg1 : i32, i32, i32
  }
}

module attributes {stable_mosaic.version = 11 : i64} {
  func.func @_tail_kernel(%arg0: i32, %arg1: memref<1x4x2x256xbf16, #tpu.memory_space<vmem>>, %arg2: memref<1x2x1x256xbf16, #tpu.memory_space<vmem>>, %arg3: memref<128x128xbf16, #tpu.memory_space<vmem>>, %arg4: memref<1x128xf32, #tpu.memory_space<vmem>>, %arg5: memref<1x1x128xbf16, #tpu.memory_space<vmem>>, %arg6: memref<1x128xbf16, #tpu.memory_space<vmem>>, %arg7: memref<1x128xbf16, #tpu.memory_space<vmem>>) attributes {dimension_semantics = [#tpu.dimension_semantics<parallel>], iteration_bounds = array<i64: 2>, scalar_prefetch = 0 : i64, scratch_operands = 2 : i64, tpu.core_type = #tpu.core_type<tc>, window_params = [{transform_indices = @transform_0, window_bounds = array<i64: 1, 4, 2, 256>}, {transform_indices = @transform_1, window_bounds = array<i64: 1, 2, 1, 256>}, {pipeline_mode = #tpu.pipeline_mode<synchronous>, transform_indices = @transform_2, window_bounds = array<i64: 128, 128>}, {pipeline_mode = #tpu.pipeline_mode<synchronous>, transform_indices = @transform_3, window_bounds = array<i64: 1, 128>}, {transform_indices = @transform_4, window_bounds = array<i64: 1, 1, 128>}]} {
    %c0 = arith.constant 0 : index
    %c0_0 = arith.constant 0 : index
    %c0_1 = arith.constant 0 : index
    %c0_2 = arith.constant 0 : index
    %0 = vector.load %arg1[%c0, %c0_0, %c0_1, %c0_2] : memref<1x4x2x256xbf16, #tpu.memory_space<vmem>>, vector<1x4x2x256xbf16>
    %1 = vector.shape_cast %0 : vector<1x4x2x256xbf16> to vector<4x2x256xbf16>
    %2 = vector.extract_strided_slice %1 {offsets = [0, 0, 0], sizes = [4, 2, 128], strides = [1, 1, 1]} : vector<4x2x256xbf16> to vector<4x2x128xbf16>
    %3 = vector.extract_strided_slice %1 {offsets = [0, 0, 128], sizes = [4, 2, 128], strides = [1, 1, 1]} : vector<4x2x256xbf16> to vector<4x2x128xbf16>
    %4 = vector.extract_strided_slice %2 {offsets = [0, 0, 0], sizes = [4, 1, 128], strides = [1, 1, 1]} : vector<4x2x128xbf16> to vector<4x1x128xbf16>
    %5 = vector.extract_strided_slice %3 {offsets = [0, 0, 0], sizes = [4, 1, 128], strides = [1, 1, 1]} : vector<4x2x128xbf16> to vector<4x1x128xbf16>
    %6 = vector.extract_strided_slice %2 {offsets = [0, 1, 0], sizes = [4, 1, 128], strides = [1, 1, 1]} : vector<4x2x128xbf16> to vector<4x1x128xbf16>
    %7 = arith.maximumf %4, %5 : vector<4x1x128xbf16>
    %8 = arith.maximumf %7, %6 : vector<4x1x128xbf16>
    %9 = vector.extract_strided_slice %8 {offsets = [0, 0, 0], sizes = [1, 1, 128], strides = [1, 1, 1]} : vector<4x1x128xbf16> to vector<1x1x128xbf16>
    %10 = vector.shape_cast %9 : vector<1x1x128xbf16> to vector<1x128xbf16>
    %11 = vector.extract_strided_slice %8 {offsets = [1, 0, 0], sizes = [1, 1, 128], strides = [1, 1, 1]} : vector<4x1x128xbf16> to vector<1x1x128xbf16>
    %12 = vector.shape_cast %11 : vector<1x1x128xbf16> to vector<1x128xbf16>
    %13 = arith.maximumf %10, %12 : vector<1x128xbf16>
    %14 = vector.extract_strided_slice %8 {offsets = [2, 0, 0], sizes = [1, 1, 128], strides = [1, 1, 1]} : vector<4x1x128xbf16> to vector<1x1x128xbf16>
    %15 = vector.shape_cast %14 : vector<1x1x128xbf16> to vector<1x128xbf16>
    %16 = arith.maximumf %13, %15 : vector<1x128xbf16>
    %c0_3 = arith.constant 0 : index
    %c0_4 = arith.constant 0 : index
    %17 = vector.load %arg6[%c0_3, %c0_4] : memref<1x128xbf16, #tpu.memory_space<vmem>>, vector<1x128xbf16>
    tpu.vector_store %arg6[%c0_3, %c0_4], %16 {strides = array<i32>} : memref<1x128xbf16, #tpu.memory_space<vmem>>, vector<1x128xbf16>,
    %c0_5 = arith.constant 0 : index
    %c0_6 = arith.constant 0 : index
    %c0_7 = arith.constant 0 : index
    %c0_8 = arith.constant 0 : index
    %18 = vector.load %arg2[%c0_5, %c0_6, %c0_7, %c0_8] : memref<1x2x1x256xbf16, #tpu.memory_space<vmem>>, vector<1x1x1x128xbf16>
    %19 = vector.shape_cast %18 : vector<1x1x1x128xbf16> to vector<1x128xbf16>
    %c0_9 = arith.constant 0 : index
    %c0_10 = arith.constant 0 : index
    %20 = vector.load %arg7[%c0_9, %c0_10] : memref<1x128xbf16, #tpu.memory_space<vmem>>, vector<1x128xbf16>
    tpu.vector_store %arg7[%c0_9, %c0_10], %19 {strides = array<i32>} : memref<1x128xbf16, #tpu.memory_space<vmem>>, vector<1x128xbf16>,
    %c0_11 = arith.constant 0 : index
    %c0_12 = arith.constant 0 : index
    %21 = vector.load %arg7[%c0_11, %c0_12] : memref<1x128xbf16, #tpu.memory_space<vmem>>, vector<1x128xbf16>
    %c0_13 = arith.constant 0 : index
    %c0_14 = arith.constant 0 : index
    %22 = vector.load %arg3[%c0_13, %c0_14] : memref<128x128xbf16, #tpu.memory_space<vmem>>, vector<128x128xbf16>
    %cst = arith.constant dense<0.000000e+00> : vector<1x128xf32>
    %23 = tpu.matmul %21, %22, %cst {dimension_numbers = #tpu.dot_dimension_numbers<[1], [0], [0], [1], [0, 0, 1, 1], [], []>} : vector<1x128xbf16>, vector<128x128xbf16>, vector<1x128xf32> -> vector<1x128xf32>
    %c0_15 = arith.constant 0 : index
    %c0_16 = arith.constant 0 : index
    %24 = vector.load %arg4[%c0_15, %c0_16] : memref<1x128xf32, #tpu.memory_space<vmem>>, vector<1x128xf32>
    %25 = arith.addf %23, %24 : vector<1x128xf32>
    %c0_17 = arith.constant 0 : index
    %c0_18 = arith.constant 0 : index
    %26 = vector.load %arg6[%c0_17, %c0_18] : memref<1x128xbf16, #tpu.memory_space<vmem>>, vector<1x128xbf16>
    %27 = arith.extf %26 : vector<1x128xbf16> to vector<1x128xf32>
    %28 = arith.addf %27, %25 : vector<1x128xf32>
    %29 = arith.truncf %28 : vector<1x128xf32> to vector<1x128xbf16>
    %c0_19 = arith.constant 0 : index
    %c0_20 = arith.constant 0 : index
    %c0_21 = arith.constant 0 : index
    %30 = vector.load %arg5[%c0_19, %c0_20, %c0_21] : memref<1x1x128xbf16, #tpu.memory_space<vmem>>, vector<1x1x128xbf16>
    %31 = vector.shape_cast %30 : vector<1x1x128xbf16> to vector<1x128xbf16>
    %32 = vector.shape_cast %29 : vector<1x128xbf16> to vector<1x1x128xbf16>
    tpu.vector_store %arg5[%c0_19, %c0_20, %c0_21], %32 {strides = array<i32>} : memref<1x1x128xbf16, #tpu.memory_space<vmem>>, vector<1x1x128xbf16>,
    return
  }
  func.func @transform_0(%arg0: i32) -> (i32, i32, i32, i32) {
    %c0_i32 = arith.constant 0 : i32
    %c0_i32_0 = arith.constant 0 : i32
    %c0_i32_1 = arith.constant 0 : i32
    %c0_i32_2 = arith.constant 0 : i32
    return %arg0, %c0_i32, %c0_i32_0, %c0_i32_1 : i32, i32, i32, i32
  }
  func.func @transform_1(%arg0: i32) -> (i32, i32, i32, i32) {
    %c0_i32 = arith.constant 0 : i32
    %c0_i32_0 = arith.constant 0 : i32
    %c0_i32_1 = arith.constant 0 : i32
    %c0_i32_2 = arith.constant 0 : i32
    return %arg0, %c0_i32, %c0_i32_0, %c0_i32_1 : i32, i32, i32, i32
  }
  func.func @transform_2(%arg0: i32) -> (i32, i32) {
    %c0_i32 = arith.constant 0 : i32
    %c0_i32_0 = arith.constant 0 : i32
    %c0_i32_1 = arith.constant 0 : i32
    return %c0_i32, %c0_i32_0 : i32, i32
  }
  func.func @transform_3(%arg0: i32) -> (i32, i32) {
    %c0_i32 = arith.constant 0 : i32
    %c0_i32_0 = arith.constant 0 : i32
    %c0_i32_1 = arith.constant 0 : i32
    return %c0_i32, %c0_i32_0 : i32, i32
  }
  func.func @transform_4(%arg0: i32) -> (i32, i32, i32) {
    %c0_i32 = arith.constant 0 : i32
    %c0_i32_0 = arith.constant 0 : i32
    %c0_i32_1 = arith.constant 0 : i32
    return %arg0, %c0_i32, %c0_i32_0 : i32, i32, i32
  }
}

</mosaic_0001>

<llo_original>
// kernel: entry_flow_forward.11
$region0: #{entry_flow_forward.11}
  #allocation0 [shape = 'u32[]', space=smem, size = 0x4, offset = 0x4, fixed_abs, tag = 'smem constant byte address 0x4 - core index']
  #allocation1 [shape = 'u32[144,128]{1,0:T(1,128)}', space=vmem, size = 0x12000, scoped, tag = 'internal scratch']
  #allocation2 [shape = 'f32[64,128]{1,0:T(8,128)}', space=vmem, size = 0x8000, scoped, tag = 'scratch operand']
  %s0 = inlined_call_operand.vmem [shape: bf16[128,128], index: 0, kind: input, shape index: {}]
  %s1 = inlined_call_operand.vmem [shape: bf16[128,128], index: 1, kind: input, shape index: {}]
  %s2 = inlined_call_operand.vmem [shape: f32[1,128], index: 2, kind: input, shape index: {}]
  %s3 = inlined_call_operand.vmem [shape: bf16[128,128], index: 3, kind: output, shape index: {}]
  %s4 = sld [smem:[#allocation0]]
  $region53: #{entry_flow_forward.11} parent=0
    _
  %s6 = ssub.s32 1, %s4
  %s7 = scalar_select 0, %s6, %s4
  loop: start=0, step=1, limit=4
  $region2: #{entry_flow_forward.11} parent=0 // loop_pre_header
    _
  $region3: #{entry_flow_forward.11} parent=0 // loop_header
    %s9 = sphi 0, %s13
    %p10 = scmp.ge.s32.totalorder %s9, 4
    %s16 = sphi 0, %s35
    %s17 = sphi 0, %s31
    %s18 = sphi 0, %s27
    %s19 = sphi 0, %s16
    %s20 = sphi 0, %s17
    %s21 = sphi 0, %s18
    %s22 = sphi 0, %s19
    %s23 = sphi 0, %s20
    %s24 = sphi 0, %s21
    %s40 = sphi 0, %s42
    %s43 = sphi 0, %s40
    %s44 = sphi 0, %s43
    %s60 = sphi 0, %s44
    %s68 = sphi 0, %s70
    %s71 = sphi 0, %s68
    %s72 = sphi 0, %s71
    %s88 = sphi 0, %s72
    %s94 = sphi 0, %s96
    %s97 = sphi 0, %s94
    %s98 = sphi 0, %s97
    %s114 = sphi 0, %s98
    %s122 = sphi 0, %s124
    %s125 = sphi 0, %s122
    %s126 = sphi 0, %s125
    %s142 = sphi 0, %s126
  $region4: #{entry_flow_forward.11} parent=0 // loop_header_branch
    %12 = sbr.rel (%p10) target = $region8
  $region5: #{entry_flow_forward.11} parent=0 // loop_body
    %s14 = ssub.s32 %s9, 1
    %s15 = ssub.s32 %s9, 2
    %s25 = sadd.s32 1, %s18
    %p26 = scmp.ge.s32.totalorder %s25, 1
    %s27 = scalar_select %p26, 0, %s25
    %s28 = sadd.s32 1, %s17
    %s29 = scalar_select %p26, %s28, %s17
    %p30 = scmp.ge.s32.totalorder %s29, 1
    %s31 = scalar_select %p30, 0, %s29
    %s32 = sadd.s32 1, %s16
    %s33 = scalar_select %p30, %s32, %s16
    %p34 = scmp.ge.s32.totalorder %s33, 2
    %s35 = scalar_select %p34, 0, %s33
    %s36 = ssub.s32 %s16, %s35
    %s37 = ssub.s32 %s18, %s27
    %s38 = sor.u32 %s36, %s37
    %p39 = scmp.eq.s32.totalorder %s38, 0
    %s41 = sadd.s32 %s40, 1
    %s42 = scalar_select %p39, %s40, %s41
    %p45 = pneg %p39
    %p46 = scmp.eq.s32.totalorder %s9, 1
    %p47 = por %p45, %p46
    %p48 = scmp.ne.s32.totalorder %s40, %s43
    %p49 = scmp.eq.s32.totalorder %s9, 0
    %p50 = por %p48, %p49
    %p51 = scmp.ne.s32.totalorder %s40, %s43
    %p52 = scmp.eq.s32.totalorder %s14, 1
    %p53 = por %p51, %p52
    %p54 = scmp.ne.s32.totalorder %s43, %s44
    %p55 = scmp.eq.s32.totalorder %s14, 0
    %p56 = por %p54, %p55
    %p57 = scmp.ne.s32.totalorder %s43, %s44
    %p58 = scmp.eq.s32.totalorder %s15, 1
    %p59 = por %p57, %p58
    %p61 = scmp.ne.s32.totalorder %s44, %s60
    %p62 = scmp.eq.s32.totalorder %s15, 0
    %p63 = por %p61, %p62
    %s64 = ssub.s32 %s18, %s27
    %s65 = ssub.s32 %s17, %s31
    %s66 = sor.u32 %s64, %s65
    %p67 = scmp.eq.s32.totalorder %s66, 0
    %s69 = sadd.s32 %s68, 1
    %s70 = scalar_select %p67, %s68, %s69
    %p73 = pneg %p67
    %p74 = scmp.eq.s32.totalorder %s9, 1
    %p75 = por %p73, %p74
    %p76 = scmp.ne.s32.totalorder %s68, %s71
    %p77 = scmp.eq.s32.totalorder %s9, 0
    %p78 = por %p76, %p77
    %p79 = scmp.ne.s32.totalorder %s68, %s71
    %p80 = scmp.eq.s32.totalorder %s14, 1
    %p81 = por %p79, %p80
    %p82 = scmp.ne.s32.totalorder %s71, %s72
    %p83 = scmp.eq.s32.totalorder %s14, 0
    %p84 = por %p82, %p83
    %p85 = scmp.ne.s32.totalorder %s71, %s72
    %p86 = scmp.eq.s32.totalorder %s15, 1
    %p87 = por %p85, %p86
    %p89 = scmp.ne.s32.totalorder %s72, %s88
    %p90 = scmp.eq.s32.totalorder %s15, 0
    %p91 = por %p89, %p90
    %s92 = ssub.s32 %s17, %s31
    %p93 = scmp.eq.s32.totalorder %s92, 0
    %s95 = sadd.s32 %s94, 1
    %s96 = scalar_select %p93, %s94, %s95
    %p99 = pneg %p93
    %p100 = scmp.eq.s32.totalorder %s9, 1
    %p101 = por %p99, %p100
    %p102 = scmp.ne.s32.totalorder %s94, %s97
    %p103 = scmp.eq.s32.totalorder %s9, 0
    %p104 = por %p102, %p103
    %p105 = scmp.ne.s32.totalorder %s94, %s97
    %p106 = scmp.eq.s32.totalorder %s14, 1
    %p107 = por %p105, %p106
    %p108 = scmp.ne.s32.totalorder %s97, %s98
    %p109 = scmp.eq.s32.totalorder %s14, 0
    %p110 = por %p108, %p109
    %p111 = scmp.ne.s32.totalorder %s97, %s98
    %p112 = scmp.eq.s32.totalorder %s15, 1
    %p113 = por %p111, %p112
    %p115 = scmp.ne.s32.totalorder %s98, %s114
    %p116 = scmp.eq.s32.totalorder %s15, 0
    %p117 = por %p115, %p116
    %s118 = ssub.s32 %s16, %s35
    %s119 = ssub.s32 %s17, %s31
    %s120 = sor.u32 %s118, %s119
    %p121 = scmp.eq.s32.totalorder %s120, 0
    %s123 = sadd.s32 %s122, 1
    %s124 = scalar_select %p121, %s122, %s123
    %p127 = pneg %p121
    %p128 = scmp.eq.s32.totalorder %s9, 1
    %p129 = por %p127, %p128
    %p130 = scmp.ne.s32.totalorder %s122, %s125
    %p131 = scmp.eq.s32.totalorder %s9, 0
    %p132 = por %p130, %p131
    %p133 = scmp.ne.s32.totalorder %s122, %s125
    %p134 = scmp.eq.s32.totalorder %s14, 1
    %p135 = por %p133, %p134
    %p136 = scmp.ne.s32.totalorder %s125, %s126
    %p137 = scmp.eq.s32.totalorder %s14, 0
    %p138 = por %p136, %p137
    %p139 = scmp.ne.s32.totalorder %s125, %s126
    %p140 = scmp.eq.s32.totalorder %s15, 1
    %p141 = por %p139, %p140
    %p143 = scmp.ne.s32.totalorder %s126, %s142
    %p144 = scmp.eq.s32.totalorder %s15, 0
    %p145 = por %p143, %p144
    %p146 = scmp.le.s32.totalorder 1, %s9
    %p147 = scmp.lt.s32.totalorder %s9, 3
    %p148 = pnand %p146, %p147
    %p149 = pneg %p148
    // Predicated region
    $region9: #{entry_flow_forward.11} parent=5 // pred_check
      _
    $region10: #{entry_flow_forward.11} parent=5 // pred_check_branch
      %151 = sbr.rel (%p148) target = $region12
    $region11: #{entry_flow_forward.11} parent=5 // pred_region
      %s152 = ssub.s32 %s9, 1
      // Predicated region
      $region13: #{entry_flow_forward.11} parent=11 // pred_check
        %p153 = pneg %p84
      $region14: #{entry_flow_forward.11} parent=11 // pred_check_branch
        %155 = sbr.rel (%p153) target = $region16
      $region15: #{entry_flow_forward.11} parent=11 // pred_region
        %s156 = smul.u32 16, %s21
        %p157 = scmp.lt.s32.totalorder %s156, 15
        %s158 = scalar_select %p157, %s156, 15
        %p159 = scmp.lt.s32.totalorder %s20, 0
        %s160 = scalar_select %p159, %s20, 0
        %s161 = sadd.s32 %s160, %s158
        %s162 = smul.addr %s161, 4
        %s163 = scalar_lea.vmem %s1, %s162
        %s164 = smul.u32 16, %s21
      $region16: #{entry_flow_forward.11} parent=11 // pred_fallthru
        _
      // Predicated region
      $region17: #{entry_flow_forward.11} parent=11 // pred_check
        %p165 = pneg %p110
      $region18: #{entry_flow_forward.11} parent=11 // pred_check_branch
        %167 = sbr.rel (%p165) target = $region20
      $region19: #{entry_flow_forward.11} parent=11 // pred_region
        %p168 = scmp.lt.s32.totalorder %s20, 0
        %s169 = scalar_select %p168, %s20, 0
        %s170 = scalar_lea.vmem %s2, %s169
      $region20: #{entry_flow_forward.11} parent=11 // pred_fallthru
        _
    $region12: #{entry_flow_forward.11} parent=5 // pred_fallthru
      _
    %p171 = scmp.lt.s32.totalorder %s9, 2
    // Predicated region
    $region21: #{entry_flow_forward.11} parent=5 // pred_check
      %p172 = pneg %p171
    $region22: #{entry_flow_forward.11} parent=5 // pred_check_branch
      %174 = sbr.rel (%p172) target = $region24
    $region23: #{entry_flow_forward.11} parent=5 // pred_region
      // Predicated region
      $region25: #{entry_flow_forward.11} parent=23 // pred_check
        %p175 = pneg %p50
      $region26: #{entry_flow_forward.11} parent=23 // pred_check_branch
        %177 = sbr.rel (%p175) target = $region28
      $region27: #{entry_flow_forward.11} parent=23 // pred_region
        %s178 = smul.u32 8, %s16
        %p179 = scmp.lt.s32.totalorder %s178, 15
        %s180 = scalar_select %p179, %s178, 15
        %p181 = scmp.lt.s32.totalorder %s18, 0
        %s182 = scalar_select %p181, %s18, 0
        %s183 = sadd.s32 %s182, %s180
        %s184 = smul.addr %s183, 4
        %s185 = scalar_lea.vmem %s0, %s184
        %s186 = smul.u32 8, %s16
      $region28: #{entry_flow_forward.11} parent=23 // pred_fallthru
        _
    $region24: #{entry_flow_forward.11} parent=5 // pred_fallthru
      _
    %p187 = scmp.le.s32.totalorder 1, %s9
    %p188 = scmp.lt.s32.totalorder %s9, 3
    %p189 = pnand %p187, %p188
    %p190 = pneg %p189
    // Predicated region
    $region29: #{entry_flow_forward.11} parent=5 // pred_check
      _
    $region30: #{entry_flow_forward.11} parent=5 // pred_check_branch
      %192 = sbr.rel (%p189) target = $region32
    $region31: #{entry_flow_forward.11} parent=5 // pred_region
      %s193 = ssub.s32 %s9, 1
      %s194 = smul.u32 8, %s19
      %p195 = scmp.lt.s32.totalorder %s194, 15
      %s196 = scalar_select %p195, %s194, 15
      %p197 = scmp.lt.s32.totalorder %s21, 0
      %s198 = scalar_select %p197, %s21, 0
      %s199 = sadd.s32 %s198, %s196
      %s200 = smul.addr %s199, 4
      %s201 = scalar_lea.vmem %s0, %s200
      %p202 = pneg %p56
      %p203 = pneg %p53
      %s204 = smul.u32 16, %s21
      %p205 = scmp.lt.s32.totalorder %s204, 15
      %s206 = scalar_select %p205, %s204, 15
      %p207 = scmp.lt.s32.totalorder %s20, 0
      %s208 = scalar_select %p207, %s20, 0
      %s209 = sadd.s32 %s208, %s206
      %s210 = smul.addr %s209, 4
      %s211 = scalar_lea.vmem %s1, %s210
      %p212 = pneg %p84
      %p213 = pneg %p81
      %p214 = scmp.lt.s32.totalorder %s20, 0
      %s215 = scalar_select %p214, %s20, 0
      %s216 = scalar_lea.vmem %s2, %s215
      %p217 = pneg %p110
      %p218 = pneg %p107
      %p219 = pneg %p138
      %p220 = pneg %p135
      %s221 = smul.u32 8, %s19
      %p222 = scmp.lt.s32.totalorder %s221, 15
      %s223 = scalar_select %p222, %s221, 15
      %p224 = scmp.lt.s32.totalorder %s20, 0
      %s225 = scalar_select %p224, %s20, 0
      %s226 = sadd.s32 %s225, %s223
      %s227 = smul.addr %s226, 4
      %s228 = scalar_lea.vmem %s3, %s227
      %s229 = smul.u32 8, %s19
      %p230 = scmp.lt.s32.totalorder %s229, 15
      %s231 = scalar_select %p230, %s229, 15
      %p232 = scmp.lt.s32.totalorder %s21, 0
      %s233 = scalar_select %p232, %s21, 0
      %s234 = sadd.s32 %s233, %s231
      %s235 = smul.addr %s234, 4
      %s236 = scalar_lea.vmem %s0, %s235
      %s237 = smul.u32 8, %s19
      %s238 = smul.u32 16, %s21
      %p239 = scmp.lt.s32.totalorder %s238, 15
      %s240 = scalar_select %p239, %s238, 15
      %p241 = scmp.lt.s32.totalorder %s20, 0
      %s242 = scalar_select %p241, %s20, 0
      %s243 = sadd.s32 %s242, %s240
      %s244 = smul.addr %s243, 4
      %s245 = scalar_lea.vmem %s1, %s244
      %s246 = smul.u32 16, %s21
      %p247 = scmp.lt.s32.totalorder %s20, 0
      %s248 = scalar_select %p247, %s20, 0
      %s249 = scalar_lea.vmem %s2, %s248
      %s250 = smul.u32 8, %s19
      %p251 = scmp.lt.s32.totalorder %s250, 15
      %s252 = scalar_select %p251, %s250, 15
      %p253 = scmp.lt.s32.totalorder %s20, 0
      %s254 = scalar_select %p253, %s20, 0
      %s255 = sadd.s32 %s254, %s252
      %s256 = smul.addr %s255, 4
      %s257 = scalar_lea.vmem %s3, %s256
      %s258 = smul.u32 8, %s19
      %p260 = scmp.eq.s32.totalorder %s21, 0
      // Predicated region
      $region33: #{entry_flow_forward.11} parent=31 // pred_check
        %p261 = pneg %p260
      $region34: #{entry_flow_forward.11} parent=31 // pred_check_branch
        %263 = sbr.rel (%p261) target = $region36
      $region35: #{entry_flow_forward.11} parent=31 // pred_region
        %264 = vst [vmem:[#allocation2] sm:$0xff] 0.0
        %265 = vst [vmem:[#allocation2 + $0x8] sm:$0xff] 0.0
        %266 = vst [vmem:[#allocation2 + $0x10] sm:$0xff] 0.0
        %267 = vst [vmem:[#allocation2 + $0x18] sm:$0xff] 0.0
        %268 = vst [vmem:[#allocation2 + $0x20] sm:$0xff] 0.0
        %269 = vst [vmem:[#allocation2 + $0x28] sm:$0xff] 0.0
        %270 = vst [vmem:[#allocation2 + $0x30] sm:$0xff] 0.0
        %271 = vst [vmem:[#allocation2 + $0x38] sm:$0xff] 0.0
      $region36: #{entry_flow_forward.11} parent=31 // pred_fallthru
        _
      %v272 = vld [vmem:[#allocation2] sm:$0xff]
      %v273 = vld [vmem:[#allocation2 + $0x8] sm:$0xff]
      %v274 = vld [vmem:[#allocation2 + $0x10] sm:$0xff]
      %v275 = vld [vmem:[#allocation2 + $0x18] sm:$0xff]
      %v276 = vld [vmem:[#allocation2 + $0x20] sm:$0xff]
      %v277 = vld [vmem:[#allocation2 + $0x28] sm:$0xff]
      %v278 = vld [vmem:[#allocation2 + $0x30] sm:$0xff]
      %v279 = vld [vmem:[#allocation2 + $0x38] sm:$0xff]
      %v280 = vld [vmem:[%s236] sm:$0xf]
      %v281 = vld [vmem:[%s236 + $0x4] sm:$0xf]
      %v282 = vld [vmem:[%s236 + $0x8] sm:$0xf]
      %v283 = vld [vmem:[%s236 + $0xc] sm:$0xf]
      %v284 = vld [vmem:[%s236 + $0x10] sm:$0xf]
      %v285 = vld [vmem:[%s236 + $0x14] sm:$0xf]
      %v286 = vld [vmem:[%s236 + $0x18] sm:$0xf]
      %v287 = vld [vmem:[%s236 + $0x1c] sm:$0xf]
      %v288 = vld [vmem:[%s245] sm:$0xf]
      %v289 = vld [vmem:[%s245 + $0x4] sm:$0xf]
      %v290 = vld [vmem:[%s245 + $0x8] sm:$0xf]
      %v291 = vld [vmem:[%s245 + $0xc] sm:$0xf]
      %v292 = vld [vmem:[%s245 + $0x10] sm:$0xf]
      %v293 = vld [vmem:[%s245 + $0x14] sm:$0xf]
      %v294 = vld [vmem:[%s245 + $0x18] sm:$0xf]
      %v295 = vld [vmem:[%s245 + $0x1c] sm:$0xf]
      %v296 = vld [vmem:[%s245 + $0x20] sm:$0xf]
      %v297 = vld [vmem:[%s245 + $0x24] sm:$0xf]
      %v298 = vld [vmem:[%s245 + $0x28] sm:$0xf]
      %v299 = vld [vmem:[%s245 + $0x2c] sm:$0xf]
      %v300 = vld [vmem:[%s245 + $0x30] sm:$0xf]
      %v301 = vld [vmem:[%s245 + $0x34] sm:$0xf]
      %v302 = vld [vmem:[%s245 + $0x38] sm:$0xf]
      %v303 = vld [vmem:[%s245 + $0x3c] sm:$0xf]
      %v312 = vunpack.c.l.b16 %v280
      %v313 = vunpack.c.l.b16 %v281
      %v314 = vunpack.c.l.b16 %v282
      %v315 = vunpack.c.l.b16 %v283
      %v316 = vunpack.c.l.b16 %v284
      %v317 = vunpack.c.l.b16 %v285
      %v318 = vunpack.c.l.b16 %v286
      %v319 = vunpack.c.l.b16 %v287
      %v320 = vpack.c.b16 %v313, %v312
      %v321 = vpack.c.b16 %v315, %v314
      %v322 = vpack.c.b16 %v317, %v316
      %v323 = vpack.c.b16 %v319, %v318
      %v344 = vunpack.c.l.b16 %v288
      %v345 = vunpack.c.l.b16 %v289
      %v346 = vunpack.c.l.b16 %v290
      %v347 = vunpack.c.l.b16 %v291
      %v348 = vunpack.c.l.b16 %v292
      %v349 = vunpack.c.l.b16 %v293
      %v350 = vunpack.c.l.b16 %v294
      %v351 = vunpack.c.l.b16 %v295
      %v352 = vunpack.c.l.b16 %v296
      %v353 = vunpack.c.l.b16 %v297
      %v354 = vunpack.c.l.b16 %v298
      %v355 = vunpack.c.l.b16 %v299
      %v356 = vunpack.c.l.b16 %v300
      %v357 = vunpack.c.l.b16 %v301
      %v358 = vunpack.c.l.b16 %v302
      %v359 = vunpack.c.l.b16 %v303
      %v360 = vpack.c.b16 %v345, %v344
      %v361 = vpack.c.b16 %v347, %v346
      %v362 = vpack.c.b16 %v349, %v348
      %v363 = vpack.c.b16 %v351, %v350
      %v364 = vpack.c.b16 %v353, %v352
      %v365 = vpack.c.b16 %v355, %v354
      %v366 = vpack.c.b16 %v357, %v356
      %v367 = vpack.c.b16 %v359, %v358
      %376 = vmatprep.subr.bf16.mxu0 0
      %377 = vmatpush1.bf16.msra.mxu0 %v367
      %378 = vmatprep.subr.bf16.mxu0 0
      %379 = vmatpush1.bf16.msra.mxu0 %v366
      %380 = vmatprep.subr.bf16.mxu0 0
      %381 = vmatpush1.bf16.msra.mxu0 %v365
      %382 = vmatprep.subr.bf16.mxu0 0
      %383 = vmatpush1.bf16.msra.mxu0 %v364
      %384 = vmatprep.subr.bf16.mxu0 0
      %385 = vmatpush1.bf16.msra.mxu0 %v363
      %386 = vmatprep.subr.bf16.mxu0 0
      %387 = vmatpush1.bf16.msra.mxu0 %v362
      %388 = vmatprep.subr.bf16.mxu0 0
      %389 = vmatpush1.bf16.msra.mxu0 %v361
      %390 = vmatprep.subr.bf16.mxu0 0
      %391 = vmatpush1.bf16.msra.mxu0 %v360
      %392 = vmatprep.subr.bf16.mxu0 0
      %393 = vmatpush2.bf16.msra.mxu0 0
      %394 = vmatprep.subr.bf16.mxu0 0
      %395 = vmatpush2.bf16.msra.mxu0 0
      %396 = vmatprep.subr.bf16.mxu0 0
      %397 = vmatpush2.bf16.msra.mxu0 0
      %398 = vmatprep.subr.bf16.mxu0 0
      %399 = vmatpush2.bf16.msra.mxu0 0
      %400 = vmatprep.subr.bf16.mxu0 0
      %401 = vmatpush2.bf16.msra.mxu0 0
      %402 = vmatprep.subr.bf16.mxu0 0
      %403 = vmatpush2.bf16.msra.mxu0 0
      %404 = vmatprep.subr.bf16.mxu0 0
      %405 = vmatpush2.bf16.msra.mxu0 0
      %406 = vmatprep.subr.bf16.mxu0 0
      %407 = vmatpush2.bf16.msra.mxu0 0
      %408 = vmatprep.mubr.bf16.mxu0 0
      %409 = vmatmul.mubr.bf16.gmra.mxu0 %v320
      %v410 = vpop.f32.mrf.mxu0
      %v411 = vadd.f32 0.0, %v410
      %v412 = vpop.f32.mrf.mxu0
      %v413 = vpop.f32.mrf.mxu0
      %v414 = vadd.f32 0.0, %v413
      %v415 = vpop.f32.mrf.mxu0
      %416 = vmatprep.mubr.bf16.mxu0 0
      %417 = vmatmul.mubr.bf16.gmra.mxu0 %v321
      %v418 = vpop.f32.mrf.mxu0
      %v419 = vadd.f32 0.0, %v418
      %v420 = vpop.f32.mrf.mxu0
      %v421 = vpop.f32.mrf.mxu0
      %v422 = vadd.f32 0.0, %v421
      %v423 = vpop.f32.mrf.mxu0
      %424 = vmatprep.mubr.bf16.mxu0 0
      %425 = vmatmul.mubr.bf16.gmra.mxu0 %v322
      %v426 = vpop.f32.mrf.mxu0
      %v427 = vadd.f32 0.0, %v426
      %v428 = vpop.f32.mrf.mxu0
      %v429 = vpop.f32.mrf.mxu0
      %v430 = vadd.f32 0.0, %v429
      %v431 = vpop.f32.mrf.mxu0
      %432 = vmatprep.mubr.bf16.mxu0 0
      %433 = vmatmul.mubr.bf16.gmra.mxu0 %v323
      %v434 = vpop.f32.mrf.mxu0
      %v435 = vadd.f32 0.0, %v434
      %v436 = vpop.f32.mrf.mxu0
      %v437 = vpop.f32.mrf.mxu0
      %v438 = vadd.f32 0.0, %v437
      %v439 = vpop.f32.mrf.mxu0
      %440 = vdwg.mxu0
      %v441 = vadd.f32 %v272, %v411
      %v442 = vadd.f32 %v273, %v414
      %v443 = vadd.f32 %v274, %v419
      %v444 = vadd.f32 %v275, %v422
      %v445 = vadd.f32 %v276, %v427
      %v446 = vadd.f32 %v277, %v430
      %v447 = vadd.f32 %v278, %v435
      %v448 = vadd.f32 %v279, %v438
      %449 = vst [vmem:[#allocation2] sm:$0xff] %v441
      %450 = vst [vmem:[#allocation2 + $0x8] sm:$0xff] %v442
      %451 = vst [vmem:[#allocation2 + $0x10] sm:$0xff] %v443
      %452 = vst [vmem:[#allocation2 + $0x18] sm:$0xff] %v444
      %453 = vst [vmem:[#allocation2 + $0x20] sm:$0xff] %v445
      %454 = vst [vmem:[#allocation2 + $0x28] sm:$0xff] %v446
      %455 = vst [vmem:[#allocation2 + $0x30] sm:$0xff] %v447
      %456 = vst [vmem:[#allocation2 + $0x38] sm:$0xff] %v448
      // Predicated region
      $region37: #{entry_flow_forward.11} parent=31 // pred_check
        %p457 = pneg %p260
      $region38: #{entry_flow_forward.11} parent=31 // pred_check_branch
        %459 = sbr.rel (%p457) target = $region40
      $region39: #{entry_flow_forward.11} parent=31 // pred_region
        %v460 = vld [vmem:[#allocation2] sm:$0xff]
        %v461 = vld [vmem:[#allocation2 + $0x8] sm:$0xff]
        %v462 = vld [vmem:[#allocation2 + $0x10] sm:$0xff]
        %v463 = vld [vmem:[#allocation2 + $0x18] sm:$0xff]
        %v464 = vld [vmem:[#allocation2 + $0x20] sm:$0xff]
        %v465 = vld [vmem:[#allocation2 + $0x28] sm:$0xff]
        %v466 = vld [vmem:[#allocation2 + $0x30] sm:$0xff]
        %v467 = vld [vmem:[#allocation2 + $0x38] sm:$0xff]
        %v468 = vld [vmem:[%s249] sm:$0x1]
        %v470 = vlaneseq
        %v471 = vshrl.u32 %v470, 7
        %v472 = vsub.s32 0, %v471
        %v473 = vrot.slane %v468, %v472
        %v475 = vadd.f32 %v460, %v473
        %v476 = vadd.f32 %v461, %v473
        %v477 = vadd.f32 %v462, %v473
        %v478 = vadd.f32 %v463, %v473
        %v479 = vadd.f32 %v464, %v473
        %v480 = vadd.f32 %v465, %v473
        %v481 = vadd.f32 %v466, %v473
        %v482 = vadd.f32 %v467, %v473
        %v483 = vmax.f32 %v475, 0.0
        %v484 = vmax.f32 %v476, 0.0
        %v485 = vmax.f32 %v477, 0.0
        %v486 = vmax.f32 %v478, 0.0
        %v487 = vmax.f32 %v479, 0.0
        %v488 = vmax.f32 %v480, 0.0
        %v489 = vmax.f32 %v481, 0.0
        %v490 = vmax.f32 %v482, 0.0
        %v491 = vpack.c.bf16 %v484, %v483
        %v492 = vpack.c.bf16 %v486, %v485
        %v493 = vpack.c.bf16 %v488, %v487
        %v494 = vpack.c.bf16 %v490, %v489
        %v499 = vunpack.c.l.b16 %v491
        %v500 = vunpack.c.h.b16 %v491
        %v501 = vunpack.c.l.b16 %v492
        %v502 = vunpack.c.h.b16 %v492
        %v503 = vunpack.c.l.b16 %v493
        %v504 = vunpack.c.h.b16 %v493
        %v505 = vunpack.c.l.b16 %v494
        %v506 = vunpack.c.h.b16 %v494
        %v507 = vpack.c.b16 %v499, %v499
        %v508 = vpack.c.b16 %v500, %v500
        %v509 = vpack.c.b16 %v501, %v501
        %v510 = vpack.c.b16 %v502, %v502
        %v511 = vpack.c.b16 %v503, %v503
        %v512 = vpack.c.b16 %v504, %v504
        %v513 = vpack.c.b16 %v505, %v505
        %v514 = vpack.c.b16 %v506, %v506
        %523 = vst [vmem:[%s257] sm:$0xf] %v507
        %524 = vst [vmem:[%s257 + $0x4] sm:$0xf] %v508
        %525 = vst [vmem:[%s257 + $0x8] sm:$0xf] %v509
        %526 = vst [vmem:[%s257 + $0xc] sm:$0xf] %v510
        %527 = vst [vmem:[%s257 + $0x10] sm:$0xf] %v511
        %528 = vst [vmem:[%s257 + $0x14] sm:$0xf] %v512
        %529 = vst [vmem:[%s257 + $0x18] sm:$0xf] %v513
        %530 = vst [vmem:[%s257 + $0x1c] sm:$0xf] %v514
      $region40: #{entry_flow_forward.11} parent=31 // pred_fallthru
        _
      %s531 = smul.u32 8, %s19
      %p532 = scmp.lt.s32.totalorder %s531, 15
      %s533 = scalar_select %p532, %s531, 15
      %p534 = scmp.lt.s32.totalorder %s20, 0
      %s535 = scalar_select %p534, %s20, 0
      %s536 = sadd.s32 %s535, %s533
      %s537 = smul.addr %s536, 4
      %s538 = scalar_lea.vmem %s3, %s537
      // Predicated region
      $region41: #{entry_flow_forward.11} parent=31 // pred_check
        %p539 = pneg %p135
      $region42: #{entry_flow_forward.11} parent=31 // pred_check_branch
        %541 = sbr.rel (%p539) target = $region44
      $region43: #{entry_flow_forward.11} parent=31 // pred_region
        %s542 = smul.u32 8, %s19
      $region44: #{entry_flow_forward.11} parent=31 // pred_fallthru
        _
    $region32: #{entry_flow_forward.11} parent=5 // pred_fallthru
      _
    %p543 = scmp.le.s32.totalorder 2, %s9
    // Predicated region
    $region45: #{entry_flow_forward.11} parent=5 // pred_check
      %p544 = pneg %p543
    $region46: #{entry_flow_forward.11} parent=5 // pred_check_branch
      %546 = sbr.rel (%p544) target = $region48
    $region47: #{entry_flow_forward.11} parent=5 // pred_region
      %s547 = ssub.s32 %s9, 2
      // Predicated region
      $region49: #{entry_flow_forward.11} parent=47 // pred_check
        %p548 = pneg %p141
      $region50: #{entry_flow_forward.11} parent=47 // pred_check_branch
        %550 = sbr.rel (%p548) target = $region52
      $region51: #{entry_flow_forward.11} parent=47 // pred_region
        %s551 = smul.u32 8, %s22
        %p552 = scmp.lt.s32.totalorder %s551, 15
        %s553 = scalar_select %p552, %s551, 15
        %p554 = scmp.lt.s32.totalorder %s23, 0
        %s555 = scalar_select %p554, %s23, 0
        %s556 = sadd.s32 %s555, %s553
        %s557 = smul.addr %s556, 4
        %s558 = scalar_lea.vmem %s3, %s557
      $region52: #{entry_flow_forward.11} parent=47 // pred_fallthru
        _
    $region48: #{entry_flow_forward.11} parent=5 // pred_fallthru
      _
  $region6: #{entry_flow_forward.11} parent=0 // loop_footer
    %s13 = sadd.s32 1, %s9
  $region7: #{entry_flow_forward.11} parent=0 // loop_footer_branch
    %8 = sbr.rel target = $region3
  $region8: #{entry_flow_forward.11} parent=0 // loop_exit
    _

// kernel: entry_flow_forward.12
$region0: #{entry_flow_forward.12}
  #allocation0 [shape = 'u32[]', space=smem, size = 0x4, offset = 0x4, fixed_abs, tag = 'smem constant byte address 0x4 - core index']
  #allocation1 [shape = 'u32[144,128]{1,0:T(1,128)}', space=vmem, size = 0x12000, scoped, tag = 'internal scratch']
  #allocation2 [shape = 'f32[64,128]{1,0:T(8,128)}', space=vmem, size = 0x8000, scoped, tag = 'scratch operand']
  %s0 = inlined_call_operand.vmem [shape: bf16[128,1152], index: 0, kind: input, shape index: {}]
  %s1 = inlined_call_operand.vmem [shape: bf16[1152,128], index: 1, kind: input, shape index: {}]
  %s2 = inlined_call_operand.vmem [shape: f32[1,128], index: 2, kind: input, shape index: {}]
  %s3 = inlined_call_operand.vmem [shape: bf16[128,128], index: 3, kind: output, shape index: {}]
  %s4 = sld [smem:[#allocation0]]
  $region79: #{entry_flow_forward.12} parent=0
    _
  %s6 = ssub.s32 1, %s4
  %s7 = scalar_select 0, %s6, %s4
  $region1: #{entry_flow_forward.12} parent=0
    #allocation3 [shape = 'u8[98304]{0}', space=vmem, size = 0x18000, scoped, tag = 'input window, operand 0']
    loop: start=0, step=1, limit=8
    $region2: #{entry_flow_forward.12} parent=1 // loop_pre_header
      _
    $region3: #{entry_flow_forward.12} parent=1 // loop_header
      %s9 = sphi 0, %s13
      %p10 = scmp.ge.s32.totalorder %s9, 8
      %s16 = sphi 0, %s35
      %s17 = sphi 0, %s31
      %s18 = sphi 0, %s27
      %s19 = sphi 0, %s16
      %s20 = sphi 0, %s17
      %s21 = sphi 0, %s18
      %s22 = sphi 0, %s19
      %s23 = sphi 0, %s20
      %s24 = sphi 0, %s21
      %s40 = sphi 0, %s42
      %s43 = sphi 0, %s40
      %s44 = sphi 0, %s43
      %s60 = sphi 0, %s44
      %s68 = sphi 0, %s70
      %s71 = sphi 0, %s68
      %s72 = sphi 0, %s71
      %s88 = sphi 0, %s72
      %s94 = sphi 0, %s96
      %s97 = sphi 0, %s94
      %s98 = sphi 0, %s97
      %s114 = sphi 0, %s98
      %s122 = sphi 0, %s124
      %s125 = sphi 0, %s122
      %s126 = sphi 0, %s125
      %s142 = sphi 0, %s126
    $region4: #{entry_flow_forward.12} parent=1 // loop_header_branch
      %12 = sbr.rel (%p10) target = $region8
    $region5: #{entry_flow_forward.12} parent=1 // loop_body
      %s14 = ssub.s32 %s9, 1
      %s15 = ssub.s32 %s9, 2
      %s25 = sadd.s32 1, %s18
      %p26 = scmp.ge.s32.totalorder %s25, 3
      %s27 = scalar_select %p26, 0, %s25
      %s28 = sadd.s32 1, %s17
      %s29 = scalar_select %p26, %s28, %s17
      %p30 = scmp.ge.s32.totalorder %s29, 1
      %s31 = scalar_select %p30, 0, %s29
      %s32 = sadd.s32 1, %s16
      %s33 = scalar_select %p30, %s32, %s16
      %p34 = scmp.ge.s32.totalorder %s33, 2
      %s35 = scalar_select %p34, 0, %s33
      %s36 = ssub.s32 %s16, %s35
      %s37 = ssub.s32 %s18, %s27
      %s38 = sor.u32 %s36, %s37
      %p39 = scmp.eq.s32.totalorder %s38, 0
      %s41 = sadd.s32 %s40, 1
      %s42 = scalar_select %p39, %s40, %s41
      %p45 = pneg %p39
      %p46 = scmp.eq.s32.totalorder %s9, 5
      %p47 = por %p45, %p46
      %p48 = scmp.ne.s32.totalorder %s40, %s43
      %p49 = scmp.eq.s32.totalorder %s9, 0
      %p50 = por %p48, %p49
      %p51 = scmp.ne.s32.totalorder %s40, %s43
      %p52 = scmp.eq.s32.totalorder %s14, 5
      %p53 = por %p51, %p52
      %p54 = scmp.ne.s32.totalorder %s43, %s44
      %p55 = scmp.eq.s32.totalorder %s14, 0
      %p56 = por %p54, %p55
      %p57 = scmp.ne.s32.totalorder %s43, %s44
      %p58 = scmp.eq.s32.totalorder %s15, 5
      %p59 = por %p57, %p58
      %p61 = scmp.ne.s32.totalorder %s44, %s60
      %p62 = scmp.eq.s32.totalorder %s15, 0
      %p63 = por %p61, %p62
      %s64 = ssub.s32 %s18, %s27
      %s65 = ssub.s32 %s17, %s31
      %s66 = sor.u32 %s64, %s65
      %p67 = scmp.eq.s32.totalorder %s66, 0
      %s69 = sadd.s32 %s68, 1
      %s70 = scalar_select %p67, %s68, %s69
      %p73 = pneg %p67
      %p74 = scmp.eq.s32.totalorder %s9, 5
      %p75 = por %p73, %p74
      %p76 = scmp.ne.s32.totalorder %s68, %s71
      %p77 = scmp.eq.s32.totalorder %s9, 0
      %p78 = por %p76, %p77
      %p79 = scmp.ne.s32.totalorder %s68, %s71
      %p80 = scmp.eq.s32.totalorder %s14, 5
      %p81 = por %p79, %p80
      %p82 = scmp.ne.s32.totalorder %s71, %s72
      %p83 = scmp.eq.s32.totalorder %s14, 0
      %p84 = por %p82, %p83
      %p85 = scmp.ne.s32.totalorder %s71, %s72
      %p86 = scmp.eq.s32.totalorder %s15, 5
      %p87 = por %p85, %p86
      %p89 = scmp.ne.s32.totalorder %s72, %s88
      %p90 = scmp.eq.s32.totalorder %s15, 0
      %p91 = por %p89, %p90
      %s92 = ssub.s32 %s17, %s31
      %p93 = scmp.eq.s32.totalorder %s92, 0
      %s95 = sadd.s32 %s94, 1
      %s96 = scalar_select %p93, %s94, %s95
      %p99 = pneg %p93
      %p100 = scmp.eq.s32.totalorder %s9, 5
      %p101 = por %p99, %p100
      %p102 = scmp.ne.s32.totalorder %s94, %s97
      %p103 = scmp.eq.s32.totalorder %s9, 0
      %p104 = por %p102, %p103
      %p105 = scmp.ne.s32.totalorder %s94, %s97
      %p106 = scmp.eq.s32.totalorder %s14, 5
      %p107 = por %p105, %p106
      %p108 = scmp.ne.s32.totalorder %s97, %s98
      %p109 = scmp.eq.s32.totalorder %s14, 0
      %p110 = por %p108, %p109
      %p111 = scmp.ne.s32.totalorder %s97, %s98
      %p112 = scmp.eq.s32.totalorder %s15, 5
      %p113 = por %p111, %p112
      %p115 = scmp.ne.s32.totalorder %s98, %s114
      %p116 = scmp.eq.s32.totalorder %s15, 0
      %p117 = por %p115, %p116
      %s118 = ssub.s32 %s16, %s35
      %s119 = ssub.s32 %s17, %s31
      %s120 = sor.u32 %s118, %s119
      %p121 = scmp.eq.s32.totalorder %s120, 0
      %s123 = sadd.s32 %s122, 1
      %s124 = scalar_select %p121, %s122, %s123
      %p127 = pneg %p121
      %p128 = scmp.eq.s32.totalorder %s9, 5
      %p129 = por %p127, %p128
      %p130 = scmp.ne.s32.totalorder %s122, %s125
      %p131 = scmp.eq.s32.totalorder %s9, 0
      %p132 = por %p130, %p131
      %p133 = scmp.ne.s32.totalorder %s122, %s125
      %p134 = scmp.eq.s32.totalorder %s14, 5
      %p135 = por %p133, %p134
      %p136 = scmp.ne.s32.totalorder %s125, %s126
      %p137 = scmp.eq.s32.totalorder %s14, 0
      %p138 = por %p136, %p137
      %p139 = scmp.ne.s32.totalorder %s125, %s126
      %p140 = scmp.eq.s32.totalorder %s15, 5
      %p141 = por %p139, %p140
      %p143 = scmp.ne.s32.totalorder %s126, %s142
      %p144 = scmp.eq.s32.totalorder %s15, 0
      %p145 = por %p143, %p144
      %p146 = scmp.le.s32.totalorder 1, %s9
      %p147 = scmp.lt.s32.totalorder %s9, 7
      %p148 = pnand %p146, %p147
      %p149 = pneg %p148
      // Predicated region
      $region9: #{entry_flow_forward.12} parent=5 // pred_check
        _
      $region10: #{entry_flow_forward.12} parent=5 // pred_check_branch
        %151 = sbr.rel (%p148) target = $region12
      $region11: #{entry_flow_forward.12} parent=5 // pred_region
        %s152 = ssub.s32 %s9, 1
        // Predicated region
        $region13: #{entry_flow_forward.12} parent=11 // pred_check
          %p153 = pneg %p110
        $region14: #{entry_flow_forward.12} parent=11 // pred_check_branch
          %155 = sbr.rel (%p153) target = $region16
        $region15: #{entry_flow_forward.12} parent=11 // pred_region
          %p156 = scmp.lt.s32.totalorder %s20, 0
          %s157 = scalar_select %p156, %s20, 0
          %s158 = scalar_lea.vmem %s2, %s157
        $region16: #{entry_flow_forward.12} parent=11 // pred_fallthru
          _
      $region12: #{entry_flow_forward.12} parent=5 // pred_fallthru
        _
      %p159 = scmp.lt.s32.totalorder %s9, 6
      // Predicated region
      $region17: #{entry_flow_forward.12} parent=5 // pred_check
        %p160 = pneg %p159
      $region18: #{entry_flow_forward.12} parent=5 // pred_check_branch
        %162 = sbr.rel (%p160) target = $region20
      $region19: #{entry_flow_forward.12} parent=5 // pred_region
        // Predicated region
        $region21: #{entry_flow_forward.12} parent=19 // pred_check
          %p163 = pneg %p50
        $region22: #{entry_flow_forward.12} parent=19 // pred_check_branch
          %165 = sbr.rel (%p163) target = $region24
        $region23: #{entry_flow_forward.12} parent=19 // pred_region
          %s166 = sand.u32 %s40, 1
          %s167 = sand.u32 %s40, 1
          %s168 = smul.addr %s167, 96
          %s169 = scalar_lea.vmem [#allocation3], %s168
          %s170 = smul.u32 8, %s16
          %s171 = smul.u32 3, %s18
          %s172 = smul.addr %s170, 9
          %s173 = sadd.s32 %s171, %s172
          %s174 = smul.addr %s173, 4
          %s175 = scalar_lea.vmem %s0, %s174
          // Predicated region
          $region25: #{entry_flow_forward.12} parent=23 // pred_check
            _
          $region26: #{entry_flow_forward.12} parent=23 // pred_check_branch
            %177 = sbr.rel (0) target = $region28
          $region27: #{entry_flow_forward.12} parent=23 // pred_region
            // Predicated region
            $region29: #{entry_flow_forward.12} parent=27 // pred_check
              _
            $region30: #{entry_flow_forward.12} parent=27 // pred_check_branch
              %179 = sbr.rel (0) target = $region32
            $region31: #{entry_flow_forward.12} parent=27 // pred_region
              %s180 = scalar_lea.vmem %s175, 8
              %s181 = scalar_lea.vmem %s169, 8 [#allocation3]
              loop: start=0, step=1, limit=1
              $region33: #{entry_flow_forward.12} parent=31 // loop_pre_header
                _
              $region34: #{entry_flow_forward.12} parent=31 // loop_header
                %s183 = sphi 0, %s187
                %p184 = scmp.ge.s32.totalorder %s183, 1
                %s188 = sphi %s175, %s175
                %s189 = sphi %s169, %s169
              $region35: #{entry_flow_forward.12} parent=31 // loop_header_branch
                %186 = sbr.rel (%p184) target = $region39
              $region36: #{entry_flow_forward.12} parent=31 // loop_body
                %v190 = vld [vmem:[%s188] sm:$0xff]
                %191 = vst [vmem:[%s189] sm:$0xff] %v190
                %v192 = vld [vmem:[%s188 + $0x24] sm:$0xff]
                %193 = vst [vmem:[%s189 + $0xc] sm:$0xff] %v192
                %v194 = vld [vmem:[%s188 + $0x48] sm:$0xff]
                %195 = vst [vmem:[%s189 + $0x18] sm:$0xff] %v194
                %v196 = vld [vmem:[%s188 + $0x6c] sm:$0xff]
                %197 = vst [vmem:[%s189 + $0x24] sm:$0xff] %v196
                %v198 = vld [vmem:[%s188 + $0x90] sm:$0xff]
                %199 = vst [vmem:[%s189 + $0x30] sm:$0xff] %v198
                %v200 = vld [vmem:[%s188 + $0xb4] sm:$0xff]
                %201 = vst [vmem:[%s189 + $0x3c] sm:$0xff] %v200
                %v202 = vld [vmem:[%s188 + $0xd8] sm:$0xff]
                %203 = vst [vmem:[%s189 + $0x48] sm:$0xff] %v202
                %v204 = vld [vmem:[%s188 + $0xfc] sm:$0xff]
                %205 = vst [vmem:[%s189 + $0x54] sm:$0xff] %v204
              $region37: #{entry_flow_forward.12} parent=31 // loop_footer
                %s187 = sadd.s32 1, %s183
              $region38: #{entry_flow_forward.12} parent=31 // loop_footer_branch
                %182 = sbr.rel target = $region34
              $region39: #{entry_flow_forward.12} parent=31 // loop_exit
                _
              %s207 = ssub.s32 16, 1
              loop: start=0, step=1, limit=1
              $region40: #{entry_flow_forward.12} parent=31 // loop_pre_header
                _
              $region41: #{entry_flow_forward.12} parent=31 // loop_header
                %s209 = sphi 0, %s213
                %p210 = scmp.ge.s32.totalorder %s209, 1
                %s214 = sphi %s180, %s180
                %s215 = sphi %s181, %s181
              $region42: #{entry_flow_forward.12} parent=31 // loop_header_branch
                %212 = sbr.rel (%p210) target = $region46
              $region43: #{entry_flow_forward.12} parent=31 // loop_body
                %v216 = vld [vmem:[%s214] sm:%s207]
                %217 = vst [vmem:[%s215] sm:%s207] %v216
                %v218 = vld [vmem:[%s214 + $0x24] sm:%s207]
                %219 = vst [vmem:[%s215 + $0xc] sm:%s207] %v218
                %v220 = vld [vmem:[%s214 + $0x48] sm:%s207]
                %221 = vst [vmem:[%s215 + $0x18] sm:%s207] %v220
                %v222 = vld [vmem:[%s214 + $0x6c] sm:%s207]
                %223 = vst [vmem:[%s215 + $0x24] sm:%s207] %v222
                %v224 = vld [vmem:[%s214 + $0x90] sm:%s207]
                %225 = vst [vmem:[%s215 + $0x30] sm:%s207] %v224
                %v226 = vld [vmem:[%s214 + $0xb4] sm:%s207]
                %227 = vst [vmem:[%s215 + $0x3c] sm:%s207] %v226
                %v228 = vld [vmem:[%s214 + $0xd8] sm:%s207]
                %229 = vst [vmem:[%s215 + $0x48] sm:%s207] %v228
                %v230 = vld [vmem:[%s214 + $0xfc] sm:%s207]
                %231 = vst [vmem:[%s215 + $0x54] sm:%s207] %v230
              $region44: #{entry_flow_forward.12} parent=31 // loop_footer
                %s213 = sadd.s32 1, %s209
              $region45: #{entry_flow_forward.12} parent=31 // loop_footer_branch
                %208 = sbr.rel target = $region41
              $region46: #{entry_flow_forward.12} parent=31 // loop_exit
                _
            $region32: #{entry_flow_forward.12} parent=27 // pred_fallthru
              _
          $region28: #{entry_flow_forward.12} parent=23 // pred_fallthru
            _
          %232 = vnop
        $region24: #{entry_flow_forward.12} parent=19 // pred_fallthru
          _
        // Predicated region
        $region47: #{entry_flow_forward.12} parent=19 // pred_check
          %p233 = pneg %p78
        $region48: #{entry_flow_forward.12} parent=19 // pred_check_branch
          %235 = sbr.rel (%p233) target = $region50
        $region49: #{entry_flow_forward.12} parent=19 // pred_region
          %s236 = smul.u32 48, %s18
          %p237 = scmp.lt.s32.totalorder %s236, 143
          %s238 = scalar_select %p237, %s236, 143
          %p239 = scmp.lt.s32.totalorder %s17, 0
          %s240 = scalar_select %p239, %s17, 0
          %s241 = sadd.s32 %s240, %s238
          %s242 = smul.addr %s241, 4
          %s243 = scalar_lea.vmem %s1, %s242
          %s244 = smul.u32 48, %s18
        $region50: #{entry_flow_forward.12} parent=19 // pred_fallthru
          _
      $region20: #{entry_flow_forward.12} parent=5 // pred_fallthru
        _
      %p245 = scmp.le.s32.totalorder 1, %s9
      %p246 = scmp.lt.s32.totalorder %s9, 7
      %p247 = pnand %p245, %p246
      %p248 = pneg %p247
      // Predicated region
      $region51: #{entry_flow_forward.12} parent=5 // pred_check
        _
      $region52: #{entry_flow_forward.12} parent=5 // pred_check_branch
        %250 = sbr.rel (%p247) target = $region54
      $region53: #{entry_flow_forward.12} parent=5 // pred_region
        %s251 = ssub.s32 %s9, 1
        %s252 = sand.u32 %s43, 1
        %s253 = sand.u32 %s43, 1
        %s254 = smul.addr %s253, 96
        %s255 = scalar_lea.vmem [#allocation3], %s254
        // Predicated region
        $region55: #{entry_flow_forward.12} parent=53 // pred_check
          %p256 = pneg %p56
        $region56: #{entry_flow_forward.12} parent=53 // pred_check_branch
          %258 = sbr.rel (%p256) target = $region58
        $region57: #{entry_flow_forward.12} parent=53 // pred_region
          _
        $region58: #{entry_flow_forward.12} parent=53 // pred_fallthru
          _
        %s259 = sand.u32 %s43, 1
        %s260 = sand.u32 %s43, 1
        %s261 = smul.addr %s260, 96
        %s262 = scalar_lea.vmem [#allocation3], %s261
        %p263 = pneg %p56
        %p264 = pneg %p53
        %s265 = smul.u32 48, %s21
        %p266 = scmp.lt.s32.totalorder %s265, 143
        %s267 = scalar_select %p266, %s265, 143
        %p268 = scmp.lt.s32.totalorder %s20, 0
        %s269 = scalar_select %p268, %s20, 0
        %s270 = sadd.s32 %s269, %s267
        %s271 = smul.addr %s270, 4
        %s272 = scalar_lea.vmem %s1, %s271
        %p273 = pneg %p84
        %p274 = pneg %p81
        %p275 = scmp.lt.s32.totalorder %s20, 0
        %s276 = scalar_select %p275, %s20, 0
        %s277 = scalar_lea.vmem %s2, %s276
        %p278 = pneg %p110
        %p279 = pneg %p107
        %p280 = pneg %p138
        %p281 = pneg %p135
        %s282 = smul.u32 8, %s19
        %p283 = scmp.lt.s32.totalorder %s282, 15
        %s284 = scalar_select %p283, %s282, 15
        %p285 = scmp.lt.s32.totalorder %s20, 0
        %s286 = scalar_select %p285, %s20, 0
        %s287 = sadd.s32 %s286, %s284
        %s288 = smul.addr %s287, 4
        %s289 = scalar_lea.vmem %s3, %s288
        %s290 = smul.u32 8, %s19
        %s291 = smul.u32 3, %s21
        %s292 = smul.u32 48, %s21
        %p293 = scmp.lt.s32.totalorder %s292, 143
        %s294 = scalar_select %p293, %s292, 143
        %p295 = scmp.lt.s32.totalorder %s20, 0
        %s296 = scalar_select %p295, %s20, 0
        %s297 = sadd.s32 %s296, %s294
        %s298 = smul.addr %s297, 4
        %s299 = scalar_lea.vmem %s1, %s298
        %s300 = smul.u32 48, %s21
        %p301 = scmp.lt.s32.totalorder %s20, 0
        %s302 = scalar_select %p301, %s20, 0
        %s303 = scalar_lea.vmem %s2, %s302
        %s304 = smul.u32 8, %s19
        %p305 = scmp.lt.s32.totalorder %s304, 15
        %s306 = scalar_select %p305, %s304, 15
        %p307 = scmp.lt.s32.totalorder %s20, 0
        %s308 = scalar_select %p307, %s20, 0
        %s309 = sadd.s32 %s308, %s306
        %s310 = smul.addr %s309, 4
        %s311 = scalar_lea.vmem %s3, %s310
        %s312 = smul.u32 8, %s19
        %p314 = scmp.eq.s32.totalorder %s21, 0
        // Predicated region
        $region59: #{entry_flow_forward.12} parent=53 // pred_check
          %p315 = pneg %p314
        $region60: #{entry_flow_forward.12} parent=53 // pred_check_branch
          %317 = sbr.rel (%p315) target = $region62
        $region61: #{entry_flow_forward.12} parent=53 // pred_region
          %318 = vst [vmem:[#allocation2] sm:$0xff] 0.0
          %319 = vst [vmem:[#allocation2 + $0x8] sm:$0xff] 0.0
          %320 = vst [vmem:[#allocation2 + $0x10] sm:$0xff] 0.0
          %321 = vst [vmem:[#allocation2 + $0x18] sm:$0xff] 0.0
          %322 = vst [vmem:[#allocation2 + $0x20] sm:$0xff] 0.0
          %323 = vst [vmem:[#allocation2 + $0x28] sm:$0xff] 0.0
          %324 = vst [vmem:[#allocation2 + $0x30] sm:$0xff] 0.0
          %325 = vst [vmem:[#allocation2 + $0x38] sm:$0xff] 0.0
        $region62: #{entry_flow_forward.12} parent=53 // pred_fallthru
          _
        %v326 = vld [vmem:[#allocation2] sm:$0xff]
        %v327 = vld [vmem:[#allocation2 + $0x8] sm:$0xff]
        %v328 = vld [vmem:[#allocation2 + $0x10] sm:$0xff]
        %v329 = vld [vmem:[#allocation2 + $0x18] sm:$0xff]
        %v330 = vld [vmem:[#allocation2 + $0x20] sm:$0xff]
        %v331 = vld [vmem:[#allocation2 + $0x28] sm:$0xff]
        %v332 = vld [vmem:[#allocation2 + $0x30] sm:$0xff]
        %v333 = vld [vmem:[#allocation2 + $0x38] sm:$0xff]
        %v334 = vld [vmem:[%s255] sm:$0xff]
        %v335 = vld [vmem:[%s255 + $0x8] sm:$0xf]
        %v336 = vld [vmem:[%s255 + $0xc] sm:$0xff]
        %v337 = vld [vmem:[%s255 + $0x14] sm:$0xf]
        %v338 = vld [vmem:[%s255 + $0x18] sm:$0xff]
        %v339 = vld [vmem:[%s255 + $0x20] sm:$0xf]
        %v340 = vld [vmem:[%s255 + $0x24] sm:$0xff]
        %v341 = vld [vmem:[%s255 + $0x2c] sm:$0xf]
        %v342 = vld [vmem:[%s255 + $0x30] sm:$0xff]
        %v343 = vld [vmem:[%s255 + $0x38] sm:$0xf]
        %v344 = vld [vmem:[%s255 + $0x3c] sm:$0xff]
        %v345 = vld [vmem:[%s255 + $0x44] sm:$0xf]
        %v346 = vld [vmem:[%s255 + $0x48] sm:$0xff]
        %v347 = vld [vmem:[%s255 + $0x50] sm:$0xf]
        %v348 = vld [vmem:[%s255 + $0x54] sm:$0xff]
        %v349 = vld [vmem:[%s255 + $0x5c] sm:$0xf]
        %v350 = vld [vmem:[%s299] sm:$0xf]
        %v351 = vld [vmem:[%s299 + $0x4] sm:$0xf]
        %v352 = vld [vmem:[%s299 + $0x8] sm:$0xf]
        %v353 = vld [vmem:[%s299 + $0xc] sm:$0xf]
        %v354 = vld [vmem:[%s299 + $0x10] sm:$0xf]
        %v355 = vld [vmem:[%s299 + $0x14] sm:$0xf]
        %v356 = vld [vmem:[%s299 + $0x18] sm:$0xf]
        %v357 = vld [vmem:[%s299 + $0x1c] sm:$0xf]
        %v358 = vld [vmem:[%s299 + $0x20] sm:$0xf]
        %v359 = vld [vmem:[%s299 + $0x24] sm:$0xf]
        %v360 = vld [vmem:[%s299 + $0x28] sm:$0xf]
        %v361 = vld [vmem:[%s299 + $0x2c] sm:$0xf]
        %v362 = vld [vmem:[%s299 + $0x30] sm:$0xf]
        %v363 = vld [vmem:[%s299 + $0x34] sm:$0xf]
        %v364 = vld [vmem:[%s299 + $0x38] sm:$0xf]
        %v365 = vld [vmem:[%s299 + $0x3c] sm:$0xf]
        %v366 = vld [vmem:[%s299 + $0x40] sm:$0xf]
        %v367 = vld [vmem:[%s299 + $0x44] sm:$0xf]
        %v368 = vld [vmem:[%s299 + $0x48] sm:$0xf]
        %v369 = vld [vmem:[%s299 + $0x4c] sm:$0xf]
        %v370 = vld [vmem:[%s299 + $0x50] sm:$0xf]
        %v371 = vld [vmem:[%s299 + $0x54] sm:$0xf]
        %v372 = vld [vmem:[%s299 + $0x58] sm:$0xf]
        %v373 = vld [vmem:[%s299 + $0x5c] sm:$0xf]
        %v374 = vld [vmem:[%s299 + $0x60] sm:$0xf]
        %v375 = vld [vmem:[%s299 + $0x64] sm:$0xf]
        %v376 = vld [vmem:[%s299 + $0x68] sm:$0xf]
        %v377 = vld [vmem:[%s299 + $0x6c] sm:$0xf]
        %v378 = vld [vmem:[%s299 + $0x70] sm:$0xf]
        %v379 = vld [vmem:[%s299 + $0x74] sm:$0xf]
        %v380 = vld [vmem:[%s299 + $0x78] sm:$0xf]
        %v381 = vld [vmem:[%s299 + $0x7c] sm:$0xf]
        %v382 = vld [vmem:[%s299 + $0x80] sm:$0xf]
        %v383 = vld [vmem:[%s299 + $0x84] sm:$0xf]
        %v384 = vld [vmem:[%s299 + $0x88] sm:$0xf]
        %v385 = vld [vmem:[%s299 + $0x8c] sm:$0xf]
        %v386 = vld [vmem:[%s299 + $0x90] sm:$0xf]
        %v387 = vld [vmem:[%s299 + $0x94] sm:$0xf]
        %v388 = vld [vmem:[%s299 + $0x98] sm:$0xf]
        %v389 = vld [vmem:[%s299 + $0x9c] sm:$0xf]
        %v390 = vld [vmem:[%s299 + $0xa0] sm:$0xf]
        %v391 = vld [vmem:[%s299 + $0xa4] sm:$0xf]
        %v392 = vld [vmem:[%s299 + $0xa8] sm:$0xf]
        %v393 = vld [vmem:[%s299 + $0xac] sm:$0xf]
        %v394 = vld [vmem:[%s299 + $0xb0] sm:$0xf]
        %v395 = vld [vmem:[%s299 + $0xb4] sm:$0xf]
        %v396 = vld [vmem:[%s299 + $0xb8] sm:$0xf]
        %v397 = vld [vmem:[%s299 + $0xbc] sm:$0xf]
        %v414 = vunpack.c.l.b16 %v334
        %v415 = vunpack.c.h.b16 %v334
        %v416 = vunpack.c.l.b16 %v335
        %v417 = vunpack.c.l.b16 %v336
        %v418 = vunpack.c.h.b16 %v336
        %v419 = vunpack.c.l.b16 %v337
        %v420 = vunpack.c.l.b16 %v338
        %v421 = vunpack.c.h.b16 %v338
        %v422 = vunpack.c.l.b16 %v339
        %v423 = vunpack.c.l.b16 %v340
        %v424 = vunpack.c.h.b16 %v340
        %v425 = vunpack.c.l.b16 %v341
        %v426 = vunpack.c.l.b16 %v342
        %v427 = vunpack.c.h.b16 %v342
        %v428 = vunpack.c.l.b16 %v343
        %v429 = vunpack.c.l.b16 %v344
        %v430 = vunpack.c.h.b16 %v344
        %v431 = vunpack.c.l.b16 %v345
        %v432 = vunpack.c.l.b16 %v346
        %v433 = vunpack.c.h.b16 %v346
        %v434 = vunpack.c.l.b16 %v347
        %v435 = vunpack.c.l.b16 %v348
        %v436 = vunpack.c.h.b16 %v348
        %v437 = vunpack.c.l.b16 %v349
        %v438 = vpack.c.b16 %v417, %v414
        %v439 = vpack.c.b16 %v418, %v415
        %v440 = vpack.c.b16 %v419, %v416
        %v441 = vpack.c.b16 %v423, %v420
        %v442 = vpack.c.b16 %v424, %v421
        %v443 = vpack.c.b16 %v425, %v422
        %v444 = vpack.c.b16 %v429, %v426
        %v445 = vpack.c.b16 %v430, %v427
        %v446 = vpack.c.b16 %v431, %v428
        %v447 = vpack.c.b16 %v435, %v432
        %v448 = vpack.c.b16 %v436, %v433
        %v449 = vpack.c.b16 %v437, %v434
        %v510 = vunpack.c.l.b16 %v350
        %v511 = vunpack.c.l.b16 %v351
        %v512 = vunpack.c.l.b16 %v352
        %v513 = vunpack.c.l.b16 %v353
        %v514 = vunpack.c.l.b16 %v354
        %v515 = vunpack.c.l.b16 %v355
        %v516 = vunpack.c.l.b16 %v356
        %v517 = vunpack.c.l.b16 %v357
        %v518 = vunpack.c.l.b16 %v358
        %v519 = vunpack.c.l.b16 %v359
        %v520 = vunpack.c.l.b16 %v360
        %v521 = vunpack.c.l.b16 %v361
        %v522 = vunpack.c.l.b16 %v362
        %v523 = vunpack.c.l.b16 %v363
        %v524 = vunpack.c.l.b16 %v364
        %v525 = vunpack.c.l.b16 %v365
        %v526 = vunpack.c.l.b16 %v366
        %v527 = vunpack.c.l.b16 %v367
        %v528 = vunpack.c.l.b16 %v368
        %v529 = vunpack.c.l.b16 %v369
        %v530 = vunpack.c.l.b16 %v370
        %v531 = vunpack.c.l.b16 %v371
        %v532 = vunpack.c.l.b16 %v372
        %v533 = vunpack.c.l.b16 %v373
        %v534 = vunpack.c.l.b16 %v374
        %v535 = vunpack.c.l.b16 %v375
        %v536 = vunpack.c.l.b16 %v376
        %v537 = vunpack.c.l.b16 %v377
        %v538 = vunpack.c.l.b16 %v378
        %v539 = vunpack.c.l.b16 %v379
        %v540 = vunpack.c.l.b16 %v380
        %v541 = vunpack.c.l.b16 %v381
        %v542 = vunpack.c.l.b16 %v382
        %v543 = vunpack.c.l.b16 %v383
        %v544 = vunpack.c.l.b16 %v384
        %v545 = vunpack.c.l.b16 %v385
        %v546 = vunpack.c.l.b16 %v386
        %v547 = vunpack.c.l.b16 %v387
        %v548 = vunpack.c.l.b16 %v388
        %v549 = vunpack.c.l.b16 %v389
        %v550 = vunpack.c.l.b16 %v390
        %v551 = vunpack.c.l.b16 %v391
        %v552 = vunpack.c.l.b16 %v392
        %v553 = vunpack.c.l.b16 %v393
        %v554 = vunpack.c.l.b16 %v394
        %v555 = vunpack.c.l.b16 %v395
        %v556 = vunpack.c.l.b16 %v396
        %v557 = vunpack.c.l.b16 %v397
        %v558 = vpack.c.b16 %v511, %v510
        %v559 = vpack.c.b16 %v513, %v512
        %v560 = vpack.c.b16 %v515, %v514
        %v561 = vpack.c.b16 %v517, %v516
        %v562 = vpack.c.b16 %v519, %v518
        %v563 = vpack.c.b16 %v521, %v520
        %v564 = vpack.c.b16 %v523, %v522
        %v565 = vpack.c.b16 %v525, %v524
        %v566 = vpack.c.b16 %v527, %v526
        %v567 = vpack.c.b16 %v529, %v528
        %v568 = vpack.c.b16 %v531, %v530
        %v569 = vpack.c.b16 %v533, %v532
        %v570 = vpack.c.b16 %v535, %v534
        %v571 = vpack.c.b16 %v537, %v536
        %v572 = vpack.c.b16 %v539, %v538
        %v573 = vpack.c.b16 %v541, %v540
        %v574 = vpack.c.b16 %v543, %v542
        %v575 = vpack.c.b16 %v545, %v544
        %v576 = vpack.c.b16 %v547, %v546
        %v577 = vpack.c.b16 %v549, %v548
        %v578 = vpack.c.b16 %v551, %v550
        %v579 = vpack.c.b16 %v553, %v552
        %v580 = vpack.c.b16 %v555, %v554
        %v581 = vpack.c.b16 %v557, %v556
        %606 = vmatprep.subr.bf16.mxu0 0
        %607 = vmatpush1.bf16.msra.mxu0 %v565
        %608 = vmatprep.subr.bf16.mxu0 0
        %609 = vmatpush1.bf16.msra.mxu0 %v564
        %610 = vmatprep.subr.bf16.mxu0 0
        %611 = vmatpush1.bf16.msra.mxu0 %v563
        %612 = vmatprep.subr.bf16.mxu0 0
        %613 = vmatpush1.bf16.msra.mxu0 %v562
        %614 = vmatprep.subr.bf16.mxu0 0
        %615 = vmatpush1.bf16.msra.mxu0 %v561
        %616 = vmatprep.subr.bf16.mxu0 0
        %617 = vmatpush1.bf16.msra.mxu0 %v560
        %618 = vmatprep.subr.bf16.mxu0 0
        %619 = vmatpush1.bf16.msra.mxu0 %v559
        %620 = vmatprep.subr.bf16.mxu0 0
        %621 = vmatpush1.bf16.msra.mxu0 %v558
        %622 = vmatprep.subr.bf16.mxu0 0
        %623 = vmatpush2.bf16.msra.mxu0 %v573
        %624 = vmatprep.subr.bf16.mxu0 0
        %625 = vmatpush2.bf16.msra.mxu0 %v572
        %626 = vmatprep.subr.bf16.mxu0 0
        %627 = vmatpush2.bf16.msra.mxu0 %v571
        %628 = vmatprep.subr.bf16.mxu0 0
        %629 = vmatpush2.bf16.msra.mxu0 %v570
        %630 = vmatprep.subr.bf16.mxu0 0
        %631 = vmatpush2.bf16.msra.mxu0 %v569
        %632 = vmatprep.subr.bf16.mxu0 0
        %633 = vmatpush2.bf16.msra.mxu0 %v568
        %634 = vmatprep.subr.bf16.mxu0 0
        %635 = vmatpush2.bf16.msra.mxu0 %v567
        %636 = vmatprep.subr.bf16.mxu0 0
        %637 = vmatpush2.bf16.msra.mxu0 %v566
        %638 = vmatprep.mubr.bf16.mxu0 %v439
        %639 = vmatmul.mubr.bf16.gmra.mxu0 %v438
        %v640 = vpop.f32.mrf.mxu0
        %v641 = vadd.f32 0.0, %v640
        %v642 = vpop.f32.mrf.mxu0
        %v643 = vpop.f32.mrf.mxu0
        %v644 = vadd.f32 0.0, %v643
        %v645 = vpop.f32.mrf.mxu0
        %646 = vmatprep.mubr.bf16.mxu0 %v442
        %647 = vmatmul.mubr.bf16.gmra.mxu0 %v441
        %v648 = vpop.f32.mrf.mxu0
        %v649 = vadd.f32 0.0, %v648
        %v650 = vpop.f32.mrf.mxu0
        %v651 = vpop.f32.mrf.mxu0
        %v652 = vadd.f32 0.0, %v651
        %v653 = vpop.f32.mrf.mxu0
        %654 = vmatprep.mubr.bf16.mxu0 %v445
        %655 = vmatmul.mubr.bf16.gmra.mxu0 %v444
        %v656 = vpop.f32.mrf.mxu0
        %v657 = vadd.f32 0.0, %v656
        %v658 = vpop.f32.mrf.mxu0
        %v659 = vpop.f32.mrf.mxu0
        %v660 = vadd.f32 0.0, %v659
        %v661 = vpop.f32.mrf.mxu0
        %662 = vmatprep.mubr.bf16.mxu0 %v448
        %663 = vmatmul.mubr.bf16.gmra.mxu0 %v447
        %v664 = vpop.f32.mrf.mxu0
        %v665 = vadd.f32 0.0, %v664
        %v666 = vpop.f32.mrf.mxu0
        %v667 = vpop.f32.mrf.mxu0
        %v668 = vadd.f32 0.0, %v667
        %v669 = vpop.f32.mrf.mxu0
        %670 = vdwg.mxu0
        %671 = vmatprep.subr.bf16.mxu0 0
        %672 = vmatpush1.bf16.msra.mxu0 %v581
        %673 = vmatprep.subr.bf16.mxu0 0
        %674 = vmatpush1.bf16.msra.mxu0 %v580
        %675 = vmatprep.subr.bf16.mxu0 0
        %676 = vmatpush1.bf16.msra.mxu0 %v579
        %677 = vmatprep.subr.bf16.mxu0 0
        %678 = vmatpush1.bf16.msra.mxu0 %v578
        %679 = vmatprep.subr.bf16.mxu0 0
        %680 = vmatpush1.bf16.msra.mxu0 %v577
        %681 = vmatprep.subr.bf16.mxu0 0
        %682 = vmatpush1.bf16.msra.mxu0 %v576
        %683 = vmatprep.subr.bf16.mxu0 0
        %684 = vmatpush1.bf16.msra.mxu0 %v575
        %685 = vmatprep.subr.bf16.mxu0 0
        %686 = vmatpush1.bf16.msra.mxu0 %v574
        %687 = vmatprep.subr.bf16.mxu0 0
        %688 = vmatpush2.bf16.msra.mxu0 0
        %689 = vmatprep.subr.bf16.mxu0 0
        %690 = vmatpush2.bf16.msra.mxu0 0
        %691 = vmatprep.subr.bf16.mxu0 0
        %692 = vmatpush2.bf16.msra.mxu0 0
        %693 = vmatprep.subr.bf16.mxu0 0
        %694 = vmatpush2.bf16.msra.mxu0 0
        %695 = vmatprep.subr.bf16.mxu0 0
        %696 = vmatpush2.bf16.msra.mxu0 0
        %697 = vmatprep.subr.bf16.mxu0 0
        %698 = vmatpush2.bf16.msra.mxu0 0
        %699 = vmatprep.subr.bf16.mxu0 0
        %700 = vmatpush2.bf16.msra.mxu0 0
        %701 = vmatprep.subr.bf16.mxu0 0
        %702 = vmatpush2.bf16.msra.mxu0 0
        %703 = vmatprep.mubr.bf16.mxu0 0
        %704 = vmatmul.mubr.bf16.gmra.mxu0 %v440
        %v705 = vpop.f32.mrf.mxu0
        %v706 = vadd.f32 %v641, %v705
        %v707 = vpop.f32.mrf.mxu0
        %v708 = vpop.f32.mrf.mxu0
        %v709 = vadd.f32 %v644, %v708
        %v710 = vpop.f32.mrf.mxu0
        %711 = vmatprep.mubr.bf16.mxu0 0
        %712 = vmatmul.mubr.bf16.gmra.mxu0 %v443
        %v713 = vpop.f32.mrf.mxu0
        %v714 = vadd.f32 %v649, %v713
        %v715 = vpop.f32.mrf.mxu0
        %v716 = vpop.f32.mrf.mxu0
        %v717 = vadd.f32 %v652, %v716
        %v718 = vpop.f32.mrf.mxu0
        %719 = vmatprep.mubr.bf16.mxu0 0
        %720 = vmatmul.mubr.bf16.gmra.mxu0 %v446
        %v721 = vpop.f32.mrf.mxu0
        %v722 = vadd.f32 %v657, %v721
        %v723 = vpop.f32.mrf.mxu0
        %v724 = vpop.f32.mrf.mxu0
        %v725 = vadd.f32 %v660, %v724
        %v726 = vpop.f32.mrf.mxu0
        %727 = vmatprep.mubr.bf16.mxu0 0
        %728 = vmatmul.mubr.bf16.gmra.mxu0 %v449
        %v729 = vpop.f32.mrf.mxu0
        %v730 = vadd.f32 %v665, %v729
        %v731 = vpop.f32.mrf.mxu0
        %v732 = vpop.f32.mrf.mxu0
        %v733 = vadd.f32 %v668, %v732
        %v734 = vpop.f32.mrf.mxu0
        %735 = vdwg.mxu0
        %v736 = vadd.f32 %v326, %v706
        %v737 = vadd.f32 %v327, %v709
        %v738 = vadd.f32 %v328, %v714
        %v739 = vadd.f32 %v329, %v717
        %v740 = vadd.f32 %v330, %v722
        %v741 = vadd.f32 %v331, %v725
        %v742 = vadd.f32 %v332, %v730
        %v743 = vadd.f32 %v333, %v733
        %744 = vst [vmem:[#allocation2] sm:$0xff] %v736
        %745 = vst [vmem:[#allocation2 + $0x8] sm:$0xff] %v737
        %746 = vst [vmem:[#allocation2 + $0x10] sm:$0xff] %v738
        %747 = vst [vmem:[#allocation2 + $0x18] sm:$0xff] %v739
        %748 = vst [vmem:[#allocation2 + $0x20] sm:$0xff] %v740
        %749 = vst [vmem:[#allocation2 + $0x28] sm:$0xff] %v741
        %750 = vst [vmem:[#allocation2 + $0x30] sm:$0xff] %v742
        %751 = vst [vmem:[#allocation2 + $0x38] sm:$0xff] %v743
        %p752 = scmp.eq.s32.totalorder %s21, 2
        // Predicated region
        $region63: #{entry_flow_forward.12} parent=53 // pred_check
          %p753 = pneg %p752
        $region64: #{entry_flow_forward.12} parent=53 // pred_check_branch
          %755 = sbr.rel (%p753) target = $region66
        $region65: #{entry_flow_forward.12} parent=53 // pred_region
          %v756 = vld [vmem:[#allocation2] sm:$0xff]
          %v757 = vld [vmem:[#allocation2 + $0x8] sm:$0xff]
          %v758 = vld [vmem:[#allocation2 + $0x10] sm:$0xff]
          %v759 = vld [vmem:[#allocation2 + $0x18] sm:$0xff]
          %v760 = vld [vmem:[#allocation2 + $0x20] sm:$0xff]
          %v761 = vld [vmem:[#allocation2 + $0x28] sm:$0xff]
          %v762 = vld [vmem:[#allocation2 + $0x30] sm:$0xff]
          %v763 = vld [vmem:[#allocation2 + $0x38] sm:$0xff]
          %v764 = vld [vmem:[%s303] sm:$0x1]
          %v766 = vlaneseq
          %v767 = vshrl.u32 %v766, 7
          %v768 = vsub.s32 0, %v767
          %v769 = vrot.slane %v764, %v768
          %v771 = vadd.f32 %v756, %v769
          %v772 = vadd.f32 %v757, %v769
          %v773 = vadd.f32 %v758, %v769
          %v774 = vadd.f32 %v759, %v769
          %v775 = vadd.f32 %v760, %v769
          %v776 = vadd.f32 %v761, %v769
          %v777 = vadd.f32 %v762, %v769
          %v778 = vadd.f32 %v763, %v769
          %v779 = vmax.f32 %v771, 0.0
          %v780 = vmax.f32 %v772, 0.0
          %v781 = vmax.f32 %v773, 0.0
          %v782 = vmax.f32 %v774, 0.0
          %v783 = vmax.f32 %v775, 0.0
          %v784 = vmax.f32 %v776, 0.0
          %v785 = vmax.f32 %v777, 0.0
          %v786 = vmax.f32 %v778, 0.0
          %v787 = vpack.c.bf16 %v780, %v779
          %v788 = vpack.c.bf16 %v782, %v781
          %v789 = vpack.c.bf16 %v784, %v783
          %v790 = vpack.c.bf16 %v786, %v785
          %v795 = vunpack.c.l.b16 %v787
          %v796 = vunpack.c.h.b16 %v787
          %v797 = vunpack.c.l.b16 %v788
          %v798 = vunpack.c.h.b16 %v788
          %v799 = vunpack.c.l.b16 %v789
          %v800 = vunpack.c.h.b16 %v789
          %v801 = vunpack.c.l.b16 %v790
          %v802 = vunpack.c.h.b16 %v790
          %v803 = vpack.c.b16 %v795, %v795
          %v804 = vpack.c.b16 %v796, %v796
          %v805 = vpack.c.b16 %v797, %v797
          %v806 = vpack.c.b16 %v798, %v798
          %v807 = vpack.c.b16 %v799, %v799
          %v808 = vpack.c.b16 %v800, %v800
          %v809 = vpack.c.b16 %v801, %v801
          %v810 = vpack.c.b16 %v802, %v802
          %819 = vst [vmem:[%s311] sm:$0xf] %v803
          %820 = vst [vmem:[%s311 + $0x4] sm:$0xf] %v804
          %821 = vst [vmem:[%s311 + $0x8] sm:$0xf] %v805
          %822 = vst [vmem:[%s311 + $0xc] sm:$0xf] %v806
          %823 = vst [vmem:[%s311 + $0x10] sm:$0xf] %v807
          %824 = vst [vmem:[%s311 + $0x14] sm:$0xf] %v808
          %825 = vst [vmem:[%s311 + $0x18] sm:$0xf] %v809
          %826 = vst [vmem:[%s311 + $0x1c] sm:$0xf] %v810
        $region66: #{entry_flow_forward.12} parent=53 // pred_fallthru
          _
        %s827 = smul.u32 8, %s19
        %p828 = scmp.lt.s32.totalorder %s827, 15
        %s829 = scalar_select %p828, %s827, 15
        %p830 = scmp.lt.s32.totalorder %s20, 0
        %s831 = scalar_select %p830, %s20, 0
        %s832 = sadd.s32 %s831, %s829
        %s833 = smul.addr %s832, 4
        %s834 = scalar_lea.vmem %s3, %s833
        // Predicated region
        $region67: #{entry_flow_forward.12} parent=53 // pred_check
          %p835 = pneg %p135
        $region68: #{entry_flow_forward.12} parent=53 // pred_check_branch
          %837 = sbr.rel (%p835) target = $region70
        $region69: #{entry_flow_forward.12} parent=53 // pred_region
          %s838 = smul.u32 8, %s19
        $region70: #{entry_flow_forward.12} parent=53 // pred_fallthru
          _
      $region54: #{entry_flow_forward.12} parent=5 // pred_fallthru
        _
      %p839 = scmp.le.s32.totalorder 2, %s9
      // Predicated region
      $region71: #{entry_flow_forward.12} parent=5 // pred_check
        %p840 = pneg %p839
      $region72: #{entry_flow_forward.12} parent=5 // pred_check_branch
        %842 = sbr.rel (%p840) target = $region74
      $region73: #{entry_flow_forward.12} parent=5 // pred_region
        %s843 = ssub.s32 %s9, 2
        // Predicated region
        $region75: #{entry_flow_forward.12} parent=73 // pred_check
          %p844 = pneg %p141
        $region76: #{entry_flow_forward.12} parent=73 // pred_check_branch
          %846 = sbr.rel (%p844) target = $region78
        $region77: #{entry_flow_forward.12} parent=73 // pred_region
          %s847 = smul.u32 8, %s22
          %p848 = scmp.lt.s32.totalorder %s847, 15
          %s849 = scalar_select %p848, %s847, 15
          %p850 = scmp.lt.s32.totalorder %s23, 0
          %s851 = scalar_select %p850, %s23, 0
          %s852 = sadd.s32 %s851, %s849
          %s853 = smul.addr %s852, 4
          %s854 = scalar_lea.vmem %s3, %s853
        $region78: #{entry_flow_forward.12} parent=73 // pred_fallthru
          _
      $region74: #{entry_flow_forward.12} parent=5 // pred_fallthru
        _
    $region6: #{entry_flow_forward.12} parent=1 // loop_footer
      %s13 = sadd.s32 1, %s9
    $region7: #{entry_flow_forward.12} parent=1 // loop_footer_branch
      %8 = sbr.rel target = $region3
    $region8: #{entry_flow_forward.12} parent=1 // loop_exit
      _

// kernel: entry_flow_forward.13
$region0: #{entry_flow_forward.13}
  #allocation0 [shape = 'u32[]', space=smem, size = 0x4, offset = 0x4, fixed_abs, tag = 'smem constant byte address 0x4 - core index']
  #allocation1 [shape = 'u32[144,128]{1,0:T(1,128)}', space=vmem, size = 0x12000, scoped, tag = 'internal scratch']
  #allocation2 [shape = 'bf16[64,128]{1,0:T(8,128)(2,1)}', space=vmem, size = 0x4000, scoped, tag = 'scratch operand']
  %s0 = inlined_call_operand.vmem [shape: bf16[2,10,10,128], index: 0, kind: input, shape index: {}]
  %s1 = inlined_call_operand.vmem [shape: f32[9,128], index: 1, kind: input, shape index: {}]
  %s2 = inlined_call_operand.vmem [shape: bf16[128,128], index: 2, kind: input, shape index: {}]
  %s3 = inlined_call_operand.vmem [shape: f32[1,128], index: 3, kind: input, shape index: {}]
  %s4 = inlined_call_operand.vmem [shape: bf16[2,64,128], index: 4, kind: output, shape index: {}]
  %s5 = sld [smem:[#allocation0]]
  $region49: #{entry_flow_forward.13} parent=0
    _
  %s7 = ssub.s32 1, %s5
  %s8 = scalar_select 0, %s7, %s5
  loop: start=0, step=1, limit=4
  $region2: #{entry_flow_forward.13} parent=0 // loop_pre_header
    _
  $region3: #{entry_flow_forward.13} parent=0 // loop_header
    %s10 = sphi 0, %s14
    %p11 = scmp.ge.s32.totalorder %s10, 4
    %s17 = sphi 0, %s29
    %s18 = sphi 0, %s25
    %s19 = sphi 0, %s17
    %s20 = sphi 0, %s18
    %s21 = sphi 0, %s19
    %s22 = sphi 0, %s20
    %s32 = sphi 0, %s34
    %s35 = sphi 0, %s32
    %s36 = sphi 0, %s35
    %s52 = sphi 0, %s36
    %s56 = sphi 0, %s56
    %s58 = sphi 0, %s56
    %s59 = sphi 0, %s58
    %s73 = sphi 0, %s59
    %s79 = sphi 0, %s81
    %s82 = sphi 0, %s79
    %s83 = sphi 0, %s82
    %s99 = sphi 0, %s83
    %s105 = sphi 0, %s107
    %s108 = sphi 0, %s105
    %s109 = sphi 0, %s108
    %s125 = sphi 0, %s109
    %s133 = sphi 0, %s135
    %s136 = sphi 0, %s133
    %s137 = sphi 0, %s136
    %s153 = sphi 0, %s137
  $region4: #{entry_flow_forward.13} parent=0 // loop_header_branch
    %13 = sbr.rel (%p11) target = $region8
  $region5: #{entry_flow_forward.13} parent=0 // loop_body
    %s15 = ssub.s32 %s10, 1
    %s16 = ssub.s32 %s10, 2
    %s23 = sadd.s32 1, %s18
    %p24 = scmp.ge.s32.totalorder %s23, 1
    %s25 = scalar_select %p24, 0, %s23
    %s26 = sadd.s32 1, %s17
    %s27 = scalar_select %p24, %s26, %s17
    %p28 = scmp.ge.s32.totalorder %s27, 2
    %s29 = scalar_select %p28, 0, %s27
    %s30 = ssub.s32 %s17, %s29
    %p31 = scmp.eq.s32.totalorder %s30, 0
    %s33 = sadd.s32 %s32, 1
    %s34 = scalar_select %p31, %s32, %s33
    %p37 = pneg %p31
    %p38 = scmp.eq.s32.totalorder %s10, 1
    %p39 = por %p37, %p38
    %p40 = scmp.ne.s32.totalorder %s32, %s35
    %p41 = scmp.eq.s32.totalorder %s10, 0
    %p42 = por %p40, %p41
    %p43 = scmp.ne.s32.totalorder %s32, %s35
    %p44 = scmp.eq.s32.totalorder %s15, 1
    %p45 = por %p43, %p44
    %p46 = scmp.ne.s32.totalorder %s35, %s36
    %p47 = scmp.eq.s32.totalorder %s15, 0
    %p48 = por %p46, %p47
    %p49 = scmp.ne.s32.totalorder %s35, %s36
    %p50 = scmp.eq.s32.totalorder %s16, 1
    %p51 = por %p49, %p50
    %p53 = scmp.ne.s32.totalorder %s36, %s52
    %p54 = scmp.eq.s32.totalorder %s16, 0
    %p55 = por %p53, %p54
    %s57 = sadd.s32 %s56, 1
    %p60 = scmp.eq.s32.totalorder %s10, 1
    %p61 = scmp.ne.s32.totalorder %s56, %s58
    %p62 = scmp.eq.s32.totalorder %s10, 0
    %p63 = por %p61, %p62
    %p64 = scmp.ne.s32.totalorder %s56, %s58
    %p65 = scmp.eq.s32.totalorder %s15, 1
    %p66 = por %p64, %p65
    %p67 = scmp.ne.s32.totalorder %s58, %s59
    %p68 = scmp.eq.s32.totalorder %s15, 0
    %p69 = por %p67, %p68
    %p70 = scmp.ne.s32.totalorder %s58, %s59
    %p71 = scmp.eq.s32.totalorder %s16, 1
    %p72 = por %p70, %p71
    %p74 = scmp.ne.s32.totalorder %s59, %s73
    %p75 = scmp.eq.s32.totalorder %s16, 0
    %p76 = por %p74, %p75
    %s77 = ssub.s32 %s18, %s25
    %p78 = scmp.eq.s32.totalorder %s77, 0
    %s80 = sadd.s32 %s79, 1
    %s81 = scalar_select %p78, %s79, %s80
    %p84 = pneg %p78
    %p85 = scmp.eq.s32.totalorder %s10, 1
    %p86 = por %p84, %p85
    %p87 = scmp.ne.s32.totalorder %s79, %s82
    %p88 = scmp.eq.s32.totalorder %s10, 0
    %p89 = por %p87, %p88
    %p90 = scmp.ne.s32.totalorder %s79, %s82
    %p91 = scmp.eq.s32.totalorder %s15, 1
    %p92 = por %p90, %p91
    %p93 = scmp.ne.s32.totalorder %s82, %s83
    %p94 = scmp.eq.s32.totalorder %s15, 0
    %p95 = por %p93, %p94
    %p96 = scmp.ne.s32.totalorder %s82, %s83
    %p97 = scmp.eq.s32.totalorder %s16, 1
    %p98 = por %p96, %p97
    %p100 = scmp.ne.s32.totalorder %s83, %s99
    %p101 = scmp.eq.s32.totalorder %s16, 0
    %p102 = por %p100, %p101
    %s103 = ssub.s32 %s18, %s25
    %p104 = scmp.eq.s32.totalorder %s103, 0
    %s106 = sadd.s32 %s105, 1
    %s107 = scalar_select %p104, %s105, %s106
    %p110 = pneg %p104
    %p111 = scmp.eq.s32.totalorder %s10, 1
    %p112 = por %p110, %p111
    %p113 = scmp.ne.s32.totalorder %s105, %s108
    %p114 = scmp.eq.s32.totalorder %s10, 0
    %p115 = por %p113, %p114
    %p116 = scmp.ne.s32.totalorder %s105, %s108
    %p117 = scmp.eq.s32.totalorder %s15, 1
    %p118 = por %p116, %p117
    %p119 = scmp.ne.s32.totalorder %s108, %s109
    %p120 = scmp.eq.s32.totalorder %s15, 0
    %p121 = por %p119, %p120
    %p122 = scmp.ne.s32.totalorder %s108, %s109
    %p123 = scmp.eq.s32.totalorder %s16, 1
    %p124 = por %p122, %p123
    %p126 = scmp.ne.s32.totalorder %s109, %s125
    %p127 = scmp.eq.s32.totalorder %s16, 0
    %p128 = por %p126, %p127
    %s129 = ssub.s32 %s17, %s29
    %s130 = ssub.s32 %s18, %s25
    %s131 = sor.u32 %s129, %s130
    %p132 = scmp.eq.s32.totalorder %s131, 0
    %s134 = sadd.s32 %s133, 1
    %s135 = scalar_select %p132, %s133, %s134
    %p138 = pneg %p132
    %p139 = scmp.eq.s32.totalorder %s10, 1
    %p140 = por %p138, %p139
    %p141 = scmp.ne.s32.totalorder %s133, %s136
    %p142 = scmp.eq.s32.totalorder %s10, 0
    %p143 = por %p141, %p142
    %p144 = scmp.ne.s32.totalorder %s133, %s136
    %p145 = scmp.eq.s32.totalorder %s15, 1
    %p146 = por %p144, %p145
    %p147 = scmp.ne.s32.totalorder %s136, %s137
    %p148 = scmp.eq.s32.totalorder %s15, 0
    %p149 = por %p147, %p148
    %p150 = scmp.ne.s32.totalorder %s136, %s137
    %p151 = scmp.eq.s32.totalorder %s16, 1
    %p152 = por %p150, %p151
    %p154 = scmp.ne.s32.totalorder %s137, %s153
    %p155 = scmp.eq.s32.totalorder %s16, 0
    %p156 = por %p154, %p155
    %p157 = scmp.le.s32.totalorder 1, %s10
    %p158 = scmp.lt.s32.totalorder %s10, 3
    %p159 = pnand %p157, %p158
    %p160 = pneg %p159
    // Predicated region
    $region9: #{entry_flow_forward.13} parent=5 // pred_check
      _
    $region10: #{entry_flow_forward.13} parent=5 // pred_check_branch
      %162 = sbr.rel (%p159) target = $region12
    $region11: #{entry_flow_forward.13} parent=5 // pred_region
      %s163 = ssub.s32 %s10, 1
      // Predicated region
      $region13: #{entry_flow_forward.13} parent=11 // pred_check
        %p164 = pneg %p69
      $region14: #{entry_flow_forward.13} parent=11 // pred_check_branch
        %166 = sbr.rel (%p164) target = $region16
      $region15: #{entry_flow_forward.13} parent=11 // pred_region
        _
      $region16: #{entry_flow_forward.13} parent=11 // pred_fallthru
        _
      // Predicated region
      $region17: #{entry_flow_forward.13} parent=11 // pred_check
        %p167 = pneg %p95
      $region18: #{entry_flow_forward.13} parent=11 // pred_check_branch
        %169 = sbr.rel (%p167) target = $region20
      $region19: #{entry_flow_forward.13} parent=11 // pred_region
        %p170 = scmp.lt.s32.totalorder %s20, 0
        %s171 = scalar_select %p170, %s20, 0
        %s172 = smul.addr %s171, 4
        %s173 = scalar_lea.vmem %s2, %s172
      $region20: #{entry_flow_forward.13} parent=11 // pred_fallthru
        _
      // Predicated region
      $region21: #{entry_flow_forward.13} parent=11 // pred_check
        %p174 = pneg %p121
      $region22: #{entry_flow_forward.13} parent=11 // pred_check_branch
        %176 = sbr.rel (%p174) target = $region24
      $region23: #{entry_flow_forward.13} parent=11 // pred_region
        %p177 = scmp.lt.s32.totalorder %s20, 0
        %s178 = scalar_select %p177, %s20, 0
        %s179 = scalar_lea.vmem %s3, %s178
      $region24: #{entry_flow_forward.13} parent=11 // pred_fallthru
        _
    $region12: #{entry_flow_forward.13} parent=5 // pred_fallthru
      _
    %p180 = scmp.lt.s32.totalorder %s10, 2
    // Predicated region
    $region25: #{entry_flow_forward.13} parent=5 // pred_check
      %p181 = pneg %p180
    $region26: #{entry_flow_forward.13} parent=5 // pred_check_branch
      %183 = sbr.rel (%p181) target = $region28
    $region27: #{entry_flow_forward.13} parent=5 // pred_region
      // Predicated region
      $region29: #{entry_flow_forward.13} parent=27 // pred_check
        %p184 = pneg %p42
      $region30: #{entry_flow_forward.13} parent=27 // pred_check_branch
        %186 = sbr.rel (%p184) target = $region32
      $region31: #{entry_flow_forward.13} parent=27 // pred_region
        %p187 = scmp.lt.s32.totalorder %s17, 1
        %s188 = scalar_select %p187, %s17, 1
        %s189 = smul.addr %s188, 20
        %s190 = smul.addr %s189, 4
        %s191 = scalar_lea.vmem %s0, %s190
      $region32: #{entry_flow_forward.13} parent=27 // pred_fallthru
        _
    $region28: #{entry_flow_forward.13} parent=5 // pred_fallthru
      _
    %p192 = scmp.le.s32.totalorder 1, %s10
    %p193 = scmp.lt.s32.totalorder %s10, 3
    %p194 = pnand %p192, %p193
    %p195 = pneg %p194
    // Predicated region
    $region33: #{entry_flow_forward.13} parent=5 // pred_check
      _
    $region34: #{entry_flow_forward.13} parent=5 // pred_check_branch
      %197 = sbr.rel (%p194) target = $region36
    $region35: #{entry_flow_forward.13} parent=5 // pred_region
      %s198 = ssub.s32 %s10, 1
      %p199 = scmp.lt.s32.totalorder %s19, 1
      %s200 = scalar_select %p199, %s19, 1
      %s201 = smul.addr %s200, 20
      %s202 = smul.addr %s201, 4
      %s203 = scalar_lea.vmem %s0, %s202
      %p204 = pneg %p48
      %p205 = pneg %p45
      %p206 = pneg %p69
      %p207 = pneg %p66
      %p208 = scmp.lt.s32.totalorder %s20, 0
      %s209 = scalar_select %p208, %s20, 0
      %s210 = smul.addr %s209, 4
      %s211 = scalar_lea.vmem %s2, %s210
      %p212 = pneg %p95
      %p213 = pneg %p92
      %p214 = scmp.lt.s32.totalorder %s20, 0
      %s215 = scalar_select %p214, %s20, 0
      %s216 = scalar_lea.vmem %s3, %s215
      %p217 = pneg %p121
      %p218 = pneg %p118
      %p219 = pneg %p149
      %p220 = pneg %p146
      %p221 = scmp.lt.s32.totalorder %s19, 1
      %s222 = scalar_select %p221, %s19, 1
      %p223 = scmp.lt.s32.totalorder %s20, 0
      %s224 = scalar_select %p223, %s20, 0
      %s225 = smul.addr %s222, 8
      %s226 = sadd.s32 %s224, %s225
      %s227 = smul.addr %s226, 4
      %s228 = scalar_lea.vmem %s4, %s227
      %p229 = scmp.lt.s32.totalorder %s19, 1
      %s230 = scalar_select %p229, %s19, 1
      %s231 = smul.addr %s230, 20
      %s232 = smul.addr %s231, 4
      %s233 = scalar_lea.vmem %s0, %s232
      %p234 = scmp.lt.s32.totalorder %s20, 0
      %s235 = scalar_select %p234, %s20, 0
      %s236 = smul.addr %s235, 4
      %s237 = scalar_lea.vmem %s2, %s236
      %p238 = scmp.lt.s32.totalorder %s20, 0
      %s239 = scalar_select %p238, %s20, 0
      %s240 = scalar_lea.vmem %s3, %s239
      %p241 = scmp.lt.s32.totalorder %s19, 1
      %s242 = scalar_select %p241, %s19, 1
      %p243 = scmp.lt.s32.totalorder %s20, 0
      %s244 = scalar_select %p243, %s20, 0
      %s245 = smul.addr %s242, 8
      %s246 = sadd.s32 %s244, %s245
      %s247 = smul.addr %s246, 4
      %s248 = scalar_lea.vmem %s4, %s247
      %v250 = vld [vmem:[%s1] sm:$0xff]
      %v251 = vld [vmem:[%s1 + $0x8] sm:$0x1]
      %v252 = vld [vmem:[%s233] sm:$0xf]
      %v253 = vld [vmem:[%s233 + $0x8] sm:$0xf]
      %v254 = vld [vmem:[%s233 + $0x10] sm:$0xf]
      %v255 = vld [vmem:[%s233 + $0x18] sm:$0xf]
      %v256 = vld [vmem:[%s233 + $0x20] sm:$0xf]
      %v257 = vld [vmem:[%s233 + $0x28] sm:$0xf]
      %v258 = vld [vmem:[%s233 + $0x30] sm:$0xf]
      %v259 = vld [vmem:[%s233 + $0x38] sm:$0xf]
      %v260 = vunpack.c.l.bf16 %v252
      %v261 = vunpack.c.l.bf16 %v253
      %v262 = vunpack.c.l.bf16 %v254
      %v263 = vunpack.c.l.bf16 %v255
      %v264 = vunpack.c.l.bf16 %v256
      %v265 = vunpack.c.l.bf16 %v257
      %v266 = vunpack.c.l.bf16 %v258
      %v267 = vunpack.c.l.bf16 %v259
      %v268 = vlaneseq
      %v269 = vshrl.u32 %v268, 7
      %v270 = vsub.s32 0, %v269
      %v271 = vrot.slane %v250, %v270
      %v272 = vmul.f32 %v260, %v271
      %v273 = vmul.f32 %v261, %v271
      %v274 = vmul.f32 %v262, %v271
      %v275 = vmul.f32 %v263, %v271
      %v276 = vmul.f32 %v264, %v271
      %v277 = vmul.f32 %v265, %v271
      %v278 = vmul.f32 %v266, %v271
      %v279 = vmul.f32 %v267, %v271
      %v280 = vadd.f32 %v272, 0.0
      %v281 = vadd.f32 %v273, 0.0
      %v282 = vadd.f32 %v274, 0.0
      %v283 = vadd.f32 %v275, 0.0
      %v284 = vadd.f32 %v276, 0.0
      %v285 = vadd.f32 %v277, 0.0
      %v286 = vadd.f32 %v278, 0.0
      %v287 = vadd.f32 %v279, 0.0
      %v288 = vld [vmem:[%s233 + $0x4] sm:$0x1]
      %v289 = vld [vmem:[%s233 + $0xc] sm:$0x1]
      %v290 = vld [vmem:[%s233 + $0x14] sm:$0x1]
      %v291 = vld [vmem:[%s233 + $0x1c] sm:$0x1]
      %v292 = vld [vmem:[%s233 + $0x24] sm:$0x1]
      %v293 = vld [vmem:[%s233 + $0x2c] sm:$0x1]
      %v294 = vld [vmem:[%s233 + $0x34] sm:$0x1]
      %v295 = vld [vmem:[%s233 + $0x3c] sm:$0x1]
      %v296 = vunpack.c.l.bf16 %v288
      %v297 = vunpack.c.l.bf16 %v289
      %v298 = vunpack.c.l.bf16 %v290
      %v299 = vunpack.c.l.bf16 %v291
      %v300 = vunpack.c.l.bf16 %v292
      %v301 = vunpack.c.l.bf16 %v293
      %v302 = vunpack.c.l.bf16 %v294
      %v303 = vunpack.c.l.bf16 %v295
      %v304 = vlaneseq
      %v305 = vshrl.u32 %v304, 7
      %v306 = vsub.s32 1, %v305
      %v307 = vrot.slane %v250, %v306
      %v308 = vmul.f32 %v260, %v307
      %v309 = vmul.f32 %v296, %v307
      %v310 = vmul.f32 %v261, %v307
      %v311 = vmul.f32 %v297, %v307
      %v312 = vmul.f32 %v262, %v307
      %v313 = vmul.f32 %v298, %v307
      %v314 = vmul.f32 %v263, %v307
      %v315 = vmul.f32 %v299, %v307
      %v316 = vmul.f32 %v264, %v307
      %v317 = vmul.f32 %v300, %v307
      %v318 = vmul.f32 %v265, %v307
      %v319 = vmul.f32 %v301, %v307
      %v320 = vmul.f32 %v266, %v307
      %v321 = vmul.f32 %v302, %v307
      %v322 = vmul.f32 %v267, %v307
      %v323 = vmul.f32 %v303, %v307
      %vm340 = vcmask 1046528
      %v341 = vrot.slane %v308, 1
      %v342 = vrot.slane %v309, 1
      %v343 = vsel %vm340, %v341, %v342
      %v344 = vrot.slane %v310, 1
      %v345 = vrot.slane %v311, 1
      %v346 = vsel %vm340, %v344, %v345
      %v347 = vrot.slane %v312, 1
      %v348 = vrot.slane %v313, 1
      %v349 = vsel %vm340, %v347, %v348
      %v350 = vrot.slane %v314, 1
      %v351 = vrot.slane %v315, 1
      %v352 = vsel %vm340, %v350, %v351
      %v353 = vrot.slane %v316, 1
      %v354 = vrot.slane %v317, 1
      %v355 = vsel %vm340, %v353, %v354
      %v356 = vrot.slane %v318, 1
      %v357 = vrot.slane %v319, 1
      %v358 = vsel %vm340, %v356, %v357
      %v359 = vrot.slane %v320, 1
      %v360 = vrot.slane %v321, 1
      %v361 = vsel %vm340, %v359, %v360
      %v362 = vrot.slane %v322, 1
      %v363 = vrot.slane %v323, 1
      %v364 = vsel %vm340, %v362, %v363
      %v373 = vadd.f32 %v280, %v343
      %v374 = vadd.f32 %v281, %v346
      %v375 = vadd.f32 %v282, %v349
      %v376 = vadd.f32 %v283, %v352
      %v377 = vadd.f32 %v284, %v355
      %v378 = vadd.f32 %v285, %v358
      %v379 = vadd.f32 %v286, %v361
      %v380 = vadd.f32 %v287, %v364
      %v381 = vld [vmem:[%s233] sm:$0xe]
      %v382 = vld [vmem:[%s233 + $0x8] sm:$0xe]
      %v383 = vld [vmem:[%s233 + $0x10] sm:$0xe]
      %v384 = vld [vmem:[%s233 + $0x18] sm:$0xe]
      %v385 = vld [vmem:[%s233 + $0x20] sm:$0xe]
      %v386 = vld [vmem:[%s233 + $0x28] sm:$0xe]
      %v387 = vld [vmem:[%s233 + $0x30] sm:$0xe]
      %v388 = vld [vmem:[%s233 + $0x38] sm:$0xe]
      %v389 = vunpack.c.l.bf16 %v381
      %v390 = vunpack.c.l.bf16 %v382
      %v391 = vunpack.c.l.bf16 %v383
      %v392 = vunpack.c.l.bf16 %v384
      %v393 = vunpack.c.l.bf16 %v385
      %v394 = vunpack.c.l.bf16 %v386
      %v395 = vunpack.c.l.bf16 %v387
      %v396 = vunpack.c.l.bf16 %v388
      %v397 = vlaneseq
      %v398 = vshrl.u32 %v397, 7
      %v399 = vsub.s32 2, %v398
      %v400 = vrot.slane %v250, %v399
      %v401 = vmul.f32 %v389, %v400
      %v402 = vmul.f32 %v296, %v400
      %v403 = vmul.f32 %v390, %v400
      %v404 = vmul.f32 %v297, %v400
      %v405 = vmul.f32 %v391, %v400
      %v406 = vmul.f32 %v298, %v400
      %v407 = vmul.f32 %v392, %v400
      %v408 = vmul.f32 %v299, %v400
      %v409 = vmul.f32 %v393, %v400
      %v410 = vmul.f32 %v300, %v400
      %v411 = vmul.f32 %v394, %v400
      %v412 = vmul.f32 %v301, %v400
      %v413 = vmul.f32 %v395, %v400
      %v414 = vmul.f32 %v302, %v400
      %v415 = vmul.f32 %v396, %v400
      %v416 = vmul.f32 %v303, %v400
      %vm433 = vcmask 1045504
      %v434 = vrot.slane %v401, 2
      %v435 = vrot.slane %v402, 2
      %v436 = vsel %vm433, %v434, %v435
      %v437 = vrot.slane %v403, 2
      %v438 = vrot.slane %v404, 2
      %v439 = vsel %vm433, %v437, %v438
      %v440 = vrot.slane %v405, 2
      %v441 = vrot.slane %v406, 2
      %v442 = vsel %vm433, %v440, %v441
      %v443 = vrot.slane %v407, 2
      %v444 = vrot.slane %v408, 2
      %v445 = vsel %vm433, %v443, %v444
      %v446 = vrot.slane %v409, 2
      %v447 = vrot.slane %v410, 2
      %v448 = vsel %vm433, %v446, %v447
      %v449 = vrot.slane %v411, 2
      %v450 = vrot.slane %v412, 2
      %v451 = vsel %vm433, %v449, %v450
      %v452 = vrot.slane %v413, 2
      %v453 = vrot.slane %v414, 2
      %v454 = vsel %vm433, %v452, %v453
      %v455 = vrot.slane %v415, 2
      %v456 = vrot.slane %v416, 2
      %v457 = vsel %vm433, %v455, %v456
      %v466 = vadd.f32 %v373, %v436
      %v467 = vadd.f32 %v374, %v439
      %v468 = vadd.f32 %v375, %v442
      %v469 = vadd.f32 %v376, %v445
      %v470 = vadd.f32 %v377, %v448
      %v471 = vadd.f32 %v378, %v451
      %v472 = vadd.f32 %v379, %v454
      %v473 = vadd.f32 %v380, %v457
      %s474 = scalar_lea.vmem %s233, 8
      %v475 = vld [vmem:[%s474] sm:$0xf]
      %v476 = vld [vmem:[%s474 + $0x8] sm:$0xf]
      %v477 = vld [vmem:[%s474 + $0x10] sm:$0xf]
      %v478 = vld [vmem:[%s474 + $0x18] sm:$0xf]
      %v479 = vld [vmem:[%s474 + $0x20] sm:$0xf]
      %v480 = vld [vmem:[%s474 + $0x28] sm:$0xf]
      %v481 = vld [vmem:[%s474 + $0x30] sm:$0xf]
      %v482 = vld [vmem:[%s474 + $0x38] sm:$0xf]
      %v483 = vunpack.c.l.bf16 %v475
      %v484 = vunpack.c.l.bf16 %v476
      %v485 = vunpack.c.l.bf16 %v477
      %v486 = vunpack.c.l.bf16 %v478
      %v487 = vunpack.c.l.bf16 %v479
      %v488 = vunpack.c.l.bf16 %v480
      %v489 = vunpack.c.l.bf16 %v481
      %v490 = vunpack.c.l.bf16 %v482
      %v491 = vlaneseq
      %v492 = vshrl.u32 %v491, 7
      %v493 = vsub.s32 3, %v492
      %v494 = vrot.slane %v250, %v493
      %v495 = vmul.f32 %v483, %v494
      %v496 = vmul.f32 %v484, %v494
      %v497 = vmul.f32 %v485, %v494
      %v498 = vmul.f32 %v486, %v494
      %v499 = vmul.f32 %v487, %v494
      %v500 = vmul.f32 %v488, %v494
      %v501 = vmul.f32 %v489, %v494
      %v502 = vmul.f32 %v490, %v494
      %v503 = vadd.f32 %v466, %v495
      %v504 = vadd.f32 %v467, %v496
      %v505 = vadd.f32 %v468, %v497
      %v506 = vadd.f32 %v469, %v498
      %v507 = vadd.f32 %v470, %v499
      %v508 = vadd.f32 %v471, %v500
      %v509 = vadd.f32 %v472, %v501
      %v510 = vadd.f32 %v473, %v502
      %v511 = vld [vmem:[%s474 + $0x4] sm:$0x1]
      %v512 = vld [vmem:[%s474 + $0xc] sm:$0x1]
      %v513 = vld [vmem:[%s474 + $0x14] sm:$0x1]
      %v514 = vld [vmem:[%s474 + $0x1c] sm:$0x1]
      %v515 = vld [vmem:[%s474 + $0x24] sm:$0x1]
      %v516 = vld [vmem:[%s474 + $0x2c] sm:$0x1]
      %v517 = vld [vmem:[%s474 + $0x34] sm:$0x1]
      %v518 = vld [vmem:[%s474 + $0x3c] sm:$0x1]
      %v519 = vunpack.c.l.bf16 %v511
      %v520 = vunpack.c.l.bf16 %v512
      %v521 = vunpack.c.l.bf16 %v513
      %v522 = vunpack.c.l.bf16 %v514
      %v523 = vunpack.c.l.bf16 %v515
      %v524 = vunpack.c.l.bf16 %v516
      %v525 = vunpack.c.l.bf16 %v517
      %v526 = vunpack.c.l.bf16 %v518
      %v527 = vlaneseq
      %v528 = vshrl.u32 %v527, 7
      %v529 = vsub.s32 4, %v528
      %v530 = vrot.slane %v250, %v529
      %v531 = vmul.f32 %v483, %v530
      %v532 = vmul.f32 %v519, %v530
      %v533 = vmul.f32 %v484, %v530
      %v534 = vmul.f32 %v520, %v530
      %v535 = vmul.f32 %v485, %v530
      %v536 = vmul.f32 %v521, %v530
      %v537 = vmul.f32 %v486, %v530
      %v538 = vmul.f32 %v522, %v530
      %v539 = vmul.f32 %v487, %v530
      %v540 = vmul.f32 %v523, %v530
      %v541 = vmul.f32 %v488, %v530
      %v542 = vmul.f32 %v524, %v530
      %v543 = vmul.f32 %v489, %v530
      %v544 = vmul.f32 %v525, %v530
      %v545 = vmul.f32 %v490, %v530
      %v546 = vmul.f32 %v526, %v530
      %v563 = vrot.slane %v531, 1
      %v564 = vrot.slane %v532, 1
      %v565 = vsel %vm340, %v563, %v564
      %v566 = vrot.slane %v533, 1
      %v567 = vrot.slane %v534, 1
      %v568 = vsel %vm340, %v566, %v567
      %v569 = vrot.slane %v535, 1
      %v570 = vrot.slane %v536, 1
      %v571 = vsel %vm340, %v569, %v570
      %v572 = vrot.slane %v537, 1
      %v573 = vrot.slane %v538, 1
      %v574 = vsel %vm340, %v572, %v573
      %v575 = vrot.slane %v539, 1
      %v576 = vrot.slane %v540, 1
      %v577 = vsel %vm340, %v575, %v576
      %v578 = vrot.slane %v541, 1
      %v579 = vrot.slane %v542, 1
      %v580 = vsel %vm340, %v578, %v579
      %v581 = vrot.slane %v543, 1
      %v582 = vrot.slane %v544, 1
      %v583 = vsel %vm340, %v581, %v582
      %v584 = vrot.slane %v545, 1
      %v585 = vrot.slane %v546, 1
      %v586 = vsel %vm340, %v584, %v585
      %v595 = vadd.f32 %v503, %v565
      %v596 = vadd.f32 %v504, %v568
      %v597 = vadd.f32 %v505, %v571
      %v598 = vadd.f32 %v506, %v574
      %v599 = vadd.f32 %v507, %v577
      %v600 = vadd.f32 %v508, %v580
      %v601 = vadd.f32 %v509, %v583
      %v602 = vadd.f32 %v510, %v586
      %v603 = vld [vmem:[%s474] sm:$0xe]
      %v604 = vld [vmem:[%s474 + $0x8] sm:$0xe]
      %v605 = vld [vmem:[%s474 + $0x10] sm:$0xe]
      %v606 = vld [vmem:[%s474 + $0x18] sm:$0xe]
      %v607 = vld [vmem:[%s474 + $0x20] sm:$0xe]
      %v608 = vld [vmem:[%s474 + $0x28] sm:$0xe]
      %v609 = vld [vmem:[%s474 + $0x30] sm:$0xe]
      %v610 = vld [vmem:[%s474 + $0x38] sm:$0xe]
      %v611 = vunpack.c.l.bf16 %v603
      %v612 = vunpack.c.l.bf16 %v604
      %v613 = vunpack.c.l.bf16 %v605
      %v614 = vunpack.c.l.bf16 %v606
      %v615 = vunpack.c.l.bf16 %v607
      %v616 = vunpack.c.l.bf16 %v608
      %v617 = vunpack.c.l.bf16 %v609
      %v618 = vunpack.c.l.bf16 %v610
      %v619 = vlaneseq
      %v620 = vshrl.u32 %v619, 7
      %v621 = vsub.s32 5, %v620
      %v622 = vrot.slane %v250, %v621
      %v623 = vmul.f32 %v611, %v622
      %v624 = vmul.f32 %v519, %v622
      %v625 = vmul.f32 %v612, %v622
      %v626 = vmul.f32 %v520, %v622
      %v627 = vmul.f32 %v613, %v622
      %v628 = vmul.f32 %v521, %v622
      %v629 = vmul.f32 %v614, %v622
      %v630 = vmul.f32 %v522, %v622
      %v631 = vmul.f32 %v615, %v622
      %v632 = vmul.f32 %v523, %v622
      %v633 = vmul.f32 %v616, %v622
      %v634 = vmul.f32 %v524, %v622
      %v635 = vmul.f32 %v617, %v622
      %v636 = vmul.f32 %v525, %v622
      %v637 = vmul.f32 %v618, %v622
      %v638 = vmul.f32 %v526, %v622
      %v655 = vrot.slane %v623, 2
      %v656 = vrot.slane %v624, 2
      %v657 = vsel %vm433, %v655, %v656
      %v658 = vrot.slane %v625, 2
      %v659 = vrot.slane %v626, 2
      %v660 = vsel %vm433, %v658, %v659
      %v661 = vrot.slane %v627, 2
      %v662 = vrot.slane %v628, 2
      %v663 = vsel %vm433, %v661, %v662
      %v664 = vrot.slane %v629, 2
      %v665 = vrot.slane %v630, 2
      %v666 = vsel %vm433, %v664, %v665
      %v667 = vrot.slane %v631, 2
      %v668 = vrot.slane %v632, 2
      %v669 = vsel %vm433, %v667, %v668
      %v670 = vrot.slane %v633, 2
      %v671 = vrot.slane %v634, 2
      %v672 = vsel %vm433, %v670, %v671
      %v673 = vrot.slane %v635, 2
      %v674 = vrot.slane %v636, 2
      %v675 = vsel %vm433, %v673, %v674
      %v676 = vrot.slane %v637, 2
      %v677 = vrot.slane %v638, 2
      %v678 = vsel %vm433, %v676, %v677
      %v687 = vadd.f32 %v595, %v657
      %v688 = vadd.f32 %v596, %v660
      %v689 = vadd.f32 %v597, %v663
      %v690 = vadd.f32 %v598, %v666
      %v691 = vadd.f32 %v599, %v669
      %v692 = vadd.f32 %v600, %v672
      %v693 = vadd.f32 %v601, %v675
      %v694 = vadd.f32 %v602, %v678
      %s695 = scalar_lea.vmem %s233, 16
      %v696 = vld [vmem:[%s695] sm:$0xf]
      %v697 = vld [vmem:[%s695 + $0x8] sm:$0xf]
      %v698 = vld [vmem:[%s695 + $0x10] sm:$0xf]
      %v699 = vld [vmem:[%s695 + $0x18] sm:$0xf]
      %v700 = vld [vmem:[%s695 + $0x20] sm:$0xf]
      %v701 = vld [vmem:[%s695 + $0x28] sm:$0xf]
      %v702 = vld [vmem:[%s695 + $0x30] sm:$0xf]
      %v703 = vld [vmem:[%s695 + $0x38] sm:$0xf]
      %v704 = vunpack.c.l.bf16 %v696
      %v705 = vunpack.c.l.bf16 %v697
      %v706 = vunpack.c.l.bf16 %v698
      %v707 = vunpack.c.l.bf16 %v699
      %v708 = vunpack.c.l.bf16 %v700
      %v709 = vunpack.c.l.bf16 %v701
      %v710 = vunpack.c.l.bf16 %v702
      %v711 = vunpack.c.l.bf16 %v703
      %v712 = vlaneseq
      %v713 = vshrl.u32 %v712, 7
      %v714 = vsub.s32 6, %v713
      %v715 = vrot.slane %v250, %v714
      %v716 = vmul.f32 %v704, %v715
      %v717 = vmul.f32 %v705, %v715
      %v718 = vmul.f32 %v706, %v715
      %v719 = vmul.f32 %v707, %v715
      %v720 = vmul.f32 %v708, %v715
      %v721 = vmul.f32 %v709, %v715
      %v722 = vmul.f32 %v710, %v715
      %v723 = vmul.f32 %v711, %v715
      %v724 = vadd.f32 %v687, %v716
      %v725 = vadd.f32 %v688, %v717
      %v726 = vadd.f32 %v689, %v718
      %v727 = vadd.f32 %v690, %v719
      %v728 = vadd.f32 %v691, %v720
      %v729 = vadd.f32 %v692, %v721
      %v730 = vadd.f32 %v693, %v722
      %v731 = vadd.f32 %v694, %v723
      %v732 = vld [vmem:[%s695 + $0x4] sm:$0x1]
      %v733 = vld [vmem:[%s695 + $0xc] sm:$0x1]
      %v734 = vld [vmem:[%s695 + $0x14] sm:$0x1]
      %v735 = vld [vmem:[%s695 + $0x1c] sm:$0x1]
      %v736 = vld [vmem:[%s695 + $0x24] sm:$0x1]
      %v737 = vld [vmem:[%s695 + $0x2c] sm:$0x1]
      %v738 = vld [vmem:[%s695 + $0x34] sm:$0x1]
      %v739 = vld [vmem:[%s695 + $0x3c] sm:$0x1]
      %v740 = vunpack.c.l.bf16 %v732
      %v741 = vunpack.c.l.bf16 %v733
      %v742 = vunpack.c.l.bf16 %v734
      %v743 = vunpack.c.l.bf16 %v735
      %v744 = vunpack.c.l.bf16 %v736
      %v745 = vunpack.c.l.bf16 %v737
      %v746 = vunpack.c.l.bf16 %v738
      %v747 = vunpack.c.l.bf16 %v739
      %v748 = vlaneseq
      %v749 = vshrl.u32 %v748, 7
      %v750 = vsub.s32 7, %v749
      %v751 = vrot.slane %v250, %v750
      %v752 = vmul.f32 %v704, %v751
      %v753 = vmul.f32 %v740, %v751
      %v754 = vmul.f32 %v705, %v751
      %v755 = vmul.f32 %v741, %v751
      %v756 = vmul.f32 %v706, %v751
      %v757 = vmul.f32 %v742, %v751
      %v758 = vmul.f32 %v707, %v751
      %v759 = vmul.f32 %v743, %v751
      %v760 = vmul.f32 %v708, %v751
      %v761 = vmul.f32 %v744, %v751
      %v762 = vmul.f32 %v709, %v751
      %v763 = vmul.f32 %v745, %v751
      %v764 = vmul.f32 %v710, %v751
      %v765 = vmul.f32 %v746, %v751
      %v766 = vmul.f32 %v711, %v751
      %v767 = vmul.f32 %v747, %v751
      %v784 = vrot.slane %v752, 1
      %v785 = vrot.slane %v753, 1
      %v786 = vsel %vm340, %v784, %v785
      %v787 = vrot.slane %v754, 1
      %v788 = vrot.slane %v755, 1
      %v789 = vsel %vm340, %v787, %v788
      %v790 = vrot.slane %v756, 1
      %v791 = vrot.slane %v757, 1
      %v792 = vsel %vm340, %v790, %v791
      %v793 = vrot.slane %v758, 1
      %v794 = vrot.slane %v759, 1
      %v795 = vsel %vm340, %v793, %v794
      %v796 = vrot.slane %v760, 1
      %v797 = vrot.slane %v761, 1
      %v798 = vsel %vm340, %v796, %v797
      %v799 = vrot.slane %v762, 1
      %v800 = vrot.slane %v763, 1
      %v801 = vsel %vm340, %v799, %v800
      %v802 = vrot.slane %v764, 1
      %v803 = vrot.slane %v765, 1
      %v804 = vsel %vm340, %v802, %v803
      %v805 = vrot.slane %v766, 1
      %v806 = vrot.slane %v767, 1
      %v807 = vsel %vm340, %v805, %v806
      %v816 = vadd.f32 %v724, %v786
      %v817 = vadd.f32 %v725, %v789
      %v818 = vadd.f32 %v726, %v792
      %v819 = vadd.f32 %v727, %v795
      %v820 = vadd.f32 %v728, %v798
      %v821 = vadd.f32 %v729, %v801
      %v822 = vadd.f32 %v730, %v804
      %v823 = vadd.f32 %v731, %v807
      %v824 = vld [vmem:[%s695] sm:$0xe]
      %v825 = vld [vmem:[%s695 + $0x8] sm:$0xe]
      %v826 = vld [vmem:[%s695 + $0x10] sm:$0xe]
      %v827 = vld [vmem:[%s695 + $0x18] sm:$0xe]
      %v828 = vld [vmem:[%s695 + $0x20] sm:$0xe]
      %v829 = vld [vmem:[%s695 + $0x28] sm:$0xe]
      %v830 = vld [vmem:[%s695 + $0x30] sm:$0xe]
      %v831 = vld [vmem:[%s695 + $0x38] sm:$0xe]
      %v832 = vunpack.c.l.bf16 %v824
      %v833 = vunpack.c.l.bf16 %v825
      %v834 = vunpack.c.l.bf16 %v826
      %v835 = vunpack.c.l.bf16 %v827
      %v836 = vunpack.c.l.bf16 %v828
      %v837 = vunpack.c.l.bf16 %v829
      %v838 = vunpack.c.l.bf16 %v830
      %v839 = vunpack.c.l.bf16 %v831
      %v840 = vlaneseq
      %v841 = vshrl.u32 %v840, 7
      %v842 = vsub.s32 0, %v841
      %v843 = vrot.slane %v251, %v842
      %v844 = vmul.f32 %v832, %v843
      %v845 = vmul.f32 %v740, %v843
      %v846 = vmul.f32 %v833, %v843
      %v847 = vmul.f32 %v741, %v843
      %v848 = vmul.f32 %v834, %v843
      %v849 = vmul.f32 %v742, %v843
      %v850 = vmul.f32 %v835, %v843
      %v851 = vmul.f32 %v743, %v843
      %v852 = vmul.f32 %v836, %v843
      %v853 = vmul.f32 %v744, %v843
      %v854 = vmul.f32 %v837, %v843
      %v855 = vmul.f32 %v745, %v843
      %v856 = vmul.f32 %v838, %v843
      %v857 = vmul.f32 %v746, %v843
      %v858 = vmul.f32 %v839, %v843
      %v859 = vmul.f32 %v747, %v843
      %v876 = vrot.slane %v844, 2
      %v877 = vrot.slane %v845, 2
      %v878 = vsel %vm433, %v876, %v877
      %v879 = vrot.slane %v846, 2
      %v880 = vrot.slane %v847, 2
      %v881 = vsel %vm433, %v879, %v880
      %v882 = vrot.slane %v848, 2
      %v883 = vrot.slane %v849, 2
      %v884 = vsel %vm433, %v882, %v883
      %v885 = vrot.slane %v850, 2
      %v886 = vrot.slane %v851, 2
      %v887 = vsel %vm433, %v885, %v886
      %v888 = vrot.slane %v852, 2
      %v889 = vrot.slane %v853, 2
      %v890 = vsel %vm433, %v888, %v889
      %v891 = vrot.slane %v854, 2
      %v892 = vrot.slane %v855, 2
      %v893 = vsel %vm433, %v891, %v892
      %v894 = vrot.slane %v856, 2
      %v895 = vrot.slane %v857, 2
      %v896 = vsel %vm433, %v894, %v895
      %v897 = vrot.slane %v858, 2
      %v898 = vrot.slane %v859, 2
      %v899 = vsel %vm433, %v897, %v898
      %v908 = vadd.f32 %v816, %v878
      %v909 = vadd.f32 %v817, %v881
      %v910 = vadd.f32 %v818, %v884
      %v911 = vadd.f32 %v819, %v887
      %v912 = vadd.f32 %v820, %v890
      %v913 = vadd.f32 %v821, %v893
      %v914 = vadd.f32 %v822, %v896
      %v915 = vadd.f32 %v823, %v899
      %v916 = vpack.c.bf16 %v908, %v908
      %917 = vst [vmem:[#allocation2] sm:$0xf] %v916
      %v918 = vpack.c.bf16 %v909, %v909
      %919 = vst [vmem:[#allocation2 + $0x4] sm:$0xf] %v918
      %v920 = vpack.c.bf16 %v910, %v910
      %921 = vst [vmem:[#allocation2 + $0x8] sm:$0xf] %v920
      %v922 = vpack.c.bf16 %v911, %v911
      %923 = vst [vmem:[#allocation2 + $0xc] sm:$0xf] %v922
      %v924 = vpack.c.bf16 %v912, %v912
      %925 = vst [vmem:[#allocation2 + $0x10] sm:$0xf] %v924
      %v926 = vpack.c.bf16 %v913, %v913
      %927 = vst [vmem:[#allocation2 + $0x14] sm:$0xf] %v926
      %v928 = vpack.c.bf16 %v914, %v914
      %929 = vst [vmem:[#allocation2 + $0x18] sm:$0xf] %v928
      %v930 = vpack.c.bf16 %v915, %v915
      %931 = vst [vmem:[#allocation2 + $0x1c] sm:$0xf] %v930
      %v932 = vld [vmem:[#allocation2] sm:$0xf]
      %v933 = vld [vmem:[#allocation2 + $0x4] sm:$0xf]
      %v934 = vld [vmem:[#allocation2 + $0x8] sm:$0xf]
      %v935 = vld [vmem:[#allocation2 + $0xc] sm:$0xf]
      %v936 = vld [vmem:[#allocation2 + $0x10] sm:$0xf]
      %v937 = vld [vmem:[#allocation2 + $0x14] sm:$0xf]
      %v938 = vld [vmem:[#allocation2 + $0x18] sm:$0xf]
      %v939 = vld [vmem:[#allocation2 + $0x1c] sm:$0xf]
      %v940 = vld [vmem:[%s237] sm:$0xf]
      %v941 = vld [vmem:[%s237 + $0x4] sm:$0xf]
      %v942 = vld [vmem:[%s237 + $0x8] sm:$0xf]
      %v943 = vld [vmem:[%s237 + $0xc] sm:$0xf]
      %v944 = vld [vmem:[%s237 + $0x10] sm:$0xf]
      %v945 = vld [vmem:[%s237 + $0x14] sm:$0xf]
      %v946 = vld [vmem:[%s237 + $0x18] sm:$0xf]
      %v947 = vld [vmem:[%s237 + $0x1c] sm:$0xf]
      %v948 = vld [vmem:[%s237 + $0x20] sm:$0xf]
      %v949 = vld [vmem:[%s237 + $0x24] sm:$0xf]
      %v950 = vld [vmem:[%s237 + $0x28] sm:$0xf]
      %v951 = vld [vmem:[%s237 + $0x2c] sm:$0xf]
      %v952 = vld [vmem:[%s237 + $0x30] sm:$0xf]
      %v953 = vld [vmem:[%s237 + $0x34] sm:$0xf]
      %v954 = vld [vmem:[%s237 + $0x38] sm:$0xf]
      %v955 = vld [vmem:[%s237 + $0x3c] sm:$0xf]
      %v956 = vld [vmem:[%s240] sm:$0x1]
      %v958 = vlaneseq
      %v959 = vshrl.u32 %v958, 7
      %v960 = vsub.s32 0, %v959
      %v961 = vrot.slane %v956, %v960
      %v971 = vunpack.c.l.b16 %v932
      %v972 = vunpack.c.l.b16 %v933
      %v973 = vunpack.c.l.b16 %v934
      %v974 = vunpack.c.l.b16 %v935
      %v975 = vunpack.c.l.b16 %v936
      %v976 = vunpack.c.l.b16 %v937
      %v977 = vunpack.c.l.b16 %v938
      %v978 = vunpack.c.l.b16 %v939
      %v979 = vpack.c.b16 %v972, %v971
      %v980 = vpack.c.b16 %v974, %v973
      %v981 = vpack.c.b16 %v976, %v975
      %v982 = vpack.c.b16 %v978, %v977
      %v1003 = vunpack.c.l.b16 %v940
      %v1004 = vunpack.c.l.b16 %v941
      %v1005 = vunpack.c.l.b16 %v942
      %v1006 = vunpack.c.l.b16 %v943
      %v1007 = vunpack.c.l.b16 %v944
      %v1008 = vunpack.c.l.b16 %v945
      %v1009 = vunpack.c.l.b16 %v946
      %v1010 = vunpack.c.l.b16 %v947
      %v1011 = vunpack.c.l.b16 %v948
      %v1012 = vunpack.c.l.b16 %v949
      %v1013 = vunpack.c.l.b16 %v950
      %v1014 = vunpack.c.l.b16 %v951
      %v1015 = vunpack.c.l.b16 %v952
      %v1016 = vunpack.c.l.b16 %v953
      %v1017 = vunpack.c.l.b16 %v954
      %v1018 = vunpack.c.l.b16 %v955
      %v1019 = vpack.c.b16 %v1004, %v1003
      %v1020 = vpack.c.b16 %v1006, %v1005
      %v1021 = vpack.c.b16 %v1008, %v1007
      %v1022 = vpack.c.b16 %v1010, %v1009
      %v1023 = vpack.c.b16 %v1012, %v1011
      %v1024 = vpack.c.b16 %v1014, %v1013
      %v1025 = vpack.c.b16 %v1016, %v1015
      %v1026 = vpack.c.b16 %v1018, %v1017
      %1035 = vmatprep.subr.bf16.mxu0 0
      %1036 = vmatpush1.bf16.msra.mxu0 %v1026
      %1037 = vmatprep.subr.bf16.mxu0 0
      %1038 = vmatpush1.bf16.msra.mxu0 %v1025
      %1039 = vmatprep.subr.bf16.mxu0 0
      %1040 = vmatpush1.bf16.msra.mxu0 %v1024
      %1041 = vmatprep.subr.bf16.mxu0 0
      %1042 = vmatpush1.bf16.msra.mxu0 %v1023
      %1043 = vmatprep.subr.bf16.mxu0 0
      %1044 = vmatpush1.bf16.msra.mxu0 %v1022
      %1045 = vmatprep.subr.bf16.mxu0 0
      %1046 = vmatpush1.bf16.msra.mxu0 %v1021
      %1047 = vmatprep.subr.bf16.mxu0 0
      %1048 = vmatpush1.bf16.msra.mxu0 %v1020
      %1049 = vmatprep.subr.bf16.mxu0 0
      %1050 = vmatpush1.bf16.msra.mxu0 %v1019
      %1051 = vmatprep.subr.bf16.mxu0 0
      %1052 = vmatpush2.bf16.msra.mxu0 0
      %1053 = vmatprep.subr.bf16.mxu0 0
      %1054 = vmatpush2.bf16.msra.mxu0 0
      %1055 = vmatprep.subr.bf16.mxu0 0
      %1056 = vmatpush2.bf16.msra.mxu0 0
      %1057 = vmatprep.subr.bf16.mxu0 0
      %1058 = vmatpush2.bf16.msra.mxu0 0
      %1059 = vmatprep.subr.bf16.mxu0 0
      %1060 = vmatpush2.bf16.msra.mxu0 0
      %1061 = vmatprep.subr.bf16.mxu0 0
      %1062 = vmatpush2.bf16.msra.mxu0 0
      %1063 = vmatprep.subr.bf16.mxu0 0
      %1064 = vmatpush2.bf16.msra.mxu0 0
      %1065 = vmatprep.subr.bf16.mxu0 0
      %1066 = vmatpush2.bf16.msra.mxu0 0
      %1067 = vmatprep.mubr.bf16.mxu0 0
      %1068 = vmatmul.mubr.bf16.gmra.mxu0 %v979
      %v1069 = vpop.f32.mrf.mxu0
      %v1070 = vadd.f32 %v961, %v1069
      %v1071 = vpop.f32.mrf.mxu0
      %v1072 = vpop.f32.mrf.mxu0
      %v1073 = vadd.f32 %v961, %v1072
      %v1074 = vpop.f32.mrf.mxu0
      %1075 = vmatprep.mubr.bf16.mxu0 0
      %1076 = vmatmul.mubr.bf16.gmra.mxu0 %v980
      %v1077 = vpop.f32.mrf.mxu0
      %v1078 = vadd.f32 %v961, %v1077
      %v1079 = vpop.f32.mrf.mxu0
      %v1080 = vpop.f32.mrf.mxu0
      %v1081 = vadd.f32 %v961, %v1080
      %v1082 = vpop.f32.mrf.mxu0
      %1083 = vmatprep.mubr.bf16.mxu0 0
      %1084 = vmatmul.mubr.bf16.gmra.mxu0 %v981
      %v1085 = vpop.f32.mrf.mxu0
      %v1086 = vadd.f32 %v961, %v1085
      %v1087 = vpop.f32.mrf.mxu0
      %v1088 = vpop.f32.mrf.mxu0
      %v1089 = vadd.f32 %v961, %v1088
      %v1090 = vpop.f32.mrf.mxu0
      %1091 = vmatprep.mubr.bf16.mxu0 0
      %1092 = vmatmul.mubr.bf16.gmra.mxu0 %v982
      %v1093 = vpop.f32.mrf.mxu0
      %v1094 = vadd.f32 %v961, %v1093
      %v1095 = vpop.f32.mrf.mxu0
      %v1096 = vpop.f32.mrf.mxu0
      %v1097 = vadd.f32 %v961, %v1096
      %v1098 = vpop.f32.mrf.mxu0
      %1099 = vdwg.mxu0
      %v1100 = vmax.f32 %v1070, 0.0
      %v1101 = vmax.f32 %v1073, 0.0
      %v1102 = vmax.f32 %v1078, 0.0
      %v1103 = vmax.f32 %v1081, 0.0
      %v1104 = vmax.f32 %v1086, 0.0
      %v1105 = vmax.f32 %v1089, 0.0
      %v1106 = vmax.f32 %v1094, 0.0
      %v1107 = vmax.f32 %v1097, 0.0
      %v1108 = vpack.c.bf16 %v1101, %v1100
      %v1109 = vpack.c.bf16 %v1103, %v1102
      %v1110 = vpack.c.bf16 %v1105, %v1104
      %v1111 = vpack.c.bf16 %v1107, %v1106
      %v1116 = vunpack.c.l.b16 %v1108
      %v1117 = vunpack.c.h.b16 %v1108
      %v1118 = vunpack.c.l.b16 %v1109
      %v1119 = vunpack.c.h.b16 %v1109
      %v1120 = vunpack.c.l.b16 %v1110
      %v1121 = vunpack.c.h.b16 %v1110
      %v1122 = vunpack.c.l.b16 %v1111
      %v1123 = vunpack.c.h.b16 %v1111
      %v1124 = vpack.c.b16 %v1116, %v1116
      %v1125 = vpack.c.b16 %v1117, %v1117
      %v1126 = vpack.c.b16 %v1118, %v1118
      %v1127 = vpack.c.b16 %v1119, %v1119
      %v1128 = vpack.c.b16 %v1120, %v1120
      %v1129 = vpack.c.b16 %v1121, %v1121
      %v1130 = vpack.c.b16 %v1122, %v1122
      %v1131 = vpack.c.b16 %v1123, %v1123
      %1140 = vst [vmem:[%s248] sm:$0xf] %v1124
      %1141 = vst [vmem:[%s248 + $0x4] sm:$0xf] %v1125
      %1142 = vst [vmem:[%s248 + $0x8] sm:$0xf] %v1126
      %1143 = vst [vmem:[%s248 + $0xc] sm:$0xf] %v1127
      %1144 = vst [vmem:[%s248 + $0x10] sm:$0xf] %v1128
      %1145 = vst [vmem:[%s248 + $0x14] sm:$0xf] %v1129
      %1146 = vst [vmem:[%s248 + $0x18] sm:$0xf] %v1130
      %1147 = vst [vmem:[%s248 + $0x1c] sm:$0xf] %v1131
      %p1148 = scmp.lt.s32.totalorder %s19, 1
      %s1149 = scalar_select %p1148, %s19, 1
      %p1150 = scmp.lt.s32.totalorder %s20, 0
      %s1151 = scalar_select %p1150, %s20, 0
      %s1152 = smul.addr %s1149, 8
      %s1153 = sadd.s32 %s1151, %s1152
      %s1154 = smul.addr %s1153, 4
      %s1155 = scalar_lea.vmem %s4, %s1154
      // Predicated region
      $region37: #{entry_flow_forward.13} parent=35 // pred_check
        %p1156 = pneg %p146
      $region38: #{entry_flow_forward.13} parent=35 // pred_check_branch
        %1158 = sbr.rel (%p1156) target = $region40
      $region39: #{entry_flow_forward.13} parent=35 // pred_region
        _
      $region40: #{entry_flow_forward.13} parent=35 // pred_fallthru
        _
    $region36: #{entry_flow_forward.13} parent=5 // pred_fallthru
      _
    %p1159 = scmp.le.s32.totalorder 2, %s10
    // Predicated region
    $region41: #{entry_flow_forward.13} parent=5 // pred_check
      %p1160 = pneg %p1159
    $region42: #{entry_flow_forward.13} parent=5 // pred_check_branch
      %1162 = sbr.rel (%p1160) target = $region44
    $region43: #{entry_flow_forward.13} parent=5 // pred_region
      %s1163 = ssub.s32 %s10, 2
      // Predicated region
      $region45: #{entry_flow_forward.13} parent=43 // pred_check
        %p1164 = pneg %p152
      $region46: #{entry_flow_forward.13} parent=43 // pred_check_branch
        %1166 = sbr.rel (%p1164) target = $region48
      $region47: #{entry_flow_forward.13} parent=43 // pred_region
        %p1167 = scmp.lt.s32.totalorder %s21, 1
        %s1168 = scalar_select %p1167, %s21, 1
        %p1169 = scmp.lt.s32.totalorder %s22, 0
        %s1170 = scalar_select %p1169, %s22, 0
        %s1171 = smul.addr %s1168, 8
        %s1172 = sadd.s32 %s1170, %s1171
        %s1173 = smul.addr %s1172, 4
        %s1174 = scalar_lea.vmem %s4, %s1173
      $region48: #{entry_flow_forward.13} parent=43 // pred_fallthru
        _
    $region44: #{entry_flow_forward.13} parent=5 // pred_fallthru
      _
  $region6: #{entry_flow_forward.13} parent=0 // loop_footer
    %s14 = sadd.s32 1, %s10
  $region7: #{entry_flow_forward.13} parent=0 // loop_footer_branch
    %9 = sbr.rel target = $region3
  $region8: #{entry_flow_forward.13} parent=0 // loop_exit
    _

// kernel: entry_flow_forward.14
$region0: #{entry_flow_forward.14}
  #allocation0 [shape = 'u32[]', space=smem, size = 0x4, offset = 0x4, fixed_abs, tag = 'smem constant byte address 0x4 - core index']
  #allocation1 [shape = 'u32[144,128]{1,0:T(1,128)}', space=vmem, size = 0x12000, scoped, tag = 'internal scratch']
  #allocation2 [shape = 'bf16[64,128]{1,0:T(8,128)(2,1)}', space=vmem, size = 0x4000, scoped, tag = 'scratch operand']
  %s0 = inlined_call_operand.vmem [shape: bf16[2,10,10,128], index: 0, kind: input, shape index: {}]
  %s1 = inlined_call_operand.vmem [shape: f32[9,128], index: 1, kind: input, shape index: {}]
  %s2 = inlined_call_operand.vmem [shape: bf16[128,128], index: 2, kind: input, shape index: {}]
  %s3 = inlined_call_operand.vmem [shape: f32[1,128], index: 3, kind: input, shape index: {}]
  %s4 = inlined_call_operand.vmem [shape: bf16[2,64,128], index: 4, kind: output, shape index: {}]
  %s5 = sld [smem:[#allocation0]]
  $region49: #{entry_flow_forward.14} parent=0
    _
  %s7 = ssub.s32 1, %s5
  %s8 = scalar_select 0, %s7, %s5
  loop: start=0, step=1, limit=4
  $region2: #{entry_flow_forward.14} parent=0 // loop_pre_header
    _
  $region3: #{entry_flow_forward.14} parent=0 // loop_header
    %s10 = sphi 0, %s14
    %p11 = scmp.ge.s32.totalorder %s10, 4
    %s17 = sphi 0, %s29
    %s18 = sphi 0, %s25
    %s19 = sphi 0, %s17
    %s20 = sphi 0, %s18
    %s21 = sphi 0, %s19
    %s22 = sphi 0, %s20
    %s32 = sphi 0, %s34
    %s35 = sphi 0, %s32
    %s36 = sphi 0, %s35
    %s52 = sphi 0, %s36
    %s56 = sphi 0, %s56
    %s58 = sphi 0, %s56
    %s59 = sphi 0, %s58
    %s73 = sphi 0, %s59
    %s79 = sphi 0, %s81
    %s82 = sphi 0, %s79
    %s83 = sphi 0, %s82
    %s99 = sphi 0, %s83
    %s105 = sphi 0, %s107
    %s108 = sphi 0, %s105
    %s109 = sphi 0, %s108
    %s125 = sphi 0, %s109
    %s133 = sphi 0, %s135
    %s136 = sphi 0, %s133
    %s137 = sphi 0, %s136
    %s153 = sphi 0, %s137
  $region4: #{entry_flow_forward.14} parent=0 // loop_header_branch
    %13 = sbr.rel (%p11) target = $region8
  $region5: #{entry_flow_forward.14} parent=0 // loop_body
    %s15 = ssub.s32 %s10, 1
    %s16 = ssub.s32 %s10, 2
    %s23 = sadd.s32 1, %s18
    %p24 = scmp.ge.s32.totalorder %s23, 1
    %s25 = scalar_select %p24, 0, %s23
    %s26 = sadd.s32 1, %s17
    %s27 = scalar_select %p24, %s26, %s17
    %p28 = scmp.ge.s32.totalorder %s27, 2
    %s29 = scalar_select %p28, 0, %s27
    %s30 = ssub.s32 %s17, %s29
    %p31 = scmp.eq.s32.totalorder %s30, 0
    %s33 = sadd.s32 %s32, 1
    %s34 = scalar_select %p31, %s32, %s33
    %p37 = pneg %p31
    %p38 = scmp.eq.s32.totalorder %s10, 1
    %p39 = por %p37, %p38
    %p40 = scmp.ne.s32.totalorder %s32, %s35
    %p41 = scmp.eq.s32.totalorder %s10, 0
    %p42 = por %p40, %p41
    %p43 = scmp.ne.s32.totalorder %s32, %s35
    %p44 = scmp.eq.s32.totalorder %s15, 1
    %p45 = por %p43, %p44
    %p46 = scmp.ne.s32.totalorder %s35, %s36
    %p47 = scmp.eq.s32.totalorder %s15, 0
    %p48 = por %p46, %p47
    %p49 = scmp.ne.s32.totalorder %s35, %s36
    %p50 = scmp.eq.s32.totalorder %s16, 1
    %p51 = por %p49, %p50
    %p53 = scmp.ne.s32.totalorder %s36, %s52
    %p54 = scmp.eq.s32.totalorder %s16, 0
    %p55 = por %p53, %p54
    %s57 = sadd.s32 %s56, 1
    %p60 = scmp.eq.s32.totalorder %s10, 1
    %p61 = scmp.ne.s32.totalorder %s56, %s58
    %p62 = scmp.eq.s32.totalorder %s10, 0
    %p63 = por %p61, %p62
    %p64 = scmp.ne.s32.totalorder %s56, %s58
    %p65 = scmp.eq.s32.totalorder %s15, 1
    %p66 = por %p64, %p65
    %p67 = scmp.ne.s32.totalorder %s58, %s59
    %p68 = scmp.eq.s32.totalorder %s15, 0
    %p69 = por %p67, %p68
    %p70 = scmp.ne.s32.totalorder %s58, %s59
    %p71 = scmp.eq.s32.totalorder %s16, 1
    %p72 = por %p70, %p71
    %p74 = scmp.ne.s32.totalorder %s59, %s73
    %p75 = scmp.eq.s32.totalorder %s16, 0
    %p76 = por %p74, %p75
    %s77 = ssub.s32 %s18, %s25
    %p78 = scmp.eq.s32.totalorder %s77, 0
    %s80 = sadd.s32 %s79, 1
    %s81 = scalar_select %p78, %s79, %s80
    %p84 = pneg %p78
    %p85 = scmp.eq.s32.totalorder %s10, 1
    %p86 = por %p84, %p85
    %p87 = scmp.ne.s32.totalorder %s79, %s82
    %p88 = scmp.eq.s32.totalorder %s10, 0
    %p89 = por %p87, %p88
    %p90 = scmp.ne.s32.totalorder %s79, %s82
    %p91 = scmp.eq.s32.totalorder %s15, 1
    %p92 = por %p90, %p91
    %p93 = scmp.ne.s32.totalorder %s82, %s83
    %p94 = scmp.eq.s32.totalorder %s15, 0
    %p95 = por %p93, %p94
    %p96 = scmp.ne.s32.totalorder %s82, %s83
    %p97 = scmp.eq.s32.totalorder %s16, 1
    %p98 = por %p96, %p97
    %p100 = scmp.ne.s32.totalorder %s83, %s99
    %p101 = scmp.eq.s32.totalorder %s16, 0
    %p102 = por %p100, %p101
    %s103 = ssub.s32 %s18, %s25
    %p104 = scmp.eq.s32.totalorder %s103, 0
    %s106 = sadd.s32 %s105, 1
    %s107 = scalar_select %p104, %s105, %s106
    %p110 = pneg %p104
    %p111 = scmp.eq.s32.totalorder %s10, 1
    %p112 = por %p110, %p111
    %p113 = scmp.ne.s32.totalorder %s105, %s108
    %p114 = scmp.eq.s32.totalorder %s10, 0
    %p115 = por %p113, %p114
    %p116 = scmp.ne.s32.totalorder %s105, %s108
    %p117 = scmp.eq.s32.totalorder %s15, 1
    %p118 = por %p116, %p117
    %p119 = scmp.ne.s32.totalorder %s108, %s109
    %p120 = scmp.eq.s32.totalorder %s15, 0
    %p121 = por %p119, %p120
    %p122 = scmp.ne.s32.totalorder %s108, %s109
    %p123 = scmp.eq.s32.totalorder %s16, 1
    %p124 = por %p122, %p123
    %p126 = scmp.ne.s32.totalorder %s109, %s125
    %p127 = scmp.eq.s32.totalorder %s16, 0
    %p128 = por %p126, %p127
    %s129 = ssub.s32 %s17, %s29
    %s130 = ssub.s32 %s18, %s25
    %s131 = sor.u32 %s129, %s130
    %p132 = scmp.eq.s32.totalorder %s131, 0
    %s134 = sadd.s32 %s133, 1
    %s135 = scalar_select %p132, %s133, %s134
    %p138 = pneg %p132
    %p139 = scmp.eq.s32.totalorder %s10, 1
    %p140 = por %p138, %p139
    %p141 = scmp.ne.s32.totalorder %s133, %s136
    %p142 = scmp.eq.s32.totalorder %s10, 0
    %p143 = por %p141, %p142
    %p144 = scmp.ne.s32.totalorder %s133, %s136
    %p145 = scmp.eq.s32.totalorder %s15, 1
    %p146 = por %p144, %p145
    %p147 = scmp.ne.s32.totalorder %s136, %s137
    %p148 = scmp.eq.s32.totalorder %s15, 0
    %p149 = por %p147, %p148
    %p150 = scmp.ne.s32.totalorder %s136, %s137
    %p151 = scmp.eq.s32.totalorder %s16, 1
    %p152 = por %p150, %p151
    %p154 = scmp.ne.s32.totalorder %s137, %s153
    %p155 = scmp.eq.s32.totalorder %s16, 0
    %p156 = por %p154, %p155
    %p157 = scmp.le.s32.totalorder 1, %s10
    %p158 = scmp.lt.s32.totalorder %s10, 3
    %p159 = pnand %p157, %p158
    %p160 = pneg %p159
    // Predicated region
    $region9: #{entry_flow_forward.14} parent=5 // pred_check
      _
    $region10: #{entry_flow_forward.14} parent=5 // pred_check_branch
      %162 = sbr.rel (%p159) target = $region12
    $region11: #{entry_flow_forward.14} parent=5 // pred_region
      %s163 = ssub.s32 %s10, 1
      // Predicated region
      $region13: #{entry_flow_forward.14} parent=11 // pred_check
        %p164 = pneg %p69
      $region14: #{entry_flow_forward.14} parent=11 // pred_check_branch
        %166 = sbr.rel (%p164) target = $region16
      $region15: #{entry_flow_forward.14} parent=11 // pred_region
        _
      $region16: #{entry_flow_forward.14} parent=11 // pred_fallthru
        _
      // Predicated region
      $region17: #{entry_flow_forward.14} parent=11 // pred_check
        %p167 = pneg %p95
      $region18: #{entry_flow_forward.14} parent=11 // pred_check_branch
        %169 = sbr.rel (%p167) target = $region20
      $region19: #{entry_flow_forward.14} parent=11 // pred_region
        %p170 = scmp.lt.s32.totalorder %s20, 0
        %s171 = scalar_select %p170, %s20, 0
        %s172 = smul.addr %s171, 4
        %s173 = scalar_lea.vmem %s2, %s172
      $region20: #{entry_flow_forward.14} parent=11 // pred_fallthru
        _
      // Predicated region
      $region21: #{entry_flow_forward.14} parent=11 // pred_check
        %p174 = pneg %p121
      $region22: #{entry_flow_forward.14} parent=11 // pred_check_branch
        %176 = sbr.rel (%p174) target = $region24
      $region23: #{entry_flow_forward.14} parent=11 // pred_region
        %p177 = scmp.lt.s32.totalorder %s20, 0
        %s178 = scalar_select %p177, %s20, 0
        %s179 = scalar_lea.vmem %s3, %s178
      $region24: #{entry_flow_forward.14} parent=11 // pred_fallthru
        _
    $region12: #{entry_flow_forward.14} parent=5 // pred_fallthru
      _
    %p180 = scmp.lt.s32.totalorder %s10, 2
    // Predicated region
    $region25: #{entry_flow_forward.14} parent=5 // pred_check
      %p181 = pneg %p180
    $region26: #{entry_flow_forward.14} parent=5 // pred_check_branch
      %183 = sbr.rel (%p181) target = $region28
    $region27: #{entry_flow_forward.14} parent=5 // pred_region
      // Predicated region
      $region29: #{entry_flow_forward.14} parent=27 // pred_check
        %p184 = pneg %p42
      $region30: #{entry_flow_forward.14} parent=27 // pred_check_branch
        %186 = sbr.rel (%p184) target = $region32
      $region31: #{entry_flow_forward.14} parent=27 // pred_region
        %p187 = scmp.lt.s32.totalorder %s17, 1
        %s188 = scalar_select %p187, %s17, 1
        %s189 = smul.addr %s188, 20
        %s190 = smul.addr %s189, 4
        %s191 = scalar_lea.vmem %s0, %s190
      $region32: #{entry_flow_forward.14} parent=27 // pred_fallthru
        _
    $region28: #{entry_flow_forward.14} parent=5 // pred_fallthru
      _
    %p192 = scmp.le.s32.totalorder 1, %s10
    %p193 = scmp.lt.s32.totalorder %s10, 3
    %p194 = pnand %p192, %p193
    %p195 = pneg %p194
    // Predicated region
    $region33: #{entry_flow_forward.14} parent=5 // pred_check
      _
    $region34: #{entry_flow_forward.14} parent=5 // pred_check_branch
      %197 = sbr.rel (%p194) target = $region36
    $region35: #{entry_flow_forward.14} parent=5 // pred_region
      %s198 = ssub.s32 %s10, 1
      %p199 = scmp.lt.s32.totalorder %s19, 1
      %s200 = scalar_select %p199, %s19, 1
      %s201 = smul.addr %s200, 20
      %s202 = smul.addr %s201, 4
      %s203 = scalar_lea.vmem %s0, %s202
      %p204 = pneg %p48
      %p205 = pneg %p45
      %p206 = pneg %p69
      %p207 = pneg %p66
      %p208 = scmp.lt.s32.totalorder %s20, 0
      %s209 = scalar_select %p208, %s20, 0
      %s210 = smul.addr %s209, 4
      %s211 = scalar_lea.vmem %s2, %s210
      %p212 = pneg %p95
      %p213 = pneg %p92
      %p214 = scmp.lt.s32.totalorder %s20, 0
      %s215 = scalar_select %p214, %s20, 0
      %s216 = scalar_lea.vmem %s3, %s215
      %p217 = pneg %p121
      %p218 = pneg %p118
      %p219 = pneg %p149
      %p220 = pneg %p146
      %p221 = scmp.lt.s32.totalorder %s19, 1
      %s222 = scalar_select %p221, %s19, 1
      %p223 = scmp.lt.s32.totalorder %s20, 0
      %s224 = scalar_select %p223, %s20, 0
      %s225 = smul.addr %s222, 8
      %s226 = sadd.s32 %s224, %s225
      %s227 = smul.addr %s226, 4
      %s228 = scalar_lea.vmem %s4, %s227
      %p229 = scmp.lt.s32.totalorder %s19, 1
      %s230 = scalar_select %p229, %s19, 1
      %s231 = smul.addr %s230, 20
      %s232 = smul.addr %s231, 4
      %s233 = scalar_lea.vmem %s0, %s232
      %p234 = scmp.lt.s32.totalorder %s20, 0
      %s235 = scalar_select %p234, %s20, 0
      %s236 = smul.addr %s235, 4
      %s237 = scalar_lea.vmem %s2, %s236
      %p238 = scmp.lt.s32.totalorder %s20, 0
      %s239 = scalar_select %p238, %s20, 0
      %s240 = scalar_lea.vmem %s3, %s239
      %p241 = scmp.lt.s32.totalorder %s19, 1
      %s242 = scalar_select %p241, %s19, 1
      %p243 = scmp.lt.s32.totalorder %s20, 0
      %s244 = scalar_select %p243, %s20, 0
      %s245 = smul.addr %s242, 8
      %s246 = sadd.s32 %s244, %s245
      %s247 = smul.addr %s246, 4
      %s248 = scalar_lea.vmem %s4, %s247
      %v250 = vld [vmem:[%s1] sm:$0xff]
      %v251 = vld [vmem:[%s1 + $0x8] sm:$0x1]
      %v252 = vld [vmem:[%s233] sm:$0xf]
      %v253 = vld [vmem:[%s233 + $0x8] sm:$0xf]
      %v254 = vld [vmem:[%s233 + $0x10] sm:$0xf]
      %v255 = vld [vmem:[%s233 + $0x18] sm:$0xf]
      %v256 = vld [vmem:[%s233 + $0x20] sm:$0xf]
      %v257 = vld [vmem:[%s233 + $0x28] sm:$0xf]
      %v258 = vld [vmem:[%s233 + $0x30] sm:$0xf]
      %v259 = vld [vmem:[%s233 + $0x38] sm:$0xf]
      %v260 = vunpack.c.l.bf16 %v252
      %v261 = vunpack.c.l.bf16 %v253
      %v262 = vunpack.c.l.bf16 %v254
      %v263 = vunpack.c.l.bf16 %v255
      %v264 = vunpack.c.l.bf16 %v256
      %v265 = vunpack.c.l.bf16 %v257
      %v266 = vunpack.c.l.bf16 %v258
      %v267 = vunpack.c.l.bf16 %v259
      %v268 = vlaneseq
      %v269 = vshrl.u32 %v268, 7
      %v270 = vsub.s32 0, %v269
      %v271 = vrot.slane %v250, %v270
      %v272 = vmul.f32 %v260, %v271
      %v273 = vmul.f32 %v261, %v271
      %v274 = vmul.f32 %v262, %v271
      %v275 = vmul.f32 %v263, %v271
      %v276 = vmul.f32 %v264, %v271
      %v277 = vmul.f32 %v265, %v271
      %v278 = vmul.f32 %v266, %v271
      %v279 = vmul.f32 %v267, %v271
      %v280 = vadd.f32 %v272, 0.0
      %v281 = vadd.f32 %v273, 0.0
      %v282 = vadd.f32 %v274, 0.0
      %v283 = vadd.f32 %v275, 0.0
      %v284 = vadd.f32 %v276, 0.0
      %v285 = vadd.f32 %v277, 0.0
      %v286 = vadd.f32 %v278, 0.0
      %v287 = vadd.f32 %v279, 0.0
      %v288 = vld [vmem:[%s233 + $0x4] sm:$0x1]
      %v289 = vld [vmem:[%s233 + $0xc] sm:$0x1]
      %v290 = vld [vmem:[%s233 + $0x14] sm:$0x1]
      %v291 = vld [vmem:[%s233 + $0x1c] sm:$0x1]
      %v292 = vld [vmem:[%s233 + $0x24] sm:$0x1]
      %v293 = vld [vmem:[%s233 + $0x2c] sm:$0x1]
      %v294 = vld [vmem:[%s233 + $0x34] sm:$0x1]
      %v295 = vld [vmem:[%s233 + $0x3c] sm:$0x1]
      %v296 = vunpack.c.l.bf16 %v288
      %v297 = vunpack.c.l.bf16 %v289
      %v298 = vunpack.c.l.bf16 %v290
      %v299 = vunpack.c.l.bf16 %v291
      %v300 = vunpack.c.l.bf16 %v292
      %v301 = vunpack.c.l.bf16 %v293
      %v302 = vunpack.c.l.bf16 %v294
      %v303 = vunpack.c.l.bf16 %v295
      %v304 = vlaneseq
      %v305 = vshrl.u32 %v304, 7
      %v306 = vsub.s32 1, %v305
      %v307 = vrot.slane %v250, %v306
      %v308 = vmul.f32 %v260, %v307
      %v309 = vmul.f32 %v296, %v307
      %v310 = vmul.f32 %v261, %v307
      %v311 = vmul.f32 %v297, %v307
      %v312 = vmul.f32 %v262, %v307
      %v313 = vmul.f32 %v298, %v307
      %v314 = vmul.f32 %v263, %v307
      %v315 = vmul.f32 %v299, %v307
      %v316 = vmul.f32 %v264, %v307
      %v317 = vmul.f32 %v300, %v307
      %v318 = vmul.f32 %v265, %v307
      %v319 = vmul.f32 %v301, %v307
      %v320 = vmul.f32 %v266, %v307
      %v321 = vmul.f32 %v302, %v307
      %v322 = vmul.f32 %v267, %v307
      %v323 = vmul.f32 %v303, %v307
      %vm340 = vcmask 1046528
      %v341 = vrot.slane %v308, 1
      %v342 = vrot.slane %v309, 1
      %v343 = vsel %vm340, %v341, %v342
      %v344 = vrot.slane %v310, 1
      %v345 = vrot.slane %v311, 1
      %v346 = vsel %vm340, %v344, %v345
      %v347 = vrot.slane %v312, 1
      %v348 = vrot.slane %v313, 1
      %v349 = vsel %vm340, %v347, %v348
      %v350 = vrot.slane %v314, 1
      %v351 = vrot.slane %v315, 1
      %v352 = vsel %vm340, %v350, %v351
      %v353 = vrot.slane %v316, 1
      %v354 = vrot.slane %v317, 1
      %v355 = vsel %vm340, %v353, %v354
      %v356 = vrot.slane %v318, 1
      %v357 = vrot.slane %v319, 1
      %v358 = vsel %vm340, %v356, %v357
      %v359 = vrot.slane %v320, 1
      %v360 = vrot.slane %v321, 1
      %v361 = vsel %vm340, %v359, %v360
      %v362 = vrot.slane %v322, 1
      %v363 = vrot.slane %v323, 1
      %v364 = vsel %vm340, %v362, %v363
      %v373 = vadd.f32 %v280, %v343
      %v374 = vadd.f32 %v281, %v346
      %v375 = vadd.f32 %v282, %v349
      %v376 = vadd.f32 %v283, %v352
      %v377 = vadd.f32 %v284, %v355
      %v378 = vadd.f32 %v285, %v358
      %v379 = vadd.f32 %v286, %v361
      %v380 = vadd.f32 %v287, %v364
      %v381 = vld [vmem:[%s233] sm:$0xe]
      %v382 = vld [vmem:[%s233 + $0x8] sm:$0xe]
      %v383 = vld [vmem:[%s233 + $0x10] sm:$0xe]
      %v384 = vld [vmem:[%s233 + $0x18] sm:$0xe]
      %v385 = vld [vmem:[%s233 + $0x20] sm:$0xe]
      %v386 = vld [vmem:[%s233 + $0x28] sm:$0xe]
      %v387 = vld [vmem:[%s233 + $0x30] sm:$0xe]
      %v388 = vld [vmem:[%s233 + $0x38] sm:$0xe]
      %v389 = vunpack.c.l.bf16 %v381
      %v390 = vunpack.c.l.bf16 %v382
      %v391 = vunpack.c.l.bf16 %v383
      %v392 = vunpack.c.l.bf16 %v384
      %v393 = vunpack.c.l.bf16 %v385
      %v394 = vunpack.c.l.bf16 %v386
      %v395 = vunpack.c.l.bf16 %v387
      %v396 = vunpack.c.l.bf16 %v388
      %v397 = vlaneseq
      %v398 = vshrl.u32 %v397, 7
      %v399 = vsub.s32 2, %v398
      %v400 = vrot.slane %v250, %v399
      %v401 = vmul.f32 %v389, %v400
      %v402 = vmul.f32 %v296, %v400
      %v403 = vmul.f32 %v390, %v400
      %v404 = vmul.f32 %v297, %v400
      %v405 = vmul.f32 %v391, %v400
      %v406 = vmul.f32 %v298, %v400
      %v407 = vmul.f32 %v392, %v400
      %v408 = vmul.f32 %v299, %v400
      %v409 = vmul.f32 %v393, %v400
      %v410 = vmul.f32 %v300, %v400
      %v411 = vmul.f32 %v394, %v400
      %v412 = vmul.f32 %v301, %v400
      %v413 = vmul.f32 %v395, %v400
      %v414 = vmul.f32 %v302, %v400
      %v415 = vmul.f32 %v396, %v400
      %v416 = vmul.f32 %v303, %v400
      %vm433 = vcmask 1045504
      %v434 = vrot.slane %v401, 2
      %v435 = vrot.slane %v402, 2
      %v436 = vsel %vm433, %v434, %v435
      %v437 = vrot.slane %v403, 2
      %v438 = vrot.slane %v404, 2
      %v439 = vsel %vm433, %v437, %v438
      %v440 = vrot.slane %v405, 2
      %v441 = vrot.slane %v406, 2
      %v442 = vsel %vm433, %v440, %v441
      %v443 = vrot.slane %v407, 2
      %v444 = vrot.slane %v408, 2
      %v445 = vsel %vm433, %v443, %v444
      %v446 = vrot.slane %v409, 2
      %v447 = vrot.slane %v410, 2
      %v448 = vsel %vm433, %v446, %v447
      %v449 = vrot.slane %v411, 2
      %v450 = vrot.slane %v412, 2
      %v451 = vsel %vm433, %v449, %v450
      %v452 = vrot.slane %v413, 2
      %v453 = vrot.slane %v414, 2
      %v454 = vsel %vm433, %v452, %v453
      %v455 = vrot.slane %v415, 2
      %v456 = vrot.slane %v416, 2
      %v457 = vsel %vm433, %v455, %v456
      %v466 = vadd.f32 %v373, %v436
      %v467 = vadd.f32 %v374, %v439
      %v468 = vadd.f32 %v375, %v442
      %v469 = vadd.f32 %v376, %v445
      %v470 = vadd.f32 %v377, %v448
      %v471 = vadd.f32 %v378, %v451
      %v472 = vadd.f32 %v379, %v454
      %v473 = vadd.f32 %v380, %v457
      %s474 = scalar_lea.vmem %s233, 8
      %v475 = vld [vmem:[%s474] sm:$0xf]
      %v476 = vld [vmem:[%s474 + $0x8] sm:$0xf]
      %v477 = vld [vmem:[%s474 + $0x10] sm:$0xf]
      %v478 = vld [vmem:[%s474 + $0x18] sm:$0xf]
      %v479 = vld [vmem:[%s474 + $0x20] sm:$0xf]
      %v480 = vld [vmem:[%s474 + $0x28] sm:$0xf]
      %v481 = vld [vmem:[%s474 + $0x30] sm:$0xf]
      %v482 = vld [vmem:[%s474 + $0x38] sm:$0xf]
      %v483 = vunpack.c.l.bf16 %v475
      %v484 = vunpack.c.l.bf16 %v476
      %v485 = vunpack.c.l.bf16 %v477
      %v486 = vunpack.c.l.bf16 %v478
      %v487 = vunpack.c.l.bf16 %v479
      %v488 = vunpack.c.l.bf16 %v480
      %v489 = vunpack.c.l.bf16 %v481
      %v490 = vunpack.c.l.bf16 %v482
      %v491 = vlaneseq
      %v492 = vshrl.u32 %v491, 7
      %v493 = vsub.s32 3, %v492
      %v494 = vrot.slane %v250, %v493
      %v495 = vmul.f32 %v483, %v494
      %v496 = vmul.f32 %v484, %v494
      %v497 = vmul.f32 %v485, %v494
      %v498 = vmul.f32 %v486, %v494
      %v499 = vmul.f32 %v487, %v494
      %v500 = vmul.f32 %v488, %v494
      %v501 = vmul.f32 %v489, %v494
      %v502 = vmul.f32 %v490, %v494
      %v503 = vadd.f32 %v466, %v495
      %v504 = vadd.f32 %v467, %v496
      %v505 = vadd.f32 %v468, %v497
      %v506 = vadd.f32 %v469, %v498
      %v507 = vadd.f32 %v470, %v499
      %v508 = vadd.f32 %v471, %v500
      %v509 = vadd.f32 %v472, %v501
      %v510 = vadd.f32 %v473, %v502
      %v511 = vld [vmem:[%s474 + $0x4] sm:$0x1]
      %v512 = vld [vmem:[%s474 + $0xc] sm:$0x1]
      %v513 = vld [vmem:[%s474 + $0x14] sm:$0x1]
      %v514 = vld [vmem:[%s474 + $0x1c] sm:$0x1]
      %v515 = vld [vmem:[%s474 + $0x24] sm:$0x1]
      %v516 = vld [vmem:[%s474 + $0x2c] sm:$0x1]
      %v517 = vld [vmem:[%s474 + $0x34] sm:$0x1]
      %v518 = vld [vmem:[%s474 + $0x3c] sm:$0x1]
      %v519 = vunpack.c.l.bf16 %v511
      %v520 = vunpack.c.l.bf16 %v512
      %v521 = vunpack.c.l.bf16 %v513
      %v522 = vunpack.c.l.bf16 %v514
      %v523 = vunpack.c.l.bf16 %v515
      %v524 = vunpack.c.l.bf16 %v516
      %v525 = vunpack.c.l.bf16 %v517
      %v526 = vunpack.c.l.bf16 %v518
      %v527 = vlaneseq
      %v528 = vshrl.u32 %v527, 7
      %v529 = vsub.s32 4, %v528
      %v530 = vrot.slane %v250, %v529
      %v531 = vmul.f32 %v483, %v530
      %v532 = vmul.f32 %v519, %v530
      %v533 = vmul.f32 %v484, %v530
      %v534 = vmul.f32 %v520, %v530
      %v535 = vmul.f32 %v485, %v530
      %v536 = vmul.f32 %v521, %v530
      %v537 = vmul.f32 %v486, %v530
      %v538 = vmul.f32 %v522, %v530
      %v539 = vmul.f32 %v487, %v530
      %v540 = vmul.f32 %v523, %v530
      %v541 = vmul.f32 %v488, %v530
      %v542 = vmul.f32 %v524, %v530
      %v543 = vmul.f32 %v489, %v530
      %v544 = vmul.f32 %v525, %v530
      %v545 = vmul.f32 %v490, %v530
      %v546 = vmul.f32 %v526, %v530
      %v563 = vrot.slane %v531, 1
      %v564 = vrot.slane %v532, 1
      %v565 = vsel %vm340, %v563, %v564
      %v566 = vrot.slane %v533, 1
      %v567 = vrot.slane %v534, 1
      %v568 = vsel %vm340, %v566, %v567
      %v569 = vrot.slane %v535, 1
      %v570 = vrot.slane %v536, 1
      %v571 = vsel %vm340, %v569, %v570
      %v572 = vrot.slane %v537, 1
      %v573 = vrot.slane %v538, 1
      %v574 = vsel %vm340, %v572, %v573
      %v575 = vrot.slane %v539, 1
      %v576 = vrot.slane %v540, 1
      %v577 = vsel %vm340, %v575, %v576
      %v578 = vrot.slane %v541, 1
      %v579 = vrot.slane %v542, 1
      %v580 = vsel %vm340, %v578, %v579
      %v581 = vrot.slane %v543, 1
      %v582 = vrot.slane %v544, 1
      %v583 = vsel %vm340, %v581, %v582
      %v584 = vrot.slane %v545, 1
      %v585 = vrot.slane %v546, 1
      %v586 = vsel %vm340, %v584, %v585
      %v595 = vadd.f32 %v503, %v565
      %v596 = vadd.f32 %v504, %v568
      %v597 = vadd.f32 %v505, %v571
      %v598 = vadd.f32 %v506, %v574
      %v599 = vadd.f32 %v507, %v577
      %v600 = vadd.f32 %v508, %v580
      %v601 = vadd.f32 %v509, %v583
      %v602 = vadd.f32 %v510, %v586
      %v603 = vld [vmem:[%s474] sm:$0xe]
      %v604 = vld [vmem:[%s474 + $0x8] sm:$0xe]
      %v605 = vld [vmem:[%s474 + $0x10] sm:$0xe]
      %v606 = vld [vmem:[%s474 + $0x18] sm:$0xe]
      %v607 = vld [vmem:[%s474 + $0x20] sm:$0xe]
      %v608 = vld [vmem:[%s474 + $0x28] sm:$0xe]
      %v609 = vld [vmem:[%s474 + $0x30] sm:$0xe]
      %v610 = vld [vmem:[%s474 + $0x38] sm:$0xe]
      %v611 = vunpack.c.l.bf16 %v603
      %v612 = vunpack.c.l.bf16 %v604
      %v613 = vunpack.c.l.bf16 %v605
      %v614 = vunpack.c.l.bf16 %v606
      %v615 = vunpack.c.l.bf16 %v607
      %v616 = vunpack.c.l.bf16 %v608
      %v617 = vunpack.c.l.bf16 %v609
      %v618 = vunpack.c.l.bf16 %v610
      %v619 = vlaneseq
      %v620 = vshrl.u32 %v619, 7
      %v621 = vsub.s32 5, %v620
      %v622 = vrot.slane %v250, %v621
      %v623 = vmul.f32 %v611, %v622
      %v624 = vmul.f32 %v519, %v622
      %v625 = vmul.f32 %v612, %v622
      %v626 = vmul.f32 %v520, %v622
      %v627 = vmul.f32 %v613, %v622
      %v628 = vmul.f32 %v521, %v622
      %v629 = vmul.f32 %v614, %v622
      %v630 = vmul.f32 %v522, %v622
      %v631 = vmul.f32 %v615, %v622
      %v632 = vmul.f32 %v523, %v622
      %v633 = vmul.f32 %v616, %v622
      %v634 = vmul.f32 %v524, %v622
      %v635 = vmul.f32 %v617, %v622
      %v636 = vmul.f32 %v525, %v622
      %v637 = vmul.f32 %v618, %v622
      %v638 = vmul.f32 %v526, %v622
      %v655 = vrot.slane %v623, 2
      %v656 = vrot.slane %v624, 2
      %v657 = vsel %vm433, %v655, %v656
      %v658 = vrot.slane %v625, 2
      %v659 = vrot.slane %v626, 2
      %v660 = vsel %vm433, %v658, %v659
      %v661 = vrot.slane %v627, 2
      %v662 = vrot.slane %v628, 2
      %v663 = vsel %vm433, %v661, %v662
      %v664 = vrot.slane %v629, 2
      %v665 = vrot.slane %v630, 2
      %v666 = vsel %vm433, %v664, %v665
      %v667 = vrot.slane %v631, 2
      %v668 = vrot.slane %v632, 2
      %v669 = vsel %vm433, %v667, %v668
      %v670 = vrot.slane %v633, 2
      %v671 = vrot.slane %v634, 2
      %v672 = vsel %vm433, %v670, %v671
      %v673 = vrot.slane %v635, 2
      %v674 = vrot.slane %v636, 2
      %v675 = vsel %vm433, %v673, %v674
      %v676 = vrot.slane %v637, 2
      %v677 = vrot.slane %v638, 2
      %v678 = vsel %vm433, %v676, %v677
      %v687 = vadd.f32 %v595, %v657
      %v688 = vadd.f32 %v596, %v660
      %v689 = vadd.f32 %v597, %v663
      %v690 = vadd.f32 %v598, %v666
      %v691 = vadd.f32 %v599, %v669
      %v692 = vadd.f32 %v600, %v672
      %v693 = vadd.f32 %v601, %v675
      %v694 = vadd.f32 %v602, %v678
      %s695 = scalar_lea.vmem %s233, 16
      %v696 = vld [vmem:[%s695] sm:$0xf]
      %v697 = vld [vmem:[%s695 + $0x8] sm:$0xf]
      %v698 = vld [vmem:[%s695 + $0x10] sm:$0xf]
      %v699 = vld [vmem:[%s695 + $0x18] sm:$0xf]
      %v700 = vld [vmem:[%s695 + $0x20] sm:$0xf]
      %v701 = vld [vmem:[%s695 + $0x28] sm:$0xf]
      %v702 = vld [vmem:[%s695 + $0x30] sm:$0xf]
      %v703 = vld [vmem:[%s695 + $0x38] sm:$0xf]
      %v704 = vunpack.c.l.bf16 %v696
      %v705 = vunpack.c.l.bf16 %v697
      %v706 = vunpack.c.l.bf16 %v698
      %v707 = vunpack.c.l.bf16 %v699
      %v708 = vunpack.c.l.bf16 %v700
      %v709 = vunpack.c.l.bf16 %v701
      %v710 = vunpack.c.l.bf16 %v702
      %v711 = vunpack.c.l.bf16 %v703
      %v712 = vlaneseq
      %v713 = vshrl.u32 %v712, 7
      %v714 = vsub.s32 6, %v713
      %v715 = vrot.slane %v250, %v714
      %v716 = vmul.f32 %v704, %v715
      %v717 = vmul.f32 %v705, %v715
      %v718 = vmul.f32 %v706, %v715
      %v719 = vmul.f32 %v707, %v715
      %v720 = vmul.f32 %v708, %v715
      %v721 = vmul.f32 %v709, %v715
      %v722 = vmul.f32 %v710, %v715
      %v723 = vmul.f32 %v711, %v715
      %v724 = vadd.f32 %v687, %v716
      %v725 = vadd.f32 %v688, %v717
      %v726 = vadd.f32 %v689, %v718
      %v727 = vadd.f32 %v690, %v719
      %v728 = vadd.f32 %v691, %v720
      %v729 = vadd.f32 %v692, %v721
      %v730 = vadd.f32 %v693, %v722
      %v731 = vadd.f32 %v694, %v723
      %v732 = vld [vmem:[%s695 + $0x4] sm:$0x1]
      %v733 = vld [vmem:[%s695 + $0xc] sm:$0x1]
      %v734 = vld [vmem:[%s695 + $0x14] sm:$0x1]
      %v735 = vld [vmem:[%s695 + $0x1c] sm:$0x1]
      %v736 = vld [vmem:[%s695 + $0x24] sm:$0x1]
      %v737 = vld [vmem:[%s695 + $0x2c] sm:$0x1]
      %v738 = vld [vmem:[%s695 + $0x34] sm:$0x1]
      %v739 = vld [vmem:[%s695 + $0x3c] sm:$0x1]
      %v740 = vunpack.c.l.bf16 %v732
      %v741 = vunpack.c.l.bf16 %v733
      %v742 = vunpack.c.l.bf16 %v734
      %v743 = vunpack.c.l.bf16 %v735
      %v744 = vunpack.c.l.bf16 %v736
      %v745 = vunpack.c.l.bf16 %v737
      %v746 = vunpack.c.l.bf16 %v738
      %v747 = vunpack.c.l.bf16 %v739
      %v748 = vlaneseq
      %v749 = vshrl.u32 %v748, 7
      %v750 = vsub.s32 7, %v749
      %v751 = vrot.slane %v250, %v750
      %v752 = vmul.f32 %v704, %v751
      %v753 = vmul.f32 %v740, %v751
      %v754 = vmul.f32 %v705, %v751
      %v755 = vmul.f32 %v741, %v751
      %v756 = vmul.f32 %v706, %v751
      %v757 = vmul.f32 %v742, %v751
      %v758 = vmul.f32 %v707, %v751
      %v759 = vmul.f32 %v743, %v751
      %v760 = vmul.f32 %v708, %v751
      %v761 = vmul.f32 %v744, %v751
      %v762 = vmul.f32 %v709, %v751
      %v763 = vmul.f32 %v745, %v751
      %v764 = vmul.f32 %v710, %v751
      %v765 = vmul.f32 %v746, %v751
      %v766 = vmul.f32 %v711, %v751
      %v767 = vmul.f32 %v747, %v751
      %v784 = vrot.slane %v752, 1
      %v785 = vrot.slane %v753, 1
      %v786 = vsel %vm340, %v784, %v785
      %v787 = vrot.slane %v754, 1
      %v788 = vrot.slane %v755, 1
      %v789 = vsel %vm340, %v787, %v788
      %v790 = vrot.slane %v756, 1
      %v791 = vrot.slane %v757, 1
      %v792 = vsel %vm340, %v790, %v791
      %v793 = vrot.slane %v758, 1
      %v794 = vrot.slane %v759, 1
      %v795 = vsel %vm340, %v793, %v794
      %v796 = vrot.slane %v760, 1
      %v797 = vrot.slane %v761, 1
      %v798 = vsel %vm340, %v796, %v797
      %v799 = vrot.slane %v762, 1
      %v800 = vrot.slane %v763, 1
      %v801 = vsel %vm340, %v799, %v800
      %v802 = vrot.slane %v764, 1
      %v803 = vrot.slane %v765, 1
      %v804 = vsel %vm340, %v802, %v803
      %v805 = vrot.slane %v766, 1
      %v806 = vrot.slane %v767, 1
      %v807 = vsel %vm340, %v805, %v806
      %v816 = vadd.f32 %v724, %v786
      %v817 = vadd.f32 %v725, %v789
      %v818 = vadd.f32 %v726, %v792
      %v819 = vadd.f32 %v727, %v795
      %v820 = vadd.f32 %v728, %v798
      %v821 = vadd.f32 %v729, %v801
      %v822 = vadd.f32 %v730, %v804
      %v823 = vadd.f32 %v731, %v807
      %v824 = vld [vmem:[%s695] sm:$0xe]
      %v825 = vld [vmem:[%s695 + $0x8] sm:$0xe]
      %v826 = vld [vmem:[%s695 + $0x10] sm:$0xe]
      %v827 = vld [vmem:[%s695 + $0x18] sm:$0xe]
      %v828 = vld [vmem:[%s695 + $0x20] sm:$0xe]
      %v829 = vld [vmem:[%s695 + $0x28] sm:$0xe]
      %v830 = vld [vmem:[%s695 + $0x30] sm:$0xe]
      %v831 = vld [vmem:[%s695 + $0x38] sm:$0xe]
      %v832 = vunpack.c.l.bf16 %v824
      %v833 = vunpack.c.l.bf16 %v825
      %v834 = vunpack.c.l.bf16 %v826
      %v835 = vunpack.c.l.bf16 %v827
      %v836 = vunpack.c.l.bf16 %v828
      %v837 = vunpack.c.l.bf16 %v829
      %v838 = vunpack.c.l.bf16 %v830
      %v839 = vunpack.c.l.bf16 %v831
      %v840 = vlaneseq
      %v841 = vshrl.u32 %v840, 7
      %v842 = vsub.s32 0, %v841
      %v843 = vrot.slane %v251, %v842
      %v844 = vmul.f32 %v832, %v843
      %v845 = vmul.f32 %v740, %v843
      %v846 = vmul.f32 %v833, %v843
      %v847 = vmul.f32 %v741, %v843
      %v848 = vmul.f32 %v834, %v843
      %v849 = vmul.f32 %v742, %v843
      %v850 = vmul.f32 %v835, %v843
      %v851 = vmul.f32 %v743, %v843
      %v852 = vmul.f32 %v836, %v843
      %v853 = vmul.f32 %v744, %v843
      %v854 = vmul.f32 %v837, %v843
      %v855 = vmul.f32 %v745, %v843
      %v856 = vmul.f32 %v838, %v843
      %v857 = vmul.f32 %v746, %v843
      %v858 = vmul.f32 %v839, %v843
      %v859 = vmul.f32 %v747, %v843
      %v876 = vrot.slane %v844, 2
      %v877 = vrot.slane %v845, 2
      %v878 = vsel %vm433, %v876, %v877
      %v879 = vrot.slane %v846, 2
      %v880 = vrot.slane %v847, 2
      %v881 = vsel %vm433, %v879, %v880
      %v882 = vrot.slane %v848, 2
      %v883 = vrot.slane %v849, 2
      %v884 = vsel %vm433, %v882, %v883
      %v885 = vrot.slane %v850, 2
      %v886 = vrot.slane %v851, 2
      %v887 = vsel %vm433, %v885, %v886
      %v888 = vrot.slane %v852, 2
      %v889 = vrot.slane %v853, 2
      %v890 = vsel %vm433, %v888, %v889
      %v891 = vrot.slane %v854, 2
      %v892 = vrot.slane %v855, 2
      %v893 = vsel %vm433, %v891, %v892
      %v894 = vrot.slane %v856, 2
      %v895 = vrot.slane %v857, 2
      %v896 = vsel %vm433, %v894, %v895
      %v897 = vrot.slane %v858, 2
      %v898 = vrot.slane %v859, 2
      %v899 = vsel %vm433, %v897, %v898
      %v908 = vadd.f32 %v816, %v878
      %v909 = vadd.f32 %v817, %v881
      %v910 = vadd.f32 %v818, %v884
      %v911 = vadd.f32 %v819, %v887
      %v912 = vadd.f32 %v820, %v890
      %v913 = vadd.f32 %v821, %v893
      %v914 = vadd.f32 %v822, %v896
      %v915 = vadd.f32 %v823, %v899
      %v916 = vpack.c.bf16 %v908, %v908
      %917 = vst [vmem:[#allocation2] sm:$0xf] %v916
      %v918 = vpack.c.bf16 %v909, %v909
      %919 = vst [vmem:[#allocation2 + $0x4] sm:$0xf] %v918
      %v920 = vpack.c.bf16 %v910, %v910
      %921 = vst [vmem:[#allocation2 + $0x8] sm:$0xf] %v920
      %v922 = vpack.c.bf16 %v911, %v911
      %923 = vst [vmem:[#allocation2 + $0xc] sm:$0xf] %v922
      %v924 = vpack.c.bf16 %v912, %v912
      %925 = vst [vmem:[#allocation2 + $0x10] sm:$0xf] %v924
      %v926 = vpack.c.bf16 %v913, %v913
      %927 = vst [vmem:[#allocation2 + $0x14] sm:$0xf] %v926
      %v928 = vpack.c.bf16 %v914, %v914
      %929 = vst [vmem:[#allocation2 + $0x18] sm:$0xf] %v928
      %v930 = vpack.c.bf16 %v915, %v915
      %931 = vst [vmem:[#allocation2 + $0x1c] sm:$0xf] %v930
      %v932 = vld [vmem:[#allocation2] sm:$0xf]
      %v933 = vld [vmem:[#allocation2 + $0x4] sm:$0xf]
      %v934 = vld [vmem:[#allocation2 + $0x8] sm:$0xf]
      %v935 = vld [vmem:[#allocation2 + $0xc] sm:$0xf]
      %v936 = vld [vmem:[#allocation2 + $0x10] sm:$0xf]
      %v937 = vld [vmem:[#allocation2 + $0x14] sm:$0xf]
      %v938 = vld [vmem:[#allocation2 + $0x18] sm:$0xf]
      %v939 = vld [vmem:[#allocation2 + $0x1c] sm:$0xf]
      %v940 = vld [vmem:[%s237] sm:$0xf]
      %v941 = vld [vmem:[%s237 + $0x4] sm:$0xf]
      %v942 = vld [vmem:[%s237 + $0x8] sm:$0xf]
      %v943 = vld [vmem:[%s237 + $0xc] sm:$0xf]
      %v944 = vld [vmem:[%s237 + $0x10] sm:$0xf]
      %v945 = vld [vmem:[%s237 + $0x14] sm:$0xf]
      %v946 = vld [vmem:[%s237 + $0x18] sm:$0xf]
      %v947 = vld [vmem:[%s237 + $0x1c] sm:$0xf]
      %v948 = vld [vmem:[%s237 + $0x20] sm:$0xf]
      %v949 = vld [vmem:[%s237 + $0x24] sm:$0xf]
      %v950 = vld [vmem:[%s237 + $0x28] sm:$0xf]
      %v951 = vld [vmem:[%s237 + $0x2c] sm:$0xf]
      %v952 = vld [vmem:[%s237 + $0x30] sm:$0xf]
      %v953 = vld [vmem:[%s237 + $0x34] sm:$0xf]
      %v954 = vld [vmem:[%s237 + $0x38] sm:$0xf]
      %v955 = vld [vmem:[%s237 + $0x3c] sm:$0xf]
      %v956 = vld [vmem:[%s240] sm:$0x1]
      %v958 = vlaneseq
      %v959 = vshrl.u32 %v958, 7
      %v960 = vsub.s32 0, %v959
      %v961 = vrot.slane %v956, %v960
      %v971 = vunpack.c.l.b16 %v932
      %v972 = vunpack.c.l.b16 %v933
      %v973 = vunpack.c.l.b16 %v934
      %v974 = vunpack.c.l.b16 %v935
      %v975 = vunpack.c.l.b16 %v936
      %v976 = vunpack.c.l.b16 %v937
      %v977 = vunpack.c.l.b16 %v938
      %v978 = vunpack.c.l.b16 %v939
      %v979 = vpack.c.b16 %v972, %v971
      %v980 = vpack.c.b16 %v974, %v973
      %v981 = vpack.c.b16 %v976, %v975
      %v982 = vpack.c.b16 %v978, %v977
      %v1003 = vunpack.c.l.b16 %v940
      %v1004 = vunpack.c.l.b16 %v941
      %v1005 = vunpack.c.l.b16 %v942
      %v1006 = vunpack.c.l.b16 %v943
      %v1007 = vunpack.c.l.b16 %v944
      %v1008 = vunpack.c.l.b16 %v945
      %v1009 = vunpack.c.l.b16 %v946
      %v1010 = vunpack.c.l.b16 %v947
      %v1011 = vunpack.c.l.b16 %v948
      %v1012 = vunpack.c.l.b16 %v949
      %v1013 = vunpack.c.l.b16 %v950
      %v1014 = vunpack.c.l.b16 %v951
      %v1015 = vunpack.c.l.b16 %v952
      %v1016 = vunpack.c.l.b16 %v953
      %v1017 = vunpack.c.l.b16 %v954
      %v1018 = vunpack.c.l.b16 %v955
      %v1019 = vpack.c.b16 %v1004, %v1003
      %v1020 = vpack.c.b16 %v1006, %v1005
      %v1021 = vpack.c.b16 %v1008, %v1007
      %v1022 = vpack.c.b16 %v1010, %v1009
      %v1023 = vpack.c.b16 %v1012, %v1011
      %v1024 = vpack.c.b16 %v1014, %v1013
      %v1025 = vpack.c.b16 %v1016, %v1015
      %v1026 = vpack.c.b16 %v1018, %v1017
      %1035 = vmatprep.subr.bf16.mxu0 0
      %1036 = vmatpush1.bf16.msra.mxu0 %v1026
      %1037 = vmatprep.subr.bf16.mxu0 0
      %1038 = vmatpush1.bf16.msra.mxu0 %v1025
      %1039 = vmatprep.subr.bf16.mxu0 0
      %1040 = vmatpush1.bf16.msra.mxu0 %v1024
      %1041 = vmatprep.subr.bf16.mxu0 0
      %1042 = vmatpush1.bf16.msra.mxu0 %v1023
      %1043 = vmatprep.subr.bf16.mxu0 0
      %1044 = vmatpush1.bf16.msra.mxu0 %v1022
      %1045 = vmatprep.subr.bf16.mxu0 0
      %1046 = vmatpush1.bf16.msra.mxu0 %v1021
      %1047 = vmatprep.subr.bf16.mxu0 0
      %1048 = vmatpush1.bf16.msra.mxu0 %v1020
      %1049 = vmatprep.subr.bf16.mxu0 0
      %1050 = vmatpush1.bf16.msra.mxu0 %v1019
      %1051 = vmatprep.subr.bf16.mxu0 0
      %1052 = vmatpush2.bf16.msra.mxu0 0
      %1053 = vmatprep.subr.bf16.mxu0 0
      %1054 = vmatpush2.bf16.msra.mxu0 0
      %1055 = vmatprep.subr.bf16.mxu0 0
      %1056 = vmatpush2.bf16.msra.mxu0 0
      %1057 = vmatprep.subr.bf16.mxu0 0
      %1058 = vmatpush2.bf16.msra.mxu0 0
      %1059 = vmatprep.subr.bf16.mxu0 0
      %1060 = vmatpush2.bf16.msra.mxu0 0
      %1061 = vmatprep.subr.bf16.mxu0 0
      %1062 = vmatpush2.bf16.msra.mxu0 0
      %1063 = vmatprep.subr.bf16.mxu0 0
      %1064 = vmatpush2.bf16.msra.mxu0 0
      %1065 = vmatprep.subr.bf16.mxu0 0
      %1066 = vmatpush2.bf16.msra.mxu0 0
      %1067 = vmatprep.mubr.bf16.mxu0 0
      %1068 = vmatmul.mubr.bf16.gmra.mxu0 %v979
      %v1069 = vpop.f32.mrf.mxu0
      %v1070 = vadd.f32 %v961, %v1069
      %v1071 = vpop.f32.mrf.mxu0
      %v1072 = vpop.f32.mrf.mxu0
      %v1073 = vadd.f32 %v961, %v1072
      %v1074 = vpop.f32.mrf.mxu0
      %1075 = vmatprep.mubr.bf16.mxu0 0
      %1076 = vmatmul.mubr.bf16.gmra.mxu0 %v980
      %v1077 = vpop.f32.mrf.mxu0
      %v1078 = vadd.f32 %v961, %v1077
      %v1079 = vpop.f32.mrf.mxu0
      %v1080 = vpop.f32.mrf.mxu0
      %v1081 = vadd.f32 %v961, %v1080
      %v1082 = vpop.f32.mrf.mxu0
      %1083 = vmatprep.mubr.bf16.mxu0 0
      %1084 = vmatmul.mubr.bf16.gmra.mxu0 %v981
      %v1085 = vpop.f32.mrf.mxu0
      %v1086 = vadd.f32 %v961, %v1085
      %v1087 = vpop.f32.mrf.mxu0
      %v1088 = vpop.f32.mrf.mxu0
      %v1089 = vadd.f32 %v961, %v1088
      %v1090 = vpop.f32.mrf.mxu0
      %1091 = vmatprep.mubr.bf16.mxu0 0
      %1092 = vmatmul.mubr.bf16.gmra.mxu0 %v982
      %v1093 = vpop.f32.mrf.mxu0
      %v1094 = vadd.f32 %v961, %v1093
      %v1095 = vpop.f32.mrf.mxu0
      %v1096 = vpop.f32.mrf.mxu0
      %v1097 = vadd.f32 %v961, %v1096
      %v1098 = vpop.f32.mrf.mxu0
      %1099 = vdwg.mxu0
      %v1100 = vpack.c.bf16 %v1073, %v1070
      %v1101 = vpack.c.bf16 %v1081, %v1078
      %v1102 = vpack.c.bf16 %v1089, %v1086
      %v1103 = vpack.c.bf16 %v1097, %v1094
      %v1108 = vunpack.c.l.b16 %v1100
      %v1109 = vunpack.c.h.b16 %v1100
      %v1110 = vunpack.c.l.b16 %v1101
      %v1111 = vunpack.c.h.b16 %v1101
      %v1112 = vunpack.c.l.b16 %v1102
      %v1113 = vunpack.c.h.b16 %v1102
      %v1114 = vunpack.c.l.b16 %v1103
      %v1115 = vunpack.c.h.b16 %v1103
      %v1116 = vpack.c.b16 %v1108, %v1108
      %v1117 = vpack.c.b16 %v1109, %v1109
      %v1118 = vpack.c.b16 %v1110, %v1110
      %v1119 = vpack.c.b16 %v1111, %v1111
      %v1120 = vpack.c.b16 %v1112, %v1112
      %v1121 = vpack.c.b16 %v1113, %v1113
      %v1122 = vpack.c.b16 %v1114, %v1114
      %v1123 = vpack.c.b16 %v1115, %v1115
      %1132 = vst [vmem:[%s248] sm:$0xf] %v1116
      %1133 = vst [vmem:[%s248 + $0x4] sm:$0xf] %v1117
      %1134 = vst [vmem:[%s248 + $0x8] sm:$0xf] %v1118
      %1135 = vst [vmem:[%s248 + $0xc] sm:$0xf] %v1119
      %1136 = vst [vmem:[%s248 + $0x10] sm:$0xf] %v1120
      %1137 = vst [vmem:[%s248 + $0x14] sm:$0xf] %v1121
      %1138 = vst [vmem:[%s248 + $0x18] sm:$0xf] %v1122
      %1139 = vst [vmem:[%s248 + $0x1c] sm:$0xf] %v1123
      %p1140 = scmp.lt.s32.totalorder %s19, 1
      %s1141 = scalar_select %p1140, %s19, 1
      %p1142 = scmp.lt.s32.totalorder %s20, 0
      %s1143 = scalar_select %p1142, %s20, 0
      %s1144 = smul.addr %s1141, 8
      %s1145 = sadd.s32 %s1143, %s1144
      %s1146 = smul.addr %s1145, 4
      %s1147 = scalar_lea.vmem %s4, %s1146
      // Predicated region
      $region37: #{entry_flow_forward.14} parent=35 // pred_check
        %p1148 = pneg %p146
      $region38: #{entry_flow_forward.14} parent=35 // pred_check_branch
        %1150 = sbr.rel (%p1148) target = $region40
      $region39: #{entry_flow_forward.14} parent=35 // pred_region
        _
      $region40: #{entry_flow_forward.14} parent=35 // pred_fallthru
        _
    $region36: #{entry_flow_forward.14} parent=5 // pred_fallthru
      _
    %p1151 = scmp.le.s32.totalorder 2, %s10
    // Predicated region
    $region41: #{entry_flow_forward.14} parent=5 // pred_check
      %p1152 = pneg %p1151
    $region42: #{entry_flow_forward.14} parent=5 // pred_check_branch
      %1154 = sbr.rel (%p1152) target = $region44
    $region43: #{entry_flow_forward.14} parent=5 // pred_region
      %s1155 = ssub.s32 %s10, 2
      // Predicated region
      $region45: #{entry_flow_forward.14} parent=43 // pred_check
        %p1156 = pneg %p152
      $region46: #{entry_flow_forward.14} parent=43 // pred_check_branch
        %1158 = sbr.rel (%p1156) target = $region48
      $region47: #{entry_flow_forward.14} parent=43 // pred_region
        %p1159 = scmp.lt.s32.totalorder %s21, 1
        %s1160 = scalar_select %p1159, %s21, 1
        %p1161 = scmp.lt.s32.totalorder %s22, 0
        %s1162 = scalar_select %p1161, %s22, 0
        %s1163 = smul.addr %s1160, 8
        %s1164 = sadd.s32 %s1162, %s1163
        %s1165 = smul.addr %s1164, 4
        %s1166 = scalar_lea.vmem %s4, %s1165
      $region48: #{entry_flow_forward.14} parent=43 // pred_fallthru
        _
    $region44: #{entry_flow_forward.14} parent=5 // pred_fallthru
      _
  $region6: #{entry_flow_forward.14} parent=0 // loop_footer
    %s14 = sadd.s32 1, %s10
  $region7: #{entry_flow_forward.14} parent=0 // loop_footer_branch
    %9 = sbr.rel target = $region3
  $region8: #{entry_flow_forward.14} parent=0 // loop_exit
    _

// kernel: entry_flow_forward.15
$region0: #{entry_flow_forward.15}
  #allocation0 [shape = 'u32[]', space=smem, size = 0x4, offset = 0x4, fixed_abs, tag = 'smem constant byte address 0x4 - core index']
  #allocation1 [shape = 'u32[144,128]{1,0:T(1,128)}', space=vmem, size = 0x12000, scoped, tag = 'internal scratch']
  #allocation2 [shape = 'bf16[16,128]{1,0:T(8,128)(2,1)}', space=vmem, size = 0x1000, scoped, tag = 'scratch operand']
  #allocation3 [shape = 'bf16[16,128]{1,0:T(8,128)(2,1)}', space=vmem, size = 0x1000, scoped, tag = 'scratch operand']
  %s0 = inlined_call_operand.vmem [shape: bf16[2,10,5,256], index: 0, kind: input, shape index: {}]
  %s1 = inlined_call_operand.vmem [shape: bf16[2,8,4,256], index: 1, kind: input, shape index: {}]
  %s2 = inlined_call_operand.vmem [shape: bf16[128,128], index: 2, kind: input, shape index: {}]
  %s3 = inlined_call_operand.vmem [shape: f32[1,128], index: 3, kind: input, shape index: {}]
  %s4 = inlined_call_operand.vmem [shape: bf16[2,16,128], index: 4, kind: output, shape index: {}]
  %s5 = sld [smem:[#allocation0]]
  $region49: #{entry_flow_forward.15} parent=0
    _
  %s7 = ssub.s32 1, %s5
  %s8 = scalar_select 0, %s7, %s5
  loop: start=0, step=1, limit=4
  $region2: #{entry_flow_forward.15} parent=0 // loop_pre_header
    _
  $region3: #{entry_flow_forward.15} parent=0 // loop_header
    %s10 = sphi 0, %s14
    %p11 = scmp.ge.s32.totalorder %s10, 4
    %s20 = sphi 0, %s22
    %s23 = sphi 0, %s20
    %s24 = sphi 0, %s23
    %s40 = sphi 0, %s24
    %s46 = sphi 0, %s48
    %s49 = sphi 0, %s46
    %s50 = sphi 0, %s49
    %s66 = sphi 0, %s50
    %s70 = sphi 0, %s70
    %s72 = sphi 0, %s70
    %s73 = sphi 0, %s72
    %s87 = sphi 0, %s73
    %s91 = sphi 0, %s91
    %s93 = sphi 0, %s91
    %s94 = sphi 0, %s93
    %s108 = sphi 0, %s94
    %s114 = sphi 0, %s116
    %s117 = sphi 0, %s114
    %s118 = sphi 0, %s117
    %s134 = sphi 0, %s118
  $region4: #{entry_flow_forward.15} parent=0 // loop_header_branch
    %13 = sbr.rel (%p11) target = $region8
  $region5: #{entry_flow_forward.15} parent=0 // loop_body
    %s15 = ssub.s32 %s10, 1
    %s16 = ssub.s32 %s10, 2
    %s17 = sadd.s32 %s10, 1
    %s18 = ssub.s32 %s10, %s17
    %p19 = scmp.eq.s32.totalorder %s18, 0
    %s21 = sadd.s32 %s20, 1
    %s22 = scalar_select %p19, %s20, %s21
    %p25 = pneg %p19
    %p26 = scmp.eq.s32.totalorder %s10, 1
    %p27 = por %p25, %p26
    %p28 = scmp.ne.s32.totalorder %s20, %s23
    %p29 = scmp.eq.s32.totalorder %s10, 0
    %p30 = por %p28, %p29
    %p31 = scmp.ne.s32.totalorder %s20, %s23
    %p32 = scmp.eq.s32.totalorder %s15, 1
    %p33 = por %p31, %p32
    %p34 = scmp.ne.s32.totalorder %s23, %s24
    %p35 = scmp.eq.s32.totalorder %s15, 0
    %p36 = por %p34, %p35
    %p37 = scmp.ne.s32.totalorder %s23, %s24
    %p38 = scmp.eq.s32.totalorder %s16, 1
    %p39 = por %p37, %p38
    %p41 = scmp.ne.s32.totalorder %s24, %s40
    %p42 = scmp.eq.s32.totalorder %s16, 0
    %p43 = por %p41, %p42
    %s44 = ssub.s32 %s10, %s17
    %p45 = scmp.eq.s32.totalorder %s44, 0
    %s47 = sadd.s32 %s46, 1
    %s48 = scalar_select %p45, %s46, %s47
    %p51 = pneg %p45
    %p52 = scmp.eq.s32.totalorder %s10, 1
    %p53 = por %p51, %p52
    %p54 = scmp.ne.s32.totalorder %s46, %s49
    %p55 = scmp.eq.s32.totalorder %s10, 0
    %p56 = por %p54, %p55
    %p57 = scmp.ne.s32.totalorder %s46, %s49
    %p58 = scmp.eq.s32.totalorder %s15, 1
    %p59 = por %p57, %p58
    %p60 = scmp.ne.s32.totalorder %s49, %s50
    %p61 = scmp.eq.s32.totalorder %s15, 0
    %p62 = por %p60, %p61
    %p63 = scmp.ne.s32.totalorder %s49, %s50
    %p64 = scmp.eq.s32.totalorder %s16, 1
    %p65 = por %p63, %p64
    %p67 = scmp.ne.s32.totalorder %s50, %s66
    %p68 = scmp.eq.s32.totalorder %s16, 0
    %p69 = por %p67, %p68
    %s71 = sadd.s32 %s70, 1
    %p74 = scmp.eq.s32.totalorder %s10, 1
    %p75 = scmp.ne.s32.totalorder %s70, %s72
    %p76 = scmp.eq.s32.totalorder %s10, 0
    %p77 = por %p75, %p76
    %p78 = scmp.ne.s32.totalorder %s70, %s72
    %p79 = scmp.eq.s32.totalorder %s15, 1
    %p80 = por %p78, %p79
    %p81 = scmp.ne.s32.totalorder %s72, %s73
    %p82 = scmp.eq.s32.totalorder %s15, 0
    %p83 = por %p81, %p82
    %p84 = scmp.ne.s32.totalorder %s72, %s73
    %p85 = scmp.eq.s32.totalorder %s16, 1
    %p86 = por %p84, %p85
    %p88 = scmp.ne.s32.totalorder %s73, %s87
    %p89 = scmp.eq.s32.totalorder %s16, 0
    %p90 = por %p88, %p89
    %s92 = sadd.s32 %s91, 1
    %p95 = scmp.eq.s32.totalorder %s10, 1
    %p96 = scmp.ne.s32.totalorder %s91, %s93
    %p97 = scmp.eq.s32.totalorder %s10, 0
    %p98 = por %p96, %p97
    %p99 = scmp.ne.s32.totalorder %s91, %s93
    %p100 = scmp.eq.s32.totalorder %s15, 1
    %p101 = por %p99, %p100
    %p102 = scmp.ne.s32.totalorder %s93, %s94
    %p103 = scmp.eq.s32.totalorder %s15, 0
    %p104 = por %p102, %p103
    %p105 = scmp.ne.s32.totalorder %s93, %s94
    %p106 = scmp.eq.s32.totalorder %s16, 1
    %p107 = por %p105, %p106
    %p109 = scmp.ne.s32.totalorder %s94, %s108
    %p110 = scmp.eq.s32.totalorder %s16, 0
    %p111 = por %p109, %p110
    %s112 = ssub.s32 %s10, %s17
    %p113 = scmp.eq.s32.totalorder %s112, 0
    %s115 = sadd.s32 %s114, 1
    %s116 = scalar_select %p113, %s114, %s115
    %p119 = pneg %p113
    %p120 = scmp.eq.s32.totalorder %s10, 1
    %p121 = por %p119, %p120
    %p122 = scmp.ne.s32.totalorder %s114, %s117
    %p123 = scmp.eq.s32.totalorder %s10, 0
    %p124 = por %p122, %p123
    %p125 = scmp.ne.s32.totalorder %s114, %s117
    %p126 = scmp.eq.s32.totalorder %s15, 1
    %p127 = por %p125, %p126
    %p128 = scmp.ne.s32.totalorder %s117, %s118
    %p129 = scmp.eq.s32.totalorder %s15, 0
    %p130 = por %p128, %p129
    %p131 = scmp.ne.s32.totalorder %s117, %s118
    %p132 = scmp.eq.s32.totalorder %s16, 1
    %p133 = por %p131, %p132
    %p135 = scmp.ne.s32.totalorder %s118, %s134
    %p136 = scmp.eq.s32.totalorder %s16, 0
    %p137 = por %p135, %p136
    %p138 = scmp.le.s32.totalorder 1, %s10
    %p139 = scmp.lt.s32.totalorder %s10, 3
    %p140 = pnand %p138, %p139
    %p141 = pneg %p140
    // Predicated region
    $region9: #{entry_flow_forward.15} parent=5 // pred_check
      _
    $region10: #{entry_flow_forward.15} parent=5 // pred_check_branch
      %143 = sbr.rel (%p140) target = $region12
    $region11: #{entry_flow_forward.15} parent=5 // pred_region
      %s144 = ssub.s32 %s10, 1
      // Predicated region
      $region13: #{entry_flow_forward.15} parent=11 // pred_check
        %p145 = pneg %p83
      $region14: #{entry_flow_forward.15} parent=11 // pred_check_branch
        %147 = sbr.rel (%p145) target = $region16
      $region15: #{entry_flow_forward.15} parent=11 // pred_region
        _
      $region16: #{entry_flow_forward.15} parent=11 // pred_fallthru
        _
      // Predicated region
      $region17: #{entry_flow_forward.15} parent=11 // pred_check
        %p148 = pneg %p104
      $region18: #{entry_flow_forward.15} parent=11 // pred_check_branch
        %150 = sbr.rel (%p148) target = $region20
      $region19: #{entry_flow_forward.15} parent=11 // pred_region
        _
      $region20: #{entry_flow_forward.15} parent=11 // pred_fallthru
        _
    $region12: #{entry_flow_forward.15} parent=5 // pred_fallthru
      _
    %p151 = scmp.lt.s32.totalorder %s10, 2
    // Predicated region
    $region21: #{entry_flow_forward.15} parent=5 // pred_check
      %p152 = pneg %p151
    $region22: #{entry_flow_forward.15} parent=5 // pred_check_branch
      %154 = sbr.rel (%p152) target = $region24
    $region23: #{entry_flow_forward.15} parent=5 // pred_region
      // Predicated region
      $region25: #{entry_flow_forward.15} parent=23 // pred_check
        %p155 = pneg %p30
      $region26: #{entry_flow_forward.15} parent=23 // pred_check_branch
        %157 = sbr.rel (%p155) target = $region28
      $region27: #{entry_flow_forward.15} parent=23 // pred_region
        %p158 = scmp.lt.s32.totalorder %s10, 1
        %s159 = scalar_select %p158, %s10, 1
        %s160 = smul.addr %s159, 20
        %s161 = smul.addr %s160, 4
        %s162 = scalar_lea.vmem %s0, %s161
      $region28: #{entry_flow_forward.15} parent=23 // pred_fallthru
        _
      // Predicated region
      $region29: #{entry_flow_forward.15} parent=23 // pred_check
        %p163 = pneg %p56
      $region30: #{entry_flow_forward.15} parent=23 // pred_check_branch
        %165 = sbr.rel (%p163) target = $region32
      $region31: #{entry_flow_forward.15} parent=23 // pred_region
        %p166 = scmp.lt.s32.totalorder %s10, 1
        %s167 = scalar_select %p166, %s10, 1
        %s168 = smul.addr %s167, 16
        %s169 = smul.addr %s168, 2
        %s170 = scalar_lea.vmem %s1, %s169
      $region32: #{entry_flow_forward.15} parent=23 // pred_fallthru
        _
    $region24: #{entry_flow_forward.15} parent=5 // pred_fallthru
      _
    %p171 = scmp.le.s32.totalorder 1, %s10
    %p172 = scmp.lt.s32.totalorder %s10, 3
    %p173 = pnand %p171, %p172
    %p174 = pneg %p173
    // Predicated region
    $region33: #{entry_flow_forward.15} parent=5 // pred_check
      _
    $region34: #{entry_flow_forward.15} parent=5 // pred_check_branch
      %176 = sbr.rel (%p173) target = $region36
    $region35: #{entry_flow_forward.15} parent=5 // pred_region
      %s177 = ssub.s32 %s10, 1
      %p178 = scmp.lt.s32.totalorder %s15, 1
      %s179 = scalar_select %p178, %s15, 1
      %s180 = smul.addr %s179, 20
      %s181 = smul.addr %s180, 4
      %s182 = scalar_lea.vmem %s0, %s181
      %p183 = pneg %p36
      %p184 = pneg %p33
      %p185 = scmp.lt.s32.totalorder %s15, 1
      %s186 = scalar_select %p185, %s15, 1
      %s187 = smul.addr %s186, 16
      %s188 = smul.addr %s187, 2
      %s189 = scalar_lea.vmem %s1, %s188
      %p190 = pneg %p62
      %p191 = pneg %p59
      %p192 = pneg %p83
      %p193 = pneg %p80
      %p194 = pneg %p104
      %p195 = pneg %p101
      %p196 = pneg %p130
      %p197 = pneg %p127
      %p198 = scmp.lt.s32.totalorder %s15, 1
      %s199 = scalar_select %p198, %s15, 1
      %s200 = smul.addr %s199, 2
      %s201 = smul.addr %s200, 4
      %s202 = scalar_lea.vmem %s4, %s201
      %p203 = scmp.lt.s32.totalorder %s15, 1
      %s204 = scalar_select %p203, %s15, 1
      %s205 = smul.addr %s204, 20
      %s206 = smul.addr %s205, 4
      %s207 = scalar_lea.vmem %s0, %s206
      %p208 = scmp.lt.s32.totalorder %s15, 1
      %s209 = scalar_select %p208, %s15, 1
      %s210 = smul.addr %s209, 16
      %s211 = smul.addr %s210, 2
      %s212 = scalar_lea.vmem %s1, %s211
      %p213 = scmp.lt.s32.totalorder %s15, 1
      %s214 = scalar_select %p213, %s15, 1
      %s215 = smul.addr %s214, 2
      %s216 = smul.addr %s215, 4
      %s217 = scalar_lea.vmem %s4, %s216
      %v219 = vld [vmem:[%s207] sm:$0x77]
      %v220 = vld [vmem:[%s207 + $0x8] sm:$0x77]
      %v221 = vld [vmem:[%s207 + $0x10] sm:$0x77]
      %v222 = vld [vmem:[%s207 + $0x18] sm:$0x77]
      %v223 = vld [vmem:[%s207 + $0x20] sm:$0x77]
      %v224 = vld [vmem:[%s207 + $0x28] sm:$0x77]
      %v225 = vld [vmem:[%s207 + $0x30] sm:$0x77]
      %v226 = vld [vmem:[%s207 + $0x38] sm:$0x77]
      %v227 = vld [vmem:[%s207 + $0x40] sm:$0x77]
      %v237 = vrot.slane %v219, 4
      %v238 = vrot.slane %v220, 4
      %v239 = vrot.slane %v221, 4
      %v240 = vrot.slane %v222, 4
      %v241 = vrot.slane %v223, 4
      %v242 = vrot.slane %v224, 4
      %v243 = vrot.slane %v225, 4
      %v244 = vrot.slane %v226, 4
      %v245 = vrot.slane %v227, 4
      %v255 = vmax.bf16 %v219, %v237
      %v256 = vmax.bf16 %v220, %v238
      %v257 = vmax.bf16 %v221, %v239
      %v258 = vmax.bf16 %v222, %v240
      %v259 = vmax.bf16 %v223, %v241
      %v260 = vmax.bf16 %v224, %v242
      %v261 = vmax.bf16 %v225, %v243
      %v262 = vmax.bf16 %v226, %v244
      %v263 = vmax.bf16 %v227, %v245
      %v265 = vshrl.u32 %v219, 16
      %v267 = vrot.slane %v265, 4
      %v268 = vshll.u32 %v219, 16
      %v270 = vrot.slane %v268, 5
      %v271 = vor.u32 %v267, %v270
      %v272 = vrot.slane %v271, 4
      %v274 = vshrl.u32 %v220, 16
      %v276 = vrot.slane %v274, 4
      %v277 = vshll.u32 %v220, 16
      %v279 = vrot.slane %v277, 5
      %v280 = vor.u32 %v276, %v279
      %v281 = vrot.slane %v280, 4
      %v283 = vshrl.u32 %v221, 16
      %v285 = vrot.slane %v283, 4
      %v286 = vshll.u32 %v221, 16
      %v288 = vrot.slane %v286, 5
      %v289 = vor.u32 %v285, %v288
      %v290 = vrot.slane %v289, 4
      %v292 = vshrl.u32 %v222, 16
      %v294 = vrot.slane %v292, 4
      %v295 = vshll.u32 %v222, 16
      %v297 = vrot.slane %v295, 5
      %v298 = vor.u32 %v294, %v297
      %v299 = vrot.slane %v298, 4
      %v301 = vshrl.u32 %v223, 16
      %v303 = vrot.slane %v301, 4
      %v304 = vshll.u32 %v223, 16
      %v306 = vrot.slane %v304, 5
      %v307 = vor.u32 %v303, %v306
      %v308 = vrot.slane %v307, 4
      %v310 = vshrl.u32 %v224, 16
      %v312 = vrot.slane %v310, 4
      %v313 = vshll.u32 %v224, 16
      %v315 = vrot.slane %v313, 5
      %v316 = vor.u32 %v312, %v315
      %v317 = vrot.slane %v316, 4
      %v319 = vshrl.u32 %v225, 16
      %v321 = vrot.slane %v319, 4
      %v322 = vshll.u32 %v225, 16
      %v324 = vrot.slane %v322, 5
      %v325 = vor.u32 %v321, %v324
      %v326 = vrot.slane %v325, 4
      %v328 = vshrl.u32 %v226, 16
      %v330 = vrot.slane %v328, 4
      %v331 = vshll.u32 %v226, 16
      %v333 = vrot.slane %v331, 5
      %v334 = vor.u32 %v330, %v333
      %v335 = vrot.slane %v334, 4
      %v337 = vshrl.u32 %v227, 16
      %v339 = vrot.slane %v337, 4
      %v340 = vshll.u32 %v227, 16
      %v342 = vrot.slane %v340, 5
      %v343 = vor.u32 %v339, %v342
      %v344 = vrot.slane %v343, 4
      %v354 = vmax.bf16 %v255, %v272
      %v355 = vmax.bf16 %v256, %v281
      %v356 = vmax.bf16 %v257, %v290
      %v357 = vmax.bf16 %v258, %v299
      %v358 = vmax.bf16 %v259, %v308
      %v359 = vmax.bf16 %v260, %v317
      %v360 = vmax.bf16 %v261, %v326
      %v361 = vmax.bf16 %v262, %v335
      %v362 = vmax.bf16 %v263, %v344
      %v363 = vmax.bf16 %v354, %v355
      %v364 = vmax.bf16 %v363, %v356
      %365 = vst [vmem:[#allocation2] sm:$0x3] %v364
      %v366 = vld [vmem:[%s212] sm:$0x3]
      %367 = vst [vmem:[#allocation3] sm:$0x3] %v366
      %v368 = vmax.bf16 %v356, %v357
      %v369 = vmax.bf16 %v368, %v358
      %v371 = vrot.slane %v369, 6
      %373 = vst [vmem:[#allocation2] sm:$0xc] %v371
      %s374 = scalar_lea.vmem %s212, 8
      %v375 = vld [vmem:[%s374] sm:$0x3]
      %v377 = vcombine.low %v375, %v375
      %v379 = vunpack.c.l.s4 1983009808
      %v380 = vunpack.c.0.s8 %v379
      %v381 = vlaneseq
      %v382 = vshrl.u32 %v381, 7
      %v383 = vsub.s32 %v380, %v382
      %v384 = vrot.slane %v377, %v383
      %386 = vst [vmem:[#allocation3] sm:$0xc] %v384
      %v387 = vmax.bf16 %v358, %v359
      %v388 = vmax.bf16 %v387, %v360
      %389 = vst [vmem:[#allocation2 + $0x4] sm:$0x3] %v388
      %s390 = scalar_lea.vmem %s212, 16
      %v391 = vld [vmem:[%s390] sm:$0x3]
      %392 = vst [vmem:[#allocation3 + $0x4] sm:$0x3] %v391
      %v393 = vmax.bf16 %v360, %v361
      %v394 = vmax.bf16 %v393, %v362
      %v396 = vrot.slane %v394, 6
      %398 = vst [vmem:[#allocation2 + $0x4] sm:$0xc] %v396
      %s399 = scalar_lea.vmem %s212, 24
      %v400 = vld [vmem:[%s399] sm:$0x3]
      %v402 = vcombine.low %v400, %v400
      %v404 = vunpack.c.l.s4 1983009808
      %v405 = vunpack.c.0.s8 %v404
      %v406 = vlaneseq
      %v407 = vshrl.u32 %v406, 7
      %v408 = vsub.s32 %v405, %v407
      %v409 = vrot.slane %v402, %v408
      %411 = vst [vmem:[#allocation3 + $0x4] sm:$0xc] %v409
      %v412 = vld [vmem:[#allocation3] sm:$0xf]
      %v413 = vld [vmem:[#allocation3 + $0x4] sm:$0xf]
      %v414 = vld [vmem:[%s2] sm:$0xf]
      %v415 = vld [vmem:[%s2 + $0x4] sm:$0xf]
      %v416 = vld [vmem:[%s2 + $0x8] sm:$0xf]
      %v417 = vld [vmem:[%s2 + $0xc] sm:$0xf]
      %v418 = vld [vmem:[%s2 + $0x10] sm:$0xf]
      %v419 = vld [vmem:[%s2 + $0x14] sm:$0xf]
      %v420 = vld [vmem:[%s2 + $0x18] sm:$0xf]
      %v421 = vld [vmem:[%s2 + $0x1c] sm:$0xf]
      %v422 = vld [vmem:[%s2 + $0x20] sm:$0xf]
      %v423 = vld [vmem:[%s2 + $0x24] sm:$0xf]
      %v424 = vld [vmem:[%s2 + $0x28] sm:$0xf]
      %v425 = vld [vmem:[%s2 + $0x2c] sm:$0xf]
      %v426 = vld [vmem:[%s2 + $0x30] sm:$0xf]
      %v427 = vld [vmem:[%s2 + $0x34] sm:$0xf]
      %v428 = vld [vmem:[%s2 + $0x38] sm:$0xf]
      %v429 = vld [vmem:[%s2 + $0x3c] sm:$0xf]
      %v430 = vld [vmem:[%s3] sm:$0x1]
      %v432 = vlaneseq
      %v433 = vshrl.u32 %v432, 7
      %v434 = vsub.s32 0, %v433
      %v435 = vrot.slane %v430, %v434
      %v439 = vunpack.c.l.b16 %v412
      %v440 = vunpack.c.l.b16 %v413
      %v441 = vpack.c.b16 %v440, %v439
      %v459 = vunpack.c.l.b16 %v414
      %v460 = vunpack.c.l.b16 %v415
      %v461 = vunpack.c.l.b16 %v416
      %v462 = vunpack.c.l.b16 %v417
      %v463 = vunpack.c.l.b16 %v418
      %v464 = vunpack.c.l.b16 %v419
      %v465 = vunpack.c.l.b16 %v420
      %v466 = vunpack.c.l.b16 %v421
      %v467 = vunpack.c.l.b16 %v422
      %v468 = vunpack.c.l.b16 %v423
      %v469 = vunpack.c.l.b16 %v424
      %v470 = vunpack.c.l.b16 %v425
      %v471 = vunpack.c.l.b16 %v426
      %v472 = vunpack.c.l.b16 %v427
      %v473 = vunpack.c.l.b16 %v428
      %v474 = vunpack.c.l.b16 %v429
      %v475 = vpack.c.b16 %v460, %v459
      %v476 = vpack.c.b16 %v462, %v461
      %v477 = vpack.c.b16 %v464, %v463
      %v478 = vpack.c.b16 %v466, %v465
      %v479 = vpack.c.b16 %v468, %v467
      %v480 = vpack.c.b16 %v470, %v469
      %v481 = vpack.c.b16 %v472, %v471
      %v482 = vpack.c.b16 %v474, %v473
      %491 = vmatprep.subr.bf16.mxu0 0
      %492 = vmatpush1.bf16.msra.mxu0 %v482
      %493 = vmatprep.subr.bf16.mxu0 0
      %494 = vmatpush1.bf16.msra.mxu0 %v481
      %495 = vmatprep.subr.bf16.mxu0 0
      %496 = vmatpush1.bf16.msra.mxu0 %v480
      %497 = vmatprep.subr.bf16.mxu0 0
      %498 = vmatpush1.bf16.msra.mxu0 %v479
      %499 = vmatprep.subr.bf16.mxu0 0
      %500 = vmatpush1.bf16.msra.mxu0 %v478
      %501 = vmatprep.subr.bf16.mxu0 0
      %502 = vmatpush1.bf16.msra.mxu0 %v477
      %503 = vmatprep.subr.bf16.mxu0 0
      %504 = vmatpush1.bf16.msra.mxu0 %v476
      %505 = vmatprep.subr.bf16.mxu0 0
      %506 = vmatpush1.bf16.msra.mxu0 %v475
      %507 = vmatprep.subr.bf16.mxu0 0
      %508 = vmatpush2.bf16.msra.mxu0 0
      %509 = vmatprep.subr.bf16.mxu0 0
      %510 = vmatpush2.bf16.msra.mxu0 0
      %511 = vmatprep.subr.bf16.mxu0 0
      %512 = vmatpush2.bf16.msra.mxu0 0
      %513 = vmatprep.subr.bf16.mxu0 0
      %514 = vmatpush2.bf16.msra.mxu0 0
      %515 = vmatprep.subr.bf16.mxu0 0
      %516 = vmatpush2.bf16.msra.mxu0 0
      %517 = vmatprep.subr.bf16.mxu0 0
      %518 = vmatpush2.bf16.msra.mxu0 0
      %519 = vmatprep.subr.bf16.mxu0 0
      %520 = vmatpush2.bf16.msra.mxu0 0
      %521 = vmatprep.subr.bf16.mxu0 0
      %522 = vmatpush2.bf16.msra.mxu0 0
      %523 = vmatprep.mubr.bf16.mxu0 0
      %524 = vmatmul.mubr.bf16.gmra.mxu0 %v441
      %v525 = vpop.f32.mrf.mxu0
      %v526 = vadd.f32 %v435, %v525
      %v527 = vpop.f32.mrf.mxu0
      %v528 = vpop.f32.mrf.mxu0
      %v529 = vadd.f32 %v435, %v528
      %v530 = vpop.f32.mrf.mxu0
      %531 = vdwg.mxu0
      %v532 = vld [vmem:[#allocation2] sm:$0xf]
      %v533 = vld [vmem:[#allocation2 + $0x4] sm:$0xf]
      %v534 = vunpack.c.l.bf16 %v532
      %v535 = vunpack.c.l.bf16 %v533
      %v536 = vadd.f32 %v534, %v526
      %v537 = vadd.f32 %v535, %v529
      %v538 = vmax.f32 %v536, 0.0
      %v539 = vmax.f32 %v537, 0.0
      %v540 = vpack.c.bf16 %v539, %v538
      %v542 = vunpack.c.l.b16 %v540
      %v543 = vunpack.c.h.b16 %v540
      %v544 = vpack.c.b16 %v542, %v542
      %v545 = vpack.c.b16 %v543, %v543
      %548 = vst [vmem:[%s217] sm:$0xf] %v544
      %549 = vst [vmem:[%s217 + $0x4] sm:$0xf] %v545
      %p550 = scmp.lt.s32.totalorder %s15, 1
      %s551 = scalar_select %p550, %s15, 1
      %s552 = smul.addr %s551, 2
      %s553 = smul.addr %s552, 4
      %s554 = scalar_lea.vmem %s4, %s553
      // Predicated region
      $region37: #{entry_flow_forward.15} parent=35 // pred_check
        %p555 = pneg %p127
      $region38: #{entry_flow_forward.15} parent=35 // pred_check_branch
        %557 = sbr.rel (%p555) target = $region40
      $region39: #{entry_flow_forward.15} parent=35 // pred_region
        _
      $region40: #{entry_flow_forward.15} parent=35 // pred_fallthru
        _
    $region36: #{entry_flow_forward.15} parent=5 // pred_fallthru
      _
    %p558 = scmp.le.s32.totalorder 2, %s10
    // Predicated region
    $region41: #{entry_flow_forward.15} parent=5 // pred_check
      %p559 = pneg %p558
    $region42: #{entry_flow_forward.15} parent=5 // pred_check_branch
      %561 = sbr.rel (%p559) target = $region44
    $region43: #{entry_flow_forward.15} parent=5 // pred_region
      %s562 = ssub.s32 %s10, 2
      // Predicated region
      $region45: #{entry_flow_forward.15} parent=43 // pred_check
        %p563 = pneg %p133
      $region46: #{entry_flow_forward.15} parent=43 // pred_check_branch
        %565 = sbr.rel (%p563) target = $region48
      $region47: #{entry_flow_forward.15} parent=43 // pred_region
        %p566 = scmp.lt.s32.totalorder %s16, 1
        %s567 = scalar_select %p566, %s16, 1
        %s568 = smul.addr %s567, 2
        %s569 = smul.addr %s568, 4
        %s570 = scalar_lea.vmem %s4, %s569
      $region48: #{entry_flow_forward.15} parent=43 // pred_fallthru
        _
    $region44: #{entry_flow_forward.15} parent=5 // pred_fallthru
      _
  $region6: #{entry_flow_forward.15} parent=0 // loop_footer
    %s14 = sadd.s32 1, %s10
  $region7: #{entry_flow_forward.15} parent=0 // loop_footer_branch
    %9 = sbr.rel target = $region3
  $region8: #{entry_flow_forward.15} parent=0 // loop_exit
    _

// kernel: entry_flow_forward.16
$region0: #{entry_flow_forward.16}
  #allocation0 [shape = 'u32[]', space=smem, size = 0x4, offset = 0x4, fixed_abs, tag = 'smem constant byte address 0x4 - core index']
  #allocation1 [shape = 'u32[144,128]{1,0:T(1,128)}', space=vmem, size = 0x12000, scoped, tag = 'internal scratch']
  #allocation2 [shape = 'bf16[16,128]{1,0:T(8,128)(2,1)}', space=vmem, size = 0x1000, scoped, tag = 'scratch operand']
  %s0 = inlined_call_operand.vmem [shape: bf16[2,6,6,128], index: 0, kind: input, shape index: {}]
  %s1 = inlined_call_operand.vmem [shape: f32[9,128], index: 1, kind: input, shape index: {}]
  %s2 = inlined_call_operand.vmem [shape: bf16[128,128], index: 2, kind: input, shape index: {}]
  %s3 = inlined_call_operand.vmem [shape: f32[1,128], index: 3, kind: input, shape index: {}]
  %s4 = inlined_call_operand.vmem [shape: bf16[2,16,128], index: 4, kind: output, shape index: {}]
  %s5 = sld [smem:[#allocation0]]
  $region49: #{entry_flow_forward.16} parent=0
    _
  %s7 = ssub.s32 1, %s5
  %s8 = scalar_select 0, %s7, %s5
  loop: start=0, step=1, limit=4
  $region2: #{entry_flow_forward.16} parent=0 // loop_pre_header
    _
  $region3: #{entry_flow_forward.16} parent=0 // loop_header
    %s10 = sphi 0, %s14
    %p11 = scmp.ge.s32.totalorder %s10, 4
    %s17 = sphi 0, %s29
    %s18 = sphi 0, %s25
    %s19 = sphi 0, %s17
    %s20 = sphi 0, %s18
    %s21 = sphi 0, %s19
    %s22 = sphi 0, %s20
    %s32 = sphi 0, %s34
    %s35 = sphi 0, %s32
    %s36 = sphi 0, %s35
    %s52 = sphi 0, %s36
    %s56 = sphi 0, %s56
    %s58 = sphi 0, %s56
    %s59 = sphi 0, %s58
    %s73 = sphi 0, %s59
    %s79 = sphi 0, %s81
    %s82 = sphi 0, %s79
    %s83 = sphi 0, %s82
    %s99 = sphi 0, %s83
    %s105 = sphi 0, %s107
    %s108 = sphi 0, %s105
    %s109 = sphi 0, %s108
    %s125 = sphi 0, %s109
    %s133 = sphi 0, %s135
    %s136 = sphi 0, %s133
    %s137 = sphi 0, %s136
    %s153 = sphi 0, %s137
  $region4: #{entry_flow_forward.16} parent=0 // loop_header_branch
    %13 = sbr.rel (%p11) target = $region8
  $region5: #{entry_flow_forward.16} parent=0 // loop_body
    %s15 = ssub.s32 %s10, 1
    %s16 = ssub.s32 %s10, 2
    %s23 = sadd.s32 1, %s18
    %p24 = scmp.ge.s32.totalorder %s23, 1
    %s25 = scalar_select %p24, 0, %s23
    %s26 = sadd.s32 1, %s17
    %s27 = scalar_select %p24, %s26, %s17
    %p28 = scmp.ge.s32.totalorder %s27, 2
    %s29 = scalar_select %p28, 0, %s27
    %s30 = ssub.s32 %s17, %s29
    %p31 = scmp.eq.s32.totalorder %s30, 0
    %s33 = sadd.s32 %s32, 1
    %s34 = scalar_select %p31, %s32, %s33
    %p37 = pneg %p31
    %p38 = scmp.eq.s32.totalorder %s10, 1
    %p39 = por %p37, %p38
    %p40 = scmp.ne.s32.totalorder %s32, %s35
    %p41 = scmp.eq.s32.totalorder %s10, 0
    %p42 = por %p40, %p41
    %p43 = scmp.ne.s32.totalorder %s32, %s35
    %p44 = scmp.eq.s32.totalorder %s15, 1
    %p45 = por %p43, %p44
    %p46 = scmp.ne.s32.totalorder %s35, %s36
    %p47 = scmp.eq.s32.totalorder %s15, 0
    %p48 = por %p46, %p47
    %p49 = scmp.ne.s32.totalorder %s35, %s36
    %p50 = scmp.eq.s32.totalorder %s16, 1
    %p51 = por %p49, %p50
    %p53 = scmp.ne.s32.totalorder %s36, %s52
    %p54 = scmp.eq.s32.totalorder %s16, 0
    %p55 = por %p53, %p54
    %s57 = sadd.s32 %s56, 1
    %p60 = scmp.eq.s32.totalorder %s10, 1
    %p61 = scmp.ne.s32.totalorder %s56, %s58
    %p62 = scmp.eq.s32.totalorder %s10, 0
    %p63 = por %p61, %p62
    %p64 = scmp.ne.s32.totalorder %s56, %s58
    %p65 = scmp.eq.s32.totalorder %s15, 1
    %p66 = por %p64, %p65
    %p67 = scmp.ne.s32.totalorder %s58, %s59
    %p68 = scmp.eq.s32.totalorder %s15, 0
    %p69 = por %p67, %p68
    %p70 = scmp.ne.s32.totalorder %s58, %s59
    %p71 = scmp.eq.s32.totalorder %s16, 1
    %p72 = por %p70, %p71
    %p74 = scmp.ne.s32.totalorder %s59, %s73
    %p75 = scmp.eq.s32.totalorder %s16, 0
    %p76 = por %p74, %p75
    %s77 = ssub.s32 %s18, %s25
    %p78 = scmp.eq.s32.totalorder %s77, 0
    %s80 = sadd.s32 %s79, 1
    %s81 = scalar_select %p78, %s79, %s80
    %p84 = pneg %p78
    %p85 = scmp.eq.s32.totalorder %s10, 1
    %p86 = por %p84, %p85
    %p87 = scmp.ne.s32.totalorder %s79, %s82
    %p88 = scmp.eq.s32.totalorder %s10, 0
    %p89 = por %p87, %p88
    %p90 = scmp.ne.s32.totalorder %s79, %s82
    %p91 = scmp.eq.s32.totalorder %s15, 1
    %p92 = por %p90, %p91
    %p93 = scmp.ne.s32.totalorder %s82, %s83
    %p94 = scmp.eq.s32.totalorder %s15, 0
    %p95 = por %p93, %p94
    %p96 = scmp.ne.s32.totalorder %s82, %s83
    %p97 = scmp.eq.s32.totalorder %s16, 1
    %p98 = por %p96, %p97
    %p100 = scmp.ne.s32.totalorder %s83, %s99
    %p101 = scmp.eq.s32.totalorder %s16, 0
    %p102 = por %p100, %p101
    %s103 = ssub.s32 %s18, %s25
    %p104 = scmp.eq.s32.totalorder %s103, 0
    %s106 = sadd.s32 %s105, 1
    %s107 = scalar_select %p104, %s105, %s106
    %p110 = pneg %p104
    %p111 = scmp.eq.s32.totalorder %s10, 1
    %p112 = por %p110, %p111
    %p113 = scmp.ne.s32.totalorder %s105, %s108
    %p114 = scmp.eq.s32.totalorder %s10, 0
    %p115 = por %p113, %p114
    %p116 = scmp.ne.s32.totalorder %s105, %s108
    %p117 = scmp.eq.s32.totalorder %s15, 1
    %p118 = por %p116, %p117
    %p119 = scmp.ne.s32.totalorder %s108, %s109
    %p120 = scmp.eq.s32.totalorder %s15, 0
    %p121 = por %p119, %p120
    %p122 = scmp.ne.s32.totalorder %s108, %s109
    %p123 = scmp.eq.s32.totalorder %s16, 1
    %p124 = por %p122, %p123
    %p126 = scmp.ne.s32.totalorder %s109, %s125
    %p127 = scmp.eq.s32.totalorder %s16, 0
    %p128 = por %p126, %p127
    %s129 = ssub.s32 %s17, %s29
    %s130 = ssub.s32 %s18, %s25
    %s131 = sor.u32 %s129, %s130
    %p132 = scmp.eq.s32.totalorder %s131, 0
    %s134 = sadd.s32 %s133, 1
    %s135 = scalar_select %p132, %s133, %s134
    %p138 = pneg %p132
    %p139 = scmp.eq.s32.totalorder %s10, 1
    %p140 = por %p138, %p139
    %p141 = scmp.ne.s32.totalorder %s133, %s136
    %p142 = scmp.eq.s32.totalorder %s10, 0
    %p143 = por %p141, %p142
    %p144 = scmp.ne.s32.totalorder %s133, %s136
    %p145 = scmp.eq.s32.totalorder %s15, 1
    %p146 = por %p144, %p145
    %p147 = scmp.ne.s32.totalorder %s136, %s137
    %p148 = scmp.eq.s32.totalorder %s15, 0
    %p149 = por %p147, %p148
    %p150 = scmp.ne.s32.totalorder %s136, %s137
    %p151 = scmp.eq.s32.totalorder %s16, 1
    %p152 = por %p150, %p151
    %p154 = scmp.ne.s32.totalorder %s137, %s153
    %p155 = scmp.eq.s32.totalorder %s16, 0
    %p156 = por %p154, %p155
    %p157 = scmp.le.s32.totalorder 1, %s10
    %p158 = scmp.lt.s32.totalorder %s10, 3
    %p159 = pnand %p157, %p158
    %p160 = pneg %p159
    // Predicated region
    $region9: #{entry_flow_forward.16} parent=5 // pred_check
      _
    $region10: #{entry_flow_forward.16} parent=5 // pred_check_branch
      %162 = sbr.rel (%p159) target = $region12
    $region11: #{entry_flow_forward.16} parent=5 // pred_region
      %s163 = ssub.s32 %s10, 1
      // Predicated region
      $region13: #{entry_flow_forward.16} parent=11 // pred_check
        %p164 = pneg %p69
      $region14: #{entry_flow_forward.16} parent=11 // pred_check_branch
        %166 = sbr.rel (%p164) target = $region16
      $region15: #{entry_flow_forward.16} parent=11 // pred_region
        _
      $region16: #{entry_flow_forward.16} parent=11 // pred_fallthru
        _
      // Predicated region
      $region17: #{entry_flow_forward.16} parent=11 // pred_check
        %p167 = pneg %p95
      $region18: #{entry_flow_forward.16} parent=11 // pred_check_branch
        %169 = sbr.rel (%p167) target = $region20
      $region19: #{entry_flow_forward.16} parent=11 // pred_region
        %p170 = scmp.lt.s32.totalorder %s20, 0
        %s171 = scalar_select %p170, %s20, 0
        %s172 = smul.addr %s171, 4
        %s173 = scalar_lea.vmem %s2, %s172
      $region20: #{entry_flow_forward.16} parent=11 // pred_fallthru
        _
      // Predicated region
      $region21: #{entry_flow_forward.16} parent=11 // pred_check
        %p174 = pneg %p121
      $region22: #{entry_flow_forward.16} parent=11 // pred_check_branch
        %176 = sbr.rel (%p174) target = $region24
      $region23: #{entry_flow_forward.16} parent=11 // pred_region
        %p177 = scmp.lt.s32.totalorder %s20, 0
        %s178 = scalar_select %p177, %s20, 0
        %s179 = scalar_lea.vmem %s3, %s178
      $region24: #{entry_flow_forward.16} parent=11 // pred_fallthru
        _
    $region12: #{entry_flow_forward.16} parent=5 // pred_fallthru
      _
    %p180 = scmp.lt.s32.totalorder %s10, 2
    // Predicated region
    $region25: #{entry_flow_forward.16} parent=5 // pred_check
      %p181 = pneg %p180
    $region26: #{entry_flow_forward.16} parent=5 // pred_check_branch
      %183 = sbr.rel (%p181) target = $region28
    $region27: #{entry_flow_forward.16} parent=5 // pred_region
      // Predicated region
      $region29: #{entry_flow_forward.16} parent=27 // pred_check
        %p184 = pneg %p42
      $region30: #{entry_flow_forward.16} parent=27 // pred_check_branch
        %186 = sbr.rel (%p184) target = $region32
      $region31: #{entry_flow_forward.16} parent=27 // pred_region
        %p187 = scmp.lt.s32.totalorder %s17, 1
        %s188 = scalar_select %p187, %s17, 1
        %s189 = smul.addr %s188, 6
        %s190 = smul.addr %s189, 4
        %s191 = scalar_lea.vmem %s0, %s190
      $region32: #{entry_flow_forward.16} parent=27 // pred_fallthru
        _
    $region28: #{entry_flow_forward.16} parent=5 // pred_fallthru
      _
    %p192 = scmp.le.s32.totalorder 1, %s10
    %p193 = scmp.lt.s32.totalorder %s10, 3
    %p194 = pnand %p192, %p193
    %p195 = pneg %p194
    // Predicated region
    $region33: #{entry_flow_forward.16} parent=5 // pred_check
      _
    $region34: #{entry_flow_forward.16} parent=5 // pred_check_branch
      %197 = sbr.rel (%p194) target = $region36
    $region35: #{entry_flow_forward.16} parent=5 // pred_region
      %s198 = ssub.s32 %s10, 1
      %p199 = scmp.lt.s32.totalorder %s19, 1
      %s200 = scalar_select %p199, %s19, 1
      %s201 = smul.addr %s200, 6
      %s202 = smul.addr %s201, 4
      %s203 = scalar_lea.vmem %s0, %s202
      %p204 = pneg %p48
      %p205 = pneg %p45
      %p206 = pneg %p69
      %p207 = pneg %p66
      %p208 = scmp.lt.s32.totalorder %s20, 0
      %s209 = scalar_select %p208, %s20, 0
      %s210 = smul.addr %s209, 4
      %s211 = scalar_lea.vmem %s2, %s210
      %p212 = pneg %p95
      %p213 = pneg %p92
      %p214 = scmp.lt.s32.totalorder %s20, 0
      %s215 = scalar_select %p214, %s20, 0
      %s216 = scalar_lea.vmem %s3, %s215
      %p217 = pneg %p121
      %p218 = pneg %p118
      %p219 = pneg %p149
      %p220 = pneg %p146
      %p221 = scmp.lt.s32.totalorder %s19, 1
      %s222 = scalar_select %p221, %s19, 1
      %p223 = scmp.lt.s32.totalorder %s20, 0
      %s224 = scalar_select %p223, %s20, 0
      %s225 = smul.addr %s222, 2
      %s226 = sadd.s32 %s224, %s225
      %s227 = smul.addr %s226, 4
      %s228 = scalar_lea.vmem %s4, %s227
      %p229 = scmp.lt.s32.totalorder %s19, 1
      %s230 = scalar_select %p229, %s19, 1
      %s231 = smul.addr %s230, 6
      %s232 = smul.addr %s231, 4
      %s233 = scalar_lea.vmem %s0, %s232
      %p234 = scmp.lt.s32.totalorder %s20, 0
      %s235 = scalar_select %p234, %s20, 0
      %s236 = smul.addr %s235, 4
      %s237 = scalar_lea.vmem %s2, %s236
      %p238 = scmp.lt.s32.totalorder %s20, 0
      %s239 = scalar_select %p238, %s20, 0
      %s240 = scalar_lea.vmem %s3, %s239
      %p241 = scmp.lt.s32.totalorder %s19, 1
      %s242 = scalar_select %p241, %s19, 1
      %p243 = scmp.lt.s32.totalorder %s20, 0
      %s244 = scalar_select %p243, %s20, 0
      %s245 = smul.addr %s242, 2
      %s246 = sadd.s32 %s244, %s245
      %s247 = smul.addr %s246, 4
      %s248 = scalar_lea.vmem %s4, %s247
      %v250 = vld [vmem:[%s1] sm:$0xff]
      %v251 = vld [vmem:[%s1 + $0x8] sm:$0x1]
      %v252 = vld [vmem:[%s233] sm:$0x3]
      %v253 = vld [vmem:[%s233 + $0x4] sm:$0x3]
      %v254 = vld [vmem:[%s233 + $0x8] sm:$0x3]
      %v255 = vld [vmem:[%s233 + $0xc] sm:$0x3]
      %v256 = vunpack.c.l.bf16 %v252
      %v257 = vunpack.c.l.bf16 %v253
      %v258 = vunpack.c.l.bf16 %v254
      %v259 = vunpack.c.l.bf16 %v255
      %v260 = vlaneseq
      %v261 = vshrl.u32 %v260, 7
      %v262 = vsub.s32 0, %v261
      %v263 = vrot.slane %v250, %v262
      %v264 = vmul.f32 %v256, %v263
      %v265 = vmul.f32 %v257, %v263
      %v266 = vmul.f32 %v258, %v263
      %v267 = vmul.f32 %v259, %v263
      %v268 = vadd.f32 %v264, 0.0
      %v269 = vadd.f32 %v265, 0.0
      %v270 = vadd.f32 %v266, 0.0
      %v271 = vadd.f32 %v267, 0.0
      %v272 = vld [vmem:[%s233] sm:$0x7]
      %v273 = vld [vmem:[%s233 + $0x4] sm:$0x7]
      %v274 = vld [vmem:[%s233 + $0x8] sm:$0x7]
      %v275 = vld [vmem:[%s233 + $0xc] sm:$0x7]
      %v276 = vunpack.c.l.bf16 %v272
      %v277 = vunpack.c.l.bf16 %v273
      %v278 = vunpack.c.l.bf16 %v274
      %v279 = vunpack.c.l.bf16 %v275
      %v280 = vlaneseq
      %v281 = vshrl.u32 %v280, 7
      %v282 = vsub.s32 1, %v281
      %v283 = vrot.slane %v250, %v282
      %v284 = vmul.f32 %v276, %v283
      %v285 = vmul.f32 %v277, %v283
      %v286 = vmul.f32 %v278, %v283
      %v287 = vmul.f32 %v279, %v283
      %v292 = vrot.slane %v284, 1
      %v293 = vrot.slane %v285, 1
      %v294 = vrot.slane %v286, 1
      %v295 = vrot.slane %v287, 1
      %v300 = vadd.f32 %v268, %v292
      %v301 = vadd.f32 %v269, %v293
      %v302 = vadd.f32 %v270, %v294
      %v303 = vadd.f32 %v271, %v295
      %v304 = vld [vmem:[%s233] sm:$0x6]
      %v305 = vld [vmem:[%s233 + $0x4] sm:$0x6]
      %v306 = vld [vmem:[%s233 + $0x8] sm:$0x6]
      %v307 = vld [vmem:[%s233 + $0xc] sm:$0x6]
      %v308 = vunpack.c.l.bf16 %v304
      %v309 = vunpack.c.l.bf16 %v305
      %v310 = vunpack.c.l.bf16 %v306
      %v311 = vunpack.c.l.bf16 %v307
      %v312 = vlaneseq
      %v313 = vshrl.u32 %v312, 7
      %v314 = vsub.s32 2, %v313
      %v315 = vrot.slane %v250, %v314
      %v316 = vmul.f32 %v308, %v315
      %v317 = vmul.f32 %v309, %v315
      %v318 = vmul.f32 %v310, %v315
      %v319 = vmul.f32 %v311, %v315
      %v324 = vrot.slane %v316, 2
      %v325 = vrot.slane %v317, 2
      %v326 = vrot.slane %v318, 2
      %v327 = vrot.slane %v319, 2
      %v332 = vadd.f32 %v300, %v324
      %v333 = vadd.f32 %v301, %v325
      %v334 = vadd.f32 %v302, %v326
      %v335 = vadd.f32 %v303, %v327
      %s336 = scalar_lea.vmem %s233, 4
      %v337 = vld [vmem:[%s336] sm:$0x3]
      %v338 = vld [vmem:[%s336 + $0x4] sm:$0x3]
      %v339 = vld [vmem:[%s336 + $0x8] sm:$0x3]
      %v340 = vld [vmem:[%s336 + $0xc] sm:$0x3]
      %v341 = vunpack.c.l.bf16 %v337
      %v342 = vunpack.c.l.bf16 %v338
      %v343 = vunpack.c.l.bf16 %v339
      %v344 = vunpack.c.l.bf16 %v340
      %v345 = vlaneseq
      %v346 = vshrl.u32 %v345, 7
      %v347 = vsub.s32 3, %v346
      %v348 = vrot.slane %v250, %v347
      %v349 = vmul.f32 %v341, %v348
      %v350 = vmul.f32 %v342, %v348
      %v351 = vmul.f32 %v343, %v348
      %v352 = vmul.f32 %v344, %v348
      %v353 = vadd.f32 %v332, %v349
      %v354 = vadd.f32 %v333, %v350
      %v355 = vadd.f32 %v334, %v351
      %v356 = vadd.f32 %v335, %v352
      %v357 = vld [vmem:[%s336] sm:$0x7]
      %v358 = vld [vmem:[%s336 + $0x4] sm:$0x7]
      %v359 = vld [vmem:[%s336 + $0x8] sm:$0x7]
      %v360 = vld [vmem:[%s336 + $0xc] sm:$0x7]
      %v361 = vunpack.c.l.bf16 %v357
      %v362 = vunpack.c.l.bf16 %v358
      %v363 = vunpack.c.l.bf16 %v359
      %v364 = vunpack.c.l.bf16 %v360
      %v365 = vlaneseq
      %v366 = vshrl.u32 %v365, 7
      %v367 = vsub.s32 4, %v366
      %v368 = vrot.slane %v250, %v367
      %v369 = vmul.f32 %v361, %v368
      %v370 = vmul.f32 %v362, %v368
      %v371 = vmul.f32 %v363, %v368
      %v372 = vmul.f32 %v364, %v368
      %v377 = vrot.slane %v369, 1
      %v378 = vrot.slane %v370, 1
      %v379 = vrot.slane %v371, 1
      %v380 = vrot.slane %v372, 1
      %v385 = vadd.f32 %v353, %v377
      %v386 = vadd.f32 %v354, %v378
      %v387 = vadd.f32 %v355, %v379
      %v388 = vadd.f32 %v356, %v380
      %v389 = vld [vmem:[%s336] sm:$0x6]
      %v390 = vld [vmem:[%s336 + $0x4] sm:$0x6]
      %v391 = vld [vmem:[%s336 + $0x8] sm:$0x6]
      %v392 = vld [vmem:[%s336 + $0xc] sm:$0x6]
      %v393 = vunpack.c.l.bf16 %v389
      %v394 = vunpack.c.l.bf16 %v390
      %v395 = vunpack.c.l.bf16 %v391
      %v396 = vunpack.c.l.bf16 %v392
      %v397 = vlaneseq
      %v398 = vshrl.u32 %v397, 7
      %v399 = vsub.s32 5, %v398
      %v400 = vrot.slane %v250, %v399
      %v401 = vmul.f32 %v393, %v400
      %v402 = vmul.f32 %v394, %v400
      %v403 = vmul.f32 %v395, %v400
      %v404 = vmul.f32 %v396, %v400
      %v409 = vrot.slane %v401, 2
      %v410 = vrot.slane %v402, 2
      %v411 = vrot.slane %v403, 2
      %v412 = vrot.slane %v404, 2
      %v417 = vadd.f32 %v385, %v409
      %v418 = vadd.f32 %v386, %v410
      %v419 = vadd.f32 %v387, %v411
      %v420 = vadd.f32 %v388, %v412
      %s421 = scalar_lea.vmem %s233, 8
      %v422 = vld [vmem:[%s421] sm:$0x3]
      %v423 = vld [vmem:[%s421 + $0x4] sm:$0x3]
      %v424 = vld [vmem:[%s421 + $0x8] sm:$0x3]
      %v425 = vld [vmem:[%s421 + $0xc] sm:$0x3]
      %v426 = vunpack.c.l.bf16 %v422
      %v427 = vunpack.c.l.bf16 %v423
      %v428 = vunpack.c.l.bf16 %v424
      %v429 = vunpack.c.l.bf16 %v425
      %v430 = vlaneseq
      %v431 = vshrl.u32 %v430, 7
      %v432 = vsub.s32 6, %v431
      %v433 = vrot.slane %v250, %v432
      %v434 = vmul.f32 %v426, %v433
      %v435 = vmul.f32 %v427, %v433
      %v436 = vmul.f32 %v428, %v433
      %v437 = vmul.f32 %v429, %v433
      %v438 = vadd.f32 %v417, %v434
      %v439 = vadd.f32 %v418, %v435
      %v440 = vadd.f32 %v419, %v436
      %v441 = vadd.f32 %v420, %v437
      %v442 = vld [vmem:[%s421] sm:$0x7]
      %v443 = vld [vmem:[%s421 + $0x4] sm:$0x7]
      %v444 = vld [vmem:[%s421 + $0x8] sm:$0x7]
      %v445 = vld [vmem:[%s421 + $0xc] sm:$0x7]
      %v446 = vunpack.c.l.bf16 %v442
      %v447 = vunpack.c.l.bf16 %v443
      %v448 = vunpack.c.l.bf16 %v444
      %v449 = vunpack.c.l.bf16 %v445
      %v450 = vlaneseq
      %v451 = vshrl.u32 %v450, 7
      %v452 = vsub.s32 7, %v451
      %v453 = vrot.slane %v250, %v452
      %v454 = vmul.f32 %v446, %v453
      %v455 = vmul.f32 %v447, %v453
      %v456 = vmul.f32 %v448, %v453
      %v457 = vmul.f32 %v449, %v453
      %v462 = vrot.slane %v454, 1
      %v463 = vrot.slane %v455, 1
      %v464 = vrot.slane %v456, 1
      %v465 = vrot.slane %v457, 1
      %v470 = vadd.f32 %v438, %v462
      %v471 = vadd.f32 %v439, %v463
      %v472 = vadd.f32 %v440, %v464
      %v473 = vadd.f32 %v441, %v465
      %v474 = vld [vmem:[%s421] sm:$0x6]
      %v475 = vld [vmem:[%s421 + $0x4] sm:$0x6]
      %v476 = vld [vmem:[%s421 + $0x8] sm:$0x6]
      %v477 = vld [vmem:[%s421 + $0xc] sm:$0x6]
      %v478 = vunpack.c.l.bf16 %v474
      %v479 = vunpack.c.l.bf16 %v475
      %v480 = vunpack.c.l.bf16 %v476
      %v481 = vunpack.c.l.bf16 %v477
      %v482 = vlaneseq
      %v483 = vshrl.u32 %v482, 7
      %v484 = vsub.s32 0, %v483
      %v485 = vrot.slane %v251, %v484
      %v486 = vmul.f32 %v478, %v485
      %v487 = vmul.f32 %v479, %v485
      %v488 = vmul.f32 %v480, %v485
      %v489 = vmul.f32 %v481, %v485
      %v494 = vrot.slane %v486, 2
      %v495 = vrot.slane %v487, 2
      %v496 = vrot.slane %v488, 2
      %v497 = vrot.slane %v489, 2
      %v502 = vadd.f32 %v470, %v494
      %v503 = vadd.f32 %v471, %v495
      %v504 = vadd.f32 %v472, %v496
      %v505 = vadd.f32 %v473, %v497
      %v506 = vpack.c.bf16 %v502, %v502
      %507 = vst [vmem:[#allocation2] sm:$0x3] %v506
      %v508 = vpack.c.bf16 %v503, %v503
      %v510 = vunpack.c.l.b16 %v508
      %v511 = vpack.c.b16 %v510, %v510
      %v512 = vrot.slane %v511, 6
      %514 = vst [vmem:[#allocation2] sm:$0xc] %v512
      %v515 = vpack.c.bf16 %v504, %v504
      %516 = vst [vmem:[#allocation2 + $0x4] sm:$0x3] %v515
      %v517 = vpack.c.bf16 %v505, %v505
      %v519 = vunpack.c.l.b16 %v517
      %v520 = vpack.c.b16 %v519, %v519
      %v521 = vrot.slane %v520, 6
      %523 = vst [vmem:[#allocation2 + $0x4] sm:$0xc] %v521
      %v524 = vld [vmem:[#allocation2] sm:$0xf]
      %v525 = vld [vmem:[#allocation2 + $0x4] sm:$0xf]
      %v526 = vld [vmem:[%s237] sm:$0xf]
      %v527 = vld [vmem:[%s237 + $0x4] sm:$0xf]
      %v528 = vld [vmem:[%s237 + $0x8] sm:$0xf]
      %v529 = vld [vmem:[%s237 + $0xc] sm:$0xf]
      %v530 = vld [vmem:[%s237 + $0x10] sm:$0xf]
      %v531 = vld [vmem:[%s237 + $0x14] sm:$0xf]
      %v532 = vld [vmem:[%s237 + $0x18] sm:$0xf]
      %v533 = vld [vmem:[%s237 + $0x1c] sm:$0xf]
      %v534 = vld [vmem:[%s237 + $0x20] sm:$0xf]
      %v535 = vld [vmem:[%s237 + $0x24] sm:$0xf]
      %v536 = vld [vmem:[%s237 + $0x28] sm:$0xf]
      %v537 = vld [vmem:[%s237 + $0x2c] sm:$0xf]
      %v538 = vld [vmem:[%s237 + $0x30] sm:$0xf]
      %v539 = vld [vmem:[%s237 + $0x34] sm:$0xf]
      %v540 = vld [vmem:[%s237 + $0x38] sm:$0xf]
      %v541 = vld [vmem:[%s237 + $0x3c] sm:$0xf]
      %v542 = vld [vmem:[%s240] sm:$0x1]
      %v544 = vlaneseq
      %v545 = vshrl.u32 %v544, 7
      %v546 = vsub.s32 0, %v545
      %v547 = vrot.slane %v542, %v546
      %v551 = vunpack.c.l.b16 %v524
      %v552 = vunpack.c.l.b16 %v525
      %v553 = vpack.c.b16 %v552, %v551
      %v571 = vunpack.c.l.b16 %v526
      %v572 = vunpack.c.l.b16 %v527
      %v573 = vunpack.c.l.b16 %v528
      %v574 = vunpack.c.l.b16 %v529
      %v575 = vunpack.c.l.b16 %v530
      %v576 = vunpack.c.l.b16 %v531
      %v577 = vunpack.c.l.b16 %v532
      %v578 = vunpack.c.l.b16 %v533
      %v579 = vunpack.c.l.b16 %v534
      %v580 = vunpack.c.l.b16 %v535
      %v581 = vunpack.c.l.b16 %v536
      %v582 = vunpack.c.l.b16 %v537
      %v583 = vunpack.c.l.b16 %v538
      %v584 = vunpack.c.l.b16 %v539
      %v585 = vunpack.c.l.b16 %v540
      %v586 = vunpack.c.l.b16 %v541
      %v587 = vpack.c.b16 %v572, %v571
      %v588 = vpack.c.b16 %v574, %v573
      %v589 = vpack.c.b16 %v576, %v575
      %v590 = vpack.c.b16 %v578, %v577
      %v591 = vpack.c.b16 %v580, %v579
      %v592 = vpack.c.b16 %v582, %v581
      %v593 = vpack.c.b16 %v584, %v583
      %v594 = vpack.c.b16 %v586, %v585
      %603 = vmatprep.subr.bf16.mxu0 0
      %604 = vmatpush1.bf16.msra.mxu0 %v594
      %605 = vmatprep.subr.bf16.mxu0 0
      %606 = vmatpush1.bf16.msra.mxu0 %v593
      %607 = vmatprep.subr.bf16.mxu0 0
      %608 = vmatpush1.bf16.msra.mxu0 %v592
      %609 = vmatprep.subr.bf16.mxu0 0
      %610 = vmatpush1.bf16.msra.mxu0 %v591
      %611 = vmatprep.subr.bf16.mxu0 0
      %612 = vmatpush1.bf16.msra.mxu0 %v590
      %613 = vmatprep.subr.bf16.mxu0 0
      %614 = vmatpush1.bf16.msra.mxu0 %v589
      %615 = vmatprep.subr.bf16.mxu0 0
      %616 = vmatpush1.bf16.msra.mxu0 %v588
      %617 = vmatprep.subr.bf16.mxu0 0
      %618 = vmatpush1.bf16.msra.mxu0 %v587
      %619 = vmatprep.subr.bf16.mxu0 0
      %620 = vmatpush2.bf16.msra.mxu0 0
      %621 = vmatprep.subr.bf16.mxu0 0
      %622 = vmatpush2.bf16.msra.mxu0 0
      %623 = vmatprep.subr.bf16.mxu0 0
      %624 = vmatpush2.bf16.msra.mxu0 0
      %625 = vmatprep.subr.bf16.mxu0 0
      %626 = vmatpush2.bf16.msra.mxu0 0
      %627 = vmatprep.subr.bf16.mxu0 0
      %628 = vmatpush2.bf16.msra.mxu0 0
      %629 = vmatprep.subr.bf16.mxu0 0
      %630 = vmatpush2.bf16.msra.mxu0 0
      %631 = vmatprep.subr.bf16.mxu0 0
      %632 = vmatpush2.bf16.msra.mxu0 0
      %633 = vmatprep.subr.bf16.mxu0 0
      %634 = vmatpush2.bf16.msra.mxu0 0
      %635 = vmatprep.mubr.bf16.mxu0 0
      %636 = vmatmul.mubr.bf16.gmra.mxu0 %v553
      %v637 = vpop.f32.mrf.mxu0
      %v638 = vadd.f32 %v547, %v637
      %v639 = vpop.f32.mrf.mxu0
      %v640 = vpop.f32.mrf.mxu0
      %v641 = vadd.f32 %v547, %v640
      %v642 = vpop.f32.mrf.mxu0
      %643 = vdwg.mxu0
      %v644 = vmax.f32 %v638, 0.0
      %v645 = vmax.f32 %v641, 0.0
      %v646 = vpack.c.bf16 %v645, %v644
      %v648 = vunpack.c.l.b16 %v646
      %v649 = vunpack.c.h.b16 %v646
      %v650 = vpack.c.b16 %v648, %v648
      %v651 = vpack.c.b16 %v649, %v649
      %654 = vst [vmem:[%s248] sm:$0xf] %v650
      %655 = vst [vmem:[%s248 + $0x4] sm:$0xf] %v651
      %p656 = scmp.lt.s32.totalorder %s19, 1
      %s657 = scalar_select %p656, %s19, 1
      %p658 = scmp.lt.s32.totalorder %s20, 0
      %s659 = scalar_select %p658, %s20, 0
      %s660 = smul.addr %s657, 2
      %s661 = sadd.s32 %s659, %s660
      %s662 = smul.addr %s661, 4
      %s663 = scalar_lea.vmem %s4, %s662
      // Predicated region
      $region37: #{entry_flow_forward.16} parent=35 // pred_check
        %p664 = pneg %p146
      $region38: #{entry_flow_forward.16} parent=35 // pred_check_branch
        %666 = sbr.rel (%p664) target = $region40
      $region39: #{entry_flow_forward.16} parent=35 // pred_region
        _
      $region40: #{entry_flow_forward.16} parent=35 // pred_fallthru
        _
    $region36: #{entry_flow_forward.16} parent=5 // pred_fallthru
      _
    %p667 = scmp.le.s32.totalorder 2, %s10
    // Predicated region
    $region41: #{entry_flow_forward.16} parent=5 // pred_check
      %p668 = pneg %p667
    $region42: #{entry_flow_forward.16} parent=5 // pred_check_branch
      %670 = sbr.rel (%p668) target = $region44
    $region43: #{entry_flow_forward.16} parent=5 // pred_region
      %s671 = ssub.s32 %s10, 2
      // Predicated region
      $region45: #{entry_flow_forward.16} parent=43 // pred_check
        %p672 = pneg %p152
      $region46: #{entry_flow_forward.16} parent=43 // pred_check_branch
        %674 = sbr.rel (%p672) target = $region48
      $region47: #{entry_flow_forward.16} parent=43 // pred_region
        %p675 = scmp.lt.s32.totalorder %s21, 1
        %s676 = scalar_select %p675, %s21, 1
        %p677 = scmp.lt.s32.totalorder %s22, 0
        %s678 = scalar_select %p677, %s22, 0
        %s679 = smul.addr %s676, 2
        %s680 = sadd.s32 %s678, %s679
        %s681 = smul.addr %s680, 4
        %s682 = scalar_lea.vmem %s4, %s681
      $region48: #{entry_flow_forward.16} parent=43 // pred_fallthru
        _
    $region44: #{entry_flow_forward.16} parent=5 // pred_fallthru
      _
  $region6: #{entry_flow_forward.16} parent=0 // loop_footer
    %s14 = sadd.s32 1, %s10
  $region7: #{entry_flow_forward.16} parent=0 // loop_footer_branch
    %9 = sbr.rel target = $region3
  $region8: #{entry_flow_forward.16} parent=0 // loop_exit
    _

// kernel: entry_flow_forward.18
$region0: #{entry_flow_forward.18}
  #allocation0 [shape = 'u32[]', space=smem, size = 0x4, offset = 0x4, fixed_abs, tag = 'smem constant byte address 0x4 - core index']
  #allocation1 [shape = 'u32[144,128]{1,0:T(1,128)}', space=vmem, size = 0x12000, scoped, tag = 'internal scratch']
  #allocation2 [shape = 'bf16[4,128]{1,0:T(4,128)(2,1)}', space=vmem, size = 0x400, scoped, tag = 'scratch operand']
  #allocation3 [shape = 'bf16[4,128]{1,0:T(4,128)(2,1)}', space=vmem, size = 0x400, scoped, tag = 'scratch operand']
  %s0 = inlined_call_operand.vmem [shape: bf16[2,6,3,256], index: 0, kind: input, shape index: {}]
  %s1 = inlined_call_operand.vmem [shape: bf16[2,4,2,256], index: 1, kind: input, shape index: {}]
  %s2 = inlined_call_operand.vmem [shape: bf16[128,128], index: 2, kind: input, shape index: {}]
  %s3 = inlined_call_operand.vmem [shape: f32[1,128], index: 3, kind: input, shape index: {}]
  %s4 = inlined_call_operand.vmem [shape: bf16[2,4,128], index: 4, kind: output, shape index: {}]
  %s5 = sld [smem:[#allocation0]]
  $region49: #{entry_flow_forward.18} parent=0
    _
  %s7 = ssub.s32 1, %s5
  %s8 = scalar_select 0, %s7, %s5
  loop: start=0, step=1, limit=4
  $region2: #{entry_flow_forward.18} parent=0 // loop_pre_header
    _
  $region3: #{entry_flow_forward.18} parent=0 // loop_header
    %s10 = sphi 0, %s14
    %p11 = scmp.ge.s32.totalorder %s10, 4
    %s20 = sphi 0, %s22
    %s23 = sphi 0, %s20
    %s24 = sphi 0, %s23
    %s40 = sphi 0, %s24
    %s46 = sphi 0, %s48
    %s49 = sphi 0, %s46
    %s50 = sphi 0, %s49
    %s66 = sphi 0, %s50
    %s70 = sphi 0, %s70
    %s72 = sphi 0, %s70
    %s73 = sphi 0, %s72
    %s87 = sphi 0, %s73
    %s91 = sphi 0, %s91
    %s93 = sphi 0, %s91
    %s94 = sphi 0, %s93
    %s108 = sphi 0, %s94
    %s114 = sphi 0, %s116
    %s117 = sphi 0, %s114
    %s118 = sphi 0, %s117
    %s134 = sphi 0, %s118
  $region4: #{entry_flow_forward.18} parent=0 // loop_header_branch
    %13 = sbr.rel (%p11) target = $region8
  $region5: #{entry_flow_forward.18} parent=0 // loop_body
    %s15 = ssub.s32 %s10, 1
    %s16 = ssub.s32 %s10, 2
    %s17 = sadd.s32 %s10, 1
    %s18 = ssub.s32 %s10, %s17
    %p19 = scmp.eq.s32.totalorder %s18, 0
    %s21 = sadd.s32 %s20, 1
    %s22 = scalar_select %p19, %s20, %s21
    %p25 = pneg %p19
    %p26 = scmp.eq.s32.totalorder %s10, 1
    %p27 = por %p25, %p26
    %p28 = scmp.ne.s32.totalorder %s20, %s23
    %p29 = scmp.eq.s32.totalorder %s10, 0
    %p30 = por %p28, %p29
    %p31 = scmp.ne.s32.totalorder %s20, %s23
    %p32 = scmp.eq.s32.totalorder %s15, 1
    %p33 = por %p31, %p32
    %p34 = scmp.ne.s32.totalorder %s23, %s24
    %p35 = scmp.eq.s32.totalorder %s15, 0
    %p36 = por %p34, %p35
    %p37 = scmp.ne.s32.totalorder %s23, %s24
    %p38 = scmp.eq.s32.totalorder %s16, 1
    %p39 = por %p37, %p38
    %p41 = scmp.ne.s32.totalorder %s24, %s40
    %p42 = scmp.eq.s32.totalorder %s16, 0
    %p43 = por %p41, %p42
    %s44 = ssub.s32 %s10, %s17
    %p45 = scmp.eq.s32.totalorder %s44, 0
    %s47 = sadd.s32 %s46, 1
    %s48 = scalar_select %p45, %s46, %s47
    %p51 = pneg %p45
    %p52 = scmp.eq.s32.totalorder %s10, 1
    %p53 = por %p51, %p52
    %p54 = scmp.ne.s32.totalorder %s46, %s49
    %p55 = scmp.eq.s32.totalorder %s10, 0
    %p56 = por %p54, %p55
    %p57 = scmp.ne.s32.totalorder %s46, %s49
    %p58 = scmp.eq.s32.totalorder %s15, 1
    %p59 = por %p57, %p58
    %p60 = scmp.ne.s32.totalorder %s49, %s50
    %p61 = scmp.eq.s32.totalorder %s15, 0
    %p62 = por %p60, %p61
    %p63 = scmp.ne.s32.totalorder %s49, %s50
    %p64 = scmp.eq.s32.totalorder %s16, 1
    %p65 = por %p63, %p64
    %p67 = scmp.ne.s32.totalorder %s50, %s66
    %p68 = scmp.eq.s32.totalorder %s16, 0
    %p69 = por %p67, %p68
    %s71 = sadd.s32 %s70, 1
    %p74 = scmp.eq.s32.totalorder %s10, 1
    %p75 = scmp.ne.s32.totalorder %s70, %s72
    %p76 = scmp.eq.s32.totalorder %s10, 0
    %p77 = por %p75, %p76
    %p78 = scmp.ne.s32.totalorder %s70, %s72
    %p79 = scmp.eq.s32.totalorder %s15, 1
    %p80 = por %p78, %p79
    %p81 = scmp.ne.s32.totalorder %s72, %s73
    %p82 = scmp.eq.s32.totalorder %s15, 0
    %p83 = por %p81, %p82
    %p84 = scmp.ne.s32.totalorder %s72, %s73
    %p85 = scmp.eq.s32.totalorder %s16, 1
    %p86 = por %p84, %p85
    %p88 = scmp.ne.s32.totalorder %s73, %s87
    %p89 = scmp.eq.s32.totalorder %s16, 0
    %p90 = por %p88, %p89
    %s92 = sadd.s32 %s91, 1
    %p95 = scmp.eq.s32.totalorder %s10, 1
    %p96 = scmp.ne.s32.totalorder %s91, %s93
    %p97 = scmp.eq.s32.totalorder %s10, 0
    %p98 = por %p96, %p97
    %p99 = scmp.ne.s32.totalorder %s91, %s93
    %p100 = scmp.eq.s32.totalorder %s15, 1
    %p101 = por %p99, %p100
    %p102 = scmp.ne.s32.totalorder %s93, %s94
    %p103 = scmp.eq.s32.totalorder %s15, 0
    %p104 = por %p102, %p103
    %p105 = scmp.ne.s32.totalorder %s93, %s94
    %p106 = scmp.eq.s32.totalorder %s16, 1
    %p107 = por %p105, %p106
    %p109 = scmp.ne.s32.totalorder %s94, %s108
    %p110 = scmp.eq.s32.totalorder %s16, 0
    %p111 = por %p109, %p110
    %s112 = ssub.s32 %s10, %s17
    %p113 = scmp.eq.s32.totalorder %s112, 0
    %s115 = sadd.s32 %s114, 1
    %s116 = scalar_select %p113, %s114, %s115
    %p119 = pneg %p113
    %p120 = scmp.eq.s32.totalorder %s10, 1
    %p121 = por %p119, %p120
    %p122 = scmp.ne.s32.totalorder %s114, %s117
    %p123 = scmp.eq.s32.totalorder %s10, 0
    %p124 = por %p122, %p123
    %p125 = scmp.ne.s32.totalorder %s114, %s117
    %p126 = scmp.eq.s32.totalorder %s15, 1
    %p127 = por %p125, %p126
    %p128 = scmp.ne.s32.totalorder %s117, %s118
    %p129 = scmp.eq.s32.totalorder %s15, 0
    %p130 = por %p128, %p129
    %p131 = scmp.ne.s32.totalorder %s117, %s118
    %p132 = scmp.eq.s32.totalorder %s16, 1
    %p133 = por %p131, %p132
    %p135 = scmp.ne.s32.totalorder %s118, %s134
    %p136 = scmp.eq.s32.totalorder %s16, 0
    %p137 = por %p135, %p136
    %p138 = scmp.le.s32.totalorder 1, %s10
    %p139 = scmp.lt.s32.totalorder %s10, 3
    %p140 = pnand %p138, %p139
    %p141 = pneg %p140
    // Predicated region
    $region9: #{entry_flow_forward.18} parent=5 // pred_check
      _
    $region10: #{entry_flow_forward.18} parent=5 // pred_check_branch
      %143 = sbr.rel (%p140) target = $region12
    $region11: #{entry_flow_forward.18} parent=5 // pred_region
      %s144 = ssub.s32 %s10, 1
      // Predicated region
      $region13: #{entry_flow_forward.18} parent=11 // pred_check
        %p145 = pneg %p83
      $region14: #{entry_flow_forward.18} parent=11 // pred_check_branch
        %147 = sbr.rel (%p145) target = $region16
      $region15: #{entry_flow_forward.18} parent=11 // pred_region
        _
      $region16: #{entry_flow_forward.18} parent=11 // pred_fallthru
        _
      // Predicated region
      $region17: #{entry_flow_forward.18} parent=11 // pred_check
        %p148 = pneg %p104
      $region18: #{entry_flow_forward.18} parent=11 // pred_check_branch
        %150 = sbr.rel (%p148) target = $region20
      $region19: #{entry_flow_forward.18} parent=11 // pred_region
        _
      $region20: #{entry_flow_forward.18} parent=11 // pred_fallthru
        _
    $region12: #{entry_flow_forward.18} parent=5 // pred_fallthru
      _
    %p151 = scmp.lt.s32.totalorder %s10, 2
    // Predicated region
    $region21: #{entry_flow_forward.18} parent=5 // pred_check
      %p152 = pneg %p151
    $region22: #{entry_flow_forward.18} parent=5 // pred_check_branch
      %154 = sbr.rel (%p152) target = $region24
    $region23: #{entry_flow_forward.18} parent=5 // pred_region
      // Predicated region
      $region25: #{entry_flow_forward.18} parent=23 // pred_check
        %p155 = pneg %p30
      $region26: #{entry_flow_forward.18} parent=23 // pred_check_branch
        %157 = sbr.rel (%p155) target = $region28
      $region27: #{entry_flow_forward.18} parent=23 // pred_region
        %p158 = scmp.lt.s32.totalorder %s10, 1
        %s159 = scalar_select %p158, %s10, 1
        %s160 = smul.addr %s159, 12
        %s161 = smul.addr %s160, 2
        %s162 = scalar_lea.vmem %s0, %s161
      $region28: #{entry_flow_forward.18} parent=23 // pred_fallthru
        _
      // Predicated region
      $region29: #{entry_flow_forward.18} parent=23 // pred_check
        %p163 = pneg %p56
      $region30: #{entry_flow_forward.18} parent=23 // pred_check_branch
        %165 = sbr.rel (%p163) target = $region32
      $region31: #{entry_flow_forward.18} parent=23 // pred_region
        %p166 = scmp.lt.s32.totalorder %s10, 1
        %s167 = scalar_select %p166, %s10, 1
        %s168 = smul.addr %s167, 8
        %s169 = scalar_lea.vmem %s1, %s168
      $region32: #{entry_flow_forward.18} parent=23 // pred_fallthru
        _
    $region24: #{entry_flow_forward.18} parent=5 // pred_fallthru
      _
    %p170 = scmp.le.s32.totalorder 1, %s10
    %p171 = scmp.lt.s32.totalorder %s10, 3
    %p172 = pnand %p170, %p171
    %p173 = pneg %p172
    // Predicated region
    $region33: #{entry_flow_forward.18} parent=5 // pred_check
      _
    $region34: #{entry_flow_forward.18} parent=5 // pred_check_branch
      %175 = sbr.rel (%p172) target = $region36
    $region35: #{entry_flow_forward.18} parent=5 // pred_region
      %s176 = ssub.s32 %s10, 1
      %p177 = scmp.lt.s32.totalorder %s15, 1
      %s178 = scalar_select %p177, %s15, 1
      %s179 = smul.addr %s178, 12
      %s180 = smul.addr %s179, 2
      %s181 = scalar_lea.vmem %s0, %s180
      %p182 = pneg %p36
      %p183 = pneg %p33
      %p184 = scmp.lt.s32.totalorder %s15, 1
      %s185 = scalar_select %p184, %s15, 1
      %s186 = smul.addr %s185, 8
      %s187 = scalar_lea.vmem %s1, %s186
      %p188 = pneg %p62
      %p189 = pneg %p59
      %p190 = pneg %p83
      %p191 = pneg %p80
      %p192 = pneg %p104
      %p193 = pneg %p101
      %p194 = pneg %p130
      %p195 = pneg %p127
      %p196 = scmp.lt.s32.totalorder %s15, 1
      %s197 = scalar_select %p196, %s15, 1
      %s198 = smul.addr %s197, 2
      %s199 = scalar_lea.vmem %s4, %s198
      %p200 = scmp.lt.s32.totalorder %s15, 1
      %s201 = scalar_select %p200, %s15, 1
      %s202 = smul.addr %s201, 12
      %s203 = smul.addr %s202, 2
      %s204 = scalar_lea.vmem %s0, %s203
      %p205 = scmp.lt.s32.totalorder %s15, 1
      %s206 = scalar_select %p205, %s15, 1
      %s207 = smul.addr %s206, 8
      %s208 = scalar_lea.vmem %s1, %s207
      %p209 = scmp.lt.s32.totalorder %s15, 1
      %s210 = scalar_select %p209, %s15, 1
      %s211 = smul.addr %s210, 2
      %s212 = scalar_lea.vmem %s4, %s211
      %v214 = vld [vmem:[%s204] sm:$0xf]
      %v215 = vld [vmem:[%s204 + $0x4] sm:$0xf]
      %v216 = vld [vmem:[%s204 + $0x8] sm:$0xf]
      %v217 = vld [vmem:[%s204 + $0xc] sm:$0xf]
      %v218 = vld [vmem:[%s204 + $0x10] sm:$0xf]
      %v224 = vrot.slane %v214, 2
      %v225 = vrot.slane %v215, 2
      %v226 = vrot.slane %v216, 2
      %v227 = vrot.slane %v217, 2
      %v228 = vrot.slane %v218, 2
      %v234 = vmax.bf16 %v214, %v224
      %v235 = vmax.bf16 %v215, %v225
      %v236 = vmax.bf16 %v216, %v226
      %v237 = vmax.bf16 %v217, %v227
      %v238 = vmax.bf16 %v218, %v228
      %v240 = vshrl.u32 %v214, 16
      %v242 = vrot.slane %v240, 6
      %v243 = vshll.u32 %v214, 16
      %v245 = vrot.slane %v243, 7
      %v246 = vor.u32 %v242, %v245
      %v247 = vrot.slane %v246, 2
      %v249 = vshrl.u32 %v215, 16
      %v251 = vrot.slane %v249, 6
      %v252 = vshll.u32 %v215, 16
      %v254 = vrot.slane %v252, 7
      %v255 = vor.u32 %v251, %v254
      %v256 = vrot.slane %v255, 2
      %v258 = vshrl.u32 %v216, 16
      %v260 = vrot.slane %v258, 6
      %v261 = vshll.u32 %v216, 16
      %v263 = vrot.slane %v261, 7
      %v264 = vor.u32 %v260, %v263
      %v265 = vrot.slane %v264, 2
      %v267 = vshrl.u32 %v217, 16
      %v269 = vrot.slane %v267, 6
      %v270 = vshll.u32 %v217, 16
      %v272 = vrot.slane %v270, 7
      %v273 = vor.u32 %v269, %v272
      %v274 = vrot.slane %v273, 2
      %v276 = vshrl.u32 %v218, 16
      %v278 = vrot.slane %v276, 6
      %v279 = vshll.u32 %v218, 16
      %v281 = vrot.slane %v279, 7
      %v282 = vor.u32 %v278, %v281
      %v283 = vrot.slane %v282, 2
      %v289 = vmax.bf16 %v234, %v247
      %v290 = vmax.bf16 %v235, %v256
      %v291 = vmax.bf16 %v236, %v265
      %v292 = vmax.bf16 %v237, %v274
      %v293 = vmax.bf16 %v238, %v283
      %v294 = vmax.bf16 %v289, %v290
      %v295 = vmax.bf16 %v294, %v291
      %296 = vst [vmem:[#allocation2] sm:$0x1] %v295
      %v297 = vld [vmem:[%s208] sm:$0x1]
      %298 = vst [vmem:[#allocation3] sm:$0x1] %v297
      %v299 = vmax.bf16 %v291, %v292
      %v300 = vmax.bf16 %v299, %v293
      %v302 = vrot.slane %v300, 7
      %304 = vst [vmem:[#allocation2] sm:$0x2] %v302
      %s305 = scalar_lea.vmem %s208, 4
      %v306 = vld [vmem:[%s305] sm:$0x1]
      %v308 = vcombine.low %v306, %v306
      %v310 = vunpack.c.l.s4 1935823168
      %v311 = vunpack.c.0.s8 %v310
      %v312 = vlaneseq
      %v313 = vshrl.u32 %v312, 7
      %v314 = vsub.s32 %v311, %v313
      %v315 = vrot.slane %v308, %v314
      %317 = vst [vmem:[#allocation3] sm:$0x2] %v315
      %v318 = vld [vmem:[#allocation3] sm:$0x3]
      %v319 = vld [vmem:[%s2] sm:$0xf]
      %v320 = vld [vmem:[%s2 + $0x4] sm:$0xf]
      %v321 = vld [vmem:[%s2 + $0x8] sm:$0xf]
      %v322 = vld [vmem:[%s2 + $0xc] sm:$0xf]
      %v323 = vld [vmem:[%s2 + $0x10] sm:$0xf]
      %v324 = vld [vmem:[%s2 + $0x14] sm:$0xf]
      %v325 = vld [vmem:[%s2 + $0x18] sm:$0xf]
      %v326 = vld [vmem:[%s2 + $0x1c] sm:$0xf]
      %v327 = vld [vmem:[%s2 + $0x20] sm:$0xf]
      %v328 = vld [vmem:[%s2 + $0x24] sm:$0xf]
      %v329 = vld [vmem:[%s2 + $0x28] sm:$0xf]
      %v330 = vld [vmem:[%s2 + $0x2c] sm:$0xf]
      %v331 = vld [vmem:[%s2 + $0x30] sm:$0xf]
      %v332 = vld [vmem:[%s2 + $0x34] sm:$0xf]
      %v333 = vld [vmem:[%s2 + $0x38] sm:$0xf]
      %v334 = vld [vmem:[%s2 + $0x3c] sm:$0xf]
      %v335 = vld [vmem:[%s3] sm:$0x1]
      %v337 = vlaneseq
      %v338 = vshrl.u32 %v337, 7
      %v339 = vsub.s32 0, %v338
      %v340 = vrot.slane %v335, %v339
      %v358 = vunpack.c.l.b16 %v319
      %v359 = vunpack.c.l.b16 %v320
      %v360 = vunpack.c.l.b16 %v321
      %v361 = vunpack.c.l.b16 %v322
      %v362 = vunpack.c.l.b16 %v323
      %v363 = vunpack.c.l.b16 %v324
      %v364 = vunpack.c.l.b16 %v325
      %v365 = vunpack.c.l.b16 %v326
      %v366 = vunpack.c.l.b16 %v327
      %v367 = vunpack.c.l.b16 %v328
      %v368 = vunpack.c.l.b16 %v329
      %v369 = vunpack.c.l.b16 %v330
      %v370 = vunpack.c.l.b16 %v331
      %v371 = vunpack.c.l.b16 %v332
      %v372 = vunpack.c.l.b16 %v333
      %v373 = vunpack.c.l.b16 %v334
      %v374 = vpack.c.b16 %v359, %v358
      %v375 = vpack.c.b16 %v361, %v360
      %v376 = vpack.c.b16 %v363, %v362
      %v377 = vpack.c.b16 %v365, %v364
      %v378 = vpack.c.b16 %v367, %v366
      %v379 = vpack.c.b16 %v369, %v368
      %v380 = vpack.c.b16 %v371, %v370
      %v381 = vpack.c.b16 %v373, %v372
      %390 = vmatprep.subr.bf16.mxu0 0
      %391 = vmatpush1.bf16.msra.mxu0 %v381
      %392 = vmatprep.subr.bf16.mxu0 0
      %393 = vmatpush1.bf16.msra.mxu0 %v380
      %394 = vmatprep.subr.bf16.mxu0 0
      %395 = vmatpush1.bf16.msra.mxu0 %v379
      %396 = vmatprep.subr.bf16.mxu0 0
      %397 = vmatpush1.bf16.msra.mxu0 %v378
      %398 = vmatprep.subr.bf16.mxu0 0
      %399 = vmatpush1.bf16.msra.mxu0 %v377
      %400 = vmatprep.subr.bf16.mxu0 0
      %401 = vmatpush1.bf16.msra.mxu0 %v376
      %402 = vmatprep.subr.bf16.mxu0 0
      %403 = vmatpush1.bf16.msra.mxu0 %v375
      %404 = vmatprep.subr.bf16.mxu0 0
      %405 = vmatpush1.bf16.msra.mxu0 %v374
      %406 = vmatprep.subr.bf16.mxu0 0
      %407 = vmatpush2.bf16.msra.mxu0 0
      %408 = vmatprep.subr.bf16.mxu0 0
      %409 = vmatpush2.bf16.msra.mxu0 0
      %410 = vmatprep.subr.bf16.mxu0 0
      %411 = vmatpush2.bf16.msra.mxu0 0
      %412 = vmatprep.subr.bf16.mxu0 0
      %413 = vmatpush2.bf16.msra.mxu0 0
      %414 = vmatprep.subr.bf16.mxu0 0
      %415 = vmatpush2.bf16.msra.mxu0 0
      %416 = vmatprep.subr.bf16.mxu0 0
      %417 = vmatpush2.bf16.msra.mxu0 0
      %418 = vmatprep.subr.bf16.mxu0 0
      %419 = vmatpush2.bf16.msra.mxu0 0
      %420 = vmatprep.subr.bf16.mxu0 0
      %421 = vmatpush2.bf16.msra.mxu0 0
      %422 = vmatprep.mubr.bf16.mxu0 0
      %423 = vmatmul.mubr.bf16.gmra.mxu0 %v318
      %v424 = vpop.f32.mrf.mxu0
      %v425 = vadd.f32 %v340, %v424
      %v426 = vpop.f32.mrf.mxu0
      %v427 = vpop.f32.mrf.mxu0
      %v428 = vpop.f32.mrf.mxu0
      %429 = vdwg.mxu0
      %v430 = vld [vmem:[#allocation2] sm:$0x3]
      %v431 = vunpack.c.l.bf16 %v430
      %v432 = vadd.f32 %v431, %v425
      %v433 = vmax.f32 %v432, 0.0
      %v434 = vpack.c.bf16 %v433, %v433
      %435 = vst [vmem:[%s212] sm:$0x3] %v434
      %p436 = scmp.lt.s32.totalorder %s15, 1
      %s437 = scalar_select %p436, %s15, 1
      %s438 = smul.addr %s437, 2
      %s439 = scalar_lea.vmem %s4, %s438
      // Predicated region
      $region37: #{entry_flow_forward.18} parent=35 // pred_check
        %p440 = pneg %p127
      $region38: #{entry_flow_forward.18} parent=35 // pred_check_branch
        %442 = sbr.rel (%p440) target = $region40
      $region39: #{entry_flow_forward.18} parent=35 // pred_region
        _
      $region40: #{entry_flow_forward.18} parent=35 // pred_fallthru
        _
    $region36: #{entry_flow_forward.18} parent=5 // pred_fallthru
      _
    %p443 = scmp.le.s32.totalorder 2, %s10
    // Predicated region
    $region41: #{entry_flow_forward.18} parent=5 // pred_check
      %p444 = pneg %p443
    $region42: #{entry_flow_forward.18} parent=5 // pred_check_branch
      %446 = sbr.rel (%p444) target = $region44
    $region43: #{entry_flow_forward.18} parent=5 // pred_region
      %s447 = ssub.s32 %s10, 2
      // Predicated region
      $region45: #{entry_flow_forward.18} parent=43 // pred_check
        %p448 = pneg %p133
      $region46: #{entry_flow_forward.18} parent=43 // pred_check_branch
        %450 = sbr.rel (%p448) target = $region48
      $region47: #{entry_flow_forward.18} parent=43 // pred_region
        %p451 = scmp.lt.s32.totalorder %s16, 1
        %s452 = scalar_select %p451, %s16, 1
        %s453 = smul.addr %s452, 2
        %s454 = scalar_lea.vmem %s4, %s453
      $region48: #{entry_flow_forward.18} parent=43 // pred_fallthru
        _
    $region44: #{entry_flow_forward.18} parent=5 // pred_fallthru
      _
  $region6: #{entry_flow_forward.18} parent=0 // loop_footer
    %s14 = sadd.s32 1, %s10
  $region7: #{entry_flow_forward.18} parent=0 // loop_footer_branch
    %9 = sbr.rel target = $region3
  $region8: #{entry_flow_forward.18} parent=0 // loop_exit
    _

// kernel: entry_flow_forward.17
$region0: #{entry_flow_forward.17}
  #allocation0 [shape = 'u32[]', space=smem, size = 0x4, offset = 0x4, fixed_abs, tag = 'smem constant byte address 0x4 - core index']
  #allocation1 [shape = 'u32[144,128]{1,0:T(1,128)}', space=vmem, size = 0x12000, scoped, tag = 'internal scratch']
  #allocation2 [shape = 'bf16[16,128]{1,0:T(8,128)(2,1)}', space=vmem, size = 0x1000, scoped, tag = 'scratch operand']
  %s0 = inlined_call_operand.vmem [shape: bf16[2,6,6,128], index: 0, kind: input, shape index: {}]
  %s1 = inlined_call_operand.vmem [shape: f32[9,128], index: 1, kind: input, shape index: {}]
  %s2 = inlined_call_operand.vmem [shape: bf16[128,128], index: 2, kind: input, shape index: {}]
  %s3 = inlined_call_operand.vmem [shape: f32[1,128], index: 3, kind: input, shape index: {}]
  %s4 = inlined_call_operand.vmem [shape: bf16[2,16,128], index: 4, kind: output, shape index: {}]
  %s5 = sld [smem:[#allocation0]]
  $region49: #{entry_flow_forward.17} parent=0
    _
  %s7 = ssub.s32 1, %s5
  %s8 = scalar_select 0, %s7, %s5
  loop: start=0, step=1, limit=4
  $region2: #{entry_flow_forward.17} parent=0 // loop_pre_header
    _
  $region3: #{entry_flow_forward.17} parent=0 // loop_header
    %s10 = sphi 0, %s14
    %p11 = scmp.ge.s32.totalorder %s10, 4
    %s17 = sphi 0, %s29
    %s18 = sphi 0, %s25
    %s19 = sphi 0, %s17
    %s20 = sphi 0, %s18
    %s21 = sphi 0, %s19
    %s22 = sphi 0, %s20
    %s32 = sphi 0, %s34
    %s35 = sphi 0, %s32
    %s36 = sphi 0, %s35
    %s52 = sphi 0, %s36
    %s56 = sphi 0, %s56
    %s58 = sphi 0, %s56
    %s59 = sphi 0, %s58
    %s73 = sphi 0, %s59
    %s79 = sphi 0, %s81
    %s82 = sphi 0, %s79
    %s83 = sphi 0, %s82
    %s99 = sphi 0, %s83
    %s105 = sphi 0, %s107
    %s108 = sphi 0, %s105
    %s109 = sphi 0, %s108
    %s125 = sphi 0, %s109
    %s133 = sphi 0, %s135
    %s136 = sphi 0, %s133
    %s137 = sphi 0, %s136
    %s153 = sphi 0, %s137
  $region4: #{entry_flow_forward.17} parent=0 // loop_header_branch
    %13 = sbr.rel (%p11) target = $region8
  $region5: #{entry_flow_forward.17} parent=0 // loop_body
    %s15 = ssub.s32 %s10, 1
    %s16 = ssub.s32 %s10, 2
    %s23 = sadd.s32 1, %s18
    %p24 = scmp.ge.s32.totalorder %s23, 1
    %s25 = scalar_select %p24, 0, %s23
    %s26 = sadd.s32 1, %s17
    %s27 = scalar_select %p24, %s26, %s17
    %p28 = scmp.ge.s32.totalorder %s27, 2
    %s29 = scalar_select %p28, 0, %s27
    %s30 = ssub.s32 %s17, %s29
    %p31 = scmp.eq.s32.totalorder %s30, 0
    %s33 = sadd.s32 %s32, 1
    %s34 = scalar_select %p31, %s32, %s33
    %p37 = pneg %p31
    %p38 = scmp.eq.s32.totalorder %s10, 1
    %p39 = por %p37, %p38
    %p40 = scmp.ne.s32.totalorder %s32, %s35
    %p41 = scmp.eq.s32.totalorder %s10, 0
    %p42 = por %p40, %p41
    %p43 = scmp.ne.s32.totalorder %s32, %s35
    %p44 = scmp.eq.s32.totalorder %s15, 1
    %p45 = por %p43, %p44
    %p46 = scmp.ne.s32.totalorder %s35, %s36
    %p47 = scmp.eq.s32.totalorder %s15, 0
    %p48 = por %p46, %p47
    %p49 = scmp.ne.s32.totalorder %s35, %s36
    %p50 = scmp.eq.s32.totalorder %s16, 1
    %p51 = por %p49, %p50
    %p53 = scmp.ne.s32.totalorder %s36, %s52
    %p54 = scmp.eq.s32.totalorder %s16, 0
    %p55 = por %p53, %p54
    %s57 = sadd.s32 %s56, 1
    %p60 = scmp.eq.s32.totalorder %s10, 1
    %p61 = scmp.ne.s32.totalorder %s56, %s58
    %p62 = scmp.eq.s32.totalorder %s10, 0
    %p63 = por %p61, %p62
    %p64 = scmp.ne.s32.totalorder %s56, %s58
    %p65 = scmp.eq.s32.totalorder %s15, 1
    %p66 = por %p64, %p65
    %p67 = scmp.ne.s32.totalorder %s58, %s59
    %p68 = scmp.eq.s32.totalorder %s15, 0
    %p69 = por %p67, %p68
    %p70 = scmp.ne.s32.totalorder %s58, %s59
    %p71 = scmp.eq.s32.totalorder %s16, 1
    %p72 = por %p70, %p71
    %p74 = scmp.ne.s32.totalorder %s59, %s73
    %p75 = scmp.eq.s32.totalorder %s16, 0
    %p76 = por %p74, %p75
    %s77 = ssub.s32 %s18, %s25
    %p78 = scmp.eq.s32.totalorder %s77, 0
    %s80 = sadd.s32 %s79, 1
    %s81 = scalar_select %p78, %s79, %s80
    %p84 = pneg %p78
    %p85 = scmp.eq.s32.totalorder %s10, 1
    %p86 = por %p84, %p85
    %p87 = scmp.ne.s32.totalorder %s79, %s82
    %p88 = scmp.eq.s32.totalorder %s10, 0
    %p89 = por %p87, %p88
    %p90 = scmp.ne.s32.totalorder %s79, %s82
    %p91 = scmp.eq.s32.totalorder %s15, 1
    %p92 = por %p90, %p91
    %p93 = scmp.ne.s32.totalorder %s82, %s83
    %p94 = scmp.eq.s32.totalorder %s15, 0
    %p95 = por %p93, %p94
    %p96 = scmp.ne.s32.totalorder %s82, %s83
    %p97 = scmp.eq.s32.totalorder %s16, 1
    %p98 = por %p96, %p97
    %p100 = scmp.ne.s32.totalorder %s83, %s99
    %p101 = scmp.eq.s32.totalorder %s16, 0
    %p102 = por %p100, %p101
    %s103 = ssub.s32 %s18, %s25
    %p104 = scmp.eq.s32.totalorder %s103, 0
    %s106 = sadd.s32 %s105, 1
    %s107 = scalar_select %p104, %s105, %s106
    %p110 = pneg %p104
    %p111 = scmp.eq.s32.totalorder %s10, 1
    %p112 = por %p110, %p111
    %p113 = scmp.ne.s32.totalorder %s105, %s108
    %p114 = scmp.eq.s32.totalorder %s10, 0
    %p115 = por %p113, %p114
    %p116 = scmp.ne.s32.totalorder %s105, %s108
    %p117 = scmp.eq.s32.totalorder %s15, 1
    %p118 = por %p116, %p117
    %p119 = scmp.ne.s32.totalorder %s108, %s109
    %p120 = scmp.eq.s32.totalorder %s15, 0
    %p121 = por %p119, %p120
    %p122 = scmp.ne.s32.totalorder %s108, %s109
    %p123 = scmp.eq.s32.totalorder %s16, 1
    %p124 = por %p122, %p123
    %p126 = scmp.ne.s32.totalorder %s109, %s125
    %p127 = scmp.eq.s32.totalorder %s16, 0
    %p128 = por %p126, %p127
    %s129 = ssub.s32 %s17, %s29
    %s130 = ssub.s32 %s18, %s25
    %s131 = sor.u32 %s129, %s130
    %p132 = scmp.eq.s32.totalorder %s131, 0
    %s134 = sadd.s32 %s133, 1
    %s135 = scalar_select %p132, %s133, %s134
    %p138 = pneg %p132
    %p139 = scmp.eq.s32.totalorder %s10, 1
    %p140 = por %p138, %p139
    %p141 = scmp.ne.s32.totalorder %s133, %s136
    %p142 = scmp.eq.s32.totalorder %s10, 0
    %p143 = por %p141, %p142
    %p144 = scmp.ne.s32.totalorder %s133, %s136
    %p145 = scmp.eq.s32.totalorder %s15, 1
    %p146 = por %p144, %p145
    %p147 = scmp.ne.s32.totalorder %s136, %s137
    %p148 = scmp.eq.s32.totalorder %s15, 0
    %p149 = por %p147, %p148
    %p150 = scmp.ne.s32.totalorder %s136, %s137
    %p151 = scmp.eq.s32.totalorder %s16, 1
    %p152 = por %p150, %p151
    %p154 = scmp.ne.s32.totalorder %s137, %s153
    %p155 = scmp.eq.s32.totalorder %s16, 0
    %p156 = por %p154, %p155
    %p157 = scmp.le.s32.totalorder 1, %s10
    %p158 = scmp.lt.s32.totalorder %s10, 3
    %p159 = pnand %p157, %p158
    %p160 = pneg %p159
    // Predicated region
    $region9: #{entry_flow_forward.17} parent=5 // pred_check
      _
    $region10: #{entry_flow_forward.17} parent=5 // pred_check_branch
      %162 = sbr.rel (%p159) target = $region12
    $region11: #{entry_flow_forward.17} parent=5 // pred_region
      %s163 = ssub.s32 %s10, 1
      // Predicated region
      $region13: #{entry_flow_forward.17} parent=11 // pred_check
        %p164 = pneg %p69
      $region14: #{entry_flow_forward.17} parent=11 // pred_check_branch
        %166 = sbr.rel (%p164) target = $region16
      $region15: #{entry_flow_forward.17} parent=11 // pred_region
        _
      $region16: #{entry_flow_forward.17} parent=11 // pred_fallthru
        _
      // Predicated region
      $region17: #{entry_flow_forward.17} parent=11 // pred_check
        %p167 = pneg %p95
      $region18: #{entry_flow_forward.17} parent=11 // pred_check_branch
        %169 = sbr.rel (%p167) target = $region20
      $region19: #{entry_flow_forward.17} parent=11 // pred_region
        %p170 = scmp.lt.s32.totalorder %s20, 0
        %s171 = scalar_select %p170, %s20, 0
        %s172 = smul.addr %s171, 4
        %s173 = scalar_lea.vmem %s2, %s172
      $region20: #{entry_flow_forward.17} parent=11 // pred_fallthru
        _
      // Predicated region
      $region21: #{entry_flow_forward.17} parent=11 // pred_check
        %p174 = pneg %p121
      $region22: #{entry_flow_forward.17} parent=11 // pred_check_branch
        %176 = sbr.rel (%p174) target = $region24
      $region23: #{entry_flow_forward.17} parent=11 // pred_region
        %p177 = scmp.lt.s32.totalorder %s20, 0
        %s178 = scalar_select %p177, %s20, 0
        %s179 = scalar_lea.vmem %s3, %s178
      $region24: #{entry_flow_forward.17} parent=11 // pred_fallthru
        _
    $region12: #{entry_flow_forward.17} parent=5 // pred_fallthru
      _
    %p180 = scmp.lt.s32.totalorder %s10, 2
    // Predicated region
    $region25: #{entry_flow_forward.17} parent=5 // pred_check
      %p181 = pneg %p180
    $region26: #{entry_flow_forward.17} parent=5 // pred_check_branch
      %183 = sbr.rel (%p181) target = $region28
    $region27: #{entry_flow_forward.17} parent=5 // pred_region
      // Predicated region
      $region29: #{entry_flow_forward.17} parent=27 // pred_check
        %p184 = pneg %p42
      $region30: #{entry_flow_forward.17} parent=27 // pred_check_branch
        %186 = sbr.rel (%p184) target = $region32
      $region31: #{entry_flow_forward.17} parent=27 // pred_region
        %p187 = scmp.lt.s32.totalorder %s17, 1
        %s188 = scalar_select %p187, %s17, 1
        %s189 = smul.addr %s188, 6
        %s190 = smul.addr %s189, 4
        %s191 = scalar_lea.vmem %s0, %s190
      $region32: #{entry_flow_forward.17} parent=27 // pred_fallthru
        _
    $region28: #{entry_flow_forward.17} parent=5 // pred_fallthru
      _
    %p192 = scmp.le.s32.totalorder 1, %s10
    %p193 = scmp.lt.s32.totalorder %s10, 3
    %p194 = pnand %p192, %p193
    %p195 = pneg %p194
    // Predicated region
    $region33: #{entry_flow_forward.17} parent=5 // pred_check
      _
    $region34: #{entry_flow_forward.17} parent=5 // pred_check_branch
      %197 = sbr.rel (%p194) target = $region36
    $region35: #{entry_flow_forward.17} parent=5 // pred_region
      %s198 = ssub.s32 %s10, 1
      %p199 = scmp.lt.s32.totalorder %s19, 1
      %s200 = scalar_select %p199, %s19, 1
      %s201 = smul.addr %s200, 6
      %s202 = smul.addr %s201, 4
      %s203 = scalar_lea.vmem %s0, %s202
      %p204 = pneg %p48
      %p205 = pneg %p45
      %p206 = pneg %p69
      %p207 = pneg %p66
      %p208 = scmp.lt.s32.totalorder %s20, 0
      %s209 = scalar_select %p208, %s20, 0
      %s210 = smul.addr %s209, 4
      %s211 = scalar_lea.vmem %s2, %s210
      %p212 = pneg %p95
      %p213 = pneg %p92
      %p214 = scmp.lt.s32.totalorder %s20, 0
      %s215 = scalar_select %p214, %s20, 0
      %s216 = scalar_lea.vmem %s3, %s215
      %p217 = pneg %p121
      %p218 = pneg %p118
      %p219 = pneg %p149
      %p220 = pneg %p146
      %p221 = scmp.lt.s32.totalorder %s19, 1
      %s222 = scalar_select %p221, %s19, 1
      %p223 = scmp.lt.s32.totalorder %s20, 0
      %s224 = scalar_select %p223, %s20, 0
      %s225 = smul.addr %s222, 2
      %s226 = sadd.s32 %s224, %s225
      %s227 = smul.addr %s226, 4
      %s228 = scalar_lea.vmem %s4, %s227
      %p229 = scmp.lt.s32.totalorder %s19, 1
      %s230 = scalar_select %p229, %s19, 1
      %s231 = smul.addr %s230, 6
      %s232 = smul.addr %s231, 4
      %s233 = scalar_lea.vmem %s0, %s232
      %p234 = scmp.lt.s32.totalorder %s20, 0
      %s235 = scalar_select %p234, %s20, 0
      %s236 = smul.addr %s235, 4
      %s237 = scalar_lea.vmem %s2, %s236
      %p238 = scmp.lt.s32.totalorder %s20, 0
      %s239 = scalar_select %p238, %s20, 0
      %s240 = scalar_lea.vmem %s3, %s239
      %p241 = scmp.lt.s32.totalorder %s19, 1
      %s242 = scalar_select %p241, %s19, 1
      %p243 = scmp.lt.s32.totalorder %s20, 0
      %s244 = scalar_select %p243, %s20, 0
      %s245 = smul.addr %s242, 2
      %s246 = sadd.s32 %s244, %s245
      %s247 = smul.addr %s246, 4
      %s248 = scalar_lea.vmem %s4, %s247
      %v250 = vld [vmem:[%s1] sm:$0xff]
      %v251 = vld [vmem:[%s1 + $0x8] sm:$0x1]
      %v252 = vld [vmem:[%s233] sm:$0x3]
      %v253 = vld [vmem:[%s233 + $0x4] sm:$0x3]
      %v254 = vld [vmem:[%s233 + $0x8] sm:$0x3]
      %v255 = vld [vmem:[%s233 + $0xc] sm:$0x3]
      %v256 = vunpack.c.l.bf16 %v252
      %v257 = vunpack.c.l.bf16 %v253
      %v258 = vunpack.c.l.bf16 %v254
      %v259 = vunpack.c.l.bf16 %v255
      %v260 = vlaneseq
      %v261 = vshrl.u32 %v260, 7
      %v262 = vsub.s32 0, %v261
      %v263 = vrot.slane %v250, %v262
      %v264 = vmul.f32 %v256, %v263
      %v265 = vmul.f32 %v257, %v263
      %v266 = vmul.f32 %v258, %v263
      %v267 = vmul.f32 %v259, %v263
      %v268 = vadd.f32 %v264, 0.0
      %v269 = vadd.f32 %v265, 0.0
      %v270 = vadd.f32 %v266, 0.0
      %v271 = vadd.f32 %v267, 0.0
      %v272 = vld [vmem:[%s233] sm:$0x7]
      %v273 = vld [vmem:[%s233 + $0x4] sm:$0x7]
      %v274 = vld [vmem:[%s233 + $0x8] sm:$0x7]
      %v275 = vld [vmem:[%s233 + $0xc] sm:$0x7]
      %v276 = vunpack.c.l.bf16 %v272
      %v277 = vunpack.c.l.bf16 %v273
      %v278 = vunpack.c.l.bf16 %v274
      %v279 = vunpack.c.l.bf16 %v275
      %v280 = vlaneseq
      %v281 = vshrl.u32 %v280, 7
      %v282 = vsub.s32 1, %v281
      %v283 = vrot.slane %v250, %v282
      %v284 = vmul.f32 %v276, %v283
      %v285 = vmul.f32 %v277, %v283
      %v286 = vmul.f32 %v278, %v283
      %v287 = vmul.f32 %v279, %v283
      %v292 = vrot.slane %v284, 1
      %v293 = vrot.slane %v285, 1
      %v294 = vrot.slane %v286, 1
      %v295 = vrot.slane %v287, 1
      %v300 = vadd.f32 %v268, %v292
      %v301 = vadd.f32 %v269, %v293
      %v302 = vadd.f32 %v270, %v294
      %v303 = vadd.f32 %v271, %v295
      %v304 = vld [vmem:[%s233] sm:$0x6]
      %v305 = vld [vmem:[%s233 + $0x4] sm:$0x6]
      %v306 = vld [vmem:[%s233 + $0x8] sm:$0x6]
      %v307 = vld [vmem:[%s233 + $0xc] sm:$0x6]
      %v308 = vunpack.c.l.bf16 %v304
      %v309 = vunpack.c.l.bf16 %v305
      %v310 = vunpack.c.l.bf16 %v306
      %v311 = vunpack.c.l.bf16 %v307
      %v312 = vlaneseq
      %v313 = vshrl.u32 %v312, 7
      %v314 = vsub.s32 2, %v313
      %v315 = vrot.slane %v250, %v314
      %v316 = vmul.f32 %v308, %v315
      %v317 = vmul.f32 %v309, %v315
      %v318 = vmul.f32 %v310, %v315
      %v319 = vmul.f32 %v311, %v315
      %v324 = vrot.slane %v316, 2
      %v325 = vrot.slane %v317, 2
      %v326 = vrot.slane %v318, 2
      %v327 = vrot.slane %v319, 2
      %v332 = vadd.f32 %v300, %v324
      %v333 = vadd.f32 %v301, %v325
      %v334 = vadd.f32 %v302, %v326
      %v335 = vadd.f32 %v303, %v327
      %s336 = scalar_lea.vmem %s233, 4
      %v337 = vld [vmem:[%s336] sm:$0x3]
      %v338 = vld [vmem:[%s336 + $0x4] sm:$0x3]
      %v339 = vld [vmem:[%s336 + $0x8] sm:$0x3]
      %v340 = vld [vmem:[%s336 + $0xc] sm:$0x3]
      %v341 = vunpack.c.l.bf16 %v337
      %v342 = vunpack.c.l.bf16 %v338
      %v343 = vunpack.c.l.bf16 %v339
      %v344 = vunpack.c.l.bf16 %v340
      %v345 = vlaneseq
      %v346 = vshrl.u32 %v345, 7
      %v347 = vsub.s32 3, %v346
      %v348 = vrot.slane %v250, %v347
      %v349 = vmul.f32 %v341, %v348
      %v350 = vmul.f32 %v342, %v348
      %v351 = vmul.f32 %v343, %v348
      %v352 = vmul.f32 %v344, %v348
      %v353 = vadd.f32 %v332, %v349
      %v354 = vadd.f32 %v333, %v350
      %v355 = vadd.f32 %v334, %v351
      %v356 = vadd.f32 %v335, %v352
      %v357 = vld [vmem:[%s336] sm:$0x7]
      %v358 = vld [vmem:[%s336 + $0x4] sm:$0x7]
      %v359 = vld [vmem:[%s336 + $0x8] sm:$0x7]
      %v360 = vld [vmem:[%s336 + $0xc] sm:$0x7]
      %v361 = vunpack.c.l.bf16 %v357
      %v362 = vunpack.c.l.bf16 %v358
      %v363 = vunpack.c.l.bf16 %v359
      %v364 = vunpack.c.l.bf16 %v360
      %v365 = vlaneseq
      %v366 = vshrl.u32 %v365, 7
      %v367 = vsub.s32 4, %v366
      %v368 = vrot.slane %v250, %v367
      %v369 = vmul.f32 %v361, %v368
      %v370 = vmul.f32 %v362, %v368
      %v371 = vmul.f32 %v363, %v368
      %v372 = vmul.f32 %v364, %v368
      %v377 = vrot.slane %v369, 1
      %v378 = vrot.slane %v370, 1
      %v379 = vrot.slane %v371, 1
      %v380 = vrot.slane %v372, 1
      %v385 = vadd.f32 %v353, %v377
      %v386 = vadd.f32 %v354, %v378
      %v387 = vadd.f32 %v355, %v379
      %v388 = vadd.f32 %v356, %v380
      %v389 = vld [vmem:[%s336] sm:$0x6]
      %v390 = vld [vmem:[%s336 + $0x4] sm:$0x6]
      %v391 = vld [vmem:[%s336 + $0x8] sm:$0x6]
      %v392 = vld [vmem:[%s336 + $0xc] sm:$0x6]
      %v393 = vunpack.c.l.bf16 %v389
      %v394 = vunpack.c.l.bf16 %v390
      %v395 = vunpack.c.l.bf16 %v391
      %v396 = vunpack.c.l.bf16 %v392
      %v397 = vlaneseq
      %v398 = vshrl.u32 %v397, 7
      %v399 = vsub.s32 5, %v398
      %v400 = vrot.slane %v250, %v399
      %v401 = vmul.f32 %v393, %v400
      %v402 = vmul.f32 %v394, %v400
      %v403 = vmul.f32 %v395, %v400
      %v404 = vmul.f32 %v396, %v400
      %v409 = vrot.slane %v401, 2
      %v410 = vrot.slane %v402, 2
      %v411 = vrot.slane %v403, 2
      %v412 = vrot.slane %v404, 2
      %v417 = vadd.f32 %v385, %v409
      %v418 = vadd.f32 %v386, %v410
      %v419 = vadd.f32 %v387, %v411
      %v420 = vadd.f32 %v388, %v412
      %s421 = scalar_lea.vmem %s233, 8
      %v422 = vld [vmem:[%s421] sm:$0x3]
      %v423 = vld [vmem:[%s421 + $0x4] sm:$0x3]
      %v424 = vld [vmem:[%s421 + $0x8] sm:$0x3]
      %v425 = vld [vmem:[%s421 + $0xc] sm:$0x3]
      %v426 = vunpack.c.l.bf16 %v422
      %v427 = vunpack.c.l.bf16 %v423
      %v428 = vunpack.c.l.bf16 %v424
      %v429 = vunpack.c.l.bf16 %v425
      %v430 = vlaneseq
      %v431 = vshrl.u32 %v430, 7
      %v432 = vsub.s32 6, %v431
      %v433 = vrot.slane %v250, %v432
      %v434 = vmul.f32 %v426, %v433
      %v435 = vmul.f32 %v427, %v433
      %v436 = vmul.f32 %v428, %v433
      %v437 = vmul.f32 %v429, %v433
      %v438 = vadd.f32 %v417, %v434
      %v439 = vadd.f32 %v418, %v435
      %v440 = vadd.f32 %v419, %v436
      %v441 = vadd.f32 %v420, %v437
      %v442 = vld [vmem:[%s421] sm:$0x7]
      %v443 = vld [vmem:[%s421 + $0x4] sm:$0x7]
      %v444 = vld [vmem:[%s421 + $0x8] sm:$0x7]
      %v445 = vld [vmem:[%s421 + $0xc] sm:$0x7]
      %v446 = vunpack.c.l.bf16 %v442
      %v447 = vunpack.c.l.bf16 %v443
      %v448 = vunpack.c.l.bf16 %v444
      %v449 = vunpack.c.l.bf16 %v445
      %v450 = vlaneseq
      %v451 = vshrl.u32 %v450, 7
      %v452 = vsub.s32 7, %v451
      %v453 = vrot.slane %v250, %v452
      %v454 = vmul.f32 %v446, %v453
      %v455 = vmul.f32 %v447, %v453
      %v456 = vmul.f32 %v448, %v453
      %v457 = vmul.f32 %v449, %v453
      %v462 = vrot.slane %v454, 1
      %v463 = vrot.slane %v455, 1
      %v464 = vrot.slane %v456, 1
      %v465 = vrot.slane %v457, 1
      %v470 = vadd.f32 %v438, %v462
      %v471 = vadd.f32 %v439, %v463
      %v472 = vadd.f32 %v440, %v464
      %v473 = vadd.f32 %v441, %v465
      %v474 = vld [vmem:[%s421] sm:$0x6]
      %v475 = vld [vmem:[%s421 + $0x4] sm:$0x6]
      %v476 = vld [vmem:[%s421 + $0x8] sm:$0x6]
      %v477 = vld [vmem:[%s421 + $0xc] sm:$0x6]
      %v478 = vunpack.c.l.bf16 %v474
      %v479 = vunpack.c.l.bf16 %v475
      %v480 = vunpack.c.l.bf16 %v476
      %v481 = vunpack.c.l.bf16 %v477
      %v482 = vlaneseq
      %v483 = vshrl.u32 %v482, 7
      %v484 = vsub.s32 0, %v483
      %v485 = vrot.slane %v251, %v484
      %v486 = vmul.f32 %v478, %v485
      %v487 = vmul.f32 %v479, %v485
      %v488 = vmul.f32 %v480, %v485
      %v489 = vmul.f32 %v481, %v485
      %v494 = vrot.slane %v486, 2
      %v495 = vrot.slane %v487, 2
      %v496 = vrot.slane %v488, 2
      %v497 = vrot.slane %v489, 2
      %v502 = vadd.f32 %v470, %v494
      %v503 = vadd.f32 %v471, %v495
      %v504 = vadd.f32 %v472, %v496
      %v505 = vadd.f32 %v473, %v497
      %v506 = vpack.c.bf16 %v502, %v502
      %507 = vst [vmem:[#allocation2] sm:$0x3] %v506
      %v508 = vpack.c.bf16 %v503, %v503
      %v510 = vunpack.c.l.b16 %v508
      %v511 = vpack.c.b16 %v510, %v510
      %v512 = vrot.slane %v511, 6
      %514 = vst [vmem:[#allocation2] sm:$0xc] %v512
      %v515 = vpack.c.bf16 %v504, %v504
      %516 = vst [vmem:[#allocation2 + $0x4] sm:$0x3] %v515
      %v517 = vpack.c.bf16 %v505, %v505
      %v519 = vunpack.c.l.b16 %v517
      %v520 = vpack.c.b16 %v519, %v519
      %v521 = vrot.slane %v520, 6
      %523 = vst [vmem:[#allocation2 + $0x4] sm:$0xc] %v521
      %v524 = vld [vmem:[#allocation2] sm:$0xf]
      %v525 = vld [vmem:[#allocation2 + $0x4] sm:$0xf]
      %v526 = vld [vmem:[%s237] sm:$0xf]
      %v527 = vld [vmem:[%s237 + $0x4] sm:$0xf]
      %v528 = vld [vmem:[%s237 + $0x8] sm:$0xf]
      %v529 = vld [vmem:[%s237 + $0xc] sm:$0xf]
      %v530 = vld [vmem:[%s237 + $0x10] sm:$0xf]
      %v531 = vld [vmem:[%s237 + $0x14] sm:$0xf]
      %v532 = vld [vmem:[%s237 + $0x18] sm:$0xf]
      %v533 = vld [vmem:[%s237 + $0x1c] sm:$0xf]
      %v534 = vld [vmem:[%s237 + $0x20] sm:$0xf]
      %v535 = vld [vmem:[%s237 + $0x24] sm:$0xf]
      %v536 = vld [vmem:[%s237 + $0x28] sm:$0xf]
      %v537 = vld [vmem:[%s237 + $0x2c] sm:$0xf]
      %v538 = vld [vmem:[%s237 + $0x30] sm:$0xf]
      %v539 = vld [vmem:[%s237 + $0x34] sm:$0xf]
      %v540 = vld [vmem:[%s237 + $0x38] sm:$0xf]
      %v541 = vld [vmem:[%s237 + $0x3c] sm:$0xf]
      %v542 = vld [vmem:[%s240] sm:$0x1]
      %v544 = vlaneseq
      %v545 = vshrl.u32 %v544, 7
      %v546 = vsub.s32 0, %v545
      %v547 = vrot.slane %v542, %v546
      %v551 = vunpack.c.l.b16 %v524
      %v552 = vunpack.c.l.b16 %v525
      %v553 = vpack.c.b16 %v552, %v551
      %v571 = vunpack.c.l.b16 %v526
      %v572 = vunpack.c.l.b16 %v527
      %v573 = vunpack.c.l.b16 %v528
      %v574 = vunpack.c.l.b16 %v529
      %v575 = vunpack.c.l.b16 %v530
      %v576 = vunpack.c.l.b16 %v531
      %v577 = vunpack.c.l.b16 %v532
      %v578 = vunpack.c.l.b16 %v533
      %v579 = vunpack.c.l.b16 %v534
      %v580 = vunpack.c.l.b16 %v535
      %v581 = vunpack.c.l.b16 %v536
      %v582 = vunpack.c.l.b16 %v537
      %v583 = vunpack.c.l.b16 %v538
      %v584 = vunpack.c.l.b16 %v539
      %v585 = vunpack.c.l.b16 %v540
      %v586 = vunpack.c.l.b16 %v541
      %v587 = vpack.c.b16 %v572, %v571
      %v588 = vpack.c.b16 %v574, %v573
      %v589 = vpack.c.b16 %v576, %v575
      %v590 = vpack.c.b16 %v578, %v577
      %v591 = vpack.c.b16 %v580, %v579
      %v592 = vpack.c.b16 %v582, %v581
      %v593 = vpack.c.b16 %v584, %v583
      %v594 = vpack.c.b16 %v586, %v585
      %603 = vmatprep.subr.bf16.mxu0 0
      %604 = vmatpush1.bf16.msra.mxu0 %v594
      %605 = vmatprep.subr.bf16.mxu0 0
      %606 = vmatpush1.bf16.msra.mxu0 %v593
      %607 = vmatprep.subr.bf16.mxu0 0
      %608 = vmatpush1.bf16.msra.mxu0 %v592
      %609 = vmatprep.subr.bf16.mxu0 0
      %610 = vmatpush1.bf16.msra.mxu0 %v591
      %611 = vmatprep.subr.bf16.mxu0 0
      %612 = vmatpush1.bf16.msra.mxu0 %v590
      %613 = vmatprep.subr.bf16.mxu0 0
      %614 = vmatpush1.bf16.msra.mxu0 %v589
      %615 = vmatprep.subr.bf16.mxu0 0
      %616 = vmatpush1.bf16.msra.mxu0 %v588
      %617 = vmatprep.subr.bf16.mxu0 0
      %618 = vmatpush1.bf16.msra.mxu0 %v587
      %619 = vmatprep.subr.bf16.mxu0 0
      %620 = vmatpush2.bf16.msra.mxu0 0
      %621 = vmatprep.subr.bf16.mxu0 0
      %622 = vmatpush2.bf16.msra.mxu0 0
      %623 = vmatprep.subr.bf16.mxu0 0
      %624 = vmatpush2.bf16.msra.mxu0 0
      %625 = vmatprep.subr.bf16.mxu0 0
      %626 = vmatpush2.bf16.msra.mxu0 0
      %627 = vmatprep.subr.bf16.mxu0 0
      %628 = vmatpush2.bf16.msra.mxu0 0
      %629 = vmatprep.subr.bf16.mxu0 0
      %630 = vmatpush2.bf16.msra.mxu0 0
      %631 = vmatprep.subr.bf16.mxu0 0
      %632 = vmatpush2.bf16.msra.mxu0 0
      %633 = vmatprep.subr.bf16.mxu0 0
      %634 = vmatpush2.bf16.msra.mxu0 0
      %635 = vmatprep.mubr.bf16.mxu0 0
      %636 = vmatmul.mubr.bf16.gmra.mxu0 %v553
      %v637 = vpop.f32.mrf.mxu0
      %v638 = vadd.f32 %v547, %v637
      %v639 = vpop.f32.mrf.mxu0
      %v640 = vpop.f32.mrf.mxu0
      %v641 = vadd.f32 %v547, %v640
      %v642 = vpop.f32.mrf.mxu0
      %643 = vdwg.mxu0
      %v644 = vpack.c.bf16 %v641, %v638
      %v646 = vunpack.c.l.b16 %v644
      %v647 = vunpack.c.h.b16 %v644
      %v648 = vpack.c.b16 %v646, %v646
      %v649 = vpack.c.b16 %v647, %v647
      %652 = vst [vmem:[%s248] sm:$0xf] %v648
      %653 = vst [vmem:[%s248 + $0x4] sm:$0xf] %v649
      %p654 = scmp.lt.s32.totalorder %s19, 1
      %s655 = scalar_select %p654, %s19, 1
      %p656 = scmp.lt.s32.totalorder %s20, 0
      %s657 = scalar_select %p656, %s20, 0
      %s658 = smul.addr %s655, 2
      %s659 = sadd.s32 %s657, %s658
      %s660 = smul.addr %s659, 4
      %s661 = scalar_lea.vmem %s4, %s660
      // Predicated region
      $region37: #{entry_flow_forward.17} parent=35 // pred_check
        %p662 = pneg %p146
      $region38: #{entry_flow_forward.17} parent=35 // pred_check_branch
        %664 = sbr.rel (%p662) target = $region40
      $region39: #{entry_flow_forward.17} parent=35 // pred_region
        _
      $region40: #{entry_flow_forward.17} parent=35 // pred_fallthru
        _
    $region36: #{entry_flow_forward.17} parent=5 // pred_fallthru
      _
    %p665 = scmp.le.s32.totalorder 2, %s10
    // Predicated region
    $region41: #{entry_flow_forward.17} parent=5 // pred_check
      %p666 = pneg %p665
    $region42: #{entry_flow_forward.17} parent=5 // pred_check_branch
      %668 = sbr.rel (%p666) target = $region44
    $region43: #{entry_flow_forward.17} parent=5 // pred_region
      %s669 = ssub.s32 %s10, 2
      // Predicated region
      $region45: #{entry_flow_forward.17} parent=43 // pred_check
        %p670 = pneg %p152
      $region46: #{entry_flow_forward.17} parent=43 // pred_check_branch
        %672 = sbr.rel (%p670) target = $region48
      $region47: #{entry_flow_forward.17} parent=43 // pred_region
        %p673 = scmp.lt.s32.totalorder %s21, 1
        %s674 = scalar_select %p673, %s21, 1
        %p675 = scmp.lt.s32.totalorder %s22, 0
        %s676 = scalar_select %p675, %s22, 0
        %s677 = smul.addr %s674, 2
        %s678 = sadd.s32 %s676, %s677
        %s679 = smul.addr %s678, 4
        %s680 = scalar_lea.vmem %s4, %s679
      $region48: #{entry_flow_forward.17} parent=43 // pred_fallthru
        _
    $region44: #{entry_flow_forward.17} parent=5 // pred_fallthru
      _
  $region6: #{entry_flow_forward.17} parent=0 // loop_footer
    %s14 = sadd.s32 1, %s10
  $region7: #{entry_flow_forward.17} parent=0 // loop_footer_branch
    %9 = sbr.rel target = $region3
  $region8: #{entry_flow_forward.17} parent=0 // loop_exit
    _

// kernel: entry_flow_forward.19
$region0: #{entry_flow_forward.19}
  #allocation0 [shape = 'u32[]', space=smem, size = 0x4, offset = 0x4, fixed_abs, tag = 'smem constant byte address 0x4 - core index']
  #allocation1 [shape = 'u32[144,128]{1,0:T(1,128)}', space=vmem, size = 0x12000, scoped, tag = 'internal scratch']
  #allocation2 [shape = 'bf16[4,128]{1,0:T(4,128)(2,1)}', space=vmem, size = 0x400, scoped, tag = 'scratch operand']
  %s0 = inlined_call_operand.vmem [shape: bf16[2,4,4,128], index: 0, kind: input, shape index: {}]
  %s1 = inlined_call_operand.vmem [shape: f32[9,128], index: 1, kind: input, shape index: {}]
  %s2 = inlined_call_operand.vmem [shape: bf16[128,128], index: 2, kind: input, shape index: {}]
  %s3 = inlined_call_operand.vmem [shape: f32[1,128], index: 3, kind: input, shape index: {}]
  %s4 = inlined_call_operand.vmem [shape: bf16[2,4,128], index: 4, kind: output, shape index: {}]
  %s5 = sld [smem:[#allocation0]]
  $region49: #{entry_flow_forward.19} parent=0
    _
  %s7 = ssub.s32 1, %s5
  %s8 = scalar_select 0, %s7, %s5
  loop: start=0, step=1, limit=4
  $region2: #{entry_flow_forward.19} parent=0 // loop_pre_header
    _
  $region3: #{entry_flow_forward.19} parent=0 // loop_header
    %s10 = sphi 0, %s14
    %p11 = scmp.ge.s32.totalorder %s10, 4
    %s17 = sphi 0, %s29
    %s18 = sphi 0, %s25
    %s19 = sphi 0, %s17
    %s20 = sphi 0, %s18
    %s21 = sphi 0, %s19
    %s22 = sphi 0, %s20
    %s32 = sphi 0, %s34
    %s35 = sphi 0, %s32
    %s36 = sphi 0, %s35
    %s52 = sphi 0, %s36
    %s56 = sphi 0, %s56
    %s58 = sphi 0, %s56
    %s59 = sphi 0, %s58
    %s73 = sphi 0, %s59
    %s79 = sphi 0, %s81
    %s82 = sphi 0, %s79
    %s83 = sphi 0, %s82
    %s99 = sphi 0, %s83
    %s105 = sphi 0, %s107
    %s108 = sphi 0, %s105
    %s109 = sphi 0, %s108
    %s125 = sphi 0, %s109
    %s133 = sphi 0, %s135
    %s136 = sphi 0, %s133
    %s137 = sphi 0, %s136
    %s153 = sphi 0, %s137
  $region4: #{entry_flow_forward.19} parent=0 // loop_header_branch
    %13 = sbr.rel (%p11) target = $region8
  $region5: #{entry_flow_forward.19} parent=0 // loop_body
    %s15 = ssub.s32 %s10, 1
    %s16 = ssub.s32 %s10, 2
    %s23 = sadd.s32 1, %s18
    %p24 = scmp.ge.s32.totalorder %s23, 1
    %s25 = scalar_select %p24, 0, %s23
    %s26 = sadd.s32 1, %s17
    %s27 = scalar_select %p24, %s26, %s17
    %p28 = scmp.ge.s32.totalorder %s27, 2
    %s29 = scalar_select %p28, 0, %s27
    %s30 = ssub.s32 %s17, %s29
    %p31 = scmp.eq.s32.totalorder %s30, 0
    %s33 = sadd.s32 %s32, 1
    %s34 = scalar_select %p31, %s32, %s33
    %p37 = pneg %p31
    %p38 = scmp.eq.s32.totalorder %s10, 1
    %p39 = por %p37, %p38
    %p40 = scmp.ne.s32.totalorder %s32, %s35
    %p41 = scmp.eq.s32.totalorder %s10, 0
    %p42 = por %p40, %p41
    %p43 = scmp.ne.s32.totalorder %s32, %s35
    %p44 = scmp.eq.s32.totalorder %s15, 1
    %p45 = por %p43, %p44
    %p46 = scmp.ne.s32.totalorder %s35, %s36
    %p47 = scmp.eq.s32.totalorder %s15, 0
    %p48 = por %p46, %p47
    %p49 = scmp.ne.s32.totalorder %s35, %s36
    %p50 = scmp.eq.s32.totalorder %s16, 1
    %p51 = por %p49, %p50
    %p53 = scmp.ne.s32.totalorder %s36, %s52
    %p54 = scmp.eq.s32.totalorder %s16, 0
    %p55 = por %p53, %p54
    %s57 = sadd.s32 %s56, 1
    %p60 = scmp.eq.s32.totalorder %s10, 1
    %p61 = scmp.ne.s32.totalorder %s56, %s58
    %p62 = scmp.eq.s32.totalorder %s10, 0
    %p63 = por %p61, %p62
    %p64 = scmp.ne.s32.totalorder %s56, %s58
    %p65 = scmp.eq.s32.totalorder %s15, 1
    %p66 = por %p64, %p65
    %p67 = scmp.ne.s32.totalorder %s58, %s59
    %p68 = scmp.eq.s32.totalorder %s15, 0
    %p69 = por %p67, %p68
    %p70 = scmp.ne.s32.totalorder %s58, %s59
    %p71 = scmp.eq.s32.totalorder %s16, 1
    %p72 = por %p70, %p71
    %p74 = scmp.ne.s32.totalorder %s59, %s73
    %p75 = scmp.eq.s32.totalorder %s16, 0
    %p76 = por %p74, %p75
    %s77 = ssub.s32 %s18, %s25
    %p78 = scmp.eq.s32.totalorder %s77, 0
    %s80 = sadd.s32 %s79, 1
    %s81 = scalar_select %p78, %s79, %s80
    %p84 = pneg %p78
    %p85 = scmp.eq.s32.totalorder %s10, 1
    %p86 = por %p84, %p85
    %p87 = scmp.ne.s32.totalorder %s79, %s82
    %p88 = scmp.eq.s32.totalorder %s10, 0
    %p89 = por %p87, %p88
    %p90 = scmp.ne.s32.totalorder %s79, %s82
    %p91 = scmp.eq.s32.totalorder %s15, 1
    %p92 = por %p90, %p91
    %p93 = scmp.ne.s32.totalorder %s82, %s83
    %p94 = scmp.eq.s32.totalorder %s15, 0
    %p95 = por %p93, %p94
    %p96 = scmp.ne.s32.totalorder %s82, %s83
    %p97 = scmp.eq.s32.totalorder %s16, 1
    %p98 = por %p96, %p97
    %p100 = scmp.ne.s32.totalorder %s83, %s99
    %p101 = scmp.eq.s32.totalorder %s16, 0
    %p102 = por %p100, %p101
    %s103 = ssub.s32 %s18, %s25
    %p104 = scmp.eq.s32.totalorder %s103, 0
    %s106 = sadd.s32 %s105, 1
    %s107 = scalar_select %p104, %s105, %s106
    %p110 = pneg %p104
    %p111 = scmp.eq.s32.totalorder %s10, 1
    %p112 = por %p110, %p111
    %p113 = scmp.ne.s32.totalorder %s105, %s108
    %p114 = scmp.eq.s32.totalorder %s10, 0
    %p115 = por %p113, %p114
    %p116 = scmp.ne.s32.totalorder %s105, %s108
    %p117 = scmp.eq.s32.totalorder %s15, 1
    %p118 = por %p116, %p117
    %p119 = scmp.ne.s32.totalorder %s108, %s109
    %p120 = scmp.eq.s32.totalorder %s15, 0
    %p121 = por %p119, %p120
    %p122 = scmp.ne.s32.totalorder %s108, %s109
    %p123 = scmp.eq.s32.totalorder %s16, 1
    %p124 = por %p122, %p123
    %p126 = scmp.ne.s32.totalorder %s109, %s125
    %p127 = scmp.eq.s32.totalorder %s16, 0
    %p128 = por %p126, %p127
    %s129 = ssub.s32 %s17, %s29
    %s130 = ssub.s32 %s18, %s25
    %s131 = sor.u32 %s129, %s130
    %p132 = scmp.eq.s32.totalorder %s131, 0
    %s134 = sadd.s32 %s133, 1
    %s135 = scalar_select %p132, %s133, %s134
    %p138 = pneg %p132
    %p139 = scmp.eq.s32.totalorder %s10, 1
    %p140 = por %p138, %p139
    %p141 = scmp.ne.s32.totalorder %s133, %s136
    %p142 = scmp.eq.s32.totalorder %s10, 0
    %p143 = por %p141, %p142
    %p144 = scmp.ne.s32.totalorder %s133, %s136
    %p145 = scmp.eq.s32.totalorder %s15, 1
    %p146 = por %p144, %p145
    %p147 = scmp.ne.s32.totalorder %s136, %s137
    %p148 = scmp.eq.s32.totalorder %s15, 0
    %p149 = por %p147, %p148
    %p150 = scmp.ne.s32.totalorder %s136, %s137
    %p151 = scmp.eq.s32.totalorder %s16, 1
    %p152 = por %p150, %p151
    %p154 = scmp.ne.s32.totalorder %s137, %s153
    %p155 = scmp.eq.s32.totalorder %s16, 0
    %p156 = por %p154, %p155
    %p157 = scmp.le.s32.totalorder 1, %s10
    %p158 = scmp.lt.s32.totalorder %s10, 3
    %p159 = pnand %p157, %p158
    %p160 = pneg %p159
    // Predicated region
    $region9: #{entry_flow_forward.19} parent=5 // pred_check
      _
    $region10: #{entry_flow_forward.19} parent=5 // pred_check_branch
      %162 = sbr.rel (%p159) target = $region12
    $region11: #{entry_flow_forward.19} parent=5 // pred_region
      %s163 = ssub.s32 %s10, 1
      // Predicated region
      $region13: #{entry_flow_forward.19} parent=11 // pred_check
        %p164 = pneg %p69
      $region14: #{entry_flow_forward.19} parent=11 // pred_check_branch
        %166 = sbr.rel (%p164) target = $region16
      $region15: #{entry_flow_forward.19} parent=11 // pred_region
        _
      $region16: #{entry_flow_forward.19} parent=11 // pred_fallthru
        _
      // Predicated region
      $region17: #{entry_flow_forward.19} parent=11 // pred_check
        %p167 = pneg %p95
      $region18: #{entry_flow_forward.19} parent=11 // pred_check_branch
        %169 = sbr.rel (%p167) target = $region20
      $region19: #{entry_flow_forward.19} parent=11 // pred_region
        %p170 = scmp.lt.s32.totalorder %s20, 0
        %s171 = scalar_select %p170, %s20, 0
        %s172 = smul.addr %s171, 4
        %s173 = scalar_lea.vmem %s2, %s172
      $region20: #{entry_flow_forward.19} parent=11 // pred_fallthru
        _
      // Predicated region
      $region21: #{entry_flow_forward.19} parent=11 // pred_check
        %p174 = pneg %p121
      $region22: #{entry_flow_forward.19} parent=11 // pred_check_branch
        %176 = sbr.rel (%p174) target = $region24
      $region23: #{entry_flow_forward.19} parent=11 // pred_region
        %p177 = scmp.lt.s32.totalorder %s20, 0
        %s178 = scalar_select %p177, %s20, 0
        %s179 = scalar_lea.vmem %s3, %s178
      $region24: #{entry_flow_forward.19} parent=11 // pred_fallthru
        _
    $region12: #{entry_flow_forward.19} parent=5 // pred_fallthru
      _
    %p180 = scmp.lt.s32.totalorder %s10, 2
    // Predicated region
    $region25: #{entry_flow_forward.19} parent=5 // pred_check
      %p181 = pneg %p180
    $region26: #{entry_flow_forward.19} parent=5 // pred_check_branch
      %183 = sbr.rel (%p181) target = $region28
    $region27: #{entry_flow_forward.19} parent=5 // pred_region
      // Predicated region
      $region29: #{entry_flow_forward.19} parent=27 // pred_check
        %p184 = pneg %p42
      $region30: #{entry_flow_forward.19} parent=27 // pred_check_branch
        %186 = sbr.rel (%p184) target = $region32
      $region31: #{entry_flow_forward.19} parent=27 // pred_region
        %p187 = scmp.lt.s32.totalorder %s17, 1
        %s188 = scalar_select %p187, %s17, 1
        %s189 = smul.addr %s188, 4
        %s190 = smul.addr %s189, 2
        %s191 = scalar_lea.vmem %s0, %s190
      $region32: #{entry_flow_forward.19} parent=27 // pred_fallthru
        _
    $region28: #{entry_flow_forward.19} parent=5 // pred_fallthru
      _
    %p192 = scmp.le.s32.totalorder 1, %s10
    %p193 = scmp.lt.s32.totalorder %s10, 3
    %p194 = pnand %p192, %p193
    %p195 = pneg %p194
    // Predicated region
    $region33: #{entry_flow_forward.19} parent=5 // pred_check
      _
    $region34: #{entry_flow_forward.19} parent=5 // pred_check_branch
      %197 = sbr.rel (%p194) target = $region36
    $region35: #{entry_flow_forward.19} parent=5 // pred_region
      %s198 = ssub.s32 %s10, 1
      %p199 = scmp.lt.s32.totalorder %s19, 1
      %s200 = scalar_select %p199, %s19, 1
      %s201 = smul.addr %s200, 4
      %s202 = smul.addr %s201, 2
      %s203 = scalar_lea.vmem %s0, %s202
      %p204 = pneg %p48
      %p205 = pneg %p45
      %p206 = pneg %p69
      %p207 = pneg %p66
      %p208 = scmp.lt.s32.totalorder %s20, 0
      %s209 = scalar_select %p208, %s20, 0
      %s210 = smul.addr %s209, 4
      %s211 = scalar_lea.vmem %s2, %s210
      %p212 = pneg %p95
      %p213 = pneg %p92
      %p214 = scmp.lt.s32.totalorder %s20, 0
      %s215 = scalar_select %p214, %s20, 0
      %s216 = scalar_lea.vmem %s3, %s215
      %p217 = pneg %p121
      %p218 = pneg %p118
      %p219 = pneg %p149
      %p220 = pneg %p146
      %p221 = scmp.lt.s32.totalorder %s19, 1
      %s222 = scalar_select %p221, %s19, 1
      %p223 = scmp.lt.s32.totalorder %s20, 0
      %s224 = scalar_select %p223, %s20, 0
      %s225 = sadd.s32 %s224, %s222
      %s226 = smul.addr %s225, 2
      %s227 = scalar_lea.vmem %s4, %s226
      %p228 = scmp.lt.s32.totalorder %s19, 1
      %s229 = scalar_select %p228, %s19, 1
      %s230 = smul.addr %s229, 4
      %s231 = smul.addr %s230, 2
      %s232 = scalar_lea.vmem %s0, %s231
      %p233 = scmp.lt.s32.totalorder %s20, 0
      %s234 = scalar_select %p233, %s20, 0
      %s235 = smul.addr %s234, 4
      %s236 = scalar_lea.vmem %s2, %s235
      %p237 = scmp.lt.s32.totalorder %s20, 0
      %s238 = scalar_select %p237, %s20, 0
      %s239 = scalar_lea.vmem %s3, %s238
      %p240 = scmp.lt.s32.totalorder %s19, 1
      %s241 = scalar_select %p240, %s19, 1
      %p242 = scmp.lt.s32.totalorder %s20, 0
      %s243 = scalar_select %p242, %s20, 0
      %s244 = sadd.s32 %s243, %s241
      %s245 = smul.addr %s244, 2
      %s246 = scalar_lea.vmem %s4, %s245
      %v248 = vld [vmem:[%s1] sm:$0xff]
      %v249 = vld [vmem:[%s1 + $0x8] sm:$0x1]
      %v250 = vld [vmem:[%s232] sm:$0x1]
      %v251 = vld [vmem:[%s232 + $0x2] sm:$0x1]
      %v252 = vunpack.c.l.bf16 %v250
      %v253 = vunpack.c.l.bf16 %v251
      %v254 = vlaneseq
      %v255 = vshrl.u32 %v254, 7
      %v256 = vsub.s32 0, %v255
      %v257 = vrot.slane %v248, %v256
      %v258 = vmul.f32 %v252, %v257
      %v259 = vmul.f32 %v253, %v257
      %v260 = vadd.f32 %v258, 0.0
      %v261 = vadd.f32 %v259, 0.0
      %v262 = vld [vmem:[%s232] sm:$0x3]
      %v263 = vld [vmem:[%s232 + $0x2] sm:$0x3]
      %v264 = vunpack.c.l.bf16 %v262
      %v265 = vunpack.c.l.bf16 %v263
      %v266 = vlaneseq
      %v267 = vshrl.u32 %v266, 7
      %v268 = vsub.s32 1, %v267
      %v269 = vrot.slane %v248, %v268
      %v270 = vmul.f32 %v264, %v269
      %v271 = vmul.f32 %v265, %v269
      %v274 = vrot.slane %v270, 5
      %v275 = vrot.slane %v274, 4
      %v276 = vrot.slane %v271, 5
      %v277 = vrot.slane %v276, 4
      %v280 = vadd.f32 %v260, %v275
      %v281 = vadd.f32 %v261, %v277
      %v282 = vld [vmem:[%s232] sm:$0x2]
      %v283 = vld [vmem:[%s232 + $0x2] sm:$0x2]
      %v284 = vunpack.c.l.bf16 %v282
      %v285 = vunpack.c.l.bf16 %v283
      %v286 = vlaneseq
      %v287 = vshrl.u32 %v286, 7
      %v288 = vsub.s32 2, %v287
      %v289 = vrot.slane %v248, %v288
      %v290 = vmul.f32 %v284, %v289
      %v291 = vmul.f32 %v285, %v289
      %v294 = vrot.slane %v290, 6
      %v295 = vrot.slane %v294, 4
      %v296 = vrot.slane %v291, 6
      %v297 = vrot.slane %v296, 4
      %v300 = vadd.f32 %v280, %v295
      %v301 = vadd.f32 %v281, %v297
      %s302 = scalar_lea.vmem %s232, 2
      %v303 = vld [vmem:[%s302] sm:$0x1]
      %v304 = vld [vmem:[%s302 + $0x2] sm:$0x1]
      %v305 = vunpack.c.l.bf16 %v303
      %v306 = vunpack.c.l.bf16 %v304
      %v307 = vlaneseq
      %v308 = vshrl.u32 %v307, 7
      %v309 = vsub.s32 3, %v308
      %v310 = vrot.slane %v248, %v309
      %v311 = vmul.f32 %v305, %v310
      %v312 = vmul.f32 %v306, %v310
      %v313 = vadd.f32 %v300, %v311
      %v314 = vadd.f32 %v301, %v312
      %v315 = vld [vmem:[%s302] sm:$0x3]
      %v316 = vld [vmem:[%s302 + $0x2] sm:$0x3]
      %v317 = vunpack.c.l.bf16 %v315
      %v318 = vunpack.c.l.bf16 %v316
      %v319 = vlaneseq
      %v320 = vshrl.u32 %v319, 7
      %v321 = vsub.s32 4, %v320
      %v322 = vrot.slane %v248, %v321
      %v323 = vmul.f32 %v317, %v322
      %v324 = vmul.f32 %v318, %v322
      %v327 = vrot.slane %v323, 5
      %v328 = vrot.slane %v327, 4
      %v329 = vrot.slane %v324, 5
      %v330 = vrot.slane %v329, 4
      %v333 = vadd.f32 %v313, %v328
      %v334 = vadd.f32 %v314, %v330
      %v335 = vld [vmem:[%s302] sm:$0x2]
      %v336 = vld [vmem:[%s302 + $0x2] sm:$0x2]
      %v337 = vunpack.c.l.bf16 %v335
      %v338 = vunpack.c.l.bf16 %v336
      %v339 = vlaneseq
      %v340 = vshrl.u32 %v339, 7
      %v341 = vsub.s32 5, %v340
      %v342 = vrot.slane %v248, %v341
      %v343 = vmul.f32 %v337, %v342
      %v344 = vmul.f32 %v338, %v342
      %v347 = vrot.slane %v343, 6
      %v348 = vrot.slane %v347, 4
      %v349 = vrot.slane %v344, 6
      %v350 = vrot.slane %v349, 4
      %v353 = vadd.f32 %v333, %v348
      %v354 = vadd.f32 %v334, %v350
      %s355 = scalar_lea.vmem %s232, 4
      %v356 = vld [vmem:[%s355] sm:$0x1]
      %v357 = vld [vmem:[%s355 + $0x2] sm:$0x1]
      %v358 = vunpack.c.l.bf16 %v356
      %v359 = vunpack.c.l.bf16 %v357
      %v360 = vlaneseq
      %v361 = vshrl.u32 %v360, 7
      %v362 = vsub.s32 6, %v361
      %v363 = vrot.slane %v248, %v362
      %v364 = vmul.f32 %v358, %v363
      %v365 = vmul.f32 %v359, %v363
      %v366 = vadd.f32 %v353, %v364
      %v367 = vadd.f32 %v354, %v365
      %v368 = vld [vmem:[%s355] sm:$0x3]
      %v369 = vld [vmem:[%s355 + $0x2] sm:$0x3]
      %v370 = vunpack.c.l.bf16 %v368
      %v371 = vunpack.c.l.bf16 %v369
      %v372 = vlaneseq
      %v373 = vshrl.u32 %v372, 7
      %v374 = vsub.s32 7, %v373
      %v375 = vrot.slane %v248, %v374
      %v376 = vmul.f32 %v370, %v375
      %v377 = vmul.f32 %v371, %v375
      %v380 = vrot.slane %v376, 5
      %v381 = vrot.slane %v380, 4
      %v382 = vrot.slane %v377, 5
      %v383 = vrot.slane %v382, 4
      %v386 = vadd.f32 %v366, %v381
      %v387 = vadd.f32 %v367, %v383
      %v388 = vld [vmem:[%s355] sm:$0x2]
      %v389 = vld [vmem:[%s355 + $0x2] sm:$0x2]
      %v390 = vunpack.c.l.bf16 %v388
      %v391 = vunpack.c.l.bf16 %v389
      %v392 = vlaneseq
      %v393 = vshrl.u32 %v392, 7
      %v394 = vsub.s32 0, %v393
      %v395 = vrot.slane %v249, %v394
      %v396 = vmul.f32 %v390, %v395
      %v397 = vmul.f32 %v391, %v395
      %v400 = vrot.slane %v396, 6
      %v401 = vrot.slane %v400, 4
      %v402 = vrot.slane %v397, 6
      %v403 = vrot.slane %v402, 4
      %v406 = vadd.f32 %v386, %v401
      %v407 = vadd.f32 %v387, %v403
      %v408 = vpack.c.bf16 %v406, %v406
      %409 = vst [vmem:[#allocation2] sm:$0x1] %v408
      %v410 = vpack.c.bf16 %v407, %v407
      %v413 = vunpack.c.l.s4 1983009808
      %v414 = vunpack.c.0.s8 %v413
      %v415 = vlaneseq
      %v416 = vshrl.u32 %v415, 7
      %v417 = vsub.s32 %v414, %v416
      %v418 = vrot.slane %v410, %v417
      %v419 = vrot.slane %v418, 7
      %421 = vst [vmem:[#allocation2] sm:$0x2] %v419
      %v422 = vld [vmem:[#allocation2] sm:$0x3]
      %v423 = vld [vmem:[%s236] sm:$0xf]
      %v424 = vld [vmem:[%s236 + $0x4] sm:$0xf]
      %v425 = vld [vmem:[%s236 + $0x8] sm:$0xf]
      %v426 = vld [vmem:[%s236 + $0xc] sm:$0xf]
      %v427 = vld [vmem:[%s236 + $0x10] sm:$0xf]
      %v428 = vld [vmem:[%s236 + $0x14] sm:$0xf]
      %v429 = vld [vmem:[%s236 + $0x18] sm:$0xf]
      %v430 = vld [vmem:[%s236 + $0x1c] sm:$0xf]
      %v431 = vld [vmem:[%s236 + $0x20] sm:$0xf]
      %v432 = vld [vmem:[%s236 + $0x24] sm:$0xf]
      %v433 = vld [vmem:[%s236 + $0x28] sm:$0xf]
      %v434 = vld [vmem:[%s236 + $0x2c] sm:$0xf]
      %v435 = vld [vmem:[%s236 + $0x30] sm:$0xf]
      %v436 = vld [vmem:[%s236 + $0x34] sm:$0xf]
      %v437 = vld [vmem:[%s236 + $0x38] sm:$0xf]
      %v438 = vld [vmem:[%s236 + $0x3c] sm:$0xf]
      %v439 = vld [vmem:[%s239] sm:$0x1]
      %v441 = vlaneseq
      %v442 = vshrl.u32 %v441, 7
      %v443 = vsub.s32 0, %v442
      %v444 = vrot.slane %v439, %v443
      %v462 = vunpack.c.l.b16 %v423
      %v463 = vunpack.c.l.b16 %v424
      %v464 = vunpack.c.l.b16 %v425
      %v465 = vunpack.c.l.b16 %v426
      %v466 = vunpack.c.l.b16 %v427
      %v467 = vunpack.c.l.b16 %v428
      %v468 = vunpack.c.l.b16 %v429
      %v469 = vunpack.c.l.b16 %v430
      %v470 = vunpack.c.l.b16 %v431
      %v471 = vunpack.c.l.b16 %v432
      %v472 = vunpack.c.l.b16 %v433
      %v473 = vunpack.c.l.b16 %v434
      %v474 = vunpack.c.l.b16 %v435
      %v475 = vunpack.c.l.b16 %v436
      %v476 = vunpack.c.l.b16 %v437
      %v477 = vunpack.c.l.b16 %v438
      %v478 = vpack.c.b16 %v463, %v462
      %v479 = vpack.c.b16 %v465, %v464
      %v480 = vpack.c.b16 %v467, %v466
      %v481 = vpack.c.b16 %v469, %v468
      %v482 = vpack.c.b16 %v471, %v470
      %v483 = vpack.c.b16 %v473, %v472
      %v484 = vpack.c.b16 %v475, %v474
      %v485 = vpack.c.b16 %v477, %v476
      %494 = vmatprep.subr.bf16.mxu0 0
      %495 = vmatpush1.bf16.msra.mxu0 %v485
      %496 = vmatprep.subr.bf16.mxu0 0
      %497 = vmatpush1.bf16.msra.mxu0 %v484
      %498 = vmatprep.subr.bf16.mxu0 0
      %499 = vmatpush1.bf16.msra.mxu0 %v483
      %500 = vmatprep.subr.bf16.mxu0 0
      %501 = vmatpush1.bf16.msra.mxu0 %v482
      %502 = vmatprep.subr.bf16.mxu0 0
      %503 = vmatpush1.bf16.msra.mxu0 %v481
      %504 = vmatprep.subr.bf16.mxu0 0
      %505 = vmatpush1.bf16.msra.mxu0 %v480
      %506 = vmatprep.subr.bf16.mxu0 0
      %507 = vmatpush1.bf16.msra.mxu0 %v479
      %508 = vmatprep.subr.bf16.mxu0 0
      %509 = vmatpush1.bf16.msra.mxu0 %v478
      %510 = vmatprep.subr.bf16.mxu0 0
      %511 = vmatpush2.bf16.msra.mxu0 0
      %512 = vmatprep.subr.bf16.mxu0 0
      %513 = vmatpush2.bf16.msra.mxu0 0
      %514 = vmatprep.subr.bf16.mxu0 0
      %515 = vmatpush2.bf16.msra.mxu0 0
      %516 = vmatprep.subr.bf16.mxu0 0
      %517 = vmatpush2.bf16.msra.mxu0 0
      %518 = vmatprep.subr.bf16.mxu0 0
      %519 = vmatpush2.bf16.msra.mxu0 0
      %520 = vmatprep.subr.bf16.mxu0 0
      %521 = vmatpush2.bf16.msra.mxu0 0
      %522 = vmatprep.subr.bf16.mxu0 0
      %523 = vmatpush2.bf16.msra.mxu0 0
      %524 = vmatprep.subr.bf16.mxu0 0
      %525 = vmatpush2.bf16.msra.mxu0 0
      %526 = vmatprep.mubr.bf16.mxu0 0
      %527 = vmatmul.mubr.bf16.gmra.mxu0 %v422
      %v528 = vpop.f32.mrf.mxu0
      %v529 = vadd.f32 %v444, %v528
      %v530 = vpop.f32.mrf.mxu0
      %v531 = vpop.f32.mrf.mxu0
      %v532 = vpop.f32.mrf.mxu0
      %533 = vdwg.mxu0
      %v534 = vmax.f32 %v529, 0.0
      %v535 = vpack.c.bf16 %v534, %v534
      %536 = vst [vmem:[%s246] sm:$0x3] %v535
      %p537 = scmp.lt.s32.totalorder %s19, 1
      %s538 = scalar_select %p537, %s19, 1
      %p539 = scmp.lt.s32.totalorder %s20, 0
      %s540 = scalar_select %p539, %s20, 0
      %s541 = sadd.s32 %s540, %s538
      %s542 = smul.addr %s541, 2
      %s543 = scalar_lea.vmem %s4, %s542
      // Predicated region
      $region37: #{entry_flow_forward.19} parent=35 // pred_check
        %p544 = pneg %p146
      $region38: #{entry_flow_forward.19} parent=35 // pred_check_branch
        %546 = sbr.rel (%p544) target = $region40
      $region39: #{entry_flow_forward.19} parent=35 // pred_region
        _
      $region40: #{entry_flow_forward.19} parent=35 // pred_fallthru
        _
    $region36: #{entry_flow_forward.19} parent=5 // pred_fallthru
      _
    %p547 = scmp.le.s32.totalorder 2, %s10
    // Predicated region
    $region41: #{entry_flow_forward.19} parent=5 // pred_check
      %p548 = pneg %p547
    $region42: #{entry_flow_forward.19} parent=5 // pred_check_branch
      %550 = sbr.rel (%p548) target = $region44
    $region43: #{entry_flow_forward.19} parent=5 // pred_region
      %s551 = ssub.s32 %s10, 2
      // Predicated region
      $region45: #{entry_flow_forward.19} parent=43 // pred_check
        %p552 = pneg %p152
      $region46: #{entry_flow_forward.19} parent=43 // pred_check_branch
        %554 = sbr.rel (%p552) target = $region48
      $region47: #{entry_flow_forward.19} parent=43 // pred_region
        %p555 = scmp.lt.s32.totalorder %s21, 1
        %s556 = scalar_select %p555, %s21, 1
        %p557 = scmp.lt.s32.totalorder %s22, 0
        %s558 = scalar_select %p557, %s22, 0
        %s559 = sadd.s32 %s558, %s556
        %s560 = smul.addr %s559, 2
        %s561 = scalar_lea.vmem %s4, %s560
      $region48: #{entry_flow_forward.19} parent=43 // pred_fallthru
        _
    $region44: #{entry_flow_forward.19} parent=5 // pred_fallthru
      _
  $region6: #{entry_flow_forward.19} parent=0 // loop_footer
    %s14 = sadd.s32 1, %s10
  $region7: #{entry_flow_forward.19} parent=0 // loop_footer_branch
    %9 = sbr.rel target = $region3
  $region8: #{entry_flow_forward.19} parent=0 // loop_exit
    _

// kernel: entry_flow_forward.20
$region0: #{entry_flow_forward.20}
  #allocation0 [shape = 'u32[]', space=smem, size = 0x4, offset = 0x4, fixed_abs, tag = 'smem constant byte address 0x4 - core index']
  #allocation1 [shape = 'u32[144,128]{1,0:T(1,128)}', space=vmem, size = 0x12000, scoped, tag = 'internal scratch']
  #allocation2 [shape = 'bf16[4,128]{1,0:T(4,128)(2,1)}', space=vmem, size = 0x400, scoped, tag = 'scratch operand']
  %s0 = inlined_call_operand.vmem [shape: bf16[2,4,4,128], index: 0, kind: input, shape index: {}]
  %s1 = inlined_call_operand.vmem [shape: f32[9,128], index: 1, kind: input, shape index: {}]
  %s2 = inlined_call_operand.vmem [shape: bf16[128,128], index: 2, kind: input, shape index: {}]
  %s3 = inlined_call_operand.vmem [shape: f32[1,128], index: 3, kind: input, shape index: {}]
  %s4 = inlined_call_operand.vmem [shape: bf16[2,4,128], index: 4, kind: output, shape index: {}]
  %s5 = sld [smem:[#allocation0]]
  $region49: #{entry_flow_forward.20} parent=0
    _
  %s7 = ssub.s32 1, %s5
  %s8 = scalar_select 0, %s7, %s5
  loop: start=0, step=1, limit=4
  $region2: #{entry_flow_forward.20} parent=0 // loop_pre_header
    _
  $region3: #{entry_flow_forward.20} parent=0 // loop_header
    %s10 = sphi 0, %s14
    %p11 = scmp.ge.s32.totalorder %s10, 4
    %s17 = sphi 0, %s29
    %s18 = sphi 0, %s25
    %s19 = sphi 0, %s17
    %s20 = sphi 0, %s18
    %s21 = sphi 0, %s19
    %s22 = sphi 0, %s20
    %s32 = sphi 0, %s34
    %s35 = sphi 0, %s32
    %s36 = sphi 0, %s35
    %s52 = sphi 0, %s36
    %s56 = sphi 0, %s56
    %s58 = sphi 0, %s56
    %s59 = sphi 0, %s58
    %s73 = sphi 0, %s59
    %s79 = sphi 0, %s81
    %s82 = sphi 0, %s79
    %s83 = sphi 0, %s82
    %s99 = sphi 0, %s83
    %s105 = sphi 0, %s107
    %s108 = sphi 0, %s105
    %s109 = sphi 0, %s108
    %s125 = sphi 0, %s109
    %s133 = sphi 0, %s135
    %s136 = sphi 0, %s133
    %s137 = sphi 0, %s136
    %s153 = sphi 0, %s137
  $region4: #{entry_flow_forward.20} parent=0 // loop_header_branch
    %13 = sbr.rel (%p11) target = $region8
  $region5: #{entry_flow_forward.20} parent=0 // loop_body
    %s15 = ssub.s32 %s10, 1
    %s16 = ssub.s32 %s10, 2
    %s23 = sadd.s32 1, %s18
    %p24 = scmp.ge.s32.totalorder %s23, 1
    %s25 = scalar_select %p24, 0, %s23
    %s26 = sadd.s32 1, %s17
    %s27 = scalar_select %p24, %s26, %s17
    %p28 = scmp.ge.s32.totalorder %s27, 2
    %s29 = scalar_select %p28, 0, %s27
    %s30 = ssub.s32 %s17, %s29
    %p31 = scmp.eq.s32.totalorder %s30, 0
    %s33 = sadd.s32 %s32, 1
    %s34 = scalar_select %p31, %s32, %s33
    %p37 = pneg %p31
    %p38 = scmp.eq.s32.totalorder %s10, 1
    %p39 = por %p37, %p38
    %p40 = scmp.ne.s32.totalorder %s32, %s35
    %p41 = scmp.eq.s32.totalorder %s10, 0
    %p42 = por %p40, %p41
    %p43 = scmp.ne.s32.totalorder %s32, %s35
    %p44 = scmp.eq.s32.totalorder %s15, 1
    %p45 = por %p43, %p44
    %p46 = scmp.ne.s32.totalorder %s35, %s36
    %p47 = scmp.eq.s32.totalorder %s15, 0
    %p48 = por %p46, %p47
    %p49 = scmp.ne.s32.totalorder %s35, %s36
    %p50 = scmp.eq.s32.totalorder %s16, 1
    %p51 = por %p49, %p50
    %p53 = scmp.ne.s32.totalorder %s36, %s52
    %p54 = scmp.eq.s32.totalorder %s16, 0
    %p55 = por %p53, %p54
    %s57 = sadd.s32 %s56, 1
    %p60 = scmp.eq.s32.totalorder %s10, 1
    %p61 = scmp.ne.s32.totalorder %s56, %s58
    %p62 = scmp.eq.s32.totalorder %s10, 0
    %p63 = por %p61, %p62
    %p64 = scmp.ne.s32.totalorder %s56, %s58
    %p65 = scmp.eq.s32.totalorder %s15, 1
    %p66 = por %p64, %p65
    %p67 = scmp.ne.s32.totalorder %s58, %s59
    %p68 = scmp.eq.s32.totalorder %s15, 0
    %p69 = por %p67, %p68
    %p70 = scmp.ne.s32.totalorder %s58, %s59
    %p71 = scmp.eq.s32.totalorder %s16, 1
    %p72 = por %p70, %p71
    %p74 = scmp.ne.s32.totalorder %s59, %s73
    %p75 = scmp.eq.s32.totalorder %s16, 0
    %p76 = por %p74, %p75
    %s77 = ssub.s32 %s18, %s25
    %p78 = scmp.eq.s32.totalorder %s77, 0
    %s80 = sadd.s32 %s79, 1
    %s81 = scalar_select %p78, %s79, %s80
    %p84 = pneg %p78
    %p85 = scmp.eq.s32.totalorder %s10, 1
    %p86 = por %p84, %p85
    %p87 = scmp.ne.s32.totalorder %s79, %s82
    %p88 = scmp.eq.s32.totalorder %s10, 0
    %p89 = por %p87, %p88
    %p90 = scmp.ne.s32.totalorder %s79, %s82
    %p91 = scmp.eq.s32.totalorder %s15, 1
    %p92 = por %p90, %p91
    %p93 = scmp.ne.s32.totalorder %s82, %s83
    %p94 = scmp.eq.s32.totalorder %s15, 0
    %p95 = por %p93, %p94
    %p96 = scmp.ne.s32.totalorder %s82, %s83
    %p97 = scmp.eq.s32.totalorder %s16, 1
    %p98 = por %p96, %p97
    %p100 = scmp.ne.s32.totalorder %s83, %s99
    %p101 = scmp.eq.s32.totalorder %s16, 0
    %p102 = por %p100, %p101
    %s103 = ssub.s32 %s18, %s25
    %p104 = scmp.eq.s32.totalorder %s103, 0
    %s106 = sadd.s32 %s105, 1
    %s107 = scalar_select %p104, %s105, %s106
    %p110 = pneg %p104
    %p111 = scmp.eq.s32.totalorder %s10, 1
    %p112 = por %p110, %p111
    %p113 = scmp.ne.s32.totalorder %s105, %s108
    %p114 = scmp.eq.s32.totalorder %s10, 0
    %p115 = por %p113, %p114
    %p116 = scmp.ne.s32.totalorder %s105, %s108
    %p117 = scmp.eq.s32.totalorder %s15, 1
    %p118 = por %p116, %p117
    %p119 = scmp.ne.s32.totalorder %s108, %s109
    %p120 = scmp.eq.s32.totalorder %s15, 0
    %p121 = por %p119, %p120
    %p122 = scmp.ne.s32.totalorder %s108, %s109
    %p123 = scmp.eq.s32.totalorder %s16, 1
    %p124 = por %p122, %p123
    %p126 = scmp.ne.s32.totalorder %s109, %s125
    %p127 = scmp.eq.s32.totalorder %s16, 0
    %p128 = por %p126, %p127
    %s129 = ssub.s32 %s17, %s29
    %s130 = ssub.s32 %s18, %s25
    %s131 = sor.u32 %s129, %s130
    %p132 = scmp.eq.s32.totalorder %s131, 0
    %s134 = sadd.s32 %s133, 1
    %s135 = scalar_select %p132, %s133, %s134
    %p138 = pneg %p132
    %p139 = scmp.eq.s32.totalorder %s10, 1
    %p140 = por %p138, %p139
    %p141 = scmp.ne.s32.totalorder %s133, %s136
    %p142 = scmp.eq.s32.totalorder %s10, 0
    %p143 = por %p141, %p142
    %p144 = scmp.ne.s32.totalorder %s133, %s136
    %p145 = scmp.eq.s32.totalorder %s15, 1
    %p146 = por %p144, %p145
    %p147 = scmp.ne.s32.totalorder %s136, %s137
    %p148 = scmp.eq.s32.totalorder %s15, 0
    %p149 = por %p147, %p148
    %p150 = scmp.ne.s32.totalorder %s136, %s137
    %p151 = scmp.eq.s32.totalorder %s16, 1
    %p152 = por %p150, %p151
    %p154 = scmp.ne.s32.totalorder %s137, %s153
    %p155 = scmp.eq.s32.totalorder %s16, 0
    %p156 = por %p154, %p155
    %p157 = scmp.le.s32.totalorder 1, %s10
    %p158 = scmp.lt.s32.totalorder %s10, 3
    %p159 = pnand %p157, %p158
    %p160 = pneg %p159
    // Predicated region
    $region9: #{entry_flow_forward.20} parent=5 // pred_check
      _
    $region10: #{entry_flow_forward.20} parent=5 // pred_check_branch
      %162 = sbr.rel (%p159) target = $region12
    $region11: #{entry_flow_forward.20} parent=5 // pred_region
      %s163 = ssub.s32 %s10, 1
      // Predicated region
      $region13: #{entry_flow_forward.20} parent=11 // pred_check
        %p164 = pneg %p69
      $region14: #{entry_flow_forward.20} parent=11 // pred_check_branch
        %166 = sbr.rel (%p164) target = $region16
      $region15: #{entry_flow_forward.20} parent=11 // pred_region
        _
      $region16: #{entry_flow_forward.20} parent=11 // pred_fallthru
        _
      // Predicated region
      $region17: #{entry_flow_forward.20} parent=11 // pred_check
        %p167 = pneg %p95
      $region18: #{entry_flow_forward.20} parent=11 // pred_check_branch
        %169 = sbr.rel (%p167) target = $region20
      $region19: #{entry_flow_forward.20} parent=11 // pred_region
        %p170 = scmp.lt.s32.totalorder %s20, 0
        %s171 = scalar_select %p170, %s20, 0
        %s172 = smul.addr %s171, 4
        %s173 = scalar_lea.vmem %s2, %s172
      $region20: #{entry_flow_forward.20} parent=11 // pred_fallthru
        _
      // Predicated region
      $region21: #{entry_flow_forward.20} parent=11 // pred_check
        %p174 = pneg %p121
      $region22: #{entry_flow_forward.20} parent=11 // pred_check_branch
        %176 = sbr.rel (%p174) target = $region24
      $region23: #{entry_flow_forward.20} parent=11 // pred_region
        %p177 = scmp.lt.s32.totalorder %s20, 0
        %s178 = scalar_select %p177, %s20, 0
        %s179 = scalar_lea.vmem %s3, %s178
      $region24: #{entry_flow_forward.20} parent=11 // pred_fallthru
        _
    $region12: #{entry_flow_forward.20} parent=5 // pred_fallthru
      _
    %p180 = scmp.lt.s32.totalorder %s10, 2
    // Predicated region
    $region25: #{entry_flow_forward.20} parent=5 // pred_check
      %p181 = pneg %p180
    $region26: #{entry_flow_forward.20} parent=5 // pred_check_branch
      %183 = sbr.rel (%p181) target = $region28
    $region27: #{entry_flow_forward.20} parent=5 // pred_region
      // Predicated region
      $region29: #{entry_flow_forward.20} parent=27 // pred_check
        %p184 = pneg %p42
      $region30: #{entry_flow_forward.20} parent=27 // pred_check_branch
        %186 = sbr.rel (%p184) target = $region32
      $region31: #{entry_flow_forward.20} parent=27 // pred_region
        %p187 = scmp.lt.s32.totalorder %s17, 1
        %s188 = scalar_select %p187, %s17, 1
        %s189 = smul.addr %s188, 4
        %s190 = smul.addr %s189, 2
        %s191 = scalar_lea.vmem %s0, %s190
      $region32: #{entry_flow_forward.20} parent=27 // pred_fallthru
        _
    $region28: #{entry_flow_forward.20} parent=5 // pred_fallthru
      _
    %p192 = scmp.le.s32.totalorder 1, %s10
    %p193 = scmp.lt.s32.totalorder %s10, 3
    %p194 = pnand %p192, %p193
    %p195 = pneg %p194
    // Predicated region
    $region33: #{entry_flow_forward.20} parent=5 // pred_check
      _
    $region34: #{entry_flow_forward.20} parent=5 // pred_check_branch
      %197 = sbr.rel (%p194) target = $region36
    $region35: #{entry_flow_forward.20} parent=5 // pred_region
      %s198 = ssub.s32 %s10, 1
      %p199 = scmp.lt.s32.totalorder %s19, 1
      %s200 = scalar_select %p199, %s19, 1
      %s201 = smul.addr %s200, 4
      %s202 = smul.addr %s201, 2
      %s203 = scalar_lea.vmem %s0, %s202
      %p204 = pneg %p48
      %p205 = pneg %p45
      %p206 = pneg %p69
      %p207 = pneg %p66
      %p208 = scmp.lt.s32.totalorder %s20, 0
      %s209 = scalar_select %p208, %s20, 0
      %s210 = smul.addr %s209, 4
      %s211 = scalar_lea.vmem %s2, %s210
      %p212 = pneg %p95
      %p213 = pneg %p92
      %p214 = scmp.lt.s32.totalorder %s20, 0
      %s215 = scalar_select %p214, %s20, 0
      %s216 = scalar_lea.vmem %s3, %s215
      %p217 = pneg %p121
      %p218 = pneg %p118
      %p219 = pneg %p149
      %p220 = pneg %p146
      %p221 = scmp.lt.s32.totalorder %s19, 1
      %s222 = scalar_select %p221, %s19, 1
      %p223 = scmp.lt.s32.totalorder %s20, 0
      %s224 = scalar_select %p223, %s20, 0
      %s225 = sadd.s32 %s224, %s222
      %s226 = smul.addr %s225, 2
      %s227 = scalar_lea.vmem %s4, %s226
      %p228 = scmp.lt.s32.totalorder %s19, 1
      %s229 = scalar_select %p228, %s19, 1
      %s230 = smul.addr %s229, 4
      %s231 = smul.addr %s230, 2
      %s232 = scalar_lea.vmem %s0, %s231
      %p233 = scmp.lt.s32.totalorder %s20, 0
      %s234 = scalar_select %p233, %s20, 0
      %s235 = smul.addr %s234, 4
      %s236 = scalar_lea.vmem %s2, %s235
      %p237 = scmp.lt.s32.totalorder %s20, 0
      %s238 = scalar_select %p237, %s20, 0
      %s239 = scalar_lea.vmem %s3, %s238
      %p240 = scmp.lt.s32.totalorder %s19, 1
      %s241 = scalar_select %p240, %s19, 1
      %p242 = scmp.lt.s32.totalorder %s20, 0
      %s243 = scalar_select %p242, %s20, 0
      %s244 = sadd.s32 %s243, %s241
      %s245 = smul.addr %s244, 2
      %s246 = scalar_lea.vmem %s4, %s245
      %v248 = vld [vmem:[%s1] sm:$0xff]
      %v249 = vld [vmem:[%s1 + $0x8] sm:$0x1]
      %v250 = vld [vmem:[%s232] sm:$0x1]
      %v251 = vld [vmem:[%s232 + $0x2] sm:$0x1]
      %v252 = vunpack.c.l.bf16 %v250
      %v253 = vunpack.c.l.bf16 %v251
      %v254 = vlaneseq
      %v255 = vshrl.u32 %v254, 7
      %v256 = vsub.s32 0, %v255
      %v257 = vrot.slane %v248, %v256
      %v258 = vmul.f32 %v252, %v257
      %v259 = vmul.f32 %v253, %v257
      %v260 = vadd.f32 %v258, 0.0
      %v261 = vadd.f32 %v259, 0.0
      %v262 = vld [vmem:[%s232] sm:$0x3]
      %v263 = vld [vmem:[%s232 + $0x2] sm:$0x3]
      %v264 = vunpack.c.l.bf16 %v262
      %v265 = vunpack.c.l.bf16 %v263
      %v266 = vlaneseq
      %v267 = vshrl.u32 %v266, 7
      %v268 = vsub.s32 1, %v267
      %v269 = vrot.slane %v248, %v268
      %v270 = vmul.f32 %v264, %v269
      %v271 = vmul.f32 %v265, %v269
      %v274 = vrot.slane %v270, 5
      %v275 = vrot.slane %v274, 4
      %v276 = vrot.slane %v271, 5
      %v277 = vrot.slane %v276, 4
      %v280 = vadd.f32 %v260, %v275
      %v281 = vadd.f32 %v261, %v277
      %v282 = vld [vmem:[%s232] sm:$0x2]
      %v283 = vld [vmem:[%s232 + $0x2] sm:$0x2]
      %v284 = vunpack.c.l.bf16 %v282
      %v285 = vunpack.c.l.bf16 %v283
      %v286 = vlaneseq
      %v287 = vshrl.u32 %v286, 7
      %v288 = vsub.s32 2, %v287
      %v289 = vrot.slane %v248, %v288
      %v290 = vmul.f32 %v284, %v289
      %v291 = vmul.f32 %v285, %v289
      %v294 = vrot.slane %v290, 6
      %v295 = vrot.slane %v294, 4
      %v296 = vrot.slane %v291, 6
      %v297 = vrot.slane %v296, 4
      %v300 = vadd.f32 %v280, %v295
      %v301 = vadd.f32 %v281, %v297
      %s302 = scalar_lea.vmem %s232, 2
      %v303 = vld [vmem:[%s302] sm:$0x1]
      %v304 = vld [vmem:[%s302 + $0x2] sm:$0x1]
      %v305 = vunpack.c.l.bf16 %v303
      %v306 = vunpack.c.l.bf16 %v304
      %v307 = vlaneseq
      %v308 = vshrl.u32 %v307, 7
      %v309 = vsub.s32 3, %v308
      %v310 = vrot.slane %v248, %v309
      %v311 = vmul.f32 %v305, %v310
      %v312 = vmul.f32 %v306, %v310
      %v313 = vadd.f32 %v300, %v311
      %v314 = vadd.f32 %v301, %v312
      %v315 = vld [vmem:[%s302] sm:$0x3]
      %v316 = vld [vmem:[%s302 + $0x2] sm:$0x3]
      %v317 = vunpack.c.l.bf16 %v315
      %v318 = vunpack.c.l.bf16 %v316
      %v319 = vlaneseq
      %v320 = vshrl.u32 %v319, 7
      %v321 = vsub.s32 4, %v320
      %v322 = vrot.slane %v248, %v321
      %v323 = vmul.f32 %v317, %v322
      %v324 = vmul.f32 %v318, %v322
      %v327 = vrot.slane %v323, 5
      %v328 = vrot.slane %v327, 4
      %v329 = vrot.slane %v324, 5
      %v330 = vrot.slane %v329, 4
      %v333 = vadd.f32 %v313, %v328
      %v334 = vadd.f32 %v314, %v330
      %v335 = vld [vmem:[%s302] sm:$0x2]
      %v336 = vld [vmem:[%s302 + $0x2] sm:$0x2]
      %v337 = vunpack.c.l.bf16 %v335
      %v338 = vunpack.c.l.bf16 %v336
      %v339 = vlaneseq
      %v340 = vshrl.u32 %v339, 7
      %v341 = vsub.s32 5, %v340
      %v342 = vrot.slane %v248, %v341
      %v343 = vmul.f32 %v337, %v342
      %v344 = vmul.f32 %v338, %v342
      %v347 = vrot.slane %v343, 6
      %v348 = vrot.slane %v347, 4
      %v349 = vrot.slane %v344, 6
      %v350 = vrot.slane %v349, 4
      %v353 = vadd.f32 %v333, %v348
      %v354 = vadd.f32 %v334, %v350
      %s355 = scalar_lea.vmem %s232, 4
      %v356 = vld [vmem:[%s355] sm:$0x1]
      %v357 = vld [vmem:[%s355 + $0x2] sm:$0x1]
      %v358 = vunpack.c.l.bf16 %v356
      %v359 = vunpack.c.l.bf16 %v357
      %v360 = vlaneseq
      %v361 = vshrl.u32 %v360, 7
      %v362 = vsub.s32 6, %v361
      %v363 = vrot.slane %v248, %v362
      %v364 = vmul.f32 %v358, %v363
      %v365 = vmul.f32 %v359, %v363
      %v366 = vadd.f32 %v353, %v364
      %v367 = vadd.f32 %v354, %v365
      %v368 = vld [vmem:[%s355] sm:$0x3]
      %v369 = vld [vmem:[%s355 + $0x2] sm:$0x3]
      %v370 = vunpack.c.l.bf16 %v368
      %v371 = vunpack.c.l.bf16 %v369
      %v372 = vlaneseq
      %v373 = vshrl.u32 %v372, 7
      %v374 = vsub.s32 7, %v373
      %v375 = vrot.slane %v248, %v374
      %v376 = vmul.f32 %v370, %v375
      %v377 = vmul.f32 %v371, %v375
      %v380 = vrot.slane %v376, 5
      %v381 = vrot.slane %v380, 4
      %v382 = vrot.slane %v377, 5
      %v383 = vrot.slane %v382, 4
      %v386 = vadd.f32 %v366, %v381
      %v387 = vadd.f32 %v367, %v383
      %v388 = vld [vmem:[%s355] sm:$0x2]
      %v389 = vld [vmem:[%s355 + $0x2] sm:$0x2]
      %v390 = vunpack.c.l.bf16 %v388
      %v391 = vunpack.c.l.bf16 %v389
      %v392 = vlaneseq
      %v393 = vshrl.u32 %v392, 7
      %v394 = vsub.s32 0, %v393
      %v395 = vrot.slane %v249, %v394
      %v396 = vmul.f32 %v390, %v395
      %v397 = vmul.f32 %v391, %v395
      %v400 = vrot.slane %v396, 6
      %v401 = vrot.slane %v400, 4
      %v402 = vrot.slane %v397, 6
      %v403 = vrot.slane %v402, 4
      %v406 = vadd.f32 %v386, %v401
      %v407 = vadd.f32 %v387, %v403
      %v408 = vpack.c.bf16 %v406, %v406
      %409 = vst [vmem:[#allocation2] sm:$0x1] %v408
      %v410 = vpack.c.bf16 %v407, %v407
      %v413 = vunpack.c.l.s4 1983009808
      %v414 = vunpack.c.0.s8 %v413
      %v415 = vlaneseq
      %v416 = vshrl.u32 %v415, 7
      %v417 = vsub.s32 %v414, %v416
      %v418 = vrot.slane %v410, %v417
      %v419 = vrot.slane %v418, 7
      %421 = vst [vmem:[#allocation2] sm:$0x2] %v419
      %v422 = vld [vmem:[#allocation2] sm:$0x3]
      %v423 = vld [vmem:[%s236] sm:$0xf]
      %v424 = vld [vmem:[%s236 + $0x4] sm:$0xf]
      %v425 = vld [vmem:[%s236 + $0x8] sm:$0xf]
      %v426 = vld [vmem:[%s236 + $0xc] sm:$0xf]
      %v427 = vld [vmem:[%s236 + $0x10] sm:$0xf]
      %v428 = vld [vmem:[%s236 + $0x14] sm:$0xf]
      %v429 = vld [vmem:[%s236 + $0x18] sm:$0xf]
      %v430 = vld [vmem:[%s236 + $0x1c] sm:$0xf]
      %v431 = vld [vmem:[%s236 + $0x20] sm:$0xf]
      %v432 = vld [vmem:[%s236 + $0x24] sm:$0xf]
      %v433 = vld [vmem:[%s236 + $0x28] sm:$0xf]
      %v434 = vld [vmem:[%s236 + $0x2c] sm:$0xf]
      %v435 = vld [vmem:[%s236 + $0x30] sm:$0xf]
      %v436 = vld [vmem:[%s236 + $0x34] sm:$0xf]
      %v437 = vld [vmem:[%s236 + $0x38] sm:$0xf]
      %v438 = vld [vmem:[%s236 + $0x3c] sm:$0xf]
      %v439 = vld [vmem:[%s239] sm:$0x1]
      %v441 = vlaneseq
      %v442 = vshrl.u32 %v441, 7
      %v443 = vsub.s32 0, %v442
      %v444 = vrot.slane %v439, %v443
      %v462 = vunpack.c.l.b16 %v423
      %v463 = vunpack.c.l.b16 %v424
      %v464 = vunpack.c.l.b16 %v425
      %v465 = vunpack.c.l.b16 %v426
      %v466 = vunpack.c.l.b16 %v427
      %v467 = vunpack.c.l.b16 %v428
      %v468 = vunpack.c.l.b16 %v429
      %v469 = vunpack.c.l.b16 %v430
      %v470 = vunpack.c.l.b16 %v431
      %v471 = vunpack.c.l.b16 %v432
      %v472 = vunpack.c.l.b16 %v433
      %v473 = vunpack.c.l.b16 %v434
      %v474 = vunpack.c.l.b16 %v435
      %v475 = vunpack.c.l.b16 %v436
      %v476 = vunpack.c.l.b16 %v437
      %v477 = vunpack.c.l.b16 %v438
      %v478 = vpack.c.b16 %v463, %v462
      %v479 = vpack.c.b16 %v465, %v464
      %v480 = vpack.c.b16 %v467, %v466
      %v481 = vpack.c.b16 %v469, %v468
      %v482 = vpack.c.b16 %v471, %v470
      %v483 = vpack.c.b16 %v473, %v472
      %v484 = vpack.c.b16 %v475, %v474
      %v485 = vpack.c.b16 %v477, %v476
      %494 = vmatprep.subr.bf16.mxu0 0
      %495 = vmatpush1.bf16.msra.mxu0 %v485
      %496 = vmatprep.subr.bf16.mxu0 0
      %497 = vmatpush1.bf16.msra.mxu0 %v484
      %498 = vmatprep.subr.bf16.mxu0 0
      %499 = vmatpush1.bf16.msra.mxu0 %v483
      %500 = vmatprep.subr.bf16.mxu0 0
      %501 = vmatpush1.bf16.msra.mxu0 %v482
      %502 = vmatprep.subr.bf16.mxu0 0
      %503 = vmatpush1.bf16.msra.mxu0 %v481
      %504 = vmatprep.subr.bf16.mxu0 0
      %505 = vmatpush1.bf16.msra.mxu0 %v480
      %506 = vmatprep.subr.bf16.mxu0 0
      %507 = vmatpush1.bf16.msra.mxu0 %v479
      %508 = vmatprep.subr.bf16.mxu0 0
      %509 = vmatpush1.bf16.msra.mxu0 %v478
      %510 = vmatprep.subr.bf16.mxu0 0
      %511 = vmatpush2.bf16.msra.mxu0 0
      %512 = vmatprep.subr.bf16.mxu0 0
      %513 = vmatpush2.bf16.msra.mxu0 0
      %514 = vmatprep.subr.bf16.mxu0 0
      %515 = vmatpush2.bf16.msra.mxu0 0
      %516 = vmatprep.subr.bf16.mxu0 0
      %517 = vmatpush2.bf16.msra.mxu0 0
      %518 = vmatprep.subr.bf16.mxu0 0
      %519 = vmatpush2.bf16.msra.mxu0 0
      %520 = vmatprep.subr.bf16.mxu0 0
      %521 = vmatpush2.bf16.msra.mxu0 0
      %522 = vmatprep.subr.bf16.mxu0 0
      %523 = vmatpush2.bf16.msra.mxu0 0
      %524 = vmatprep.subr.bf16.mxu0 0
      %525 = vmatpush2.bf16.msra.mxu0 0
      %526 = vmatprep.mubr.bf16.mxu0 0
      %527 = vmatmul.mubr.bf16.gmra.mxu0 %v422
      %v528 = vpop.f32.mrf.mxu0
      %v529 = vadd.f32 %v444, %v528
      %v530 = vpop.f32.mrf.mxu0
      %v531 = vpop.f32.mrf.mxu0
      %v532 = vpop.f32.mrf.mxu0
      %533 = vdwg.mxu0
      %v534 = vpack.c.bf16 %v529, %v529
      %535 = vst [vmem:[%s246] sm:$0x3] %v534
      %p536 = scmp.lt.s32.totalorder %s19, 1
      %s537 = scalar_select %p536, %s19, 1
      %p538 = scmp.lt.s32.totalorder %s20, 0
      %s539 = scalar_select %p538, %s20, 0
      %s540 = sadd.s32 %s539, %s537
      %s541 = smul.addr %s540, 2
      %s542 = scalar_lea.vmem %s4, %s541
      // Predicated region
      $region37: #{entry_flow_forward.20} parent=35 // pred_check
        %p543 = pneg %p146
      $region38: #{entry_flow_forward.20} parent=35 // pred_check_branch
        %545 = sbr.rel (%p543) target = $region40
      $region39: #{entry_flow_forward.20} parent=35 // pred_region
        _
      $region40: #{entry_flow_forward.20} parent=35 // pred_fallthru
        _
    $region36: #{entry_flow_forward.20} parent=5 // pred_fallthru
      _
    %p546 = scmp.le.s32.totalorder 2, %s10
    // Predicated region
    $region41: #{entry_flow_forward.20} parent=5 // pred_check
      %p547 = pneg %p546
    $region42: #{entry_flow_forward.20} parent=5 // pred_check_branch
      %549 = sbr.rel (%p547) target = $region44
    $region43: #{entry_flow_forward.20} parent=5 // pred_region
      %s550 = ssub.s32 %s10, 2
      // Predicated region
      $region45: #{entry_flow_forward.20} parent=43 // pred_check
        %p551 = pneg %p152
      $region46: #{entry_flow_forward.20} parent=43 // pred_check_branch
        %553 = sbr.rel (%p551) target = $region48
      $region47: #{entry_flow_forward.20} parent=43 // pred_region
        %p554 = scmp.lt.s32.totalorder %s21, 1
        %s555 = scalar_select %p554, %s21, 1
        %p556 = scmp.lt.s32.totalorder %s22, 0
        %s557 = scalar_select %p556, %s22, 0
        %s558 = sadd.s32 %s557, %s555
        %s559 = smul.addr %s558, 2
        %s560 = scalar_lea.vmem %s4, %s559
      $region48: #{entry_flow_forward.20} parent=43 // pred_fallthru
        _
    $region44: #{entry_flow_forward.20} parent=5 // pred_fallthru
      _
  $region6: #{entry_flow_forward.20} parent=0 // loop_footer
    %s14 = sadd.s32 1, %s10
  $region7: #{entry_flow_forward.20} parent=0 // loop_footer_branch
    %9 = sbr.rel target = $region3
  $region8: #{entry_flow_forward.20} parent=0 // loop_exit
    _

// kernel: entry_flow_forward.21
$region0: #{entry_flow_forward.21}
  #allocation0 [shape = 'u32[]', space=smem, size = 0x4, offset = 0x4, fixed_abs, tag = 'smem constant byte address 0x4 - core index']
  #allocation1 [shape = 'u32[144,128]{1,0:T(1,128)}', space=vmem, size = 0x12000, scoped, tag = 'internal scratch']
  #allocation2 [shape = 'bf16[1,128]{1,0:T(2,128)(2,1)}', space=vmem, size = 0x200, scoped, tag = 'scratch operand']
  #allocation3 [shape = 'bf16[1,128]{1,0:T(2,128)(2,1)}', space=vmem, size = 0x200, scoped, tag = 'scratch operand']
  %s0 = inlined_call_operand.vmem [shape: bf16[2,4,2,256], index: 0, kind: input, shape index: {}]
  %s1 = inlined_call_operand.vmem [shape: bf16[2,2,1,256], index: 1, kind: input, shape index: {}]
  %s2 = inlined_call_operand.vmem [shape: bf16[128,128], index: 2, kind: input, shape index: {}]
  %s3 = inlined_call_operand.vmem [shape: f32[1,128], index: 3, kind: input, shape index: {}]
  %s4 = inlined_call_operand.vmem [shape: bf16[2,1,128], index: 4, kind: output, shape index: {}]
  %s5 = sld [smem:[#allocation0]]
  $region49: #{entry_flow_forward.21} parent=0
    _
  %s7 = ssub.s32 1, %s5
  %s8 = scalar_select 0, %s7, %s5
  loop: start=0, step=1, limit=4
  $region2: #{entry_flow_forward.21} parent=0 // loop_pre_header
    _
  $region3: #{entry_flow_forward.21} parent=0 // loop_header
    %s10 = sphi 0, %s14
    %p11 = scmp.ge.s32.totalorder %s10, 4
    %s20 = sphi 0, %s22
    %s23 = sphi 0, %s20
    %s24 = sphi 0, %s23
    %s40 = sphi 0, %s24
    %s46 = sphi 0, %s48
    %s49 = sphi 0, %s46
    %s50 = sphi 0, %s49
    %s66 = sphi 0, %s50
    %s70 = sphi 0, %s70
    %s72 = sphi 0, %s70
    %s73 = sphi 0, %s72
    %s87 = sphi 0, %s73
    %s91 = sphi 0, %s91
    %s93 = sphi 0, %s91
    %s94 = sphi 0, %s93
    %s108 = sphi 0, %s94
    %s114 = sphi 0, %s116
    %s117 = sphi 0, %s114
    %s118 = sphi 0, %s117
    %s134 = sphi 0, %s118
  $region4: #{entry_flow_forward.21} parent=0 // loop_header_branch
    %13 = sbr.rel (%p11) target = $region8
  $region5: #{entry_flow_forward.21} parent=0 // loop_body
    %s15 = ssub.s32 %s10, 1
    %s16 = ssub.s32 %s10, 2
    %s17 = sadd.s32 %s10, 1
    %s18 = ssub.s32 %s10, %s17
    %p19 = scmp.eq.s32.totalorder %s18, 0
    %s21 = sadd.s32 %s20, 1
    %s22 = scalar_select %p19, %s20, %s21
    %p25 = pneg %p19
    %p26 = scmp.eq.s32.totalorder %s10, 1
    %p27 = por %p25, %p26
    %p28 = scmp.ne.s32.totalorder %s20, %s23
    %p29 = scmp.eq.s32.totalorder %s10, 0
    %p30 = por %p28, %p29
    %p31 = scmp.ne.s32.totalorder %s20, %s23
    %p32 = scmp.eq.s32.totalorder %s15, 1
    %p33 = por %p31, %p32
    %p34 = scmp.ne.s32.totalorder %s23, %s24
    %p35 = scmp.eq.s32.totalorder %s15, 0
    %p36 = por %p34, %p35
    %p37 = scmp.ne.s32.totalorder %s23, %s24
    %p38 = scmp.eq.s32.totalorder %s16, 1
    %p39 = por %p37, %p38
    %p41 = scmp.ne.s32.totalorder %s24, %s40
    %p42 = scmp.eq.s32.totalorder %s16, 0
    %p43 = por %p41, %p42
    %s44 = ssub.s32 %s10, %s17
    %p45 = scmp.eq.s32.totalorder %s44, 0
    %s47 = sadd.s32 %s46, 1
    %s48 = scalar_select %p45, %s46, %s47
    %p51 = pneg %p45
    %p52 = scmp.eq.s32.totalorder %s10, 1
    %p53 = por %p51, %p52
    %p54 = scmp.ne.s32.totalorder %s46, %s49
    %p55 = scmp.eq.s32.totalorder %s10, 0
    %p56 = por %p54, %p55
    %p57 = scmp.ne.s32.totalorder %s46, %s49
    %p58 = scmp.eq.s32.totalorder %s15, 1
    %p59 = por %p57, %p58
    %p60 = scmp.ne.s32.totalorder %s49, %s50
    %p61 = scmp.eq.s32.totalorder %s15, 0
    %p62 = por %p60, %p61
    %p63 = scmp.ne.s32.totalorder %s49, %s50
    %p64 = scmp.eq.s32.totalorder %s16, 1
    %p65 = por %p63, %p64
    %p67 = scmp.ne.s32.totalorder %s50, %s66
    %p68 = scmp.eq.s32.totalorder %s16, 0
    %p69 = por %p67, %p68
    %s71 = sadd.s32 %s70, 1
    %p74 = scmp.eq.s32.totalorder %s10, 1
    %p75 = scmp.ne.s32.totalorder %s70, %s72
    %p76 = scmp.eq.s32.totalorder %s10, 0
    %p77 = por %p75, %p76
    %p78 = scmp.ne.s32.totalorder %s70, %s72
    %p79 = scmp.eq.s32.totalorder %s15, 1
    %p80 = por %p78, %p79
    %p81 = scmp.ne.s32.totalorder %s72, %s73
    %p82 = scmp.eq.s32.totalorder %s15, 0
    %p83 = por %p81, %p82
    %p84 = scmp.ne.s32.totalorder %s72, %s73
    %p85 = scmp.eq.s32.totalorder %s16, 1
    %p86 = por %p84, %p85
    %p88 = scmp.ne.s32.totalorder %s73, %s87
    %p89 = scmp.eq.s32.totalorder %s16, 0
    %p90 = por %p88, %p89
    %s92 = sadd.s32 %s91, 1
    %p95 = scmp.eq.s32.totalorder %s10, 1
    %p96 = scmp.ne.s32.totalorder %s91, %s93
    %p97 = scmp.eq.s32.totalorder %s10, 0
    %p98 = por %p96, %p97
    %p99 = scmp.ne.s32.totalorder %s91, %s93
    %p100 = scmp.eq.s32.totalorder %s15, 1
    %p101 = por %p99, %p100
    %p102 = scmp.ne.s32.totalorder %s93, %s94
    %p103 = scmp.eq.s32.totalorder %s15, 0
    %p104 = por %p102, %p103
    %p105 = scmp.ne.s32.totalorder %s93, %s94
    %p106 = scmp.eq.s32.totalorder %s16, 1
    %p107 = por %p105, %p106
    %p109 = scmp.ne.s32.totalorder %s94, %s108
    %p110 = scmp.eq.s32.totalorder %s16, 0
    %p111 = por %p109, %p110
    %s112 = ssub.s32 %s10, %s17
    %p113 = scmp.eq.s32.totalorder %s112, 0
    %s115 = sadd.s32 %s114, 1
    %s116 = scalar_select %p113, %s114, %s115
    %p119 = pneg %p113
    %p120 = scmp.eq.s32.totalorder %s10, 1
    %p121 = por %p119, %p120
    %p122 = scmp.ne.s32.totalorder %s114, %s117
    %p123 = scmp.eq.s32.totalorder %s10, 0
    %p124 = por %p122, %p123
    %p125 = scmp.ne.s32.totalorder %s114, %s117
    %p126 = scmp.eq.s32.totalorder %s15, 1
    %p127 = por %p125, %p126
    %p128 = scmp.ne.s32.totalorder %s117, %s118
    %p129 = scmp.eq.s32.totalorder %s15, 0
    %p130 = por %p128, %p129
    %p131 = scmp.ne.s32.totalorder %s117, %s118
    %p132 = scmp.eq.s32.totalorder %s16, 1
    %p133 = por %p131, %p132
    %p135 = scmp.ne.s32.totalorder %s118, %s134
    %p136 = scmp.eq.s32.totalorder %s16, 0
    %p137 = por %p135, %p136
    %p138 = scmp.le.s32.totalorder 1, %s10
    %p139 = scmp.lt.s32.totalorder %s10, 3
    %p140 = pnand %p138, %p139
    %p141 = pneg %p140
    // Predicated region
    $region9: #{entry_flow_forward.21} parent=5 // pred_check
      _
    $region10: #{entry_flow_forward.21} parent=5 // pred_check_branch
      %143 = sbr.rel (%p140) target = $region12
    $region11: #{entry_flow_forward.21} parent=5 // pred_region
      %s144 = ssub.s32 %s10, 1
      // Predicated region
      $region13: #{entry_flow_forward.21} parent=11 // pred_check
        %p145 = pneg %p83
      $region14: #{entry_flow_forward.21} parent=11 // pred_check_branch
        %147 = sbr.rel (%p145) target = $region16
      $region15: #{entry_flow_forward.21} parent=11 // pred_region
        _
      $region16: #{entry_flow_forward.21} parent=11 // pred_fallthru
        _
      // Predicated region
      $region17: #{entry_flow_forward.21} parent=11 // pred_check
        %p148 = pneg %p104
      $region18: #{entry_flow_forward.21} parent=11 // pred_check_branch
        %150 = sbr.rel (%p148) target = $region20
      $region19: #{entry_flow_forward.21} parent=11 // pred_region
        _
      $region20: #{entry_flow_forward.21} parent=11 // pred_fallthru
        _
    $region12: #{entry_flow_forward.21} parent=5 // pred_fallthru
      _
    %p151 = scmp.lt.s32.totalorder %s10, 2
    // Predicated region
    $region21: #{entry_flow_forward.21} parent=5 // pred_check
      %p152 = pneg %p151
    $region22: #{entry_flow_forward.21} parent=5 // pred_check_branch
      %154 = sbr.rel (%p152) target = $region24
    $region23: #{entry_flow_forward.21} parent=5 // pred_region
      // Predicated region
      $region25: #{entry_flow_forward.21} parent=23 // pred_check
        %p155 = pneg %p30
      $region26: #{entry_flow_forward.21} parent=23 // pred_check_branch
        %157 = sbr.rel (%p155) target = $region28
      $region27: #{entry_flow_forward.21} parent=23 // pred_region
        %p158 = scmp.lt.s32.totalorder %s10, 1
        %s159 = scalar_select %p158, %s10, 1
        %s160 = smul.addr %s159, 8
        %s161 = scalar_lea.vmem %s0, %s160
      $region28: #{entry_flow_forward.21} parent=23 // pred_fallthru
        _
      // Predicated region
      $region29: #{entry_flow_forward.21} parent=23 // pred_check
        %p162 = pneg %p56
      $region30: #{entry_flow_forward.21} parent=23 // pred_check_branch
        %164 = sbr.rel (%p162) target = $region32
      $region31: #{entry_flow_forward.21} parent=23 // pred_region
        %p165 = scmp.lt.s32.totalorder %s10, 1
        %s166 = scalar_select %p165, %s10, 1
        %s167 = smul.addr %s166, 4
        %s168 = scalar_lea.vmem %s1, %s167
      $region32: #{entry_flow_forward.21} parent=23 // pred_fallthru
        _
    $region24: #{entry_flow_forward.21} parent=5 // pred_fallthru
      _
    %p169 = scmp.le.s32.totalorder 1, %s10
    %p170 = scmp.lt.s32.totalorder %s10, 3
    %p171 = pnand %p169, %p170
    %p172 = pneg %p171
    // Predicated region
    $region33: #{entry_flow_forward.21} parent=5 // pred_check
      _
    $region34: #{entry_flow_forward.21} parent=5 // pred_check_branch
      %174 = sbr.rel (%p171) target = $region36
    $region35: #{entry_flow_forward.21} parent=5 // pred_region
      %s175 = ssub.s32 %s10, 1
      %p176 = scmp.lt.s32.totalorder %s15, 1
      %s177 = scalar_select %p176, %s15, 1
      %s178 = smul.addr %s177, 8
      %s179 = scalar_lea.vmem %s0, %s178
      %p180 = pneg %p36
      %p181 = pneg %p33
      %p182 = scmp.lt.s32.totalorder %s15, 1
      %s183 = scalar_select %p182, %s15, 1
      %s184 = smul.addr %s183, 4
      %s185 = scalar_lea.vmem %s1, %s184
      %p186 = pneg %p62
      %p187 = pneg %p59
      %p188 = pneg %p83
      %p189 = pneg %p80
      %p190 = pneg %p104
      %p191 = pneg %p101
      %p192 = pneg %p130
      %p193 = pneg %p127
      %p194 = scmp.lt.s32.totalorder %s15, 1
      %s195 = scalar_select %p194, %s15, 1
      %s196 = scalar_lea.vmem %s4, %s195
      %p197 = scmp.lt.s32.totalorder %s15, 1
      %s198 = scalar_select %p197, %s15, 1
      %s199 = smul.addr %s198, 8
      %s200 = scalar_lea.vmem %s0, %s199
      %p201 = scmp.lt.s32.totalorder %s15, 1
      %s202 = scalar_select %p201, %s15, 1
      %s203 = smul.addr %s202, 4
      %s204 = scalar_lea.vmem %s1, %s203
      %p205 = scmp.lt.s32.totalorder %s15, 1
      %s206 = scalar_select %p205, %s15, 1
      %s207 = scalar_lea.vmem %s4, %s206
      %v209 = vld [vmem:[%s200] sm:$0x3]
      %v210 = vld [vmem:[%s200 + $0x2] sm:$0x3]
      %v211 = vld [vmem:[%s200 + $0x4] sm:$0x3]
      %v215 = vrot.slane %v209, 1
      %v216 = vrot.slane %v210, 1
      %v217 = vrot.slane %v211, 1
      %v221 = vmax.bf16 %v209, %v215
      %v222 = vmax.bf16 %v210, %v216
      %v223 = vmax.bf16 %v211, %v217
      %v225 = vshrl.u32 %v209, 16
      %v227 = vrot.slane %v225, 7
      %v228 = vrot.slane %v227, 1
      %v230 = vshrl.u32 %v210, 16
      %v232 = vrot.slane %v230, 7
      %v233 = vrot.slane %v232, 1
      %v235 = vshrl.u32 %v211, 16
      %v237 = vrot.slane %v235, 7
      %v238 = vrot.slane %v237, 1
      %v242 = vmax.bf16 %v221, %v228
      %v243 = vmax.bf16 %v222, %v233
      %v244 = vmax.bf16 %v223, %v238
      %v245 = vmax.bf16 %v242, %v243
      %v246 = vmax.bf16 %v245, %v244
      %vm247 = vcmask 1040384
      %vm248 = vsmask.f32 256
      %vm249 = vmand %vm247, %vm248
      %v250 = vld [vmem:[#allocation2] sm:$0x1]
      %v251 = vsel %vm249, %v246, %v250
      %252 = vst [vmem:[#allocation2] sm:$0x1] %v251
      %v253 = vld [vmem:[%s204] sm:$0x1]
      %v254 = vld [vmem:[#allocation3] sm:$0x1]
      %v255 = vsel %vm249, %v253, %v254
      %256 = vst [vmem:[#allocation3] sm:$0x1] %v255
      %v257 = vld [vmem:[#allocation3] sm:$0x1]
      %v258 = vld [vmem:[%s2] sm:$0xf]
      %v259 = vld [vmem:[%s2 + $0x4] sm:$0xf]
      %v260 = vld [vmem:[%s2 + $0x8] sm:$0xf]
      %v261 = vld [vmem:[%s2 + $0xc] sm:$0xf]
      %v262 = vld [vmem:[%s2 + $0x10] sm:$0xf]
      %v263 = vld [vmem:[%s2 + $0x14] sm:$0xf]
      %v264 = vld [vmem:[%s2 + $0x18] sm:$0xf]
      %v265 = vld [vmem:[%s2 + $0x1c] sm:$0xf]
      %v266 = vld [vmem:[%s2 + $0x20] sm:$0xf]
      %v267 = vld [vmem:[%s2 + $0x24] sm:$0xf]
      %v268 = vld [vmem:[%s2 + $0x28] sm:$0xf]
      %v269 = vld [vmem:[%s2 + $0x2c] sm:$0xf]
      %v270 = vld [vmem:[%s2 + $0x30] sm:$0xf]
      %v271 = vld [vmem:[%s2 + $0x34] sm:$0xf]
      %v272 = vld [vmem:[%s2 + $0x38] sm:$0xf]
      %v273 = vld [vmem:[%s2 + $0x3c] sm:$0xf]
      %v274 = vld [vmem:[%s3] sm:$0x1]
      %v291 = vunpack.c.l.b16 %v258
      %v292 = vunpack.c.l.b16 %v259
      %v293 = vunpack.c.l.b16 %v260
      %v294 = vunpack.c.l.b16 %v261
      %v295 = vunpack.c.l.b16 %v262
      %v296 = vunpack.c.l.b16 %v263
      %v297 = vunpack.c.l.b16 %v264
      %v298 = vunpack.c.l.b16 %v265
      %v299 = vunpack.c.l.b16 %v266
      %v300 = vunpack.c.l.b16 %v267
      %v301 = vunpack.c.l.b16 %v268
      %v302 = vunpack.c.l.b16 %v269
      %v303 = vunpack.c.l.b16 %v270
      %v304 = vunpack.c.l.b16 %v271
      %v305 = vunpack.c.l.b16 %v272
      %v306 = vunpack.c.l.b16 %v273
      %v307 = vpack.c.b16 %v292, %v291
      %v308 = vpack.c.b16 %v294, %v293
      %v309 = vpack.c.b16 %v296, %v295
      %v310 = vpack.c.b16 %v298, %v297
      %v311 = vpack.c.b16 %v300, %v299
      %v312 = vpack.c.b16 %v302, %v301
      %v313 = vpack.c.b16 %v304, %v303
      %v314 = vpack.c.b16 %v306, %v305
      %323 = vmatprep.subr.bf16.mxu0 0
      %324 = vmatpush1.bf16.msra.mxu0 %v314
      %325 = vmatprep.subr.bf16.mxu0 0
      %326 = vmatpush1.bf16.msra.mxu0 %v313
      %327 = vmatprep.subr.bf16.mxu0 0
      %328 = vmatpush1.bf16.msra.mxu0 %v312
      %329 = vmatprep.subr.bf16.mxu0 0
      %330 = vmatpush1.bf16.msra.mxu0 %v311
      %331 = vmatprep.subr.bf16.mxu0 0
      %332 = vmatpush1.bf16.msra.mxu0 %v310
      %333 = vmatprep.subr.bf16.mxu0 0
      %334 = vmatpush1.bf16.msra.mxu0 %v309
      %335 = vmatprep.subr.bf16.mxu0 0
      %336 = vmatpush1.bf16.msra.mxu0 %v308
      %337 = vmatprep.subr.bf16.mxu0 0
      %338 = vmatpush1.bf16.msra.mxu0 %v307
      %339 = vmatprep.subr.bf16.mxu0 0
      %340 = vmatpush2.bf16.msra.mxu0 0
      %341 = vmatprep.subr.bf16.mxu0 0
      %342 = vmatpush2.bf16.msra.mxu0 0
      %343 = vmatprep.subr.bf16.mxu0 0
      %344 = vmatpush2.bf16.msra.mxu0 0
      %345 = vmatprep.subr.bf16.mxu0 0
      %346 = vmatpush2.bf16.msra.mxu0 0
      %347 = vmatprep.subr.bf16.mxu0 0
      %348 = vmatpush2.bf16.msra.mxu0 0
      %349 = vmatprep.subr.bf16.mxu0 0
      %350 = vmatpush2.bf16.msra.mxu0 0
      %351 = vmatprep.subr.bf16.mxu0 0
      %352 = vmatpush2.bf16.msra.mxu0 0
      %353 = vmatprep.subr.bf16.mxu0 0
      %354 = vmatpush2.bf16.msra.mxu0 0
      %355 = vmatprep.mubr.bf16.mxu0 0
      %356 = vmatmul.mubr.bf16.gmra.mxu0 %v257
      %v357 = vpop.f32.mrf.mxu0
      %v358 = vadd.f32 %v274, %v357
      %v359 = vpop.f32.mrf.mxu0
      %v360 = vpop.f32.mrf.mxu0
      %v361 = vpop.f32.mrf.mxu0
      %362 = vdwg.mxu0
      %v363 = vld [vmem:[#allocation2] sm:$0x1]
      %v364 = vunpack.c.l.bf16 %v363
      %v365 = vadd.f32 %v364, %v358
      %v366 = vpack.c.bf16 %v365, %v365
      %v367 = vld [vmem:[%s207] sm:$0x1]
      %v368 = vsel %vm249, %v366, %v367
      %369 = vst [vmem:[%s207] sm:$0x1] %v368
      %p370 = scmp.lt.s32.totalorder %s15, 1
      %s371 = scalar_select %p370, %s15, 1
      %s372 = scalar_lea.vmem %s4, %s371
      // Predicated region
      $region37: #{entry_flow_forward.21} parent=35 // pred_check
        %p373 = pneg %p127
      $region38: #{entry_flow_forward.21} parent=35 // pred_check_branch
        %375 = sbr.rel (%p373) target = $region40
      $region39: #{entry_flow_forward.21} parent=35 // pred_region
        _
      $region40: #{entry_flow_forward.21} parent=35 // pred_fallthru
        _
    $region36: #{entry_flow_forward.21} parent=5 // pred_fallthru
      _
    %p376 = scmp.le.s32.totalorder 2, %s10
    // Predicated region
    $region41: #{entry_flow_forward.21} parent=5 // pred_check
      %p377 = pneg %p376
    $region42: #{entry_flow_forward.21} parent=5 // pred_check_branch
      %379 = sbr.rel (%p377) target = $region44
    $region43: #{entry_flow_forward.21} parent=5 // pred_region
      %s380 = ssub.s32 %s10, 2
      // Predicated region
      $region45: #{entry_flow_forward.21} parent=43 // pred_check
        %p381 = pneg %p133
      $region46: #{entry_flow_forward.21} parent=43 // pred_check_branch
        %383 = sbr.rel (%p381) target = $region48
      $region47: #{entry_flow_forward.21} parent=43 // pred_region
        %p384 = scmp.lt.s32.totalorder %s16, 1
        %s385 = scalar_select %p384, %s16, 1
        %s386 = scalar_lea.vmem %s4, %s385
      $region48: #{entry_flow_forward.21} parent=43 // pred_fallthru
        _
    $region44: #{entry_flow_forward.21} parent=5 // pred_fallthru
      _
  $region6: #{entry_flow_forward.21} parent=0 // loop_footer
    %s14 = sadd.s32 1, %s10
  $region7: #{entry_flow_forward.21} parent=0 // loop_footer_branch
    %9 = sbr.rel target = $region3
  $region8: #{entry_flow_forward.21} parent=0 // loop_exit
    _

</llo_original>
